<compile_context>
chip_gen: v7x
topology: tpu7x:2x2x1
jax: 0.10.0
libtpu: 0.0.40
codegen_flags: <defaults>
</compile_context>

<pallas_src>
import math
from functools import partial

import jax
import jax.numpy as jnp
from jax.experimental import pallas as pl
from jax.experimental.pallas import tpu as pltpu


_LN_EPS = 1e-5


def _vmem_limit_bytes():
    # ~75% of physical per-core VMEM: v5e/v6e (128 MiB) -> 96 MiB,
    # v7x (64 MiB) -> 48 MiB.  Conservative fallback if the query fails.
    try:
        cap = pltpu.get_tpu_info().vmem_capacity_bytes
        return min(int(cap * 3 // 4), 100 * 1024 * 1024)
    except Exception:
        return 48 * 1024 * 1024


_VMEM_LIMIT = _vmem_limit_bytes()


def _cparams(n_parallel):
    return pltpu.CompilerParams(
        dimension_semantics=("parallel",) * n_parallel,
        vmem_limit_bytes=_VMEM_LIMIT,
    )


def _const_spec(shape):
    # Constant-index (weight/bias) block: single-buffered -- the block index
    # never changes, so double buffering is pure VMEM waste.
    idx = lambda *_: (0,) * len(shape)
    try:
        return pl.BlockSpec(shape, idx, pipeline_mode=pl.Buffered(1))
    except TypeError:  # older BlockSpec without pipeline_mode kwarg
        return pl.BlockSpec(shape, idx)


def _row_tile(m, target=512):
    # Largest divisor of m that is a multiple of 8 and <= target; falls back to
    # the full extent for small/awkward m.  The tile always divides m, so
    # grid = m // tile never drops rows.
    if m <= target:
        return m
    for tm in range(target, 7, -8):
        if m % tm == 0:
            return tm
    return m


def _layernorm_f32(x, g, b):
    mu = jnp.mean(x, axis=-1, keepdims=True)
    var = jnp.mean(jnp.square(x - mu), axis=-1, keepdims=True)
    return (x - mu) * jax.lax.rsqrt(var + _LN_EPS) * g + b


# ---------------------------------------------------------------------------
# Fused multi-head attention block:  LN(x_q + Wo(softmax(QK^T/sqrt(dh)) V))
# Grid over (batch, q-row tiles); weights VMEM-resident (bf16, single buffer).
# ---------------------------------------------------------------------------

def _mha_block_kernel(xq_ref, xkv_ref, wq_ref, bq_ref, wk_ref, bk_ref,
                      wv_ref, bv_ref, wo_ref, bo_ref, g_ref, b_ref, o_ref,
                      *, heads):
    xq = xq_ref[0].astype(jnp.float32)        # (tq, D) residual path in f32
    xq_b = xq.astype(jnp.bfloat16)
    xkv_b = xkv_ref[0].astype(jnp.bfloat16)   # (Sk, D)

    # QKV projections on the MXU; weights are bf16, 1/sqrt(dh) is pre-folded
    # into Wq/bq.  f32 accumulation; biases added in f32.
    q = (jnp.dot(xq_b, wq_ref[...], preferred_element_type=jnp.float32)
         + bq_ref[...]).astype(jnp.bfloat16)
    k = (jnp.dot(xkv_b, wk_ref[...], preferred_element_type=jnp.float32)
         + bk_ref[...]).astype(jnp.bfloat16)
    v = (jnp.dot(xkv_b, wv_ref[...], preferred_element_type=jnp.float32)
         + bv_ref[...]).astype(jnp.bfloat16)

    tq, d = xq.shape
    dh = d // heads

    # Per-head softmax attention (static unroll); per-head outputs are
    # concatenated so the output projection is ONE lane-dense K=D matmul.
    o_heads = []
    for h in range(heads):
        lo, hi = h * dh, (h + 1) * dh
        s = jax.lax.dot_general(q[:, lo:hi], k[:, lo:hi],
                                (((1,), (1,)), ((), ())),
                                preferred_element_type=jnp.float32)   # (tq,Sk)
        m = jnp.max(s, axis=-1, keepdims=True)
        p = jnp.exp(s - m)                                            # f32 EUP
        inv = pl.reciprocal(jnp.sum(p, axis=-1, keepdims=True), approx=True)
        oh = jnp.dot(p.astype(jnp.bfloat16), v[:, lo:hi],
                     preferred_element_type=jnp.float32) * inv        # (tq,dh)
        o_heads.append(oh.astype(jnp.bfloat16))
    o_cat = jnp.concatenate(o_heads, axis=-1)                         # (tq, D)

    attn = jnp.dot(o_cat, wo_ref[...], preferred_element_type=jnp.float32)

    # Output bias + residual + post-LayerNorm epilogue, all in f32.
    y = _layernorm_f32(attn + bo_ref[...] + xq, g_ref[...], b_ref[...])
    o_ref[0] = y.astype(o_ref.dtype)


def mha_block(xq, xkv, p, heads):
    B, Sq, D = xq.shape
    Sk = xkv.shape[1]
    assert D % heads == 0
    tq = _row_tile(Sq, target=256)
    nq = Sq // tq

    act_q = pl.BlockSpec((1, tq, D), lambda b, qi: (b, qi, 0))
    act_kv = pl.BlockSpec((1, Sk, D), lambda b, qi: (b, 0, 0))
    w_spec = _const_spec((D, D))
    b_spec = _const_spec((1, D))

    return pl.pallas_call(
        partial(_mha_block_kernel, heads=heads),
        grid=(B, nq),
        out_shape=jax.ShapeDtypeStruct((B, Sq, D), xq.dtype),
        in_specs=[act_q, act_kv,
                  w_spec, b_spec, w_spec, b_spec,
                  w_spec, b_spec, w_spec, b_spec,
                  b_spec, b_spec],
        out_specs=pl.BlockSpec((1, tq, D), lambda b, qi: (b, qi, 0)),
        compiler_params=_cparams(2),
    )(xq, xkv,
      p["wq"], p["bq"], p["wk"], p["bk"],
      p["wv"], p["bv"], p["wo"], p["bo"],
      p["ln_g"], p["ln_b"])


# ---------------------------------------------------------------------------
# Fused FFN block:  LN(x + W2(GELU(W1 x + b1)) + b2)
# Grid over row tiles of the flattened activations; bf16 weights resident.
# ---------------------------------------------------------------------------

def _ffn_ln_kernel(x_ref, w1_ref, b1_ref, w2_ref, b2_ref, g_ref, b_ref, o_ref):
    x = x_ref[...].astype(jnp.float32)                                # (tm, D)
    h = jnp.dot(x.astype(jnp.bfloat16), w1_ref[...],
                preferred_element_type=jnp.float32) + b1_ref[...]
    h = jax.nn.gelu(h)       # TODO(synk): tanh approx vs PyTorch exact erf
    y = jnp.dot(h.astype(jnp.bfloat16), w2_ref[...],
                preferred_element_type=jnp.float32) + b2_ref[...]
    o_ref[...] = _layernorm_f32(x + y, g_ref[...], b_ref[...]).astype(o_ref.dtype)


def ffn_ln_block(x, p):
    B, S, D = x.shape
    inner = p["w1"].shape[1]
    M = B * S
    x2 = x.reshape(M, D)
    tm = _row_tile(M)

    out = pl.pallas_call(
        _ffn_ln_kernel,
        grid=(M // tm,),
        out_shape=jax.ShapeDtypeStruct((M, D), x.dtype),
        in_specs=[pl.BlockSpec((tm, D), lambda i: (i, 0)),
                  _const_spec((D, inner)),
                  _const_spec((1, inner)),
                  _const_spec((inner, D)),
                  _const_spec((1, D)),
                  _const_spec((1, D)),
                  _const_spec((1, D))],
        out_specs=pl.BlockSpec((tm, D), lambda i: (i, 0)),
        compiler_params=_cparams(1),
    )(x2, p["w1"], p["b1"], p["w2"], p["b2"], p["ln_g"], p["ln_b"])
    return out.reshape(B, S, D)


# ---------------------------------------------------------------------------
# Fused GLU head:  Linear(dim, 4*dim) -> GLU(dim=2) -> Linear(2*dim, out_dim)
# W1/b1 are split into out/gate halves ONCE in prepare_params.
# ---------------------------------------------------------------------------

def _glu_head_kernel(x_ref, wo_ref, bo_ref, wg_ref, bg_ref, w2_ref, b2_ref,
                     o_ref):
    x = x_ref[...].astype(jnp.bfloat16)                               # (tm, D)
    out = jnp.dot(x, wo_ref[...], preferred_element_type=jnp.float32) + bo_ref[...]
    gate = jnp.dot(x, wg_ref[...], preferred_element_type=jnp.float32) + bg_ref[...]
    g = out * jax.nn.sigmoid(gate)                                    # f32 GLU
    y = jnp.dot(g.astype(jnp.bfloat16), w2_ref[...],
                preferred_element_type=jnp.float32) + b2_ref[...]
    o_ref[...] = y.astype(o_ref.dtype)


def glu_head(x2, p):
    M, D = x2.shape
    half = p["w_out"].shape[1]
    out_dim = p["w2"].shape[1]
    tm = _row_tile(M)

    return pl.pallas_call(
        _glu_head_kernel,
        grid=(M // tm,),
        out_shape=jax.ShapeDtypeStruct((M, out_dim), x2.dtype),
        in_specs=[pl.BlockSpec((tm, D), lambda i: (i, 0)),
                  _const_spec((D, half)),
                  _const_spec((1, half)),
                  _const_spec((D, half)),
                  _const_spec((1, half)),
                  _const_spec((half, out_dim)),
                  _const_spec((1, out_dim))],
        out_specs=pl.BlockSpec((tm, out_dim), lambda i: (i, 0)),
        compiler_params=_cparams(1),
    )(x2, p["w_out"], p["b_out"], p["w_gate"], p["b_gate"], p["w2"], p["b2"])


# ---------------------------- model composition ----------------------------

def encoder_layer(x, lp, heads):
    x = mha_block(x, x, lp["attn"], heads)
    return ffn_ln_block(x, lp["ffn"])


def cross_layer(img, bh, lp, heads):
    pi, pb = lp["img"], lp["bh"]
    img2 = mha_block(img, bh, pi["attn"], heads)
    bh2 = mha_block(bh, img, pb["attn"], heads)
    img2 = ffn_ln_block(img2, pi["ffn"])
    bh2 = ffn_ln_block(bh2, pb["ffn"])
    return img2, bh2


def post_patt_encode(params, x_img, y_bh, heads,
                     bh_attention_mask=None, img_attention_mask=None):
    # TODO(synk): attention masks accepted but not applied (reference uses None).
    e_img = x_img
    for lp in params["sfa_img"]:
        e_img = encoder_layer(e_img, lp, heads)
    e_bh = y_bh
    for lp in params["sfa_bh"]:
        e_bh = encoder_layer(e_bh, lp, heads)
    img, bh = e_img, e_bh
    for lp in params["croa"]:
        img, bh = cross_layer(img, bh, lp, heads)
    B, Sb, D = bh.shape
    y = glu_head(bh.reshape(B * Sb, D), params["head"]).reshape(B, Sb, -1)
    return img, y


# ---------------------------- deterministic init ----------------------------

def _init_linear(key, din, dout):
    w = jax.random.normal(key, (din, dout), jnp.float32) * 0.02
    b = jnp.zeros((dout,), jnp.float32)
    return w, b


def _init_block(key, dim, inner_dim):
    ks = jax.random.split(key, 6)
    wq, bq = _init_linear(ks[0], dim, dim)
    wk, bk = _init_linear(ks[1], dim, dim)
    wv, bv = _init_linear(ks[2], dim, dim)
    wo, bo = _init_linear(ks[3], dim, dim)
    w1, b1 = _init_linear(ks[4], dim, inner_dim)
    w2, b2 = _init_linear(ks[5], inner_dim, dim)
    ones = jnp.ones((dim,), jnp.float32)
    zeros = jnp.zeros((dim,), jnp.float32)
    return dict(wq=wq, bq=bq, wk=wk, bk=bk, wv=wv, bv=bv, wo=wo, bo=bo,
                ln1_g=ones, ln1_b=zeros,
                w1=w1, b1=b1, w2=w2, b2=b2, ln2_g=ones, ln2_b=zeros)


def init_params(key, lays, bhlay, imglay, dim, inner_dim, out_dim):
    ks = jax.random.split(key, bhlay + imglay + 2 * lays + 2)
    idx = 0
    sfa_bh = []
    for _ in range(bhlay):
        sfa_bh.append(_init_block(ks[idx], dim, inner_dim)); idx += 1
    sfa_img = []
    for _ in range(imglay):
        sfa_img.append(_init_block(ks[idx], dim, inner_dim)); idx += 1
    croa = []
    for _ in range(lays):
        croa.append(dict(img=_init_block(ks[idx], dim, inner_dim),
                         bh=_init_block(ks[idx + 1], dim, inner_dim)))
        idx += 2
    w1, b1 = _init_linear(ks[idx], dim, 4 * dim); idx += 1
    w2, b2 = _init_linear(ks[idx], 2 * dim, out_dim)
    return dict(sfa_bh=sfa_bh, sfa_img=sfa_img, croa=croa,
                bh_out1_w=w1, bh_out1_b=b1, bh_out2_w=w2, bh_out2_b=b2)


# ------------------- one-time parameter prep (outside jit) ------------------

def _prep_attn(blk, dim, heads):
    scale = 1.0 / math.sqrt(dim // heads)        # folded into Wq / bq
    return dict(
        wq=(blk["wq"] * scale).astype(jnp.bfloat16),
        bq=(blk["bq"] * scale).reshape(1, dim),
        wk=blk["wk"].astype(jnp.bfloat16), bk=blk["bk"].reshape(1, dim),
        wv=blk["wv"].astype(jnp.bfloat16), bv=blk["bv"].reshape(1, dim),
        wo=blk["wo"].astype(jnp.bfloat16), bo=blk["bo"].reshape(1, dim),
        ln_g=blk["ln1_g"].reshape(1, dim), ln_b=blk["ln1_b"].reshape(1, dim),
    )


def _prep_ffn(blk, dim, inner):
    return dict(
        w1=blk["w1"].astype(jnp.bfloat16), b1=blk["b1"].reshape(1, inner),
        w2=blk["w2"].astype(jnp.bfloat16), b2=blk["b2"].reshape(1, dim),
        ln_g=blk["ln2_g"].reshape(1, dim), ln_b=blk["ln2_b"].reshape(1, dim),
    )


def _prep_block(blk, dim, inner, heads):
    return dict(attn=_prep_attn(blk, dim, heads), ffn=_prep_ffn(blk, dim, inner))


def prepare_params(raw, dim, inner, out_dim, heads):
    half = 2 * dim
    w1, b1 = raw["bh_out1_w"], raw["bh_out1_b"]
    head = dict(
        w_out=w1[:, :half].astype(jnp.bfloat16),
        b_out=b1[:half].reshape(1, half),
        w_gate=w1[:, half:].astype(jnp.bfloat16),
        b_gate=b1[half:].reshape(1, half),
        w2=raw["bh_out2_w"].astype(jnp.bfloat16),
        b2=raw["bh_out2_b"].reshape(1, out_dim),
    )
    return dict(
        sfa_bh=[_prep_block(b, dim, inner, heads) for b in raw["sfa_bh"]],
        sfa_img=[_prep_block(b, dim, inner, heads) for b in raw["sfa_img"]],
        croa=[dict(img=_prep_block(c["img"], dim, inner, heads),
                   bh=_prep_block(c["bh"], dim, inner, heads))
              for c in raw["croa"]],
        head=head,
    )


# ---------------------------- demo ----------------------------

if __name__ == "__main__":
    lays, bhlay, imglay = 1, 1, 1
    # dim / inner / out_dim chosen as multiples of 128 so every block is
    # lane-dense (no masked partial stores).
    dim, heads, inner_dim, out_dim = 128, 4, 256, 128
    B, S_img, S_bh = 2, 16, 8

    key = jax.random.PRNGKey(0)
    k_par, k_img, k_bh = jax.random.split(key, 3)
    raw = init_params(k_par, lays, bhlay, imglay, dim, inner_dim, out_dim)
    params = jax.device_put(prepare_params(raw, dim, inner_dim, out_dim, heads))
    x_img = jax.random.normal(k_img, (B, S_img, dim), jnp.float32)
    y_bh = jax.random.normal(k_bh, (B, S_bh, dim), jnp.float32)

    fwd = jax.jit(partial(post_patt_encode, heads=heads))
    img_out, bh_out = fwd(params, x_img, y_bh)
    jax.block_until_ready((img_out, bh_out))

    assert img_out.shape == (B, S_img, dim), img_out.shape
    assert bh_out.shape == (B, S_bh, out_dim), bh_out.shape
    assert bool(jnp.all(jnp.isfinite(img_out))) and bool(jnp.all(jnp.isfinite(bh_out)))
    print("KERNEL_OK")
</pallas_src>

<mosaic_0001>
module attributes {stable_mosaic.version = 11 : i64} {
  func.func @_ffn_ln_kernel(%arg0: i32, %arg1: memref<32x128xf32, #tpu.memory_space<vmem>>, %arg2: memref<128x256xbf16, #tpu.memory_space<vmem>>, %arg3: memref<1x256xf32, #tpu.memory_space<vmem>>, %arg4: memref<256x128xbf16, #tpu.memory_space<vmem>>, %arg5: memref<1x128xf32, #tpu.memory_space<vmem>>, %arg6: memref<1x128xf32, #tpu.memory_space<vmem>>, %arg7: memref<1x128xf32, #tpu.memory_space<vmem>>, %arg8: memref<32x128xf32, #tpu.memory_space<vmem>>) attributes {dimension_semantics = [#tpu.dimension_semantics<parallel>], iteration_bounds = array<i64: 1>, scalar_prefetch = 0 : i64, scratch_operands = 0 : i64, tpu.core_type = #tpu.core_type<tc>, window_params = [{transform_indices = @transform_0, window_bounds = array<i64: 32, 128>}, {pipeline_mode = #tpu.pipeline_mode<synchronous>, transform_indices = @transform_1, window_bounds = array<i64: 128, 256>}, {pipeline_mode = #tpu.pipeline_mode<synchronous>, transform_indices = @transform_2, window_bounds = array<i64: 1, 256>}, {pipeline_mode = #tpu.pipeline_mode<synchronous>, transform_indices = @transform_3, window_bounds = array<i64: 256, 128>}, {pipeline_mode = #tpu.pipeline_mode<synchronous>, transform_indices = @transform_4, window_bounds = array<i64: 1, 128>}, {pipeline_mode = #tpu.pipeline_mode<synchronous>, transform_indices = @transform_5, window_bounds = array<i64: 1, 128>}, {pipeline_mode = #tpu.pipeline_mode<synchronous>, transform_indices = @transform_6, window_bounds = array<i64: 1, 128>}, {transform_indices = @transform_7, window_bounds = array<i64: 32, 128>}]} {
    %c0 = arith.constant 0 : index
    %c0_0 = arith.constant 0 : index
    %0 = vector.load %arg1[%c0, %c0_0] : memref<32x128xf32, #tpu.memory_space<vmem>>, vector<32x128xf32>
    %1 = arith.truncf %0 : vector<32x128xf32> to vector<32x128xbf16>
    %c0_1 = arith.constant 0 : index
    %c0_2 = arith.constant 0 : index
    %2 = vector.load %arg2[%c0_1, %c0_2] : memref<128x256xbf16, #tpu.memory_space<vmem>>, vector<128x256xbf16>
    %cst = arith.constant dense<0.000000e+00> : vector<32x256xf32>
    %3 = tpu.matmul %1, %2, %cst {dimension_numbers = #tpu.dot_dimension_numbers<[1], [0], [0], [1], [0, 0, 1, 1], [], []>} : vector<32x128xbf16>, vector<128x256xbf16>, vector<32x256xf32> -> vector<32x256xf32>
    %c0_3 = arith.constant 0 : index
    %c0_4 = arith.constant 0 : index
    %4 = vector.load %arg3[%c0_3, %c0_4] : memref<1x256xf32, #tpu.memory_space<vmem>>, vector<1x256xf32>
    %5 = vector.broadcast %4 : vector<1x256xf32> to vector<32x256xf32>
    %6 = arith.addf %3, %5 : vector<32x256xf32>
    %7 = arith.mulf %6, %6 : vector<32x256xf32>
    %8 = arith.mulf %6, %7 : vector<32x256xf32>
    %cst_5 = arith.constant 4.471500e-02 : f32
    %9 = vector.broadcast %cst_5 : f32 to vector<32x256xf32>
    %10 = arith.mulf %9, %8 : vector<32x256xf32>
    %11 = arith.addf %6, %10 : vector<32x256xf32>
    %cst_6 = arith.constant 0.797884583 : f32
    %12 = vector.broadcast %cst_6 : f32 to vector<32x256xf32>
    %13 = arith.mulf %12, %11 : vector<32x256xf32>
    %14 = math.tanh %13 : vector<32x256xf32>
    %cst_7 = arith.constant 1.000000e+00 : f32
    %15 = vector.broadcast %cst_7 : f32 to vector<32x256xf32>
    %16 = arith.addf %15, %14 : vector<32x256xf32>
    %cst_8 = arith.constant 5.000000e-01 : f32
    %17 = vector.broadcast %cst_8 : f32 to vector<32x256xf32>
    %18 = arith.mulf %17, %16 : vector<32x256xf32>
    %19 = arith.mulf %6, %18 : vector<32x256xf32>
    %20 = arith.truncf %19 : vector<32x256xf32> to vector<32x256xbf16>
    %c0_9 = arith.constant 0 : index
    %c0_10 = arith.constant 0 : index
    %21 = vector.load %arg4[%c0_9, %c0_10] : memref<256x128xbf16, #tpu.memory_space<vmem>>, vector<256x128xbf16>
    %cst_11 = arith.constant dense<0.000000e+00> : vector<32x128xf32>
    %22 = tpu.matmul %20, %21, %cst_11 {dimension_numbers = #tpu.dot_dimension_numbers<[1], [0], [0], [1], [0, 0, 1, 1], [], []>} : vector<32x256xbf16>, vector<256x128xbf16>, vector<32x128xf32> -> vector<32x128xf32>
    %c0_12 = arith.constant 0 : index
    %c0_13 = arith.constant 0 : index
    %23 = vector.load %arg5[%c0_12, %c0_13] : memref<1x128xf32, #tpu.memory_space<vmem>>, vector<1x128xf32>
    %24 = vector.broadcast %23 : vector<1x128xf32> to vector<32x128xf32>
    %25 = arith.addf %22, %24 : vector<32x128xf32>
    %26 = arith.addf %0, %25 : vector<32x128xf32>
    %c0_14 = arith.constant 0 : index
    %c0_15 = arith.constant 0 : index
    %27 = vector.load %arg6[%c0_14, %c0_15] : memref<1x128xf32, #tpu.memory_space<vmem>>, vector<1x128xf32>
    %c0_16 = arith.constant 0 : index
    %c0_17 = arith.constant 0 : index
    %28 = vector.load %arg7[%c0_16, %c0_17] : memref<1x128xf32, #tpu.memory_space<vmem>>, vector<1x128xf32>
    %cst_18 = arith.constant dense<0.000000e+00> : vector<32xf32>
    %29 = vector.multi_reduction <add>, %26, %cst_18 [1] : vector<32x128xf32> to vector<32xf32>
    %30 = vector.shape_cast %29 : vector<32xf32> to vector<32x1xf32>
    %cst_19 = arith.constant 1.280000e+02 : f32
    %31 = vector.broadcast %cst_19 : f32 to vector<32x1xf32>
    %32 = arith.divf %30, %31 : vector<32x1xf32>
    %33 = vector.broadcast %32 : vector<32x1xf32> to vector<32x128xf32>
    %34 = arith.subf %26, %33 : vector<32x128xf32>
    %35 = arith.mulf %34, %34 : vector<32x128xf32>
    %cst_20 = arith.constant dense<0.000000e+00> : vector<32xf32>
    %36 = vector.multi_reduction <add>, %35, %cst_20 [1] : vector<32x128xf32> to vector<32xf32>
    %37 = vector.shape_cast %36 : vector<32xf32> to vector<32x1xf32>
    %cst_21 = arith.constant 1.280000e+02 : f32
    %38 = vector.broadcast %cst_21 : f32 to vector<32x1xf32>
    %39 = arith.divf %37, %38 : vector<32x1xf32>
    %40 = vector.broadcast %32 : vector<32x1xf32> to vector<32x128xf32>
    %41 = arith.subf %26, %40 : vector<32x128xf32>
    %cst_22 = arith.constant 9.99999974E-6 : f32
    %42 = vector.broadcast %cst_22 : f32 to vector<32x1xf32>
    %43 = arith.addf %39, %42 : vector<32x1xf32>
    %44 = math.rsqrt %43 : vector<32x1xf32>
    %45 = vector.broadcast %44 : vector<32x1xf32> to vector<32x128xf32>
    %46 = arith.mulf %41, %45 : vector<32x128xf32>
    %47 = vector.broadcast %27 : vector<1x128xf32> to vector<32x128xf32>
    %48 = arith.mulf %46, %47 : vector<32x128xf32>
    %49 = vector.broadcast %28 : vector<1x128xf32> to vector<32x128xf32>
    %50 = arith.addf %48, %49 : vector<32x128xf32>
    %c0_23 = arith.constant 0 : index
    %c0_24 = arith.constant 0 : index
    %51 = vector.load %arg8[%c0_23, %c0_24] : memref<32x128xf32, #tpu.memory_space<vmem>>, vector<32x128xf32>
    tpu.vector_store %arg8[%c0_23, %c0_24], %50 {strides = array<i32>} : memref<32x128xf32, #tpu.memory_space<vmem>>, vector<32x128xf32>,
    return
  }
  func.func @transform_0(%arg0: i32) -> (i32, i32) {
    %c0_i32 = arith.constant 0 : i32
    %c0_i32_0 = arith.constant 0 : i32
    return %arg0, %c0_i32 : i32, i32
  }
  func.func @transform_1(%arg0: i32) -> (i32, i32) {
    %c0_i32 = arith.constant 0 : i32
    %c0_i32_0 = arith.constant 0 : i32
    %c0_i32_1 = arith.constant 0 : i32
    return %c0_i32, %c0_i32_0 : i32, i32
  }
  func.func @transform_2(%arg0: i32) -> (i32, i32) {
    %c0_i32 = arith.constant 0 : i32
    %c0_i32_0 = arith.constant 0 : i32
    %c0_i32_1 = arith.constant 0 : i32
    return %c0_i32, %c0_i32_0 : i32, i32
  }
  func.func @transform_3(%arg0: i32) -> (i32, i32) {
    %c0_i32 = arith.constant 0 : i32
    %c0_i32_0 = arith.constant 0 : i32
    %c0_i32_1 = arith.constant 0 : i32
    return %c0_i32, %c0_i32_0 : i32, i32
  }
  func.func @transform_4(%arg0: i32) -> (i32, i32) {
    %c0_i32 = arith.constant 0 : i32
    %c0_i32_0 = arith.constant 0 : i32
    %c0_i32_1 = arith.constant 0 : i32
    return %c0_i32, %c0_i32_0 : i32, i32
  }
  func.func @transform_5(%arg0: i32) -> (i32, i32) {
    %c0_i32 = arith.constant 0 : i32
    %c0_i32_0 = arith.constant 0 : i32
    %c0_i32_1 = arith.constant 0 : i32
    return %c0_i32, %c0_i32_0 : i32, i32
  }
  func.func @transform_6(%arg0: i32) -> (i32, i32) {
    %c0_i32 = arith.constant 0 : i32
    %c0_i32_0 = arith.constant 0 : i32
    %c0_i32_1 = arith.constant 0 : i32
    return %c0_i32, %c0_i32_0 : i32, i32
  }
  func.func @transform_7(%arg0: i32) -> (i32, i32) {
    %c0_i32 = arith.constant 0 : i32
    %c0_i32_0 = arith.constant 0 : i32
    return %arg0, %c0_i32 : i32, i32
  }
}

module attributes {stable_mosaic.version = 11 : i64} {
  func.func @_mha_block_kernel(%arg0: i32, %arg1: i32, %arg2: memref<1x8x128xf32, #tpu.memory_space<vmem>>, %arg3: memref<1x8x128xf32, #tpu.memory_space<vmem>>, %arg4: memref<128x128xbf16, #tpu.memory_space<vmem>>, %arg5: memref<1x128xf32, #tpu.memory_space<vmem>>, %arg6: memref<128x128xbf16, #tpu.memory_space<vmem>>, %arg7: memref<1x128xf32, #tpu.memory_space<vmem>>, %arg8: memref<128x128xbf16, #tpu.memory_space<vmem>>, %arg9: memref<1x128xf32, #tpu.memory_space<vmem>>, %arg10: memref<128x128xbf16, #tpu.memory_space<vmem>>, %arg11: memref<1x128xf32, #tpu.memory_space<vmem>>, %arg12: memref<1x128xf32, #tpu.memory_space<vmem>>, %arg13: memref<1x128xf32, #tpu.memory_space<vmem>>, %arg14: memref<1x8x128xf32, #tpu.memory_space<vmem>>) attributes {dimension_semantics = [#tpu.dimension_semantics<parallel>, #tpu.dimension_semantics<parallel>], iteration_bounds = array<i64: 2, 1>, scalar_prefetch = 0 : i64, scratch_operands = 0 : i64, tpu.core_type = #tpu.core_type<tc>, window_params = [{transform_indices = @transform_0, window_bounds = array<i64: 1, 8, 128>}, {transform_indices = @transform_1, window_bounds = array<i64: 1, 8, 128>}, {pipeline_mode = #tpu.pipeline_mode<synchronous>, transform_indices = @transform_2, window_bounds = array<i64: 128, 128>}, {pipeline_mode = #tpu.pipeline_mode<synchronous>, transform_indices = @transform_3, window_bounds = array<i64: 1, 128>}, {pipeline_mode = #tpu.pipeline_mode<synchronous>, transform_indices = @transform_4, window_bounds = array<i64: 128, 128>}, {pipeline_mode = #tpu.pipeline_mode<synchronous>, transform_indices = @transform_5, window_bounds = array<i64: 1, 128>}, {pipeline_mode = #tpu.pipeline_mode<synchronous>, transform_indices = @transform_6, window_bounds = array<i64: 128, 128>}, {pipeline_mode = #tpu.pipeline_mode<synchronous>, transform_indices = @transform_7, window_bounds = array<i64: 1, 128>}, {pipeline_mode = #tpu.pipeline_mode<synchronous>, transform_indices = @transform_8, window_bounds = array<i64: 128, 128>}, {pipeline_mode = #tpu.pipeline_mode<synchronous>, transform_indices = @transform_9, window_bounds = array<i64: 1, 128>}, {pipeline_mode = #tpu.pipeline_mode<synchronous>, transform_indices = @transform_10, window_bounds = array<i64: 1, 128>}, {pipeline_mode = #tpu.pipeline_mode<synchronous>, transform_indices = @transform_11, window_bounds = array<i64: 1, 128>}, {transform_indices = @transform_12, window_bounds = array<i64: 1, 8, 128>}]} {
    %c0 = arith.constant 0 : index
    %c0_0 = arith.constant 0 : index
    %c0_1 = arith.constant 0 : index
    %0 = vector.load %arg2[%c0, %c0_0, %c0_1] : memref<1x8x128xf32, #tpu.memory_space<vmem>>, vector<1x8x128xf32>
    %1 = vector.shape_cast %0 : vector<1x8x128xf32> to vector<8x128xf32>
    %2 = arith.truncf %1 : vector<8x128xf32> to vector<8x128xbf16>
    %c0_2 = arith.constant 0 : index
    %c0_3 = arith.constant 0 : index
    %c0_4 = arith.constant 0 : index
    %3 = vector.load %arg3[%c0_2, %c0_3, %c0_4] : memref<1x8x128xf32, #tpu.memory_space<vmem>>, vector<1x8x128xf32>
    %4 = vector.shape_cast %3 : vector<1x8x128xf32> to vector<8x128xf32>
    %5 = arith.truncf %4 : vector<8x128xf32> to vector<8x128xbf16>
    %c0_5 = arith.constant 0 : index
    %c0_6 = arith.constant 0 : index
    %6 = vector.load %arg4[%c0_5, %c0_6] : memref<128x128xbf16, #tpu.memory_space<vmem>>, vector<128x128xbf16>
    %cst = arith.constant dense<0.000000e+00> : vector<8x128xf32>
    %7 = tpu.matmul %2, %6, %cst {dimension_numbers = #tpu.dot_dimension_numbers<[1], [0], [0], [1], [0, 0, 1, 1], [], []>} : vector<8x128xbf16>, vector<128x128xbf16>, vector<8x128xf32> -> vector<8x128xf32>
    %c0_7 = arith.constant 0 : index
    %c0_8 = arith.constant 0 : index
    %8 = vector.load %arg5[%c0_7, %c0_8] : memref<1x128xf32, #tpu.memory_space<vmem>>, vector<1x128xf32>
    %9 = vector.broadcast %8 : vector<1x128xf32> to vector<8x128xf32>
    %10 = arith.addf %7, %9 : vector<8x128xf32>
    %11 = arith.truncf %10 : vector<8x128xf32> to vector<8x128xbf16>
    %c0_9 = arith.constant 0 : index
    %c0_10 = arith.constant 0 : index
    %12 = vector.load %arg6[%c0_9, %c0_10] : memref<128x128xbf16, #tpu.memory_space<vmem>>, vector<128x128xbf16>
    %cst_11 = arith.constant dense<0.000000e+00> : vector<8x128xf32>
    %13 = tpu.matmul %5, %12, %cst_11 {dimension_numbers = #tpu.dot_dimension_numbers<[1], [0], [0], [1], [0, 0, 1, 1], [], []>} : vector<8x128xbf16>, vector<128x128xbf16>, vector<8x128xf32> -> vector<8x128xf32>
    %c0_12 = arith.constant 0 : index
    %c0_13 = arith.constant 0 : index
    %14 = vector.load %arg7[%c0_12, %c0_13] : memref<1x128xf32, #tpu.memory_space<vmem>>, vector<1x128xf32>
    %15 = vector.broadcast %14 : vector<1x128xf32> to vector<8x128xf32>
    %16 = arith.addf %13, %15 : vector<8x128xf32>
    %17 = arith.truncf %16 : vector<8x128xf32> to vector<8x128xbf16>
    %c0_14 = arith.constant 0 : index
    %c0_15 = arith.constant 0 : index
    %18 = vector.load %arg8[%c0_14, %c0_15] : memref<128x128xbf16, #tpu.memory_space<vmem>>, vector<128x128xbf16>
    %cst_16 = arith.constant dense<0.000000e+00> : vector<8x128xf32>
    %19 = tpu.matmul %5, %18, %cst_16 {dimension_numbers = #tpu.dot_dimension_numbers<[1], [0], [0], [1], [0, 0, 1, 1], [], []>} : vector<8x128xbf16>, vector<128x128xbf16>, vector<8x128xf32> -> vector<8x128xf32>
    %c0_17 = arith.constant 0 : index
    %c0_18 = arith.constant 0 : index
    %20 = vector.load %arg9[%c0_17, %c0_18] : memref<1x128xf32, #tpu.memory_space<vmem>>, vector<1x128xf32>
    %21 = vector.broadcast %20 : vector<1x128xf32> to vector<8x128xf32>
    %22 = arith.addf %19, %21 : vector<8x128xf32>
    %23 = arith.truncf %22 : vector<8x128xf32> to vector<8x128xbf16>
    %24 = vector.extract_strided_slice %11 {offsets = [0, 0], sizes = [8, 32], strides = [1, 1]} : vector<8x128xbf16> to vector<8x32xbf16>
    %25 = vector.extract_strided_slice %17 {offsets = [0, 0], sizes = [8, 32], strides = [1, 1]} : vector<8x128xbf16> to vector<8x32xbf16>
    %cst_19 = arith.constant dense<0.000000e+00> : vector<8x8xf32>
    %26 = tpu.matmul %24, %25, %cst_19 {dimension_numbers = #tpu.dot_dimension_numbers<[1], [1], [0], [0], [0, 0, 1, 0], [], []>} : vector<8x32xbf16>, vector<8x32xbf16>, vector<8x8xf32> -> vector<8x8xf32>
    %cst_20 = arith.constant dense<0xFF800000> : vector<8xf32>
    %27 = vector.multi_reduction <maximumf>, %26, %cst_20 [1] : vector<8x8xf32> to vector<8xf32>
    %28 = vector.shape_cast %27 : vector<8xf32> to vector<8x1xf32>
    %29 = vector.broadcast %28 : vector<8x1xf32> to vector<8x8xf32>
    %30 = arith.subf %26, %29 : vector<8x8xf32>
    %31 = math.exp %30 : vector<8x8xf32>
    %cst_21 = arith.constant dense<0.000000e+00> : vector<8xf32>
    %32 = vector.multi_reduction <add>, %31, %cst_21 [1] : vector<8x8xf32> to vector<8xf32>
    %33 = vector.shape_cast %32 : vector<8xf32> to vector<8x1xf32>
    %34 = tpu.reciprocal %33 {approx = true} : vector<8x1xf32> -> vector<8x1xf32>
    %35 = arith.truncf %31 : vector<8x8xf32> to vector<8x8xbf16>
    %36 = vector.extract_strided_slice %23 {offsets = [0, 0], sizes = [8, 32], strides = [1, 1]} : vector<8x128xbf16> to vector<8x32xbf16>
    %cst_22 = arith.constant dense<0.000000e+00> : vector<8x32xf32>
    %37 = tpu.matmul %35, %36, %cst_22 {dimension_numbers = #tpu.dot_dimension_numbers<[1], [0], [0], [1], [0, 0, 1, 1], [], []>} : vector<8x8xbf16>, vector<8x32xbf16>, vector<8x32xf32> -> vector<8x32xf32>
    %38 = vector.broadcast %34 : vector<8x1xf32> to vector<8x32xf32>
    %39 = arith.mulf %37, %38 : vector<8x32xf32>
    %40 = arith.truncf %39 : vector<8x32xf32> to vector<8x32xbf16>
    %41 = vector.extract_strided_slice %11 {offsets = [0, 32], sizes = [8, 32], strides = [1, 1]} : vector<8x128xbf16> to vector<8x32xbf16>
    %42 = vector.extract_strided_slice %17 {offsets = [0, 32], sizes = [8, 32], strides = [1, 1]} : vector<8x128xbf16> to vector<8x32xbf16>
    %cst_23 = arith.constant dense<0.000000e+00> : vector<8x8xf32>
    %43 = tpu.matmul %41, %42, %cst_23 {dimension_numbers = #tpu.dot_dimension_numbers<[1], [1], [0], [0], [0, 0, 1, 0], [], []>} : vector<8x32xbf16>, vector<8x32xbf16>, vector<8x8xf32> -> vector<8x8xf32>
    %cst_24 = arith.constant dense<0xFF800000> : vector<8xf32>
    %44 = vector.multi_reduction <maximumf>, %43, %cst_24 [1] : vector<8x8xf32> to vector<8xf32>
    %45 = vector.shape_cast %44 : vector<8xf32> to vector<8x1xf32>
    %46 = vector.broadcast %45 : vector<8x1xf32> to vector<8x8xf32>
    %47 = arith.subf %43, %46 : vector<8x8xf32>
    %48 = math.exp %47 : vector<8x8xf32>
    %cst_25 = arith.constant dense<0.000000e+00> : vector<8xf32>
    %49 = vector.multi_reduction <add>, %48, %cst_25 [1] : vector<8x8xf32> to vector<8xf32>
    %50 = vector.shape_cast %49 : vector<8xf32> to vector<8x1xf32>
    %51 = tpu.reciprocal %50 {approx = true} : vector<8x1xf32> -> vector<8x1xf32>
    %52 = arith.truncf %48 : vector<8x8xf32> to vector<8x8xbf16>
    %53 = vector.extract_strided_slice %23 {offsets = [0, 32], sizes = [8, 32], strides = [1, 1]} : vector<8x128xbf16> to vector<8x32xbf16>
    %cst_26 = arith.constant dense<0.000000e+00> : vector<8x32xf32>
    %54 = tpu.matmul %52, %53, %cst_26 {dimension_numbers = #tpu.dot_dimension_numbers<[1], [0], [0], [1], [0, 0, 1, 1], [], []>} : vector<8x8xbf16>, vector<8x32xbf16>, vector<8x32xf32> -> vector<8x32xf32>
    %55 = vector.broadcast %51 : vector<8x1xf32> to vector<8x32xf32>
    %56 = arith.mulf %54, %55 : vector<8x32xf32>
    %57 = arith.truncf %56 : vector<8x32xf32> to vector<8x32xbf16>
    %58 = vector.extract_strided_slice %11 {offsets = [0, 64], sizes = [8, 32], strides = [1, 1]} : vector<8x128xbf16> to vector<8x32xbf16>
    %59 = vector.extract_strided_slice %17 {offsets = [0, 64], sizes = [8, 32], strides = [1, 1]} : vector<8x128xbf16> to vector<8x32xbf16>
    %cst_27 = arith.constant dense<0.000000e+00> : vector<8x8xf32>
    %60 = tpu.matmul %58, %59, %cst_27 {dimension_numbers = #tpu.dot_dimension_numbers<[1], [1], [0], [0], [0, 0, 1, 0], [], []>} : vector<8x32xbf16>, vector<8x32xbf16>, vector<8x8xf32> -> vector<8x8xf32>
    %cst_28 = arith.constant dense<0xFF800000> : vector<8xf32>
    %61 = vector.multi_reduction <maximumf>, %60, %cst_28 [1] : vector<8x8xf32> to vector<8xf32>
    %62 = vector.shape_cast %61 : vector<8xf32> to vector<8x1xf32>
    %63 = vector.broadcast %62 : vector<8x1xf32> to vector<8x8xf32>
    %64 = arith.subf %60, %63 : vector<8x8xf32>
    %65 = math.exp %64 : vector<8x8xf32>
    %cst_29 = arith.constant dense<0.000000e+00> : vector<8xf32>
    %66 = vector.multi_reduction <add>, %65, %cst_29 [1] : vector<8x8xf32> to vector<8xf32>
    %67 = vector.shape_cast %66 : vector<8xf32> to vector<8x1xf32>
    %68 = tpu.reciprocal %67 {approx = true} : vector<8x1xf32> -> vector<8x1xf32>
    %69 = arith.truncf %65 : vector<8x8xf32> to vector<8x8xbf16>
    %70 = vector.extract_strided_slice %23 {offsets = [0, 64], sizes = [8, 32], strides = [1, 1]} : vector<8x128xbf16> to vector<8x32xbf16>
    %cst_30 = arith.constant dense<0.000000e+00> : vector<8x32xf32>
    %71 = tpu.matmul %69, %70, %cst_30 {dimension_numbers = #tpu.dot_dimension_numbers<[1], [0], [0], [1], [0, 0, 1, 1], [], []>} : vector<8x8xbf16>, vector<8x32xbf16>, vector<8x32xf32> -> vector<8x32xf32>
    %72 = vector.broadcast %68 : vector<8x1xf32> to vector<8x32xf32>
    %73 = arith.mulf %71, %72 : vector<8x32xf32>
    %74 = arith.truncf %73 : vector<8x32xf32> to vector<8x32xbf16>
    %75 = vector.extract_strided_slice %11 {offsets = [0, 96], sizes = [8, 32], strides = [1, 1]} : vector<8x128xbf16> to vector<8x32xbf16>
    %76 = vector.extract_strided_slice %17 {offsets = [0, 96], sizes = [8, 32], strides = [1, 1]} : vector<8x128xbf16> to vector<8x32xbf16>
    %cst_31 = arith.constant dense<0.000000e+00> : vector<8x8xf32>
    %77 = tpu.matmul %75, %76, %cst_31 {dimension_numbers = #tpu.dot_dimension_numbers<[1], [1], [0], [0], [0, 0, 1, 0], [], []>} : vector<8x32xbf16>, vector<8x32xbf16>, vector<8x8xf32> -> vector<8x8xf32>
    %cst_32 = arith.constant dense<0xFF800000> : vector<8xf32>
    %78 = vector.multi_reduction <maximumf>, %77, %cst_32 [1] : vector<8x8xf32> to vector<8xf32>
    %79 = vector.shape_cast %78 : vector<8xf32> to vector<8x1xf32>
    %80 = vector.broadcast %79 : vector<8x1xf32> to vector<8x8xf32>
    %81 = arith.subf %77, %80 : vector<8x8xf32>
    %82 = math.exp %81 : vector<8x8xf32>
    %cst_33 = arith.constant dense<0.000000e+00> : vector<8xf32>
    %83 = vector.multi_reduction <add>, %82, %cst_33 [1] : vector<8x8xf32> to vector<8xf32>
    %84 = vector.shape_cast %83 : vector<8xf32> to vector<8x1xf32>
    %85 = tpu.reciprocal %84 {approx = true} : vector<8x1xf32> -> vector<8x1xf32>
    %86 = arith.truncf %82 : vector<8x8xf32> to vector<8x8xbf16>
    %87 = vector.extract_strided_slice %23 {offsets = [0, 96], sizes = [8, 32], strides = [1, 1]} : vector<8x128xbf16> to vector<8x32xbf16>
    %cst_34 = arith.constant dense<0.000000e+00> : vector<8x32xf32>
    %88 = tpu.matmul %86, %87, %cst_34 {dimension_numbers = #tpu.dot_dimension_numbers<[1], [0], [0], [1], [0, 0, 1, 1], [], []>} : vector<8x8xbf16>, vector<8x32xbf16>, vector<8x32xf32> -> vector<8x32xf32>
    %89 = vector.broadcast %85 : vector<8x1xf32> to vector<8x32xf32>
    %90 = arith.mulf %88, %89 : vector<8x32xf32>
    %91 = arith.truncf %90 : vector<8x32xf32> to vector<8x32xbf16>
    %92 = tpu.concatenate %40, %57, %74, %91 in 1 : vector<8x32xbf16>, vector<8x32xbf16>, vector<8x32xbf16>, vector<8x32xbf16> -> vector<8x128xbf16>
    %c0_35 = arith.constant 0 : index
    %c0_36 = arith.constant 0 : index
    %93 = vector.load %arg10[%c0_35, %c0_36] : memref<128x128xbf16, #tpu.memory_space<vmem>>, vector<128x128xbf16>
    %cst_37 = arith.constant dense<0.000000e+00> : vector<8x128xf32>
    %94 = tpu.matmul %92, %93, %cst_37 {dimension_numbers = #tpu.dot_dimension_numbers<[1], [0], [0], [1], [0, 0, 1, 1], [], []>} : vector<8x128xbf16>, vector<128x128xbf16>, vector<8x128xf32> -> vector<8x128xf32>
    %c0_38 = arith.constant 0 : index
    %c0_39 = arith.constant 0 : index
    %95 = vector.load %arg11[%c0_38, %c0_39] : memref<1x128xf32, #tpu.memory_space<vmem>>, vector<1x128xf32>
    %96 = vector.broadcast %95 : vector<1x128xf32> to vector<8x128xf32>
    %97 = arith.addf %94, %96 : vector<8x128xf32>
    %98 = arith.addf %97, %1 : vector<8x128xf32>
    %c0_40 = arith.constant 0 : index
    %c0_41 = arith.constant 0 : index
    %99 = vector.load %arg12[%c0_40, %c0_41] : memref<1x128xf32, #tpu.memory_space<vmem>>, vector<1x128xf32>
    %c0_42 = arith.constant 0 : index
    %c0_43 = arith.constant 0 : index
    %100 = vector.load %arg13[%c0_42, %c0_43] : memref<1x128xf32, #tpu.memory_space<vmem>>, vector<1x128xf32>
    %cst_44 = arith.constant dense<0.000000e+00> : vector<8xf32>
    %101 = vector.multi_reduction <add>, %98, %cst_44 [1] : vector<8x128xf32> to vector<8xf32>
    %102 = vector.shape_cast %101 : vector<8xf32> to vector<8x1xf32>
    %cst_45 = arith.constant 1.280000e+02 : f32
    %103 = vector.broadcast %cst_45 : f32 to vector<8x1xf32>
    %104 = arith.divf %102, %103 : vector<8x1xf32>
    %105 = vector.broadcast %104 : vector<8x1xf32> to vector<8x128xf32>
    %106 = arith.subf %98, %105 : vector<8x128xf32>
    %107 = arith.mulf %106, %106 : vector<8x128xf32>
    %cst_46 = arith.constant dense<0.000000e+00> : vector<8xf32>
    %108 = vector.multi_reduction <add>, %107, %cst_46 [1] : vector<8x128xf32> to vector<8xf32>
    %109 = vector.shape_cast %108 : vector<8xf32> to vector<8x1xf32>
    %cst_47 = arith.constant 1.280000e+02 : f32
    %110 = vector.broadcast %cst_47 : f32 to vector<8x1xf32>
    %111 = arith.divf %109, %110 : vector<8x1xf32>
    %112 = vector.broadcast %104 : vector<8x1xf32> to vector<8x128xf32>
    %113 = arith.subf %98, %112 : vector<8x128xf32>
    %cst_48 = arith.constant 9.99999974E-6 : f32
    %114 = vector.broadcast %cst_48 : f32 to vector<8x1xf32>
    %115 = arith.addf %111, %114 : vector<8x1xf32>
    %116 = math.rsqrt %115 : vector<8x1xf32>
    %117 = vector.broadcast %116 : vector<8x1xf32> to vector<8x128xf32>
    %118 = arith.mulf %113, %117 : vector<8x128xf32>
    %119 = vector.broadcast %99 : vector<1x128xf32> to vector<8x128xf32>
    %120 = arith.mulf %118, %119 : vector<8x128xf32>
    %121 = vector.broadcast %100 : vector<1x128xf32> to vector<8x128xf32>
    %122 = arith.addf %120, %121 : vector<8x128xf32>
    %c0_49 = arith.constant 0 : index
    %c0_50 = arith.constant 0 : index
    %c0_51 = arith.constant 0 : index
    %123 = vector.load %arg14[%c0_49, %c0_50, %c0_51] : memref<1x8x128xf32, #tpu.memory_space<vmem>>, vector<1x8x128xf32>
    %124 = vector.shape_cast %123 : vector<1x8x128xf32> to vector<8x128xf32>
    %125 = vector.shape_cast %122 : vector<8x128xf32> to vector<1x8x128xf32>
    tpu.vector_store %arg14[%c0_49, %c0_50, %c0_51], %125 {strides = array<i32>} : memref<1x8x128xf32, #tpu.memory_space<vmem>>, vector<1x8x128xf32>,
    return
  }
  func.func @transform_0(%arg0: i32, %arg1: i32) -> (i32, i32, i32) {
    %c0_i32 = arith.constant 0 : i32
    %c0_i32_0 = arith.constant 0 : i32
    return %arg0, %arg1, %c0_i32 : i32, i32, i32
  }
  func.func @transform_1(%arg0: i32, %arg1: i32) -> (i32, i32, i32) {
    %c0_i32 = arith.constant 0 : i32
    %c0_i32_0 = arith.constant 0 : i32
    %c0_i32_1 = arith.constant 0 : i32
    return %arg0, %c0_i32, %c0_i32_0 : i32, i32, i32
  }
  func.func @transform_2(%arg0: i32, %arg1: i32) -> (i32, i32) {
    %c0_i32 = arith.constant 0 : i32
    %c0_i32_0 = arith.constant 0 : i32
    %c0_i32_1 = arith.constant 0 : i32
    return %c0_i32, %c0_i32_0 : i32, i32
  }
  func.func @transform_3(%arg0: i32, %arg1: i32) -> (i32, i32) {
    %c0_i32 = arith.constant 0 : i32
    %c0_i32_0 = arith.constant 0 : i32
    %c0_i32_1 = arith.constant 0 : i32
    return %c0_i32, %c0_i32_0 : i32, i32
  }
  func.func @transform_4(%arg0: i32, %arg1: i32) -> (i32, i32) {
    %c0_i32 = arith.constant 0 : i32
    %c0_i32_0 = arith.constant 0 : i32
    %c0_i32_1 = arith.constant 0 : i32
    return %c0_i32, %c0_i32_0 : i32, i32
  }
  func.func @transform_5(%arg0: i32, %arg1: i32) -> (i32, i32) {
    %c0_i32 = arith.constant 0 : i32
    %c0_i32_0 = arith.constant 0 : i32
    %c0_i32_1 = arith.constant 0 : i32
    return %c0_i32, %c0_i32_0 : i32, i32
  }
  func.func @transform_6(%arg0: i32, %arg1: i32) -> (i32, i32) {
    %c0_i32 = arith.constant 0 : i32
    %c0_i32_0 = arith.constant 0 : i32
    %c0_i32_1 = arith.constant 0 : i32
    return %c0_i32, %c0_i32_0 : i32, i32
  }
  func.func @transform_7(%arg0: i32, %arg1: i32) -> (i32, i32) {
    %c0_i32 = arith.constant 0 : i32
    %c0_i32_0 = arith.constant 0 : i32
    %c0_i32_1 = arith.constant 0 : i32
    return %c0_i32, %c0_i32_0 : i32, i32
  }
  func.func @transform_8(%arg0: i32, %arg1: i32) -> (i32, i32) {
    %c0_i32 = arith.constant 0 : i32
    %c0_i32_0 = arith.constant 0 : i32
    %c0_i32_1 = arith.constant 0 : i32
    return %c0_i32, %c0_i32_0 : i32, i32
  }
  func.func @transform_9(%arg0: i32, %arg1: i32) -> (i32, i32) {
    %c0_i32 = arith.constant 0 : i32
    %c0_i32_0 = arith.constant 0 : i32
    %c0_i32_1 = arith.constant 0 : i32
    return %c0_i32, %c0_i32_0 : i32, i32
  }
  func.func @transform_10(%arg0: i32, %arg1: i32) -> (i32, i32) {
    %c0_i32 = arith.constant 0 : i32
    %c0_i32_0 = arith.constant 0 : i32
    %c0_i32_1 = arith.constant 0 : i32
    return %c0_i32, %c0_i32_0 : i32, i32
  }
  func.func @transform_11(%arg0: i32, %arg1: i32) -> (i32, i32) {
    %c0_i32 = arith.constant 0 : i32
    %c0_i32_0 = arith.constant 0 : i32
    %c0_i32_1 = arith.constant 0 : i32
    return %c0_i32, %c0_i32_0 : i32, i32
  }
  func.func @transform_12(%arg0: i32, %arg1: i32) -> (i32, i32, i32) {
    %c0_i32 = arith.constant 0 : i32
    %c0_i32_0 = arith.constant 0 : i32
    return %arg0, %arg1, %c0_i32 : i32, i32, i32
  }
}

module attributes {stable_mosaic.version = 11 : i64} {
  func.func @_mha_block_kernel(%arg0: i32, %arg1: i32, %arg2: memref<1x16x128xf32, #tpu.memory_space<vmem>>, %arg3: memref<1x16x128xf32, #tpu.memory_space<vmem>>, %arg4: memref<128x128xbf16, #tpu.memory_space<vmem>>, %arg5: memref<1x128xf32, #tpu.memory_space<vmem>>, %arg6: memref<128x128xbf16, #tpu.memory_space<vmem>>, %arg7: memref<1x128xf32, #tpu.memory_space<vmem>>, %arg8: memref<128x128xbf16, #tpu.memory_space<vmem>>, %arg9: memref<1x128xf32, #tpu.memory_space<vmem>>, %arg10: memref<128x128xbf16, #tpu.memory_space<vmem>>, %arg11: memref<1x128xf32, #tpu.memory_space<vmem>>, %arg12: memref<1x128xf32, #tpu.memory_space<vmem>>, %arg13: memref<1x128xf32, #tpu.memory_space<vmem>>, %arg14: memref<1x16x128xf32, #tpu.memory_space<vmem>>) attributes {dimension_semantics = [#tpu.dimension_semantics<parallel>, #tpu.dimension_semantics<parallel>], iteration_bounds = array<i64: 2, 1>, scalar_prefetch = 0 : i64, scratch_operands = 0 : i64, tpu.core_type = #tpu.core_type<tc>, window_params = [{transform_indices = @transform_0, window_bounds = array<i64: 1, 16, 128>}, {transform_indices = @transform_1, window_bounds = array<i64: 1, 16, 128>}, {pipeline_mode = #tpu.pipeline_mode<synchronous>, transform_indices = @transform_2, window_bounds = array<i64: 128, 128>}, {pipeline_mode = #tpu.pipeline_mode<synchronous>, transform_indices = @transform_3, window_bounds = array<i64: 1, 128>}, {pipeline_mode = #tpu.pipeline_mode<synchronous>, transform_indices = @transform_4, window_bounds = array<i64: 128, 128>}, {pipeline_mode = #tpu.pipeline_mode<synchronous>, transform_indices = @transform_5, window_bounds = array<i64: 1, 128>}, {pipeline_mode = #tpu.pipeline_mode<synchronous>, transform_indices = @transform_6, window_bounds = array<i64: 128, 128>}, {pipeline_mode = #tpu.pipeline_mode<synchronous>, transform_indices = @transform_7, window_bounds = array<i64: 1, 128>}, {pipeline_mode = #tpu.pipeline_mode<synchronous>, transform_indices = @transform_8, window_bounds = array<i64: 128, 128>}, {pipeline_mode = #tpu.pipeline_mode<synchronous>, transform_indices = @transform_9, window_bounds = array<i64: 1, 128>}, {pipeline_mode = #tpu.pipeline_mode<synchronous>, transform_indices = @transform_10, window_bounds = array<i64: 1, 128>}, {pipeline_mode = #tpu.pipeline_mode<synchronous>, transform_indices = @transform_11, window_bounds = array<i64: 1, 128>}, {transform_indices = @transform_12, window_bounds = array<i64: 1, 16, 128>}]} {
    %c0 = arith.constant 0 : index
    %c0_0 = arith.constant 0 : index
    %c0_1 = arith.constant 0 : index
    %0 = vector.load %arg2[%c0, %c0_0, %c0_1] : memref<1x16x128xf32, #tpu.memory_space<vmem>>, vector<1x16x128xf32>
    %1 = vector.shape_cast %0 : vector<1x16x128xf32> to vector<16x128xf32>
    %2 = arith.truncf %1 : vector<16x128xf32> to vector<16x128xbf16>
    %c0_2 = arith.constant 0 : index
    %c0_3 = arith.constant 0 : index
    %c0_4 = arith.constant 0 : index
    %3 = vector.load %arg3[%c0_2, %c0_3, %c0_4] : memref<1x16x128xf32, #tpu.memory_space<vmem>>, vector<1x16x128xf32>
    %4 = vector.shape_cast %3 : vector<1x16x128xf32> to vector<16x128xf32>
    %5 = arith.truncf %4 : vector<16x128xf32> to vector<16x128xbf16>
    %c0_5 = arith.constant 0 : index
    %c0_6 = arith.constant 0 : index
    %6 = vector.load %arg4[%c0_5, %c0_6] : memref<128x128xbf16, #tpu.memory_space<vmem>>, vector<128x128xbf16>
    %cst = arith.constant dense<0.000000e+00> : vector<16x128xf32>
    %7 = tpu.matmul %2, %6, %cst {dimension_numbers = #tpu.dot_dimension_numbers<[1], [0], [0], [1], [0, 0, 1, 1], [], []>} : vector<16x128xbf16>, vector<128x128xbf16>, vector<16x128xf32> -> vector<16x128xf32>
    %c0_7 = arith.constant 0 : index
    %c0_8 = arith.constant 0 : index
    %8 = vector.load %arg5[%c0_7, %c0_8] : memref<1x128xf32, #tpu.memory_space<vmem>>, vector<1x128xf32>
    %9 = vector.broadcast %8 : vector<1x128xf32> to vector<16x128xf32>
    %10 = arith.addf %7, %9 : vector<16x128xf32>
    %11 = arith.truncf %10 : vector<16x128xf32> to vector<16x128xbf16>
    %c0_9 = arith.constant 0 : index
    %c0_10 = arith.constant 0 : index
    %12 = vector.load %arg6[%c0_9, %c0_10] : memref<128x128xbf16, #tpu.memory_space<vmem>>, vector<128x128xbf16>
    %cst_11 = arith.constant dense<0.000000e+00> : vector<16x128xf32>
    %13 = tpu.matmul %5, %12, %cst_11 {dimension_numbers = #tpu.dot_dimension_numbers<[1], [0], [0], [1], [0, 0, 1, 1], [], []>} : vector<16x128xbf16>, vector<128x128xbf16>, vector<16x128xf32> -> vector<16x128xf32>
    %c0_12 = arith.constant 0 : index
    %c0_13 = arith.constant 0 : index
    %14 = vector.load %arg7[%c0_12, %c0_13] : memref<1x128xf32, #tpu.memory_space<vmem>>, vector<1x128xf32>
    %15 = vector.broadcast %14 : vector<1x128xf32> to vector<16x128xf32>
    %16 = arith.addf %13, %15 : vector<16x128xf32>
    %17 = arith.truncf %16 : vector<16x128xf32> to vector<16x128xbf16>
    %c0_14 = arith.constant 0 : index
    %c0_15 = arith.constant 0 : index
    %18 = vector.load %arg8[%c0_14, %c0_15] : memref<128x128xbf16, #tpu.memory_space<vmem>>, vector<128x128xbf16>
    %cst_16 = arith.constant dense<0.000000e+00> : vector<16x128xf32>
    %19 = tpu.matmul %5, %18, %cst_16 {dimension_numbers = #tpu.dot_dimension_numbers<[1], [0], [0], [1], [0, 0, 1, 1], [], []>} : vector<16x128xbf16>, vector<128x128xbf16>, vector<16x128xf32> -> vector<16x128xf32>
    %c0_17 = arith.constant 0 : index
    %c0_18 = arith.constant 0 : index
    %20 = vector.load %arg9[%c0_17, %c0_18] : memref<1x128xf32, #tpu.memory_space<vmem>>, vector<1x128xf32>
    %21 = vector.broadcast %20 : vector<1x128xf32> to vector<16x128xf32>
    %22 = arith.addf %19, %21 : vector<16x128xf32>
    %23 = arith.truncf %22 : vector<16x128xf32> to vector<16x128xbf16>
    %24 = vector.extract_strided_slice %11 {offsets = [0, 0], sizes = [16, 32], strides = [1, 1]} : vector<16x128xbf16> to vector<16x32xbf16>
    %25 = vector.extract_strided_slice %17 {offsets = [0, 0], sizes = [16, 32], strides = [1, 1]} : vector<16x128xbf16> to vector<16x32xbf16>
    %cst_19 = arith.constant dense<0.000000e+00> : vector<16x16xf32>
    %26 = tpu.matmul %24, %25, %cst_19 {dimension_numbers = #tpu.dot_dimension_numbers<[1], [1], [0], [0], [0, 0, 1, 0], [], []>} : vector<16x32xbf16>, vector<16x32xbf16>, vector<16x16xf32> -> vector<16x16xf32>
    %cst_20 = arith.constant dense<0xFF800000> : vector<16xf32>
    %27 = vector.multi_reduction <maximumf>, %26, %cst_20 [1] : vector<16x16xf32> to vector<16xf32>
    %28 = vector.shape_cast %27 : vector<16xf32> to vector<16x1xf32>
    %29 = vector.broadcast %28 : vector<16x1xf32> to vector<16x16xf32>
    %30 = arith.subf %26, %29 : vector<16x16xf32>
    %31 = math.exp %30 : vector<16x16xf32>
    %cst_21 = arith.constant dense<0.000000e+00> : vector<16xf32>
    %32 = vector.multi_reduction <add>, %31, %cst_21 [1] : vector<16x16xf32> to vector<16xf32>
    %33 = vector.shape_cast %32 : vector<16xf32> to vector<16x1xf32>
    %34 = tpu.reciprocal %33 {approx = true} : vector<16x1xf32> -> vector<16x1xf32>
    %35 = arith.truncf %31 : vector<16x16xf32> to vector<16x16xbf16>
    %36 = vector.extract_strided_slice %23 {offsets = [0, 0], sizes = [16, 32], strides = [1, 1]} : vector<16x128xbf16> to vector<16x32xbf16>
    %cst_22 = arith.constant dense<0.000000e+00> : vector<16x32xf32>
    %37 = tpu.matmul %35, %36, %cst_22 {dimension_numbers = #tpu.dot_dimension_numbers<[1], [0], [0], [1], [0, 0, 1, 1], [], []>} : vector<16x16xbf16>, vector<16x32xbf16>, vector<16x32xf32> -> vector<16x32xf32>
    %38 = vector.broadcast %34 : vector<16x1xf32> to vector<16x32xf32>
    %39 = arith.mulf %37, %38 : vector<16x32xf32>
    %40 = arith.truncf %39 : vector<16x32xf32> to vector<16x32xbf16>
    %41 = vector.extract_strided_slice %11 {offsets = [0, 32], sizes = [16, 32], strides = [1, 1]} : vector<16x128xbf16> to vector<16x32xbf16>
    %42 = vector.extract_strided_slice %17 {offsets = [0, 32], sizes = [16, 32], strides = [1, 1]} : vector<16x128xbf16> to vector<16x32xbf16>
    %cst_23 = arith.constant dense<0.000000e+00> : vector<16x16xf32>
    %43 = tpu.matmul %41, %42, %cst_23 {dimension_numbers = #tpu.dot_dimension_numbers<[1], [1], [0], [0], [0, 0, 1, 0], [], []>} : vector<16x32xbf16>, vector<16x32xbf16>, vector<16x16xf32> -> vector<16x16xf32>
    %cst_24 = arith.constant dense<0xFF800000> : vector<16xf32>
    %44 = vector.multi_reduction <maximumf>, %43, %cst_24 [1] : vector<16x16xf32> to vector<16xf32>
    %45 = vector.shape_cast %44 : vector<16xf32> to vector<16x1xf32>
    %46 = vector.broadcast %45 : vector<16x1xf32> to vector<16x16xf32>
    %47 = arith.subf %43, %46 : vector<16x16xf32>
    %48 = math.exp %47 : vector<16x16xf32>
    %cst_25 = arith.constant dense<0.000000e+00> : vector<16xf32>
    %49 = vector.multi_reduction <add>, %48, %cst_25 [1] : vector<16x16xf32> to vector<16xf32>
    %50 = vector.shape_cast %49 : vector<16xf32> to vector<16x1xf32>
    %51 = tpu.reciprocal %50 {approx = true} : vector<16x1xf32> -> vector<16x1xf32>
    %52 = arith.truncf %48 : vector<16x16xf32> to vector<16x16xbf16>
    %53 = vector.extract_strided_slice %23 {offsets = [0, 32], sizes = [16, 32], strides = [1, 1]} : vector<16x128xbf16> to vector<16x32xbf16>
    %cst_26 = arith.constant dense<0.000000e+00> : vector<16x32xf32>
    %54 = tpu.matmul %52, %53, %cst_26 {dimension_numbers = #tpu.dot_dimension_numbers<[1], [0], [0], [1], [0, 0, 1, 1], [], []>} : vector<16x16xbf16>, vector<16x32xbf16>, vector<16x32xf32> -> vector<16x32xf32>
    %55 = vector.broadcast %51 : vector<16x1xf32> to vector<16x32xf32>
    %56 = arith.mulf %54, %55 : vector<16x32xf32>
    %57 = arith.truncf %56 : vector<16x32xf32> to vector<16x32xbf16>
    %58 = vector.extract_strided_slice %11 {offsets = [0, 64], sizes = [16, 32], strides = [1, 1]} : vector<16x128xbf16> to vector<16x32xbf16>
    %59 = vector.extract_strided_slice %17 {offsets = [0, 64], sizes = [16, 32], strides = [1, 1]} : vector<16x128xbf16> to vector<16x32xbf16>
    %cst_27 = arith.constant dense<0.000000e+00> : vector<16x16xf32>
    %60 = tpu.matmul %58, %59, %cst_27 {dimension_numbers = #tpu.dot_dimension_numbers<[1], [1], [0], [0], [0, 0, 1, 0], [], []>} : vector<16x32xbf16>, vector<16x32xbf16>, vector<16x16xf32> -> vector<16x16xf32>
    %cst_28 = arith.constant dense<0xFF800000> : vector<16xf32>
    %61 = vector.multi_reduction <maximumf>, %60, %cst_28 [1] : vector<16x16xf32> to vector<16xf32>
    %62 = vector.shape_cast %61 : vector<16xf32> to vector<16x1xf32>
    %63 = vector.broadcast %62 : vector<16x1xf32> to vector<16x16xf32>
    %64 = arith.subf %60, %63 : vector<16x16xf32>
    %65 = math.exp %64 : vector<16x16xf32>
    %cst_29 = arith.constant dense<0.000000e+00> : vector<16xf32>
    %66 = vector.multi_reduction <add>, %65, %cst_29 [1] : vector<16x16xf32> to vector<16xf32>
    %67 = vector.shape_cast %66 : vector<16xf32> to vector<16x1xf32>
    %68 = tpu.reciprocal %67 {approx = true} : vector<16x1xf32> -> vector<16x1xf32>
    %69 = arith.truncf %65 : vector<16x16xf32> to vector<16x16xbf16>
    %70 = vector.extract_strided_slice %23 {offsets = [0, 64], sizes = [16, 32], strides = [1, 1]} : vector<16x128xbf16> to vector<16x32xbf16>
    %cst_30 = arith.constant dense<0.000000e+00> : vector<16x32xf32>
    %71 = tpu.matmul %69, %70, %cst_30 {dimension_numbers = #tpu.dot_dimension_numbers<[1], [0], [0], [1], [0, 0, 1, 1], [], []>} : vector<16x16xbf16>, vector<16x32xbf16>, vector<16x32xf32> -> vector<16x32xf32>
    %72 = vector.broadcast %68 : vector<16x1xf32> to vector<16x32xf32>
    %73 = arith.mulf %71, %72 : vector<16x32xf32>
    %74 = arith.truncf %73 : vector<16x32xf32> to vector<16x32xbf16>
    %75 = vector.extract_strided_slice %11 {offsets = [0, 96], sizes = [16, 32], strides = [1, 1]} : vector<16x128xbf16> to vector<16x32xbf16>
    %76 = vector.extract_strided_slice %17 {offsets = [0, 96], sizes = [16, 32], strides = [1, 1]} : vector<16x128xbf16> to vector<16x32xbf16>
    %cst_31 = arith.constant dense<0.000000e+00> : vector<16x16xf32>
    %77 = tpu.matmul %75, %76, %cst_31 {dimension_numbers = #tpu.dot_dimension_numbers<[1], [1], [0], [0], [0, 0, 1, 0], [], []>} : vector<16x32xbf16>, vector<16x32xbf16>, vector<16x16xf32> -> vector<16x16xf32>
    %cst_32 = arith.constant dense<0xFF800000> : vector<16xf32>
    %78 = vector.multi_reduction <maximumf>, %77, %cst_32 [1] : vector<16x16xf32> to vector<16xf32>
    %79 = vector.shape_cast %78 : vector<16xf32> to vector<16x1xf32>
    %80 = vector.broadcast %79 : vector<16x1xf32> to vector<16x16xf32>
    %81 = arith.subf %77, %80 : vector<16x16xf32>
    %82 = math.exp %81 : vector<16x16xf32>
    %cst_33 = arith.constant dense<0.000000e+00> : vector<16xf32>
    %83 = vector.multi_reduction <add>, %82, %cst_33 [1] : vector<16x16xf32> to vector<16xf32>
    %84 = vector.shape_cast %83 : vector<16xf32> to vector<16x1xf32>
    %85 = tpu.reciprocal %84 {approx = true} : vector<16x1xf32> -> vector<16x1xf32>
    %86 = arith.truncf %82 : vector<16x16xf32> to vector<16x16xbf16>
    %87 = vector.extract_strided_slice %23 {offsets = [0, 96], sizes = [16, 32], strides = [1, 1]} : vector<16x128xbf16> to vector<16x32xbf16>
    %cst_34 = arith.constant dense<0.000000e+00> : vector<16x32xf32>
    %88 = tpu.matmul %86, %87, %cst_34 {dimension_numbers = #tpu.dot_dimension_numbers<[1], [0], [0], [1], [0, 0, 1, 1], [], []>} : vector<16x16xbf16>, vector<16x32xbf16>, vector<16x32xf32> -> vector<16x32xf32>
    %89 = vector.broadcast %85 : vector<16x1xf32> to vector<16x32xf32>
    %90 = arith.mulf %88, %89 : vector<16x32xf32>
    %91 = arith.truncf %90 : vector<16x32xf32> to vector<16x32xbf16>
    %92 = tpu.concatenate %40, %57, %74, %91 in 1 : vector<16x32xbf16>, vector<16x32xbf16>, vector<16x32xbf16>, vector<16x32xbf16> -> vector<16x128xbf16>
    %c0_35 = arith.constant 0 : index
    %c0_36 = arith.constant 0 : index
    %93 = vector.load %arg10[%c0_35, %c0_36] : memref<128x128xbf16, #tpu.memory_space<vmem>>, vector<128x128xbf16>
    %cst_37 = arith.constant dense<0.000000e+00> : vector<16x128xf32>
    %94 = tpu.matmul %92, %93, %cst_37 {dimension_numbers = #tpu.dot_dimension_numbers<[1], [0], [0], [1], [0, 0, 1, 1], [], []>} : vector<16x128xbf16>, vector<128x128xbf16>, vector<16x128xf32> -> vector<16x128xf32>
    %c0_38 = arith.constant 0 : index
    %c0_39 = arith.constant 0 : index
    %95 = vector.load %arg11[%c0_38, %c0_39] : memref<1x128xf32, #tpu.memory_space<vmem>>, vector<1x128xf32>
    %96 = vector.broadcast %95 : vector<1x128xf32> to vector<16x128xf32>
    %97 = arith.addf %94, %96 : vector<16x128xf32>
    %98 = arith.addf %97, %1 : vector<16x128xf32>
    %c0_40 = arith.constant 0 : index
    %c0_41 = arith.constant 0 : index
    %99 = vector.load %arg12[%c0_40, %c0_41] : memref<1x128xf32, #tpu.memory_space<vmem>>, vector<1x128xf32>
    %c0_42 = arith.constant 0 : index
    %c0_43 = arith.constant 0 : index
    %100 = vector.load %arg13[%c0_42, %c0_43] : memref<1x128xf32, #tpu.memory_space<vmem>>, vector<1x128xf32>
    %cst_44 = arith.constant dense<0.000000e+00> : vector<16xf32>
    %101 = vector.multi_reduction <add>, %98, %cst_44 [1] : vector<16x128xf32> to vector<16xf32>
    %102 = vector.shape_cast %101 : vector<16xf32> to vector<16x1xf32>
    %cst_45 = arith.constant 1.280000e+02 : f32
    %103 = vector.broadcast %cst_45 : f32 to vector<16x1xf32>
    %104 = arith.divf %102, %103 : vector<16x1xf32>
    %105 = vector.broadcast %104 : vector<16x1xf32> to vector<16x128xf32>
    %106 = arith.subf %98, %105 : vector<16x128xf32>
    %107 = arith.mulf %106, %106 : vector<16x128xf32>
    %cst_46 = arith.constant dense<0.000000e+00> : vector<16xf32>
    %108 = vector.multi_reduction <add>, %107, %cst_46 [1] : vector<16x128xf32> to vector<16xf32>
    %109 = vector.shape_cast %108 : vector<16xf32> to vector<16x1xf32>
    %cst_47 = arith.constant 1.280000e+02 : f32
    %110 = vector.broadcast %cst_47 : f32 to vector<16x1xf32>
    %111 = arith.divf %109, %110 : vector<16x1xf32>
    %112 = vector.broadcast %104 : vector<16x1xf32> to vector<16x128xf32>
    %113 = arith.subf %98, %112 : vector<16x128xf32>
    %cst_48 = arith.constant 9.99999974E-6 : f32
    %114 = vector.broadcast %cst_48 : f32 to vector<16x1xf32>
    %115 = arith.addf %111, %114 : vector<16x1xf32>
    %116 = math.rsqrt %115 : vector<16x1xf32>
    %117 = vector.broadcast %116 : vector<16x1xf32> to vector<16x128xf32>
    %118 = arith.mulf %113, %117 : vector<16x128xf32>
    %119 = vector.broadcast %99 : vector<1x128xf32> to vector<16x128xf32>
    %120 = arith.mulf %118, %119 : vector<16x128xf32>
    %121 = vector.broadcast %100 : vector<1x128xf32> to vector<16x128xf32>
    %122 = arith.addf %120, %121 : vector<16x128xf32>
    %c0_49 = arith.constant 0 : index
    %c0_50 = arith.constant 0 : index
    %c0_51 = arith.constant 0 : index
    %123 = vector.load %arg14[%c0_49, %c0_50, %c0_51] : memref<1x16x128xf32, #tpu.memory_space<vmem>>, vector<1x16x128xf32>
    %124 = vector.shape_cast %123 : vector<1x16x128xf32> to vector<16x128xf32>
    %125 = vector.shape_cast %122 : vector<16x128xf32> to vector<1x16x128xf32>
    tpu.vector_store %arg14[%c0_49, %c0_50, %c0_51], %125 {strides = array<i32>} : memref<1x16x128xf32, #tpu.memory_space<vmem>>, vector<1x16x128xf32>,
    return
  }
  func.func @transform_0(%arg0: i32, %arg1: i32) -> (i32, i32, i32) {
    %c0_i32 = arith.constant 0 : i32
    %c0_i32_0 = arith.constant 0 : i32
    return %arg0, %arg1, %c0_i32 : i32, i32, i32
  }
  func.func @transform_1(%arg0: i32, %arg1: i32) -> (i32, i32, i32) {
    %c0_i32 = arith.constant 0 : i32
    %c0_i32_0 = arith.constant 0 : i32
    %c0_i32_1 = arith.constant 0 : i32
    return %arg0, %c0_i32, %c0_i32_0 : i32, i32, i32
  }
  func.func @transform_2(%arg0: i32, %arg1: i32) -> (i32, i32) {
    %c0_i32 = arith.constant 0 : i32
    %c0_i32_0 = arith.constant 0 : i32
    %c0_i32_1 = arith.constant 0 : i32
    return %c0_i32, %c0_i32_0 : i32, i32
  }
  func.func @transform_3(%arg0: i32, %arg1: i32) -> (i32, i32) {
    %c0_i32 = arith.constant 0 : i32
    %c0_i32_0 = arith.constant 0 : i32
    %c0_i32_1 = arith.constant 0 : i32
    return %c0_i32, %c0_i32_0 : i32, i32
  }
  func.func @transform_4(%arg0: i32, %arg1: i32) -> (i32, i32) {
    %c0_i32 = arith.constant 0 : i32
    %c0_i32_0 = arith.constant 0 : i32
    %c0_i32_1 = arith.constant 0 : i32
    return %c0_i32, %c0_i32_0 : i32, i32
  }
  func.func @transform_5(%arg0: i32, %arg1: i32) -> (i32, i32) {
    %c0_i32 = arith.constant 0 : i32
    %c0_i32_0 = arith.constant 0 : i32
    %c0_i32_1 = arith.constant 0 : i32
    return %c0_i32, %c0_i32_0 : i32, i32
  }
  func.func @transform_6(%arg0: i32, %arg1: i32) -> (i32, i32) {
    %c0_i32 = arith.constant 0 : i32
    %c0_i32_0 = arith.constant 0 : i32
    %c0_i32_1 = arith.constant 0 : i32
    return %c0_i32, %c0_i32_0 : i32, i32
  }
  func.func @transform_7(%arg0: i32, %arg1: i32) -> (i32, i32) {
    %c0_i32 = arith.constant 0 : i32
    %c0_i32_0 = arith.constant 0 : i32
    %c0_i32_1 = arith.constant 0 : i32
    return %c0_i32, %c0_i32_0 : i32, i32
  }
  func.func @transform_8(%arg0: i32, %arg1: i32) -> (i32, i32) {
    %c0_i32 = arith.constant 0 : i32
    %c0_i32_0 = arith.constant 0 : i32
    %c0_i32_1 = arith.constant 0 : i32
    return %c0_i32, %c0_i32_0 : i32, i32
  }
  func.func @transform_9(%arg0: i32, %arg1: i32) -> (i32, i32) {
    %c0_i32 = arith.constant 0 : i32
    %c0_i32_0 = arith.constant 0 : i32
    %c0_i32_1 = arith.constant 0 : i32
    return %c0_i32, %c0_i32_0 : i32, i32
  }
  func.func @transform_10(%arg0: i32, %arg1: i32) -> (i32, i32) {
    %c0_i32 = arith.constant 0 : i32
    %c0_i32_0 = arith.constant 0 : i32
    %c0_i32_1 = arith.constant 0 : i32
    return %c0_i32, %c0_i32_0 : i32, i32
  }
  func.func @transform_11(%arg0: i32, %arg1: i32) -> (i32, i32) {
    %c0_i32 = arith.constant 0 : i32
    %c0_i32_0 = arith.constant 0 : i32
    %c0_i32_1 = arith.constant 0 : i32
    return %c0_i32, %c0_i32_0 : i32, i32
  }
  func.func @transform_12(%arg0: i32, %arg1: i32) -> (i32, i32, i32) {
    %c0_i32 = arith.constant 0 : i32
    %c0_i32_0 = arith.constant 0 : i32
    return %arg0, %arg1, %c0_i32 : i32, i32, i32
  }
}

module attributes {stable_mosaic.version = 11 : i64} {
  func.func @_ffn_ln_kernel(%arg0: i32, %arg1: memref<16x128xf32, #tpu.memory_space<vmem>>, %arg2: memref<128x256xbf16, #tpu.memory_space<vmem>>, %arg3: memref<1x256xf32, #tpu.memory_space<vmem>>, %arg4: memref<256x128xbf16, #tpu.memory_space<vmem>>, %arg5: memref<1x128xf32, #tpu.memory_space<vmem>>, %arg6: memref<1x128xf32, #tpu.memory_space<vmem>>, %arg7: memref<1x128xf32, #tpu.memory_space<vmem>>, %arg8: memref<16x128xf32, #tpu.memory_space<vmem>>) attributes {dimension_semantics = [#tpu.dimension_semantics<parallel>], iteration_bounds = array<i64: 1>, scalar_prefetch = 0 : i64, scratch_operands = 0 : i64, tpu.core_type = #tpu.core_type<tc>, window_params = [{transform_indices = @transform_0, window_bounds = array<i64: 16, 128>}, {pipeline_mode = #tpu.pipeline_mode<synchronous>, transform_indices = @transform_1, window_bounds = array<i64: 128, 256>}, {pipeline_mode = #tpu.pipeline_mode<synchronous>, transform_indices = @transform_2, window_bounds = array<i64: 1, 256>}, {pipeline_mode = #tpu.pipeline_mode<synchronous>, transform_indices = @transform_3, window_bounds = array<i64: 256, 128>}, {pipeline_mode = #tpu.pipeline_mode<synchronous>, transform_indices = @transform_4, window_bounds = array<i64: 1, 128>}, {pipeline_mode = #tpu.pipeline_mode<synchronous>, transform_indices = @transform_5, window_bounds = array<i64: 1, 128>}, {pipeline_mode = #tpu.pipeline_mode<synchronous>, transform_indices = @transform_6, window_bounds = array<i64: 1, 128>}, {transform_indices = @transform_7, window_bounds = array<i64: 16, 128>}]} {
    %c0 = arith.constant 0 : index
    %c0_0 = arith.constant 0 : index
    %0 = vector.load %arg1[%c0, %c0_0] : memref<16x128xf32, #tpu.memory_space<vmem>>, vector<16x128xf32>
    %1 = arith.truncf %0 : vector<16x128xf32> to vector<16x128xbf16>
    %c0_1 = arith.constant 0 : index
    %c0_2 = arith.constant 0 : index
    %2 = vector.load %arg2[%c0_1, %c0_2] : memref<128x256xbf16, #tpu.memory_space<vmem>>, vector<128x256xbf16>
    %cst = arith.constant dense<0.000000e+00> : vector<16x256xf32>
    %3 = tpu.matmul %1, %2, %cst {dimension_numbers = #tpu.dot_dimension_numbers<[1], [0], [0], [1], [0, 0, 1, 1], [], []>} : vector<16x128xbf16>, vector<128x256xbf16>, vector<16x256xf32> -> vector<16x256xf32>
    %c0_3 = arith.constant 0 : index
    %c0_4 = arith.constant 0 : index
    %4 = vector.load %arg3[%c0_3, %c0_4] : memref<1x256xf32, #tpu.memory_space<vmem>>, vector<1x256xf32>
    %5 = vector.broadcast %4 : vector<1x256xf32> to vector<16x256xf32>
    %6 = arith.addf %3, %5 : vector<16x256xf32>
    %7 = arith.mulf %6, %6 : vector<16x256xf32>
    %8 = arith.mulf %6, %7 : vector<16x256xf32>
    %cst_5 = arith.constant 4.471500e-02 : f32
    %9 = vector.broadcast %cst_5 : f32 to vector<16x256xf32>
    %10 = arith.mulf %9, %8 : vector<16x256xf32>
    %11 = arith.addf %6, %10 : vector<16x256xf32>
    %cst_6 = arith.constant 0.797884583 : f32
    %12 = vector.broadcast %cst_6 : f32 to vector<16x256xf32>
    %13 = arith.mulf %12, %11 : vector<16x256xf32>
    %14 = math.tanh %13 : vector<16x256xf32>
    %cst_7 = arith.constant 1.000000e+00 : f32
    %15 = vector.broadcast %cst_7 : f32 to vector<16x256xf32>
    %16 = arith.addf %15, %14 : vector<16x256xf32>
    %cst_8 = arith.constant 5.000000e-01 : f32
    %17 = vector.broadcast %cst_8 : f32 to vector<16x256xf32>
    %18 = arith.mulf %17, %16 : vector<16x256xf32>
    %19 = arith.mulf %6, %18 : vector<16x256xf32>
    %20 = arith.truncf %19 : vector<16x256xf32> to vector<16x256xbf16>
    %c0_9 = arith.constant 0 : index
    %c0_10 = arith.constant 0 : index
    %21 = vector.load %arg4[%c0_9, %c0_10] : memref<256x128xbf16, #tpu.memory_space<vmem>>, vector<256x128xbf16>
    %cst_11 = arith.constant dense<0.000000e+00> : vector<16x128xf32>
    %22 = tpu.matmul %20, %21, %cst_11 {dimension_numbers = #tpu.dot_dimension_numbers<[1], [0], [0], [1], [0, 0, 1, 1], [], []>} : vector<16x256xbf16>, vector<256x128xbf16>, vector<16x128xf32> -> vector<16x128xf32>
    %c0_12 = arith.constant 0 : index
    %c0_13 = arith.constant 0 : index
    %23 = vector.load %arg5[%c0_12, %c0_13] : memref<1x128xf32, #tpu.memory_space<vmem>>, vector<1x128xf32>
    %24 = vector.broadcast %23 : vector<1x128xf32> to vector<16x128xf32>
    %25 = arith.addf %22, %24 : vector<16x128xf32>
    %26 = arith.addf %0, %25 : vector<16x128xf32>
    %c0_14 = arith.constant 0 : index
    %c0_15 = arith.constant 0 : index
    %27 = vector.load %arg6[%c0_14, %c0_15] : memref<1x128xf32, #tpu.memory_space<vmem>>, vector<1x128xf32>
    %c0_16 = arith.constant 0 : index
    %c0_17 = arith.constant 0 : index
    %28 = vector.load %arg7[%c0_16, %c0_17] : memref<1x128xf32, #tpu.memory_space<vmem>>, vector<1x128xf32>
    %cst_18 = arith.constant dense<0.000000e+00> : vector<16xf32>
    %29 = vector.multi_reduction <add>, %26, %cst_18 [1] : vector<16x128xf32> to vector<16xf32>
    %30 = vector.shape_cast %29 : vector<16xf32> to vector<16x1xf32>
    %cst_19 = arith.constant 1.280000e+02 : f32
    %31 = vector.broadcast %cst_19 : f32 to vector<16x1xf32>
    %32 = arith.divf %30, %31 : vector<16x1xf32>
    %33 = vector.broadcast %32 : vector<16x1xf32> to vector<16x128xf32>
    %34 = arith.subf %26, %33 : vector<16x128xf32>
    %35 = arith.mulf %34, %34 : vector<16x128xf32>
    %cst_20 = arith.constant dense<0.000000e+00> : vector<16xf32>
    %36 = vector.multi_reduction <add>, %35, %cst_20 [1] : vector<16x128xf32> to vector<16xf32>
    %37 = vector.shape_cast %36 : vector<16xf32> to vector<16x1xf32>
    %cst_21 = arith.constant 1.280000e+02 : f32
    %38 = vector.broadcast %cst_21 : f32 to vector<16x1xf32>
    %39 = arith.divf %37, %38 : vector<16x1xf32>
    %40 = vector.broadcast %32 : vector<16x1xf32> to vector<16x128xf32>
    %41 = arith.subf %26, %40 : vector<16x128xf32>
    %cst_22 = arith.constant 9.99999974E-6 : f32
    %42 = vector.broadcast %cst_22 : f32 to vector<16x1xf32>
    %43 = arith.addf %39, %42 : vector<16x1xf32>
    %44 = math.rsqrt %43 : vector<16x1xf32>
    %45 = vector.broadcast %44 : vector<16x1xf32> to vector<16x128xf32>
    %46 = arith.mulf %41, %45 : vector<16x128xf32>
    %47 = vector.broadcast %27 : vector<1x128xf32> to vector<16x128xf32>
    %48 = arith.mulf %46, %47 : vector<16x128xf32>
    %49 = vector.broadcast %28 : vector<1x128xf32> to vector<16x128xf32>
    %50 = arith.addf %48, %49 : vector<16x128xf32>
    %c0_23 = arith.constant 0 : index
    %c0_24 = arith.constant 0 : index
    %51 = vector.load %arg8[%c0_23, %c0_24] : memref<16x128xf32, #tpu.memory_space<vmem>>, vector<16x128xf32>
    tpu.vector_store %arg8[%c0_23, %c0_24], %50 {strides = array<i32>} : memref<16x128xf32, #tpu.memory_space<vmem>>, vector<16x128xf32>,
    return
  }
  func.func @transform_0(%arg0: i32) -> (i32, i32) {
    %c0_i32 = arith.constant 0 : i32
    %c0_i32_0 = arith.constant 0 : i32
    return %arg0, %c0_i32 : i32, i32
  }
  func.func @transform_1(%arg0: i32) -> (i32, i32) {
    %c0_i32 = arith.constant 0 : i32
    %c0_i32_0 = arith.constant 0 : i32
    %c0_i32_1 = arith.constant 0 : i32
    return %c0_i32, %c0_i32_0 : i32, i32
  }
  func.func @transform_2(%arg0: i32) -> (i32, i32) {
    %c0_i32 = arith.constant 0 : i32
    %c0_i32_0 = arith.constant 0 : i32
    %c0_i32_1 = arith.constant 0 : i32
    return %c0_i32, %c0_i32_0 : i32, i32
  }
  func.func @transform_3(%arg0: i32) -> (i32, i32) {
    %c0_i32 = arith.constant 0 : i32
    %c0_i32_0 = arith.constant 0 : i32
    %c0_i32_1 = arith.constant 0 : i32
    return %c0_i32, %c0_i32_0 : i32, i32
  }
  func.func @transform_4(%arg0: i32) -> (i32, i32) {
    %c0_i32 = arith.constant 0 : i32
    %c0_i32_0 = arith.constant 0 : i32
    %c0_i32_1 = arith.constant 0 : i32
    return %c0_i32, %c0_i32_0 : i32, i32
  }
  func.func @transform_5(%arg0: i32) -> (i32, i32) {
    %c0_i32 = arith.constant 0 : i32
    %c0_i32_0 = arith.constant 0 : i32
    %c0_i32_1 = arith.constant 0 : i32
    return %c0_i32, %c0_i32_0 : i32, i32
  }
  func.func @transform_6(%arg0: i32) -> (i32, i32) {
    %c0_i32 = arith.constant 0 : i32
    %c0_i32_0 = arith.constant 0 : i32
    %c0_i32_1 = arith.constant 0 : i32
    return %c0_i32, %c0_i32_0 : i32, i32
  }
  func.func @transform_7(%arg0: i32) -> (i32, i32) {
    %c0_i32 = arith.constant 0 : i32
    %c0_i32_0 = arith.constant 0 : i32
    return %arg0, %c0_i32 : i32, i32
  }
}

module attributes {stable_mosaic.version = 11 : i64} {
  func.func @_ffn_ln_kernel(%arg0: i32, %arg1: memref<32x128xf32, #tpu.memory_space<vmem>>, %arg2: memref<128x256xbf16, #tpu.memory_space<vmem>>, %arg3: memref<1x256xf32, #tpu.memory_space<vmem>>, %arg4: memref<256x128xbf16, #tpu.memory_space<vmem>>, %arg5: memref<1x128xf32, #tpu.memory_space<vmem>>, %arg6: memref<1x128xf32, #tpu.memory_space<vmem>>, %arg7: memref<1x128xf32, #tpu.memory_space<vmem>>, %arg8: memref<32x128xf32, #tpu.memory_space<vmem>>) attributes {dimension_semantics = [#tpu.dimension_semantics<parallel>], iteration_bounds = array<i64: 1>, scalar_prefetch = 0 : i64, scratch_operands = 0 : i64, tpu.core_type = #tpu.core_type<tc>, window_params = [{transform_indices = @transform_0, window_bounds = array<i64: 32, 128>}, {pipeline_mode = #tpu.pipeline_mode<synchronous>, transform_indices = @transform_1, window_bounds = array<i64: 128, 256>}, {pipeline_mode = #tpu.pipeline_mode<synchronous>, transform_indices = @transform_2, window_bounds = array<i64: 1, 256>}, {pipeline_mode = #tpu.pipeline_mode<synchronous>, transform_indices = @transform_3, window_bounds = array<i64: 256, 128>}, {pipeline_mode = #tpu.pipeline_mode<synchronous>, transform_indices = @transform_4, window_bounds = array<i64: 1, 128>}, {pipeline_mode = #tpu.pipeline_mode<synchronous>, transform_indices = @transform_5, window_bounds = array<i64: 1, 128>}, {pipeline_mode = #tpu.pipeline_mode<synchronous>, transform_indices = @transform_6, window_bounds = array<i64: 1, 128>}, {transform_indices = @transform_7, window_bounds = array<i64: 32, 128>}]} {
    %c0 = arith.constant 0 : index
    %c0_0 = arith.constant 0 : index
    %0 = vector.load %arg1[%c0, %c0_0] : memref<32x128xf32, #tpu.memory_space<vmem>>, vector<32x128xf32>
    %1 = arith.truncf %0 : vector<32x128xf32> to vector<32x128xbf16>
    %c0_1 = arith.constant 0 : index
    %c0_2 = arith.constant 0 : index
    %2 = vector.load %arg2[%c0_1, %c0_2] : memref<128x256xbf16, #tpu.memory_space<vmem>>, vector<128x256xbf16>
    %cst = arith.constant dense<0.000000e+00> : vector<32x256xf32>
    %3 = tpu.matmul %1, %2, %cst {dimension_numbers = #tpu.dot_dimension_numbers<[1], [0], [0], [1], [0, 0, 1, 1], [], []>} : vector<32x128xbf16>, vector<128x256xbf16>, vector<32x256xf32> -> vector<32x256xf32>
    %c0_3 = arith.constant 0 : index
    %c0_4 = arith.constant 0 : index
    %4 = vector.load %arg3[%c0_3, %c0_4] : memref<1x256xf32, #tpu.memory_space<vmem>>, vector<1x256xf32>
    %5 = vector.broadcast %4 : vector<1x256xf32> to vector<32x256xf32>
    %6 = arith.addf %3, %5 : vector<32x256xf32>
    %7 = arith.mulf %6, %6 : vector<32x256xf32>
    %8 = arith.mulf %6, %7 : vector<32x256xf32>
    %cst_5 = arith.constant 4.471500e-02 : f32
    %9 = vector.broadcast %cst_5 : f32 to vector<32x256xf32>
    %10 = arith.mulf %9, %8 : vector<32x256xf32>
    %11 = arith.addf %6, %10 : vector<32x256xf32>
    %cst_6 = arith.constant 0.797884583 : f32
    %12 = vector.broadcast %cst_6 : f32 to vector<32x256xf32>
    %13 = arith.mulf %12, %11 : vector<32x256xf32>
    %14 = math.tanh %13 : vector<32x256xf32>
    %cst_7 = arith.constant 1.000000e+00 : f32
    %15 = vector.broadcast %cst_7 : f32 to vector<32x256xf32>
    %16 = arith.addf %15, %14 : vector<32x256xf32>
    %cst_8 = arith.constant 5.000000e-01 : f32
    %17 = vector.broadcast %cst_8 : f32 to vector<32x256xf32>
    %18 = arith.mulf %17, %16 : vector<32x256xf32>
    %19 = arith.mulf %6, %18 : vector<32x256xf32>
    %20 = arith.truncf %19 : vector<32x256xf32> to vector<32x256xbf16>
    %c0_9 = arith.constant 0 : index
    %c0_10 = arith.constant 0 : index
    %21 = vector.load %arg4[%c0_9, %c0_10] : memref<256x128xbf16, #tpu.memory_space<vmem>>, vector<256x128xbf16>
    %cst_11 = arith.constant dense<0.000000e+00> : vector<32x128xf32>
    %22 = tpu.matmul %20, %21, %cst_11 {dimension_numbers = #tpu.dot_dimension_numbers<[1], [0], [0], [1], [0, 0, 1, 1], [], []>} : vector<32x256xbf16>, vector<256x128xbf16>, vector<32x128xf32> -> vector<32x128xf32>
    %c0_12 = arith.constant 0 : index
    %c0_13 = arith.constant 0 : index
    %23 = vector.load %arg5[%c0_12, %c0_13] : memref<1x128xf32, #tpu.memory_space<vmem>>, vector<1x128xf32>
    %24 = vector.broadcast %23 : vector<1x128xf32> to vector<32x128xf32>
    %25 = arith.addf %22, %24 : vector<32x128xf32>
    %26 = arith.addf %0, %25 : vector<32x128xf32>
    %c0_14 = arith.constant 0 : index
    %c0_15 = arith.constant 0 : index
    %27 = vector.load %arg6[%c0_14, %c0_15] : memref<1x128xf32, #tpu.memory_space<vmem>>, vector<1x128xf32>
    %c0_16 = arith.constant 0 : index
    %c0_17 = arith.constant 0 : index
    %28 = vector.load %arg7[%c0_16, %c0_17] : memref<1x128xf32, #tpu.memory_space<vmem>>, vector<1x128xf32>
    %cst_18 = arith.constant dense<0.000000e+00> : vector<32xf32>
    %29 = vector.multi_reduction <add>, %26, %cst_18 [1] : vector<32x128xf32> to vector<32xf32>
    %30 = vector.shape_cast %29 : vector<32xf32> to vector<32x1xf32>
    %cst_19 = arith.constant 1.280000e+02 : f32
    %31 = vector.broadcast %cst_19 : f32 to vector<32x1xf32>
    %32 = arith.divf %30, %31 : vector<32x1xf32>
    %33 = vector.broadcast %32 : vector<32x1xf32> to vector<32x128xf32>
    %34 = arith.subf %26, %33 : vector<32x128xf32>
    %35 = arith.mulf %34, %34 : vector<32x128xf32>
    %cst_20 = arith.constant dense<0.000000e+00> : vector<32xf32>
    %36 = vector.multi_reduction <add>, %35, %cst_20 [1] : vector<32x128xf32> to vector<32xf32>
    %37 = vector.shape_cast %36 : vector<32xf32> to vector<32x1xf32>
    %cst_21 = arith.constant 1.280000e+02 : f32
    %38 = vector.broadcast %cst_21 : f32 to vector<32x1xf32>
    %39 = arith.divf %37, %38 : vector<32x1xf32>
    %40 = vector.broadcast %32 : vector<32x1xf32> to vector<32x128xf32>
    %41 = arith.subf %26, %40 : vector<32x128xf32>
    %cst_22 = arith.constant 9.99999974E-6 : f32
    %42 = vector.broadcast %cst_22 : f32 to vector<32x1xf32>
    %43 = arith.addf %39, %42 : vector<32x1xf32>
    %44 = math.rsqrt %43 : vector<32x1xf32>
    %45 = vector.broadcast %44 : vector<32x1xf32> to vector<32x128xf32>
    %46 = arith.mulf %41, %45 : vector<32x128xf32>
    %47 = vector.broadcast %27 : vector<1x128xf32> to vector<32x128xf32>
    %48 = arith.mulf %46, %47 : vector<32x128xf32>
    %49 = vector.broadcast %28 : vector<1x128xf32> to vector<32x128xf32>
    %50 = arith.addf %48, %49 : vector<32x128xf32>
    %c0_23 = arith.constant 0 : index
    %c0_24 = arith.constant 0 : index
    %51 = vector.load %arg8[%c0_23, %c0_24] : memref<32x128xf32, #tpu.memory_space<vmem>>, vector<32x128xf32>
    tpu.vector_store %arg8[%c0_23, %c0_24], %50 {strides = array<i32>} : memref<32x128xf32, #tpu.memory_space<vmem>>, vector<32x128xf32>,
    return
  }
  func.func @transform_0(%arg0: i32) -> (i32, i32) {
    %c0_i32 = arith.constant 0 : i32
    %c0_i32_0 = arith.constant 0 : i32
    return %arg0, %c0_i32 : i32, i32
  }
  func.func @transform_1(%arg0: i32) -> (i32, i32) {
    %c0_i32 = arith.constant 0 : i32
    %c0_i32_0 = arith.constant 0 : i32
    %c0_i32_1 = arith.constant 0 : i32
    return %c0_i32, %c0_i32_0 : i32, i32
  }
  func.func @transform_2(%arg0: i32) -> (i32, i32) {
    %c0_i32 = arith.constant 0 : i32
    %c0_i32_0 = arith.constant 0 : i32
    %c0_i32_1 = arith.constant 0 : i32
    return %c0_i32, %c0_i32_0 : i32, i32
  }
  func.func @transform_3(%arg0: i32) -> (i32, i32) {
    %c0_i32 = arith.constant 0 : i32
    %c0_i32_0 = arith.constant 0 : i32
    %c0_i32_1 = arith.constant 0 : i32
    return %c0_i32, %c0_i32_0 : i32, i32
  }
  func.func @transform_4(%arg0: i32) -> (i32, i32) {
    %c0_i32 = arith.constant 0 : i32
    %c0_i32_0 = arith.constant 0 : i32
    %c0_i32_1 = arith.constant 0 : i32
    return %c0_i32, %c0_i32_0 : i32, i32
  }
  func.func @transform_5(%arg0: i32) -> (i32, i32) {
    %c0_i32 = arith.constant 0 : i32
    %c0_i32_0 = arith.constant 0 : i32
    %c0_i32_1 = arith.constant 0 : i32
    return %c0_i32, %c0_i32_0 : i32, i32
  }
  func.func @transform_6(%arg0: i32) -> (i32, i32) {
    %c0_i32 = arith.constant 0 : i32
    %c0_i32_0 = arith.constant 0 : i32
    %c0_i32_1 = arith.constant 0 : i32
    return %c0_i32, %c0_i32_0 : i32, i32
  }
  func.func @transform_7(%arg0: i32) -> (i32, i32) {
    %c0_i32 = arith.constant 0 : i32
    %c0_i32_0 = arith.constant 0 : i32
    return %arg0, %c0_i32 : i32, i32
  }
}

module attributes {stable_mosaic.version = 11 : i64} {
  func.func @_mha_block_kernel(%arg0: i32, %arg1: i32, %arg2: memref<1x8x128xf32, #tpu.memory_space<vmem>>, %arg3: memref<1x16x128xf32, #tpu.memory_space<vmem>>, %arg4: memref<128x128xbf16, #tpu.memory_space<vmem>>, %arg5: memref<1x128xf32, #tpu.memory_space<vmem>>, %arg6: memref<128x128xbf16, #tpu.memory_space<vmem>>, %arg7: memref<1x128xf32, #tpu.memory_space<vmem>>, %arg8: memref<128x128xbf16, #tpu.memory_space<vmem>>, %arg9: memref<1x128xf32, #tpu.memory_space<vmem>>, %arg10: memref<128x128xbf16, #tpu.memory_space<vmem>>, %arg11: memref<1x128xf32, #tpu.memory_space<vmem>>, %arg12: memref<1x128xf32, #tpu.memory_space<vmem>>, %arg13: memref<1x128xf32, #tpu.memory_space<vmem>>, %arg14: memref<1x8x128xf32, #tpu.memory_space<vmem>>) attributes {dimension_semantics = [#tpu.dimension_semantics<parallel>, #tpu.dimension_semantics<parallel>], iteration_bounds = array<i64: 2, 1>, scalar_prefetch = 0 : i64, scratch_operands = 0 : i64, tpu.core_type = #tpu.core_type<tc>, window_params = [{transform_indices = @transform_0, window_bounds = array<i64: 1, 8, 128>}, {transform_indices = @transform_1, window_bounds = array<i64: 1, 16, 128>}, {pipeline_mode = #tpu.pipeline_mode<synchronous>, transform_indices = @transform_2, window_bounds = array<i64: 128, 128>}, {pipeline_mode = #tpu.pipeline_mode<synchronous>, transform_indices = @transform_3, window_bounds = array<i64: 1, 128>}, {pipeline_mode = #tpu.pipeline_mode<synchronous>, transform_indices = @transform_4, window_bounds = array<i64: 128, 128>}, {pipeline_mode = #tpu.pipeline_mode<synchronous>, transform_indices = @transform_5, window_bounds = array<i64: 1, 128>}, {pipeline_mode = #tpu.pipeline_mode<synchronous>, transform_indices = @transform_6, window_bounds = array<i64: 128, 128>}, {pipeline_mode = #tpu.pipeline_mode<synchronous>, transform_indices = @transform_7, window_bounds = array<i64: 1, 128>}, {pipeline_mode = #tpu.pipeline_mode<synchronous>, transform_indices = @transform_8, window_bounds = array<i64: 128, 128>}, {pipeline_mode = #tpu.pipeline_mode<synchronous>, transform_indices = @transform_9, window_bounds = array<i64: 1, 128>}, {pipeline_mode = #tpu.pipeline_mode<synchronous>, transform_indices = @transform_10, window_bounds = array<i64: 1, 128>}, {pipeline_mode = #tpu.pipeline_mode<synchronous>, transform_indices = @transform_11, window_bounds = array<i64: 1, 128>}, {transform_indices = @transform_12, window_bounds = array<i64: 1, 8, 128>}]} {
    %c0 = arith.constant 0 : index
    %c0_0 = arith.constant 0 : index
    %c0_1 = arith.constant 0 : index
    %0 = vector.load %arg2[%c0, %c0_0, %c0_1] : memref<1x8x128xf32, #tpu.memory_space<vmem>>, vector<1x8x128xf32>
    %1 = vector.shape_cast %0 : vector<1x8x128xf32> to vector<8x128xf32>
    %2 = arith.truncf %1 : vector<8x128xf32> to vector<8x128xbf16>
    %c0_2 = arith.constant 0 : index
    %c0_3 = arith.constant 0 : index
    %c0_4 = arith.constant 0 : index
    %3 = vector.load %arg3[%c0_2, %c0_3, %c0_4] : memref<1x16x128xf32, #tpu.memory_space<vmem>>, vector<1x16x128xf32>
    %4 = vector.shape_cast %3 : vector<1x16x128xf32> to vector<16x128xf32>
    %5 = arith.truncf %4 : vector<16x128xf32> to vector<16x128xbf16>
    %c0_5 = arith.constant 0 : index
    %c0_6 = arith.constant 0 : index
    %6 = vector.load %arg4[%c0_5, %c0_6] : memref<128x128xbf16, #tpu.memory_space<vmem>>, vector<128x128xbf16>
    %cst = arith.constant dense<0.000000e+00> : vector<8x128xf32>
    %7 = tpu.matmul %2, %6, %cst {dimension_numbers = #tpu.dot_dimension_numbers<[1], [0], [0], [1], [0, 0, 1, 1], [], []>} : vector<8x128xbf16>, vector<128x128xbf16>, vector<8x128xf32> -> vector<8x128xf32>
    %c0_7 = arith.constant 0 : index
    %c0_8 = arith.constant 0 : index
    %8 = vector.load %arg5[%c0_7, %c0_8] : memref<1x128xf32, #tpu.memory_space<vmem>>, vector<1x128xf32>
    %9 = vector.broadcast %8 : vector<1x128xf32> to vector<8x128xf32>
    %10 = arith.addf %7, %9 : vector<8x128xf32>
    %11 = arith.truncf %10 : vector<8x128xf32> to vector<8x128xbf16>
    %c0_9 = arith.constant 0 : index
    %c0_10 = arith.constant 0 : index
    %12 = vector.load %arg6[%c0_9, %c0_10] : memref<128x128xbf16, #tpu.memory_space<vmem>>, vector<128x128xbf16>
    %cst_11 = arith.constant dense<0.000000e+00> : vector<16x128xf32>
    %13 = tpu.matmul %5, %12, %cst_11 {dimension_numbers = #tpu.dot_dimension_numbers<[1], [0], [0], [1], [0, 0, 1, 1], [], []>} : vector<16x128xbf16>, vector<128x128xbf16>, vector<16x128xf32> -> vector<16x128xf32>
    %c0_12 = arith.constant 0 : index
    %c0_13 = arith.constant 0 : index
    %14 = vector.load %arg7[%c0_12, %c0_13] : memref<1x128xf32, #tpu.memory_space<vmem>>, vector<1x128xf32>
    %15 = vector.broadcast %14 : vector<1x128xf32> to vector<16x128xf32>
    %16 = arith.addf %13, %15 : vector<16x128xf32>
    %17 = arith.truncf %16 : vector<16x128xf32> to vector<16x128xbf16>
    %c0_14 = arith.constant 0 : index
    %c0_15 = arith.constant 0 : index
    %18 = vector.load %arg8[%c0_14, %c0_15] : memref<128x128xbf16, #tpu.memory_space<vmem>>, vector<128x128xbf16>
    %cst_16 = arith.constant dense<0.000000e+00> : vector<16x128xf32>
    %19 = tpu.matmul %5, %18, %cst_16 {dimension_numbers = #tpu.dot_dimension_numbers<[1], [0], [0], [1], [0, 0, 1, 1], [], []>} : vector<16x128xbf16>, vector<128x128xbf16>, vector<16x128xf32> -> vector<16x128xf32>
    %c0_17 = arith.constant 0 : index
    %c0_18 = arith.constant 0 : index
    %20 = vector.load %arg9[%c0_17, %c0_18] : memref<1x128xf32, #tpu.memory_space<vmem>>, vector<1x128xf32>
    %21 = vector.broadcast %20 : vector<1x128xf32> to vector<16x128xf32>
    %22 = arith.addf %19, %21 : vector<16x128xf32>
    %23 = arith.truncf %22 : vector<16x128xf32> to vector<16x128xbf16>
    %24 = vector.extract_strided_slice %11 {offsets = [0, 0], sizes = [8, 32], strides = [1, 1]} : vector<8x128xbf16> to vector<8x32xbf16>
    %25 = vector.extract_strided_slice %17 {offsets = [0, 0], sizes = [16, 32], strides = [1, 1]} : vector<16x128xbf16> to vector<16x32xbf16>
    %cst_19 = arith.constant dense<0.000000e+00> : vector<8x16xf32>
    %26 = tpu.matmul %24, %25, %cst_19 {dimension_numbers = #tpu.dot_dimension_numbers<[1], [1], [0], [0], [0, 0, 1, 0], [], []>} : vector<8x32xbf16>, vector<16x32xbf16>, vector<8x16xf32> -> vector<8x16xf32>
    %cst_20 = arith.constant dense<0xFF800000> : vector<8xf32>
    %27 = vector.multi_reduction <maximumf>, %26, %cst_20 [1] : vector<8x16xf32> to vector<8xf32>
    %28 = vector.shape_cast %27 : vector<8xf32> to vector<8x1xf32>
    %29 = vector.broadcast %28 : vector<8x1xf32> to vector<8x16xf32>
    %30 = arith.subf %26, %29 : vector<8x16xf32>
    %31 = math.exp %30 : vector<8x16xf32>
    %cst_21 = arith.constant dense<0.000000e+00> : vector<8xf32>
    %32 = vector.multi_reduction <add>, %31, %cst_21 [1] : vector<8x16xf32> to vector<8xf32>
    %33 = vector.shape_cast %32 : vector<8xf32> to vector<8x1xf32>
    %34 = tpu.reciprocal %33 {approx = true} : vector<8x1xf32> -> vector<8x1xf32>
    %35 = arith.truncf %31 : vector<8x16xf32> to vector<8x16xbf16>
    %36 = vector.extract_strided_slice %23 {offsets = [0, 0], sizes = [16, 32], strides = [1, 1]} : vector<16x128xbf16> to vector<16x32xbf16>
    %cst_22 = arith.constant dense<0.000000e+00> : vector<8x32xf32>
    %37 = tpu.matmul %35, %36, %cst_22 {dimension_numbers = #tpu.dot_dimension_numbers<[1], [0], [0], [1], [0, 0, 1, 1], [], []>} : vector<8x16xbf16>, vector<16x32xbf16>, vector<8x32xf32> -> vector<8x32xf32>
    %38 = vector.broadcast %34 : vector<8x1xf32> to vector<8x32xf32>
    %39 = arith.mulf %37, %38 : vector<8x32xf32>
    %40 = arith.truncf %39 : vector<8x32xf32> to vector<8x32xbf16>
    %41 = vector.extract_strided_slice %11 {offsets = [0, 32], sizes = [8, 32], strides = [1, 1]} : vector<8x128xbf16> to vector<8x32xbf16>
    %42 = vector.extract_strided_slice %17 {offsets = [0, 32], sizes = [16, 32], strides = [1, 1]} : vector<16x128xbf16> to vector<16x32xbf16>
    %cst_23 = arith.constant dense<0.000000e+00> : vector<8x16xf32>
    %43 = tpu.matmul %41, %42, %cst_23 {dimension_numbers = #tpu.dot_dimension_numbers<[1], [1], [0], [0], [0, 0, 1, 0], [], []>} : vector<8x32xbf16>, vector<16x32xbf16>, vector<8x16xf32> -> vector<8x16xf32>
    %cst_24 = arith.constant dense<0xFF800000> : vector<8xf32>
    %44 = vector.multi_reduction <maximumf>, %43, %cst_24 [1] : vector<8x16xf32> to vector<8xf32>
    %45 = vector.shape_cast %44 : vector<8xf32> to vector<8x1xf32>
    %46 = vector.broadcast %45 : vector<8x1xf32> to vector<8x16xf32>
    %47 = arith.subf %43, %46 : vector<8x16xf32>
    %48 = math.exp %47 : vector<8x16xf32>
    %cst_25 = arith.constant dense<0.000000e+00> : vector<8xf32>
    %49 = vector.multi_reduction <add>, %48, %cst_25 [1] : vector<8x16xf32> to vector<8xf32>
    %50 = vector.shape_cast %49 : vector<8xf32> to vector<8x1xf32>
    %51 = tpu.reciprocal %50 {approx = true} : vector<8x1xf32> -> vector<8x1xf32>
    %52 = arith.truncf %48 : vector<8x16xf32> to vector<8x16xbf16>
    %53 = vector.extract_strided_slice %23 {offsets = [0, 32], sizes = [16, 32], strides = [1, 1]} : vector<16x128xbf16> to vector<16x32xbf16>
    %cst_26 = arith.constant dense<0.000000e+00> : vector<8x32xf32>
    %54 = tpu.matmul %52, %53, %cst_26 {dimension_numbers = #tpu.dot_dimension_numbers<[1], [0], [0], [1], [0, 0, 1, 1], [], []>} : vector<8x16xbf16>, vector<16x32xbf16>, vector<8x32xf32> -> vector<8x32xf32>
    %55 = vector.broadcast %51 : vector<8x1xf32> to vector<8x32xf32>
    %56 = arith.mulf %54, %55 : vector<8x32xf32>
    %57 = arith.truncf %56 : vector<8x32xf32> to vector<8x32xbf16>
    %58 = vector.extract_strided_slice %11 {offsets = [0, 64], sizes = [8, 32], strides = [1, 1]} : vector<8x128xbf16> to vector<8x32xbf16>
    %59 = vector.extract_strided_slice %17 {offsets = [0, 64], sizes = [16, 32], strides = [1, 1]} : vector<16x128xbf16> to vector<16x32xbf16>
    %cst_27 = arith.constant dense<0.000000e+00> : vector<8x16xf32>
    %60 = tpu.matmul %58, %59, %cst_27 {dimension_numbers = #tpu.dot_dimension_numbers<[1], [1], [0], [0], [0, 0, 1, 0], [], []>} : vector<8x32xbf16>, vector<16x32xbf16>, vector<8x16xf32> -> vector<8x16xf32>
    %cst_28 = arith.constant dense<0xFF800000> : vector<8xf32>
    %61 = vector.multi_reduction <maximumf>, %60, %cst_28 [1] : vector<8x16xf32> to vector<8xf32>
    %62 = vector.shape_cast %61 : vector<8xf32> to vector<8x1xf32>
    %63 = vector.broadcast %62 : vector<8x1xf32> to vector<8x16xf32>
    %64 = arith.subf %60, %63 : vector<8x16xf32>
    %65 = math.exp %64 : vector<8x16xf32>
    %cst_29 = arith.constant dense<0.000000e+00> : vector<8xf32>
    %66 = vector.multi_reduction <add>, %65, %cst_29 [1] : vector<8x16xf32> to vector<8xf32>
    %67 = vector.shape_cast %66 : vector<8xf32> to vector<8x1xf32>
    %68 = tpu.reciprocal %67 {approx = true} : vector<8x1xf32> -> vector<8x1xf32>
    %69 = arith.truncf %65 : vector<8x16xf32> to vector<8x16xbf16>
    %70 = vector.extract_strided_slice %23 {offsets = [0, 64], sizes = [16, 32], strides = [1, 1]} : vector<16x128xbf16> to vector<16x32xbf16>
    %cst_30 = arith.constant dense<0.000000e+00> : vector<8x32xf32>
    %71 = tpu.matmul %69, %70, %cst_30 {dimension_numbers = #tpu.dot_dimension_numbers<[1], [0], [0], [1], [0, 0, 1, 1], [], []>} : vector<8x16xbf16>, vector<16x32xbf16>, vector<8x32xf32> -> vector<8x32xf32>
    %72 = vector.broadcast %68 : vector<8x1xf32> to vector<8x32xf32>
    %73 = arith.mulf %71, %72 : vector<8x32xf32>
    %74 = arith.truncf %73 : vector<8x32xf32> to vector<8x32xbf16>
    %75 = vector.extract_strided_slice %11 {offsets = [0, 96], sizes = [8, 32], strides = [1, 1]} : vector<8x128xbf16> to vector<8x32xbf16>
    %76 = vector.extract_strided_slice %17 {offsets = [0, 96], sizes = [16, 32], strides = [1, 1]} : vector<16x128xbf16> to vector<16x32xbf16>
    %cst_31 = arith.constant dense<0.000000e+00> : vector<8x16xf32>
    %77 = tpu.matmul %75, %76, %cst_31 {dimension_numbers = #tpu.dot_dimension_numbers<[1], [1], [0], [0], [0, 0, 1, 0], [], []>} : vector<8x32xbf16>, vector<16x32xbf16>, vector<8x16xf32> -> vector<8x16xf32>
    %cst_32 = arith.constant dense<0xFF800000> : vector<8xf32>
    %78 = vector.multi_reduction <maximumf>, %77, %cst_32 [1] : vector<8x16xf32> to vector<8xf32>
    %79 = vector.shape_cast %78 : vector<8xf32> to vector<8x1xf32>
    %80 = vector.broadcast %79 : vector<8x1xf32> to vector<8x16xf32>
    %81 = arith.subf %77, %80 : vector<8x16xf32>
    %82 = math.exp %81 : vector<8x16xf32>
    %cst_33 = arith.constant dense<0.000000e+00> : vector<8xf32>
    %83 = vector.multi_reduction <add>, %82, %cst_33 [1] : vector<8x16xf32> to vector<8xf32>
    %84 = vector.shape_cast %83 : vector<8xf32> to vector<8x1xf32>
    %85 = tpu.reciprocal %84 {approx = true} : vector<8x1xf32> -> vector<8x1xf32>
    %86 = arith.truncf %82 : vector<8x16xf32> to vector<8x16xbf16>
    %87 = vector.extract_strided_slice %23 {offsets = [0, 96], sizes = [16, 32], strides = [1, 1]} : vector<16x128xbf16> to vector<16x32xbf16>
    %cst_34 = arith.constant dense<0.000000e+00> : vector<8x32xf32>
    %88 = tpu.matmul %86, %87, %cst_34 {dimension_numbers = #tpu.dot_dimension_numbers<[1], [0], [0], [1], [0, 0, 1, 1], [], []>} : vector<8x16xbf16>, vector<16x32xbf16>, vector<8x32xf32> -> vector<8x32xf32>
    %89 = vector.broadcast %85 : vector<8x1xf32> to vector<8x32xf32>
    %90 = arith.mulf %88, %89 : vector<8x32xf32>
    %91 = arith.truncf %90 : vector<8x32xf32> to vector<8x32xbf16>
    %92 = tpu.concatenate %40, %57, %74, %91 in 1 : vector<8x32xbf16>, vector<8x32xbf16>, vector<8x32xbf16>, vector<8x32xbf16> -> vector<8x128xbf16>
    %c0_35 = arith.constant 0 : index
    %c0_36 = arith.constant 0 : index
    %93 = vector.load %arg10[%c0_35, %c0_36] : memref<128x128xbf16, #tpu.memory_space<vmem>>, vector<128x128xbf16>
    %cst_37 = arith.constant dense<0.000000e+00> : vector<8x128xf32>
    %94 = tpu.matmul %92, %93, %cst_37 {dimension_numbers = #tpu.dot_dimension_numbers<[1], [0], [0], [1], [0, 0, 1, 1], [], []>} : vector<8x128xbf16>, vector<128x128xbf16>, vector<8x128xf32> -> vector<8x128xf32>
    %c0_38 = arith.constant 0 : index
    %c0_39 = arith.constant 0 : index
    %95 = vector.load %arg11[%c0_38, %c0_39] : memref<1x128xf32, #tpu.memory_space<vmem>>, vector<1x128xf32>
    %96 = vector.broadcast %95 : vector<1x128xf32> to vector<8x128xf32>
    %97 = arith.addf %94, %96 : vector<8x128xf32>
    %98 = arith.addf %97, %1 : vector<8x128xf32>
    %c0_40 = arith.constant 0 : index
    %c0_41 = arith.constant 0 : index
    %99 = vector.load %arg12[%c0_40, %c0_41] : memref<1x128xf32, #tpu.memory_space<vmem>>, vector<1x128xf32>
    %c0_42 = arith.constant 0 : index
    %c0_43 = arith.constant 0 : index
    %100 = vector.load %arg13[%c0_42, %c0_43] : memref<1x128xf32, #tpu.memory_space<vmem>>, vector<1x128xf32>
    %cst_44 = arith.constant dense<0.000000e+00> : vector<8xf32>
    %101 = vector.multi_reduction <add>, %98, %cst_44 [1] : vector<8x128xf32> to vector<8xf32>
    %102 = vector.shape_cast %101 : vector<8xf32> to vector<8x1xf32>
    %cst_45 = arith.constant 1.280000e+02 : f32
    %103 = vector.broadcast %cst_45 : f32 to vector<8x1xf32>
    %104 = arith.divf %102, %103 : vector<8x1xf32>
    %105 = vector.broadcast %104 : vector<8x1xf32> to vector<8x128xf32>
    %106 = arith.subf %98, %105 : vector<8x128xf32>
    %107 = arith.mulf %106, %106 : vector<8x128xf32>
    %cst_46 = arith.constant dense<0.000000e+00> : vector<8xf32>
    %108 = vector.multi_reduction <add>, %107, %cst_46 [1] : vector<8x128xf32> to vector<8xf32>
    %109 = vector.shape_cast %108 : vector<8xf32> to vector<8x1xf32>
    %cst_47 = arith.constant 1.280000e+02 : f32
    %110 = vector.broadcast %cst_47 : f32 to vector<8x1xf32>
    %111 = arith.divf %109, %110 : vector<8x1xf32>
    %112 = vector.broadcast %104 : vector<8x1xf32> to vector<8x128xf32>
    %113 = arith.subf %98, %112 : vector<8x128xf32>
    %cst_48 = arith.constant 9.99999974E-6 : f32
    %114 = vector.broadcast %cst_48 : f32 to vector<8x1xf32>
    %115 = arith.addf %111, %114 : vector<8x1xf32>
    %116 = math.rsqrt %115 : vector<8x1xf32>
    %117 = vector.broadcast %116 : vector<8x1xf32> to vector<8x128xf32>
    %118 = arith.mulf %113, %117 : vector<8x128xf32>
    %119 = vector.broadcast %99 : vector<1x128xf32> to vector<8x128xf32>
    %120 = arith.mulf %118, %119 : vector<8x128xf32>
    %121 = vector.broadcast %100 : vector<1x128xf32> to vector<8x128xf32>
    %122 = arith.addf %120, %121 : vector<8x128xf32>
    %c0_49 = arith.constant 0 : index
    %c0_50 = arith.constant 0 : index
    %c0_51 = arith.constant 0 : index
    %123 = vector.load %arg14[%c0_49, %c0_50, %c0_51] : memref<1x8x128xf32, #tpu.memory_space<vmem>>, vector<1x8x128xf32>
    %124 = vector.shape_cast %123 : vector<1x8x128xf32> to vector<8x128xf32>
    %125 = vector.shape_cast %122 : vector<8x128xf32> to vector<1x8x128xf32>
    tpu.vector_store %arg14[%c0_49, %c0_50, %c0_51], %125 {strides = array<i32>} : memref<1x8x128xf32, #tpu.memory_space<vmem>>, vector<1x8x128xf32>,
    return
  }
  func.func @transform_0(%arg0: i32, %arg1: i32) -> (i32, i32, i32) {
    %c0_i32 = arith.constant 0 : i32
    %c0_i32_0 = arith.constant 0 : i32
    return %arg0, %arg1, %c0_i32 : i32, i32, i32
  }
  func.func @transform_1(%arg0: i32, %arg1: i32) -> (i32, i32, i32) {
    %c0_i32 = arith.constant 0 : i32
    %c0_i32_0 = arith.constant 0 : i32
    %c0_i32_1 = arith.constant 0 : i32
    return %arg0, %c0_i32, %c0_i32_0 : i32, i32, i32
  }
  func.func @transform_2(%arg0: i32, %arg1: i32) -> (i32, i32) {
    %c0_i32 = arith.constant 0 : i32
    %c0_i32_0 = arith.constant 0 : i32
    %c0_i32_1 = arith.constant 0 : i32
    return %c0_i32, %c0_i32_0 : i32, i32
  }
  func.func @transform_3(%arg0: i32, %arg1: i32) -> (i32, i32) {
    %c0_i32 = arith.constant 0 : i32
    %c0_i32_0 = arith.constant 0 : i32
    %c0_i32_1 = arith.constant 0 : i32
    return %c0_i32, %c0_i32_0 : i32, i32
  }
  func.func @transform_4(%arg0: i32, %arg1: i32) -> (i32, i32) {
    %c0_i32 = arith.constant 0 : i32
    %c0_i32_0 = arith.constant 0 : i32
    %c0_i32_1 = arith.constant 0 : i32
    return %c0_i32, %c0_i32_0 : i32, i32
  }
  func.func @transform_5(%arg0: i32, %arg1: i32) -> (i32, i32) {
    %c0_i32 = arith.constant 0 : i32
    %c0_i32_0 = arith.constant 0 : i32
    %c0_i32_1 = arith.constant 0 : i32
    return %c0_i32, %c0_i32_0 : i32, i32
  }
  func.func @transform_6(%arg0: i32, %arg1: i32) -> (i32, i32) {
    %c0_i32 = arith.constant 0 : i32
    %c0_i32_0 = arith.constant 0 : i32
    %c0_i32_1 = arith.constant 0 : i32
    return %c0_i32, %c0_i32_0 : i32, i32
  }
  func.func @transform_7(%arg0: i32, %arg1: i32) -> (i32, i32) {
    %c0_i32 = arith.constant 0 : i32
    %c0_i32_0 = arith.constant 0 : i32
    %c0_i32_1 = arith.constant 0 : i32
    return %c0_i32, %c0_i32_0 : i32, i32
  }
  func.func @transform_8(%arg0: i32, %arg1: i32) -> (i32, i32) {
    %c0_i32 = arith.constant 0 : i32
    %c0_i32_0 = arith.constant 0 : i32
    %c0_i32_1 = arith.constant 0 : i32
    return %c0_i32, %c0_i32_0 : i32, i32
  }
  func.func @transform_9(%arg0: i32, %arg1: i32) -> (i32, i32) {
    %c0_i32 = arith.constant 0 : i32
    %c0_i32_0 = arith.constant 0 : i32
    %c0_i32_1 = arith.constant 0 : i32
    return %c0_i32, %c0_i32_0 : i32, i32
  }
  func.func @transform_10(%arg0: i32, %arg1: i32) -> (i32, i32) {
    %c0_i32 = arith.constant 0 : i32
    %c0_i32_0 = arith.constant 0 : i32
    %c0_i32_1 = arith.constant 0 : i32
    return %c0_i32, %c0_i32_0 : i32, i32
  }
  func.func @transform_11(%arg0: i32, %arg1: i32) -> (i32, i32) {
    %c0_i32 = arith.constant 0 : i32
    %c0_i32_0 = arith.constant 0 : i32
    %c0_i32_1 = arith.constant 0 : i32
    return %c0_i32, %c0_i32_0 : i32, i32
  }
  func.func @transform_12(%arg0: i32, %arg1: i32) -> (i32, i32, i32) {
    %c0_i32 = arith.constant 0 : i32
    %c0_i32_0 = arith.constant 0 : i32
    return %arg0, %arg1, %c0_i32 : i32, i32, i32
  }
}

module attributes {stable_mosaic.version = 11 : i64} {
  func.func @_glu_head_kernel(%arg0: i32, %arg1: memref<16x128xf32, #tpu.memory_space<vmem>>, %arg2: memref<128x256xbf16, #tpu.memory_space<vmem>>, %arg3: memref<1x256xf32, #tpu.memory_space<vmem>>, %arg4: memref<128x256xbf16, #tpu.memory_space<vmem>>, %arg5: memref<1x256xf32, #tpu.memory_space<vmem>>, %arg6: memref<256x128xbf16, #tpu.memory_space<vmem>>, %arg7: memref<1x128xf32, #tpu.memory_space<vmem>>, %arg8: memref<16x128xf32, #tpu.memory_space<vmem>>) attributes {dimension_semantics = [#tpu.dimension_semantics<parallel>], iteration_bounds = array<i64: 1>, scalar_prefetch = 0 : i64, scratch_operands = 0 : i64, tpu.core_type = #tpu.core_type<tc>, window_params = [{transform_indices = @transform_0, window_bounds = array<i64: 16, 128>}, {pipeline_mode = #tpu.pipeline_mode<synchronous>, transform_indices = @transform_1, window_bounds = array<i64: 128, 256>}, {pipeline_mode = #tpu.pipeline_mode<synchronous>, transform_indices = @transform_2, window_bounds = array<i64: 1, 256>}, {pipeline_mode = #tpu.pipeline_mode<synchronous>, transform_indices = @transform_3, window_bounds = array<i64: 128, 256>}, {pipeline_mode = #tpu.pipeline_mode<synchronous>, transform_indices = @transform_4, window_bounds = array<i64: 1, 256>}, {pipeline_mode = #tpu.pipeline_mode<synchronous>, transform_indices = @transform_5, window_bounds = array<i64: 256, 128>}, {pipeline_mode = #tpu.pipeline_mode<synchronous>, transform_indices = @transform_6, window_bounds = array<i64: 1, 128>}, {transform_indices = @transform_7, window_bounds = array<i64: 16, 128>}]} {
    %c0 = arith.constant 0 : index
    %c0_0 = arith.constant 0 : index
    %0 = vector.load %arg1[%c0, %c0_0] : memref<16x128xf32, #tpu.memory_space<vmem>>, vector<16x128xf32>
    %1 = arith.truncf %0 : vector<16x128xf32> to vector<16x128xbf16>
    %c0_1 = arith.constant 0 : index
    %c0_2 = arith.constant 0 : index
    %2 = vector.load %arg2[%c0_1, %c0_2] : memref<128x256xbf16, #tpu.memory_space<vmem>>, vector<128x256xbf16>
    %cst = arith.constant dense<0.000000e+00> : vector<16x256xf32>
    %3 = tpu.matmul %1, %2, %cst {dimension_numbers = #tpu.dot_dimension_numbers<[1], [0], [0], [1], [0, 0, 1, 1], [], []>} : vector<16x128xbf16>, vector<128x256xbf16>, vector<16x256xf32> -> vector<16x256xf32>
    %c0_3 = arith.constant 0 : index
    %c0_4 = arith.constant 0 : index
    %4 = vector.load %arg3[%c0_3, %c0_4] : memref<1x256xf32, #tpu.memory_space<vmem>>, vector<1x256xf32>
    %5 = vector.broadcast %4 : vector<1x256xf32> to vector<16x256xf32>
    %6 = arith.addf %3, %5 : vector<16x256xf32>
    %c0_5 = arith.constant 0 : index
    %c0_6 = arith.constant 0 : index
    %7 = vector.load %arg4[%c0_5, %c0_6] : memref<128x256xbf16, #tpu.memory_space<vmem>>, vector<128x256xbf16>
    %cst_7 = arith.constant dense<0.000000e+00> : vector<16x256xf32>
    %8 = tpu.matmul %1, %7, %cst_7 {dimension_numbers = #tpu.dot_dimension_numbers<[1], [0], [0], [1], [0, 0, 1, 1], [], []>} : vector<16x128xbf16>, vector<128x256xbf16>, vector<16x256xf32> -> vector<16x256xf32>
    %c0_8 = arith.constant 0 : index
    %c0_9 = arith.constant 0 : index
    %9 = vector.load %arg5[%c0_8, %c0_9] : memref<1x256xf32, #tpu.memory_space<vmem>>, vector<1x256xf32>
    %10 = vector.broadcast %9 : vector<1x256xf32> to vector<16x256xf32>
    %11 = arith.addf %8, %10 : vector<16x256xf32>
    %12 = arith.negf %11 : vector<16x256xf32>
    %13 = math.exp %12 : vector<16x256xf32>
    %cst_10 = arith.constant 1.000000e+00 : f32
    %14 = vector.broadcast %cst_10 : f32 to vector<16x256xf32>
    %15 = arith.addf %14, %13 : vector<16x256xf32>
    %16 = arith.divf %14, %15 : vector<16x256xf32>
    %17 = arith.mulf %6, %16 : vector<16x256xf32>
    %18 = arith.truncf %17 : vector<16x256xf32> to vector<16x256xbf16>
    %c0_11 = arith.constant 0 : index
    %c0_12 = arith.constant 0 : index
    %19 = vector.load %arg6[%c0_11, %c0_12] : memref<256x128xbf16, #tpu.memory_space<vmem>>, vector<256x128xbf16>
    %cst_13 = arith.constant dense<0.000000e+00> : vector<16x128xf32>
    %20 = tpu.matmul %18, %19, %cst_13 {dimension_numbers = #tpu.dot_dimension_numbers<[1], [0], [0], [1], [0, 0, 1, 1], [], []>} : vector<16x256xbf16>, vector<256x128xbf16>, vector<16x128xf32> -> vector<16x128xf32>
    %c0_14 = arith.constant 0 : index
    %c0_15 = arith.constant 0 : index
    %21 = vector.load %arg7[%c0_14, %c0_15] : memref<1x128xf32, #tpu.memory_space<vmem>>, vector<1x128xf32>
    %22 = vector.broadcast %21 : vector<1x128xf32> to vector<16x128xf32>
    %23 = arith.addf %20, %22 : vector<16x128xf32>
    %c0_16 = arith.constant 0 : index
    %c0_17 = arith.constant 0 : index
    %24 = vector.load %arg8[%c0_16, %c0_17] : memref<16x128xf32, #tpu.memory_space<vmem>>, vector<16x128xf32>
    tpu.vector_store %arg8[%c0_16, %c0_17], %23 {strides = array<i32>} : memref<16x128xf32, #tpu.memory_space<vmem>>, vector<16x128xf32>,
    return
  }
  func.func @transform_0(%arg0: i32) -> (i32, i32) {
    %c0_i32 = arith.constant 0 : i32
    %c0_i32_0 = arith.constant 0 : i32
    return %arg0, %c0_i32 : i32, i32
  }
  func.func @transform_1(%arg0: i32) -> (i32, i32) {
    %c0_i32 = arith.constant 0 : i32
    %c0_i32_0 = arith.constant 0 : i32
    %c0_i32_1 = arith.constant 0 : i32
    return %c0_i32, %c0_i32_0 : i32, i32
  }
  func.func @transform_2(%arg0: i32) -> (i32, i32) {
    %c0_i32 = arith.constant 0 : i32
    %c0_i32_0 = arith.constant 0 : i32
    %c0_i32_1 = arith.constant 0 : i32
    return %c0_i32, %c0_i32_0 : i32, i32
  }
  func.func @transform_3(%arg0: i32) -> (i32, i32) {
    %c0_i32 = arith.constant 0 : i32
    %c0_i32_0 = arith.constant 0 : i32
    %c0_i32_1 = arith.constant 0 : i32
    return %c0_i32, %c0_i32_0 : i32, i32
  }
  func.func @transform_4(%arg0: i32) -> (i32, i32) {
    %c0_i32 = arith.constant 0 : i32
    %c0_i32_0 = arith.constant 0 : i32
    %c0_i32_1 = arith.constant 0 : i32
    return %c0_i32, %c0_i32_0 : i32, i32
  }
  func.func @transform_5(%arg0: i32) -> (i32, i32) {
    %c0_i32 = arith.constant 0 : i32
    %c0_i32_0 = arith.constant 0 : i32
    %c0_i32_1 = arith.constant 0 : i32
    return %c0_i32, %c0_i32_0 : i32, i32
  }
  func.func @transform_6(%arg0: i32) -> (i32, i32) {
    %c0_i32 = arith.constant 0 : i32
    %c0_i32_0 = arith.constant 0 : i32
    %c0_i32_1 = arith.constant 0 : i32
    return %c0_i32, %c0_i32_0 : i32, i32
  }
  func.func @transform_7(%arg0: i32) -> (i32, i32) {
    %c0_i32 = arith.constant 0 : i32
    %c0_i32_0 = arith.constant 0 : i32
    return %arg0, %c0_i32 : i32, i32
  }
}

module attributes {stable_mosaic.version = 11 : i64} {
  func.func @_mha_block_kernel(%arg0: i32, %arg1: i32, %arg2: memref<1x16x128xf32, #tpu.memory_space<vmem>>, %arg3: memref<1x8x128xf32, #tpu.memory_space<vmem>>, %arg4: memref<128x128xbf16, #tpu.memory_space<vmem>>, %arg5: memref<1x128xf32, #tpu.memory_space<vmem>>, %arg6: memref<128x128xbf16, #tpu.memory_space<vmem>>, %arg7: memref<1x128xf32, #tpu.memory_space<vmem>>, %arg8: memref<128x128xbf16, #tpu.memory_space<vmem>>, %arg9: memref<1x128xf32, #tpu.memory_space<vmem>>, %arg10: memref<128x128xbf16, #tpu.memory_space<vmem>>, %arg11: memref<1x128xf32, #tpu.memory_space<vmem>>, %arg12: memref<1x128xf32, #tpu.memory_space<vmem>>, %arg13: memref<1x128xf32, #tpu.memory_space<vmem>>, %arg14: memref<1x16x128xf32, #tpu.memory_space<vmem>>) attributes {dimension_semantics = [#tpu.dimension_semantics<parallel>, #tpu.dimension_semantics<parallel>], iteration_bounds = array<i64: 2, 1>, scalar_prefetch = 0 : i64, scratch_operands = 0 : i64, tpu.core_type = #tpu.core_type<tc>, window_params = [{transform_indices = @transform_0, window_bounds = array<i64: 1, 16, 128>}, {transform_indices = @transform_1, window_bounds = array<i64: 1, 8, 128>}, {pipeline_mode = #tpu.pipeline_mode<synchronous>, transform_indices = @transform_2, window_bounds = array<i64: 128, 128>}, {pipeline_mode = #tpu.pipeline_mode<synchronous>, transform_indices = @transform_3, window_bounds = array<i64: 1, 128>}, {pipeline_mode = #tpu.pipeline_mode<synchronous>, transform_indices = @transform_4, window_bounds = array<i64: 128, 128>}, {pipeline_mode = #tpu.pipeline_mode<synchronous>, transform_indices = @transform_5, window_bounds = array<i64: 1, 128>}, {pipeline_mode = #tpu.pipeline_mode<synchronous>, transform_indices = @transform_6, window_bounds = array<i64: 128, 128>}, {pipeline_mode = #tpu.pipeline_mode<synchronous>, transform_indices = @transform_7, window_bounds = array<i64: 1, 128>}, {pipeline_mode = #tpu.pipeline_mode<synchronous>, transform_indices = @transform_8, window_bounds = array<i64: 128, 128>}, {pipeline_mode = #tpu.pipeline_mode<synchronous>, transform_indices = @transform_9, window_bounds = array<i64: 1, 128>}, {pipeline_mode = #tpu.pipeline_mode<synchronous>, transform_indices = @transform_10, window_bounds = array<i64: 1, 128>}, {pipeline_mode = #tpu.pipeline_mode<synchronous>, transform_indices = @transform_11, window_bounds = array<i64: 1, 128>}, {transform_indices = @transform_12, window_bounds = array<i64: 1, 16, 128>}]} {
    %c0 = arith.constant 0 : index
    %c0_0 = arith.constant 0 : index
    %c0_1 = arith.constant 0 : index
    %0 = vector.load %arg2[%c0, %c0_0, %c0_1] : memref<1x16x128xf32, #tpu.memory_space<vmem>>, vector<1x16x128xf32>
    %1 = vector.shape_cast %0 : vector<1x16x128xf32> to vector<16x128xf32>
    %2 = arith.truncf %1 : vector<16x128xf32> to vector<16x128xbf16>
    %c0_2 = arith.constant 0 : index
    %c0_3 = arith.constant 0 : index
    %c0_4 = arith.constant 0 : index
    %3 = vector.load %arg3[%c0_2, %c0_3, %c0_4] : memref<1x8x128xf32, #tpu.memory_space<vmem>>, vector<1x8x128xf32>
    %4 = vector.shape_cast %3 : vector<1x8x128xf32> to vector<8x128xf32>
    %5 = arith.truncf %4 : vector<8x128xf32> to vector<8x128xbf16>
    %c0_5 = arith.constant 0 : index
    %c0_6 = arith.constant 0 : index
    %6 = vector.load %arg4[%c0_5, %c0_6] : memref<128x128xbf16, #tpu.memory_space<vmem>>, vector<128x128xbf16>
    %cst = arith.constant dense<0.000000e+00> : vector<16x128xf32>
    %7 = tpu.matmul %2, %6, %cst {dimension_numbers = #tpu.dot_dimension_numbers<[1], [0], [0], [1], [0, 0, 1, 1], [], []>} : vector<16x128xbf16>, vector<128x128xbf16>, vector<16x128xf32> -> vector<16x128xf32>
    %c0_7 = arith.constant 0 : index
    %c0_8 = arith.constant 0 : index
    %8 = vector.load %arg5[%c0_7, %c0_8] : memref<1x128xf32, #tpu.memory_space<vmem>>, vector<1x128xf32>
    %9 = vector.broadcast %8 : vector<1x128xf32> to vector<16x128xf32>
    %10 = arith.addf %7, %9 : vector<16x128xf32>
    %11 = arith.truncf %10 : vector<16x128xf32> to vector<16x128xbf16>
    %c0_9 = arith.constant 0 : index
    %c0_10 = arith.constant 0 : index
    %12 = vector.load %arg6[%c0_9, %c0_10] : memref<128x128xbf16, #tpu.memory_space<vmem>>, vector<128x128xbf16>
    %cst_11 = arith.constant dense<0.000000e+00> : vector<8x128xf32>
    %13 = tpu.matmul %5, %12, %cst_11 {dimension_numbers = #tpu.dot_dimension_numbers<[1], [0], [0], [1], [0, 0, 1, 1], [], []>} : vector<8x128xbf16>, vector<128x128xbf16>, vector<8x128xf32> -> vector<8x128xf32>
    %c0_12 = arith.constant 0 : index
    %c0_13 = arith.constant 0 : index
    %14 = vector.load %arg7[%c0_12, %c0_13] : memref<1x128xf32, #tpu.memory_space<vmem>>, vector<1x128xf32>
    %15 = vector.broadcast %14 : vector<1x128xf32> to vector<8x128xf32>
    %16 = arith.addf %13, %15 : vector<8x128xf32>
    %17 = arith.truncf %16 : vector<8x128xf32> to vector<8x128xbf16>
    %c0_14 = arith.constant 0 : index
    %c0_15 = arith.constant 0 : index
    %18 = vector.load %arg8[%c0_14, %c0_15] : memref<128x128xbf16, #tpu.memory_space<vmem>>, vector<128x128xbf16>
    %cst_16 = arith.constant dense<0.000000e+00> : vector<8x128xf32>
    %19 = tpu.matmul %5, %18, %cst_16 {dimension_numbers = #tpu.dot_dimension_numbers<[1], [0], [0], [1], [0, 0, 1, 1], [], []>} : vector<8x128xbf16>, vector<128x128xbf16>, vector<8x128xf32> -> vector<8x128xf32>
    %c0_17 = arith.constant 0 : index
    %c0_18 = arith.constant 0 : index
    %20 = vector.load %arg9[%c0_17, %c0_18] : memref<1x128xf32, #tpu.memory_space<vmem>>, vector<1x128xf32>
    %21 = vector.broadcast %20 : vector<1x128xf32> to vector<8x128xf32>
    %22 = arith.addf %19, %21 : vector<8x128xf32>
    %23 = arith.truncf %22 : vector<8x128xf32> to vector<8x128xbf16>
    %24 = vector.extract_strided_slice %11 {offsets = [0, 0], sizes = [16, 32], strides = [1, 1]} : vector<16x128xbf16> to vector<16x32xbf16>
    %25 = vector.extract_strided_slice %17 {offsets = [0, 0], sizes = [8, 32], strides = [1, 1]} : vector<8x128xbf16> to vector<8x32xbf16>
    %cst_19 = arith.constant dense<0.000000e+00> : vector<16x8xf32>
    %26 = tpu.matmul %24, %25, %cst_19 {dimension_numbers = #tpu.dot_dimension_numbers<[1], [1], [0], [0], [0, 0, 1, 0], [], []>} : vector<16x32xbf16>, vector<8x32xbf16>, vector<16x8xf32> -> vector<16x8xf32>
    %cst_20 = arith.constant dense<0xFF800000> : vector<16xf32>
    %27 = vector.multi_reduction <maximumf>, %26, %cst_20 [1] : vector<16x8xf32> to vector<16xf32>
    %28 = vector.shape_cast %27 : vector<16xf32> to vector<16x1xf32>
    %29 = vector.broadcast %28 : vector<16x1xf32> to vector<16x8xf32>
    %30 = arith.subf %26, %29 : vector<16x8xf32>
    %31 = math.exp %30 : vector<16x8xf32>
    %cst_21 = arith.constant dense<0.000000e+00> : vector<16xf32>
    %32 = vector.multi_reduction <add>, %31, %cst_21 [1] : vector<16x8xf32> to vector<16xf32>
    %33 = vector.shape_cast %32 : vector<16xf32> to vector<16x1xf32>
    %34 = tpu.reciprocal %33 {approx = true} : vector<16x1xf32> -> vector<16x1xf32>
    %35 = arith.truncf %31 : vector<16x8xf32> to vector<16x8xbf16>
    %36 = vector.extract_strided_slice %23 {offsets = [0, 0], sizes = [8, 32], strides = [1, 1]} : vector<8x128xbf16> to vector<8x32xbf16>
    %cst_22 = arith.constant dense<0.000000e+00> : vector<16x32xf32>
    %37 = tpu.matmul %35, %36, %cst_22 {dimension_numbers = #tpu.dot_dimension_numbers<[1], [0], [0], [1], [0, 0, 1, 1], [], []>} : vector<16x8xbf16>, vector<8x32xbf16>, vector<16x32xf32> -> vector<16x32xf32>
    %38 = vector.broadcast %34 : vector<16x1xf32> to vector<16x32xf32>
    %39 = arith.mulf %37, %38 : vector<16x32xf32>
    %40 = arith.truncf %39 : vector<16x32xf32> to vector<16x32xbf16>
    %41 = vector.extract_strided_slice %11 {offsets = [0, 32], sizes = [16, 32], strides = [1, 1]} : vector<16x128xbf16> to vector<16x32xbf16>
    %42 = vector.extract_strided_slice %17 {offsets = [0, 32], sizes = [8, 32], strides = [1, 1]} : vector<8x128xbf16> to vector<8x32xbf16>
    %cst_23 = arith.constant dense<0.000000e+00> : vector<16x8xf32>
    %43 = tpu.matmul %41, %42, %cst_23 {dimension_numbers = #tpu.dot_dimension_numbers<[1], [1], [0], [0], [0, 0, 1, 0], [], []>} : vector<16x32xbf16>, vector<8x32xbf16>, vector<16x8xf32> -> vector<16x8xf32>
    %cst_24 = arith.constant dense<0xFF800000> : vector<16xf32>
    %44 = vector.multi_reduction <maximumf>, %43, %cst_24 [1] : vector<16x8xf32> to vector<16xf32>
    %45 = vector.shape_cast %44 : vector<16xf32> to vector<16x1xf32>
    %46 = vector.broadcast %45 : vector<16x1xf32> to vector<16x8xf32>
    %47 = arith.subf %43, %46 : vector<16x8xf32>
    %48 = math.exp %47 : vector<16x8xf32>
    %cst_25 = arith.constant dense<0.000000e+00> : vector<16xf32>
    %49 = vector.multi_reduction <add>, %48, %cst_25 [1] : vector<16x8xf32> to vector<16xf32>
    %50 = vector.shape_cast %49 : vector<16xf32> to vector<16x1xf32>
    %51 = tpu.reciprocal %50 {approx = true} : vector<16x1xf32> -> vector<16x1xf32>
    %52 = arith.truncf %48 : vector<16x8xf32> to vector<16x8xbf16>
    %53 = vector.extract_strided_slice %23 {offsets = [0, 32], sizes = [8, 32], strides = [1, 1]} : vector<8x128xbf16> to vector<8x32xbf16>
    %cst_26 = arith.constant dense<0.000000e+00> : vector<16x32xf32>
    %54 = tpu.matmul %52, %53, %cst_26 {dimension_numbers = #tpu.dot_dimension_numbers<[1], [0], [0], [1], [0, 0, 1, 1], [], []>} : vector<16x8xbf16>, vector<8x32xbf16>, vector<16x32xf32> -> vector<16x32xf32>
    %55 = vector.broadcast %51 : vector<16x1xf32> to vector<16x32xf32>
    %56 = arith.mulf %54, %55 : vector<16x32xf32>
    %57 = arith.truncf %56 : vector<16x32xf32> to vector<16x32xbf16>
    %58 = vector.extract_strided_slice %11 {offsets = [0, 64], sizes = [16, 32], strides = [1, 1]} : vector<16x128xbf16> to vector<16x32xbf16>
    %59 = vector.extract_strided_slice %17 {offsets = [0, 64], sizes = [8, 32], strides = [1, 1]} : vector<8x128xbf16> to vector<8x32xbf16>
    %cst_27 = arith.constant dense<0.000000e+00> : vector<16x8xf32>
    %60 = tpu.matmul %58, %59, %cst_27 {dimension_numbers = #tpu.dot_dimension_numbers<[1], [1], [0], [0], [0, 0, 1, 0], [], []>} : vector<16x32xbf16>, vector<8x32xbf16>, vector<16x8xf32> -> vector<16x8xf32>
    %cst_28 = arith.constant dense<0xFF800000> : vector<16xf32>
    %61 = vector.multi_reduction <maximumf>, %60, %cst_28 [1] : vector<16x8xf32> to vector<16xf32>
    %62 = vector.shape_cast %61 : vector<16xf32> to vector<16x1xf32>
    %63 = vector.broadcast %62 : vector<16x1xf32> to vector<16x8xf32>
    %64 = arith.subf %60, %63 : vector<16x8xf32>
    %65 = math.exp %64 : vector<16x8xf32>
    %cst_29 = arith.constant dense<0.000000e+00> : vector<16xf32>
    %66 = vector.multi_reduction <add>, %65, %cst_29 [1] : vector<16x8xf32> to vector<16xf32>
    %67 = vector.shape_cast %66 : vector<16xf32> to vector<16x1xf32>
    %68 = tpu.reciprocal %67 {approx = true} : vector<16x1xf32> -> vector<16x1xf32>
    %69 = arith.truncf %65 : vector<16x8xf32> to vector<16x8xbf16>
    %70 = vector.extract_strided_slice %23 {offsets = [0, 64], sizes = [8, 32], strides = [1, 1]} : vector<8x128xbf16> to vector<8x32xbf16>
    %cst_30 = arith.constant dense<0.000000e+00> : vector<16x32xf32>
    %71 = tpu.matmul %69, %70, %cst_30 {dimension_numbers = #tpu.dot_dimension_numbers<[1], [0], [0], [1], [0, 0, 1, 1], [], []>} : vector<16x8xbf16>, vector<8x32xbf16>, vector<16x32xf32> -> vector<16x32xf32>
    %72 = vector.broadcast %68 : vector<16x1xf32> to vector<16x32xf32>
    %73 = arith.mulf %71, %72 : vector<16x32xf32>
    %74 = arith.truncf %73 : vector<16x32xf32> to vector<16x32xbf16>
    %75 = vector.extract_strided_slice %11 {offsets = [0, 96], sizes = [16, 32], strides = [1, 1]} : vector<16x128xbf16> to vector<16x32xbf16>
    %76 = vector.extract_strided_slice %17 {offsets = [0, 96], sizes = [8, 32], strides = [1, 1]} : vector<8x128xbf16> to vector<8x32xbf16>
    %cst_31 = arith.constant dense<0.000000e+00> : vector<16x8xf32>
    %77 = tpu.matmul %75, %76, %cst_31 {dimension_numbers = #tpu.dot_dimension_numbers<[1], [1], [0], [0], [0, 0, 1, 0], [], []>} : vector<16x32xbf16>, vector<8x32xbf16>, vector<16x8xf32> -> vector<16x8xf32>
    %cst_32 = arith.constant dense<0xFF800000> : vector<16xf32>
    %78 = vector.multi_reduction <maximumf>, %77, %cst_32 [1] : vector<16x8xf32> to vector<16xf32>
    %79 = vector.shape_cast %78 : vector<16xf32> to vector<16x1xf32>
    %80 = vector.broadcast %79 : vector<16x1xf32> to vector<16x8xf32>
    %81 = arith.subf %77, %80 : vector<16x8xf32>
    %82 = math.exp %81 : vector<16x8xf32>
    %cst_33 = arith.constant dense<0.000000e+00> : vector<16xf32>
    %83 = vector.multi_reduction <add>, %82, %cst_33 [1] : vector<16x8xf32> to vector<16xf32>
    %84 = vector.shape_cast %83 : vector<16xf32> to vector<16x1xf32>
    %85 = tpu.reciprocal %84 {approx = true} : vector<16x1xf32> -> vector<16x1xf32>
    %86 = arith.truncf %82 : vector<16x8xf32> to vector<16x8xbf16>
    %87 = vector.extract_strided_slice %23 {offsets = [0, 96], sizes = [8, 32], strides = [1, 1]} : vector<8x128xbf16> to vector<8x32xbf16>
    %cst_34 = arith.constant dense<0.000000e+00> : vector<16x32xf32>
    %88 = tpu.matmul %86, %87, %cst_34 {dimension_numbers = #tpu.dot_dimension_numbers<[1], [0], [0], [1], [0, 0, 1, 1], [], []>} : vector<16x8xbf16>, vector<8x32xbf16>, vector<16x32xf32> -> vector<16x32xf32>
    %89 = vector.broadcast %85 : vector<16x1xf32> to vector<16x32xf32>
    %90 = arith.mulf %88, %89 : vector<16x32xf32>
    %91 = arith.truncf %90 : vector<16x32xf32> to vector<16x32xbf16>
    %92 = tpu.concatenate %40, %57, %74, %91 in 1 : vector<16x32xbf16>, vector<16x32xbf16>, vector<16x32xbf16>, vector<16x32xbf16> -> vector<16x128xbf16>
    %c0_35 = arith.constant 0 : index
    %c0_36 = arith.constant 0 : index
    %93 = vector.load %arg10[%c0_35, %c0_36] : memref<128x128xbf16, #tpu.memory_space<vmem>>, vector<128x128xbf16>
    %cst_37 = arith.constant dense<0.000000e+00> : vector<16x128xf32>
    %94 = tpu.matmul %92, %93, %cst_37 {dimension_numbers = #tpu.dot_dimension_numbers<[1], [0], [0], [1], [0, 0, 1, 1], [], []>} : vector<16x128xbf16>, vector<128x128xbf16>, vector<16x128xf32> -> vector<16x128xf32>
    %c0_38 = arith.constant 0 : index
    %c0_39 = arith.constant 0 : index
    %95 = vector.load %arg11[%c0_38, %c0_39] : memref<1x128xf32, #tpu.memory_space<vmem>>, vector<1x128xf32>
    %96 = vector.broadcast %95 : vector<1x128xf32> to vector<16x128xf32>
    %97 = arith.addf %94, %96 : vector<16x128xf32>
    %98 = arith.addf %97, %1 : vector<16x128xf32>
    %c0_40 = arith.constant 0 : index
    %c0_41 = arith.constant 0 : index
    %99 = vector.load %arg12[%c0_40, %c0_41] : memref<1x128xf32, #tpu.memory_space<vmem>>, vector<1x128xf32>
    %c0_42 = arith.constant 0 : index
    %c0_43 = arith.constant 0 : index
    %100 = vector.load %arg13[%c0_42, %c0_43] : memref<1x128xf32, #tpu.memory_space<vmem>>, vector<1x128xf32>
    %cst_44 = arith.constant dense<0.000000e+00> : vector<16xf32>
    %101 = vector.multi_reduction <add>, %98, %cst_44 [1] : vector<16x128xf32> to vector<16xf32>
    %102 = vector.shape_cast %101 : vector<16xf32> to vector<16x1xf32>
    %cst_45 = arith.constant 1.280000e+02 : f32
    %103 = vector.broadcast %cst_45 : f32 to vector<16x1xf32>
    %104 = arith.divf %102, %103 : vector<16x1xf32>
    %105 = vector.broadcast %104 : vector<16x1xf32> to vector<16x128xf32>
    %106 = arith.subf %98, %105 : vector<16x128xf32>
    %107 = arith.mulf %106, %106 : vector<16x128xf32>
    %cst_46 = arith.constant dense<0.000000e+00> : vector<16xf32>
    %108 = vector.multi_reduction <add>, %107, %cst_46 [1] : vector<16x128xf32> to vector<16xf32>
    %109 = vector.shape_cast %108 : vector<16xf32> to vector<16x1xf32>
    %cst_47 = arith.constant 1.280000e+02 : f32
    %110 = vector.broadcast %cst_47 : f32 to vector<16x1xf32>
    %111 = arith.divf %109, %110 : vector<16x1xf32>
    %112 = vector.broadcast %104 : vector<16x1xf32> to vector<16x128xf32>
    %113 = arith.subf %98, %112 : vector<16x128xf32>
    %cst_48 = arith.constant 9.99999974E-6 : f32
    %114 = vector.broadcast %cst_48 : f32 to vector<16x1xf32>
    %115 = arith.addf %111, %114 : vector<16x1xf32>
    %116 = math.rsqrt %115 : vector<16x1xf32>
    %117 = vector.broadcast %116 : vector<16x1xf32> to vector<16x128xf32>
    %118 = arith.mulf %113, %117 : vector<16x128xf32>
    %119 = vector.broadcast %99 : vector<1x128xf32> to vector<16x128xf32>
    %120 = arith.mulf %118, %119 : vector<16x128xf32>
    %121 = vector.broadcast %100 : vector<1x128xf32> to vector<16x128xf32>
    %122 = arith.addf %120, %121 : vector<16x128xf32>
    %c0_49 = arith.constant 0 : index
    %c0_50 = arith.constant 0 : index
    %c0_51 = arith.constant 0 : index
    %123 = vector.load %arg14[%c0_49, %c0_50, %c0_51] : memref<1x16x128xf32, #tpu.memory_space<vmem>>, vector<1x16x128xf32>
    %124 = vector.shape_cast %123 : vector<1x16x128xf32> to vector<16x128xf32>
    %125 = vector.shape_cast %122 : vector<16x128xf32> to vector<1x16x128xf32>
    tpu.vector_store %arg14[%c0_49, %c0_50, %c0_51], %125 {strides = array<i32>} : memref<1x16x128xf32, #tpu.memory_space<vmem>>, vector<1x16x128xf32>,
    return
  }
  func.func @transform_0(%arg0: i32, %arg1: i32) -> (i32, i32, i32) {
    %c0_i32 = arith.constant 0 : i32
    %c0_i32_0 = arith.constant 0 : i32
    return %arg0, %arg1, %c0_i32 : i32, i32, i32
  }
  func.func @transform_1(%arg0: i32, %arg1: i32) -> (i32, i32, i32) {
    %c0_i32 = arith.constant 0 : i32
    %c0_i32_0 = arith.constant 0 : i32
    %c0_i32_1 = arith.constant 0 : i32
    return %arg0, %c0_i32, %c0_i32_0 : i32, i32, i32
  }
  func.func @transform_2(%arg0: i32, %arg1: i32) -> (i32, i32) {
    %c0_i32 = arith.constant 0 : i32
    %c0_i32_0 = arith.constant 0 : i32
    %c0_i32_1 = arith.constant 0 : i32
    return %c0_i32, %c0_i32_0 : i32, i32
  }
  func.func @transform_3(%arg0: i32, %arg1: i32) -> (i32, i32) {
    %c0_i32 = arith.constant 0 : i32
    %c0_i32_0 = arith.constant 0 : i32
    %c0_i32_1 = arith.constant 0 : i32
    return %c0_i32, %c0_i32_0 : i32, i32
  }
  func.func @transform_4(%arg0: i32, %arg1: i32) -> (i32, i32) {
    %c0_i32 = arith.constant 0 : i32
    %c0_i32_0 = arith.constant 0 : i32
    %c0_i32_1 = arith.constant 0 : i32
    return %c0_i32, %c0_i32_0 : i32, i32
  }
  func.func @transform_5(%arg0: i32, %arg1: i32) -> (i32, i32) {
    %c0_i32 = arith.constant 0 : i32
    %c0_i32_0 = arith.constant 0 : i32
    %c0_i32_1 = arith.constant 0 : i32
    return %c0_i32, %c0_i32_0 : i32, i32
  }
  func.func @transform_6(%arg0: i32, %arg1: i32) -> (i32, i32) {
    %c0_i32 = arith.constant 0 : i32
    %c0_i32_0 = arith.constant 0 : i32
    %c0_i32_1 = arith.constant 0 : i32
    return %c0_i32, %c0_i32_0 : i32, i32
  }
  func.func @transform_7(%arg0: i32, %arg1: i32) -> (i32, i32) {
    %c0_i32 = arith.constant 0 : i32
    %c0_i32_0 = arith.constant 0 : i32
    %c0_i32_1 = arith.constant 0 : i32
    return %c0_i32, %c0_i32_0 : i32, i32
  }
  func.func @transform_8(%arg0: i32, %arg1: i32) -> (i32, i32) {
    %c0_i32 = arith.constant 0 : i32
    %c0_i32_0 = arith.constant 0 : i32
    %c0_i32_1 = arith.constant 0 : i32
    return %c0_i32, %c0_i32_0 : i32, i32
  }
  func.func @transform_9(%arg0: i32, %arg1: i32) -> (i32, i32) {
    %c0_i32 = arith.constant 0 : i32
    %c0_i32_0 = arith.constant 0 : i32
    %c0_i32_1 = arith.constant 0 : i32
    return %c0_i32, %c0_i32_0 : i32, i32
  }
  func.func @transform_10(%arg0: i32, %arg1: i32) -> (i32, i32) {
    %c0_i32 = arith.constant 0 : i32
    %c0_i32_0 = arith.constant 0 : i32
    %c0_i32_1 = arith.constant 0 : i32
    return %c0_i32, %c0_i32_0 : i32, i32
  }
  func.func @transform_11(%arg0: i32, %arg1: i32) -> (i32, i32) {
    %c0_i32 = arith.constant 0 : i32
    %c0_i32_0 = arith.constant 0 : i32
    %c0_i32_1 = arith.constant 0 : i32
    return %c0_i32, %c0_i32_0 : i32, i32
  }
  func.func @transform_12(%arg0: i32, %arg1: i32) -> (i32, i32, i32) {
    %c0_i32 = arith.constant 0 : i32
    %c0_i32_0 = arith.constant 0 : i32
    return %arg0, %arg1, %c0_i32 : i32, i32, i32
  }
}

</mosaic_0001>

<llo_original>
// kernel: post_patt_encode.12
$region0: #{post_patt_encode.12}
  #allocation0 [shape = 'u32[]', space=smem, size = 0x4, offset = 0x4, fixed_abs, tag = 'smem constant byte address 0x4 - core index']
  #allocation1 [shape = 'u32[144,128]{1,0:T(1,128)}', space=vmem, size = 0x12000, scoped, tag = 'internal scratch']
  %s0 = inlined_call_operand.vmem [shape: f32[16,128], index: 0, kind: input, shape index: {}]
  %s1 = inlined_call_operand.vmem [shape: bf16[128,256], index: 1, kind: input, shape index: {}]
  %s2 = inlined_call_operand.vmem [shape: f32[1,256], index: 2, kind: input, shape index: {}]
  %s3 = inlined_call_operand.vmem [shape: bf16[256,128], index: 3, kind: input, shape index: {}]
  %s4 = inlined_call_operand.vmem [shape: f32[1,128], index: 4, kind: input, shape index: {}]
  %s5 = inlined_call_operand.vmem [shape: f32[1,128], index: 5, kind: input, shape index: {}]
  %s6 = inlined_call_operand.vmem [shape: f32[1,128], index: 6, kind: input, shape index: {}]
  %s7 = inlined_call_operand.vmem [shape: f32[16,128], index: 7, kind: output, shape index: {}]
  %s8 = sld [smem:[#allocation0]]
  $region38: #{post_patt_encode.12} parent=0
    _
  %s10 = ssub.s32 1, %s8
  %s11 = scalar_select 0, %s10, %s8
  // Predicated region
  $region2: #{post_patt_encode.12} parent=0 // pred_check
    _
  $region3: #{post_patt_encode.12} parent=0 // pred_check_branch
    %13 = sbr.rel (0) target = $region5
  $region4: #{post_patt_encode.12} parent=0 // pred_region
    _
  $region5: #{post_patt_encode.12} parent=0 // pred_fallthru
    _
  // Predicated region
  $region6: #{post_patt_encode.12} parent=0 // pred_check
    _
  $region7: #{post_patt_encode.12} parent=0 // pred_check_branch
    %15 = sbr.rel (0) target = $region9
  $region8: #{post_patt_encode.12} parent=0 // pred_region
    _
  $region9: #{post_patt_encode.12} parent=0 // pred_fallthru
    _
  // Predicated region
  $region10: #{post_patt_encode.12} parent=0 // pred_check
    _
  $region11: #{post_patt_encode.12} parent=0 // pred_check_branch
    %17 = sbr.rel (0) target = $region13
  $region12: #{post_patt_encode.12} parent=0 // pred_region
    _
  $region13: #{post_patt_encode.12} parent=0 // pred_fallthru
    _
  // Predicated region
  $region14: #{post_patt_encode.12} parent=0 // pred_check
    _
  $region15: #{post_patt_encode.12} parent=0 // pred_check_branch
    %19 = sbr.rel (0) target = $region17
  $region16: #{post_patt_encode.12} parent=0 // pred_region
    _
  $region17: #{post_patt_encode.12} parent=0 // pred_fallthru
    _
  // Predicated region
  $region18: #{post_patt_encode.12} parent=0 // pred_check
    _
  $region19: #{post_patt_encode.12} parent=0 // pred_check_branch
    %21 = sbr.rel (0) target = $region21
  $region20: #{post_patt_encode.12} parent=0 // pred_region
    _
  $region21: #{post_patt_encode.12} parent=0 // pred_fallthru
    _
  // Predicated region
  $region22: #{post_patt_encode.12} parent=0 // pred_check
    _
  $region23: #{post_patt_encode.12} parent=0 // pred_check_branch
    %23 = sbr.rel (0) target = $region25
  $region24: #{post_patt_encode.12} parent=0 // pred_region
    _
  $region25: #{post_patt_encode.12} parent=0 // pred_fallthru
    _
  // Predicated region
  $region26: #{post_patt_encode.12} parent=0 // pred_check
    _
  $region27: #{post_patt_encode.12} parent=0 // pred_check_branch
    %25 = sbr.rel (0) target = $region29
  $region28: #{post_patt_encode.12} parent=0 // pred_region
    _
  $region29: #{post_patt_encode.12} parent=0 // pred_fallthru
    _
  %v27 = vld [vmem:[%s0] sm:$0xff]
  %v28 = vld [vmem:[%s0 + $0x8] sm:$0xff]
  %v29 = vpack.c.bf16 %v28, %v27
  %v30 = vld [vmem:[%s1] sm:$0xff]
  %v31 = vld [vmem:[%s1 + $0x8] sm:$0xff]
  %v32 = vld [vmem:[%s1 + $0x10] sm:$0xff]
  %v33 = vld [vmem:[%s1 + $0x18] sm:$0xff]
  %v34 = vld [vmem:[%s1 + $0x20] sm:$0xff]
  %v35 = vld [vmem:[%s1 + $0x28] sm:$0xff]
  %v36 = vld [vmem:[%s1 + $0x30] sm:$0xff]
  %v37 = vld [vmem:[%s1 + $0x38] sm:$0xff]
  %v38 = vld [vmem:[%s1 + $0x40] sm:$0xff]
  %v39 = vld [vmem:[%s1 + $0x48] sm:$0xff]
  %v40 = vld [vmem:[%s1 + $0x50] sm:$0xff]
  %v41 = vld [vmem:[%s1 + $0x58] sm:$0xff]
  %v42 = vld [vmem:[%s1 + $0x60] sm:$0xff]
  %v43 = vld [vmem:[%s1 + $0x68] sm:$0xff]
  %v44 = vld [vmem:[%s1 + $0x70] sm:$0xff]
  %v45 = vld [vmem:[%s1 + $0x78] sm:$0xff]
  %v46 = vld [vmem:[%s2] sm:$0x3]
  %v48 = vlaneseq
  %v49 = vshrl.u32 %v48, 7
  %v50 = vsub.s32 0, %v49
  %v51 = vrot.slane %v46, %v50
  %v52 = vlaneseq
  %v53 = vshrl.u32 %v52, 7
  %v54 = vsub.s32 1, %v53
  %v55 = vrot.slane %v46, %v54
  %v74 = vunpack.c.l.b16 %v30
  %v75 = vunpack.c.h.b16 %v30
  %v76 = vunpack.c.l.b16 %v31
  %v77 = vunpack.c.h.b16 %v31
  %v78 = vunpack.c.l.b16 %v32
  %v79 = vunpack.c.h.b16 %v32
  %v80 = vunpack.c.l.b16 %v33
  %v81 = vunpack.c.h.b16 %v33
  %v82 = vunpack.c.l.b16 %v34
  %v83 = vunpack.c.h.b16 %v34
  %v84 = vunpack.c.l.b16 %v35
  %v85 = vunpack.c.h.b16 %v35
  %v86 = vunpack.c.l.b16 %v36
  %v87 = vunpack.c.h.b16 %v36
  %v88 = vunpack.c.l.b16 %v37
  %v89 = vunpack.c.h.b16 %v37
  %v90 = vunpack.c.l.b16 %v38
  %v91 = vunpack.c.h.b16 %v38
  %v92 = vunpack.c.l.b16 %v39
  %v93 = vunpack.c.h.b16 %v39
  %v94 = vunpack.c.l.b16 %v40
  %v95 = vunpack.c.h.b16 %v40
  %v96 = vunpack.c.l.b16 %v41
  %v97 = vunpack.c.h.b16 %v41
  %v98 = vunpack.c.l.b16 %v42
  %v99 = vunpack.c.h.b16 %v42
  %v100 = vunpack.c.l.b16 %v43
  %v101 = vunpack.c.h.b16 %v43
  %v102 = vunpack.c.l.b16 %v44
  %v103 = vunpack.c.h.b16 %v44
  %v104 = vunpack.c.l.b16 %v45
  %v105 = vunpack.c.h.b16 %v45
  %v106 = vpack.c.b16 %v76, %v74
  %v107 = vpack.c.b16 %v77, %v75
  %v108 = vpack.c.b16 %v80, %v78
  %v109 = vpack.c.b16 %v81, %v79
  %v110 = vpack.c.b16 %v84, %v82
  %v111 = vpack.c.b16 %v85, %v83
  %v112 = vpack.c.b16 %v88, %v86
  %v113 = vpack.c.b16 %v89, %v87
  %v114 = vpack.c.b16 %v92, %v90
  %v115 = vpack.c.b16 %v93, %v91
  %v116 = vpack.c.b16 %v96, %v94
  %v117 = vpack.c.b16 %v97, %v95
  %v118 = vpack.c.b16 %v100, %v98
  %v119 = vpack.c.b16 %v101, %v99
  %v120 = vpack.c.b16 %v104, %v102
  %v121 = vpack.c.b16 %v105, %v103
  %138 = vmatprep.subr.bf16.mxu0 %v107
  %139 = vmatpush1.bf16.msra.mxu0 %v106
  %140 = vmatprep.subr.bf16.mxu0 %v109
  %141 = vmatpush1.bf16.msra.mxu0 %v108
  %142 = vmatprep.subr.bf16.mxu0 %v111
  %143 = vmatpush1.bf16.msra.mxu0 %v110
  %144 = vmatprep.subr.bf16.mxu0 %v113
  %145 = vmatpush1.bf16.msra.mxu0 %v112
  %146 = vmatprep.subr.bf16.mxu0 %v115
  %147 = vmatpush1.bf16.msra.mxu0 %v114
  %148 = vmatprep.subr.bf16.mxu0 %v117
  %149 = vmatpush1.bf16.msra.mxu0 %v116
  %150 = vmatprep.subr.bf16.mxu0 %v119
  %151 = vmatpush1.bf16.msra.mxu0 %v118
  %152 = vmatprep.subr.bf16.mxu0 %v121
  %153 = vmatpush1.bf16.msra.mxu0 %v120
  %154 = vmatprep.subr.bf16.mxu0 0
  %155 = vmatpush1.bf16.msra.mxu0 0
  %156 = vmatprep.subr.bf16.mxu0 0
  %157 = vmatpush1.bf16.msra.mxu0 0
  %158 = vmatprep.subr.bf16.mxu0 0
  %159 = vmatpush1.bf16.msra.mxu0 0
  %160 = vmatprep.subr.bf16.mxu0 0
  %161 = vmatpush1.bf16.msra.mxu0 0
  %162 = vmatprep.subr.bf16.mxu0 0
  %163 = vmatpush1.bf16.msra.mxu0 0
  %164 = vmatprep.subr.bf16.mxu0 0
  %165 = vmatpush1.bf16.msra.mxu0 0
  %166 = vmatprep.subr.bf16.mxu0 0
  %167 = vmatpush1.bf16.msra.mxu0 0
  %168 = vmatprep.subr.bf16.mxu0 0
  %169 = vmatpush1.bf16.msra.mxu0 0
  %170 = vmatprep.mubr.bf16.mxu0 0
  %171 = vmatmul.mubr.bf16.gmra.mrb[0].mxu0 %v29
  %v172 = vpop.f32.mrb[0].mxu0
  %v173 = vadd.f32 %v51, %v172
  %v174 = vpop.f32.mrb[0].mxu0
  %v175 = vadd.f32 %v55, %v174
  %v176 = vpop.f32.mrb[0].mxu0
  %v177 = vadd.f32 %v51, %v176
  %v178 = vpop.f32.mrb[0].mxu0
  %v179 = vadd.f32 %v55, %v178
  %180 = vdwg.mxu0
  %v181 = vmul.f32 %v173, %v173
  %v182 = vmul.f32 %v175, %v175
  %v183 = vmul.f32 %v177, %v177
  %v184 = vmul.f32 %v179, %v179
  %v185 = vmul.f32 %v173, %v181
  %v186 = vmul.f32 %v175, %v182
  %v187 = vmul.f32 %v177, %v183
  %v188 = vmul.f32 %v179, %v184
  %v189 = vmul.f32 %v185, 0.044715
  %v190 = vmul.f32 %v186, 0.044715
  %v191 = vmul.f32 %v187, 0.044715
  %v192 = vmul.f32 %v188, 0.044715
  %v193 = vadd.f32 %v173, %v189
  %v194 = vadd.f32 %v175, %v190
  %v195 = vadd.f32 %v177, %v191
  %v196 = vadd.f32 %v179, %v192
  %v197 = vmul.f32 %v193, 0.7978846
  %v198 = vmul.f32 %v194, 0.7978846
  %v199 = vmul.f32 %v195, 0.7978846
  %v200 = vmul.f32 %v196, 0.7978846
  %v201 = vtanh.pop %v197
  %v202 = vtanh.pop %v198
  %v203 = vtanh.pop %v199
  %v204 = vtanh.pop %v200
  %v205 = vadd.f32 %v201, 1.0
  %v206 = vadd.f32 %v202, 1.0
  %v207 = vadd.f32 %v203, 1.0
  %v208 = vadd.f32 %v204, 1.0
  %v209 = vmul.f32 %v205, 0.5
  %v210 = vmul.f32 %v206, 0.5
  %v211 = vmul.f32 %v207, 0.5
  %v212 = vmul.f32 %v208, 0.5
  %v213 = vmul.f32 %v173, %v209
  %v214 = vmul.f32 %v175, %v210
  %v215 = vmul.f32 %v177, %v211
  %v216 = vmul.f32 %v179, %v212
  %v217 = vpack.c.bf16 %v215, %v213
  %v218 = vpack.c.bf16 %v216, %v214
  %v219 = vld [vmem:[%s3] sm:$0xf]
  %v220 = vld [vmem:[%s3 + $0x4] sm:$0xf]
  %v221 = vld [vmem:[%s3 + $0x8] sm:$0xf]
  %v222 = vld [vmem:[%s3 + $0xc] sm:$0xf]
  %v223 = vld [vmem:[%s3 + $0x10] sm:$0xf]
  %v224 = vld [vmem:[%s3 + $0x14] sm:$0xf]
  %v225 = vld [vmem:[%s3 + $0x18] sm:$0xf]
  %v226 = vld [vmem:[%s3 + $0x1c] sm:$0xf]
  %v227 = vld [vmem:[%s3 + $0x20] sm:$0xf]
  %v228 = vld [vmem:[%s3 + $0x24] sm:$0xf]
  %v229 = vld [vmem:[%s3 + $0x28] sm:$0xf]
  %v230 = vld [vmem:[%s3 + $0x2c] sm:$0xf]
  %v231 = vld [vmem:[%s3 + $0x30] sm:$0xf]
  %v232 = vld [vmem:[%s3 + $0x34] sm:$0xf]
  %v233 = vld [vmem:[%s3 + $0x38] sm:$0xf]
  %v234 = vld [vmem:[%s3 + $0x3c] sm:$0xf]
  %v235 = vld [vmem:[%s3 + $0x40] sm:$0xf]
  %v236 = vld [vmem:[%s3 + $0x44] sm:$0xf]
  %v237 = vld [vmem:[%s3 + $0x48] sm:$0xf]
  %v238 = vld [vmem:[%s3 + $0x4c] sm:$0xf]
  %v239 = vld [vmem:[%s3 + $0x50] sm:$0xf]
  %v240 = vld [vmem:[%s3 + $0x54] sm:$0xf]
  %v241 = vld [vmem:[%s3 + $0x58] sm:$0xf]
  %v242 = vld [vmem:[%s3 + $0x5c] sm:$0xf]
  %v243 = vld [vmem:[%s3 + $0x60] sm:$0xf]
  %v244 = vld [vmem:[%s3 + $0x64] sm:$0xf]
  %v245 = vld [vmem:[%s3 + $0x68] sm:$0xf]
  %v246 = vld [vmem:[%s3 + $0x6c] sm:$0xf]
  %v247 = vld [vmem:[%s3 + $0x70] sm:$0xf]
  %v248 = vld [vmem:[%s3 + $0x74] sm:$0xf]
  %v249 = vld [vmem:[%s3 + $0x78] sm:$0xf]
  %v250 = vld [vmem:[%s3 + $0x7c] sm:$0xf]
  %v251 = vld [vmem:[%s4] sm:$0x1]
  %v253 = vlaneseq
  %v254 = vshrl.u32 %v253, 7
  %v255 = vsub.s32 0, %v254
  %v256 = vrot.slane %v251, %v255
  %v290 = vunpack.c.l.b16 %v219
  %v291 = vunpack.c.l.b16 %v220
  %v292 = vunpack.c.l.b16 %v221
  %v293 = vunpack.c.l.b16 %v222
  %v294 = vunpack.c.l.b16 %v223
  %v295 = vunpack.c.l.b16 %v224
  %v296 = vunpack.c.l.b16 %v225
  %v297 = vunpack.c.l.b16 %v226
  %v298 = vunpack.c.l.b16 %v227
  %v299 = vunpack.c.l.b16 %v228
  %v300 = vunpack.c.l.b16 %v229
  %v301 = vunpack.c.l.b16 %v230
  %v302 = vunpack.c.l.b16 %v231
  %v303 = vunpack.c.l.b16 %v232
  %v304 = vunpack.c.l.b16 %v233
  %v305 = vunpack.c.l.b16 %v234
  %v306 = vunpack.c.l.b16 %v235
  %v307 = vunpack.c.l.b16 %v236
  %v308 = vunpack.c.l.b16 %v237
  %v309 = vunpack.c.l.b16 %v238
  %v310 = vunpack.c.l.b16 %v239
  %v311 = vunpack.c.l.b16 %v240
  %v312 = vunpack.c.l.b16 %v241
  %v313 = vunpack.c.l.b16 %v242
  %v314 = vunpack.c.l.b16 %v243
  %v315 = vunpack.c.l.b16 %v244
  %v316 = vunpack.c.l.b16 %v245
  %v317 = vunpack.c.l.b16 %v246
  %v318 = vunpack.c.l.b16 %v247
  %v319 = vunpack.c.l.b16 %v248
  %v320 = vunpack.c.l.b16 %v249
  %v321 = vunpack.c.l.b16 %v250
  %v322 = vpack.c.b16 %v291, %v290
  %v323 = vpack.c.b16 %v293, %v292
  %v324 = vpack.c.b16 %v295, %v294
  %v325 = vpack.c.b16 %v297, %v296
  %v326 = vpack.c.b16 %v299, %v298
  %v327 = vpack.c.b16 %v301, %v300
  %v328 = vpack.c.b16 %v303, %v302
  %v329 = vpack.c.b16 %v305, %v304
  %v330 = vpack.c.b16 %v307, %v306
  %v331 = vpack.c.b16 %v309, %v308
  %v332 = vpack.c.b16 %v311, %v310
  %v333 = vpack.c.b16 %v313, %v312
  %v334 = vpack.c.b16 %v315, %v314
  %v335 = vpack.c.b16 %v317, %v316
  %v336 = vpack.c.b16 %v319, %v318
  %v337 = vpack.c.b16 %v321, %v320
  %354 = vmatprep.subr.bf16.mxu0 0
  %355 = vmatpush1.bf16.msra.mxu0 %v322
  %356 = vmatprep.subr.bf16.mxu0 0
  %357 = vmatpush1.bf16.msra.mxu0 %v323
  %358 = vmatprep.subr.bf16.mxu0 0
  %359 = vmatpush1.bf16.msra.mxu0 %v324
  %360 = vmatprep.subr.bf16.mxu0 0
  %361 = vmatpush1.bf16.msra.mxu0 %v325
  %362 = vmatprep.subr.bf16.mxu0 0
  %363 = vmatpush1.bf16.msra.mxu0 %v326
  %364 = vmatprep.subr.bf16.mxu0 0
  %365 = vmatpush1.bf16.msra.mxu0 %v327
  %366 = vmatprep.subr.bf16.mxu0 0
  %367 = vmatpush1.bf16.msra.mxu0 %v328
  %368 = vmatprep.subr.bf16.mxu0 0
  %369 = vmatpush1.bf16.msra.mxu0 %v329
  %370 = vmatprep.subr.bf16.mxu0 0
  %371 = vmatpush1.bf16.msra.mxu0 %v330
  %372 = vmatprep.subr.bf16.mxu0 0
  %373 = vmatpush1.bf16.msra.mxu0 %v331
  %374 = vmatprep.subr.bf16.mxu0 0
  %375 = vmatpush1.bf16.msra.mxu0 %v332
  %376 = vmatprep.subr.bf16.mxu0 0
  %377 = vmatpush1.bf16.msra.mxu0 %v333
  %378 = vmatprep.subr.bf16.mxu0 0
  %379 = vmatpush1.bf16.msra.mxu0 %v334
  %380 = vmatprep.subr.bf16.mxu0 0
  %381 = vmatpush1.bf16.msra.mxu0 %v335
  %382 = vmatprep.subr.bf16.mxu0 0
  %383 = vmatpush1.bf16.msra.mxu0 %v336
  %384 = vmatprep.subr.bf16.mxu0 0
  %385 = vmatpush1.bf16.msra.mxu0 %v337
  %386 = vmatprep.mubr.bf16.mxu0 %v218
  %387 = vmatmul.mubr.bf16.gmra.mrb[0].mxu0 %v217
  %v388 = vpop.f32.mrb[0].mxu0
  %v389 = vadd.f32 %v256, %v388
  %v390 = vpop.f32.mrb[0].mxu0
  %v391 = vpop.f32.mrb[0].mxu0
  %v392 = vadd.f32 %v256, %v391
  %v393 = vpop.f32.mrb[0].mxu0
  %394 = vdwg.mxu0
  %v395 = vadd.f32 %v27, %v389
  %v396 = vadd.f32 %v28, %v392
  %v397 = vld [vmem:[%s5] sm:$0x1]
  %v398 = vld [vmem:[%s6] sm:$0x1]
  %399 = vadd.xlane.f32.xlu0 %v395
  %v400 = vpop.xlane.xlu0 %399
  %401 = vadd.xlane.f32.xlu0 %v396
  %v402 = vpop.xlane.xlu0 %401
  %v403 = vrcp.pop 128.0
  %v404 = vmul.f32 %v400, %v403
  %v405 = vmul.f32 %v402, %v403
  %v406 = vsub.f32 %v395, %v404
  %v407 = vsub.f32 %v396, %v405
  %v408 = vmul.f32 %v406, %v406
  %v409 = vmul.f32 %v407, %v407
  %410 = vadd.xlane.f32.xlu0 %v408
  %v411 = vpop.xlane.xlu0 %410
  %412 = vadd.xlane.f32.xlu0 %v409
  %v413 = vpop.xlane.xlu0 %412
  %v414 = vmul.f32 %v411, %v403
  %v415 = vmul.f32 %v413, %v403
  %v416 = vadd.f32 %v414, 1e-05
  %v417 = vadd.f32 %v415, 1e-05
  %v418 = vrsqrt.pop %v416
  %v419 = vrsqrt.pop %v417
  %v420 = vmul.f32 %v406, %v418
  %v421 = vmul.f32 %v407, %v419
  %v423 = vlaneseq
  %v424 = vshrl.u32 %v423, 7
  %v425 = vsub.s32 0, %v424
  %v426 = vrot.slane %v397, %v425
  %v428 = vmul.f32 %v420, %v426
  %v429 = vmul.f32 %v421, %v426
  %v431 = vlaneseq
  %v432 = vshrl.u32 %v431, 7
  %v433 = vsub.s32 0, %v432
  %v434 = vrot.slane %v398, %v433
  %v436 = vadd.f32 %v428, %v434
  %v437 = vadd.f32 %v429, %v434
  %438 = vst [vmem:[%s7] sm:$0xff] %v436
  %439 = vst [vmem:[%s7 + $0x8] sm:$0xff] %v437
  // Predicated region
  $region30: #{post_patt_encode.12} parent=0 // pred_check
    _
  $region31: #{post_patt_encode.12} parent=0 // pred_check_branch
    %441 = sbr.rel (0) target = $region33
  $region32: #{post_patt_encode.12} parent=0 // pred_region
    _
  $region33: #{post_patt_encode.12} parent=0 // pred_fallthru
    _
  // Predicated region
  $region34: #{post_patt_encode.12} parent=0 // pred_check
    _
  $region35: #{post_patt_encode.12} parent=0 // pred_check_branch
    %443 = sbr.rel (0) target = $region37
  $region36: #{post_patt_encode.12} parent=0 // pred_region
    _
  $region37: #{post_patt_encode.12} parent=0 // pred_fallthru
    _

// kernel: post_patt_encode.10
$region0: #{post_patt_encode.10}
  #allocation0 [shape = 'u32[]', space=smem, size = 0x4, offset = 0x4, fixed_abs, tag = 'smem constant byte address 0x4 - core index']
  #allocation1 [shape = 'u32[144,128]{1,0:T(1,128)}', space=vmem, size = 0x12000, scoped, tag = 'internal scratch']
  %s0 = inlined_call_operand.vmem [shape: f32[32,128], index: 0, kind: input, shape index: {}]
  %s1 = inlined_call_operand.vmem [shape: bf16[128,256], index: 1, kind: input, shape index: {}]
  %s2 = inlined_call_operand.vmem [shape: f32[1,256], index: 2, kind: input, shape index: {}]
  %s3 = inlined_call_operand.vmem [shape: bf16[256,128], index: 3, kind: input, shape index: {}]
  %s4 = inlined_call_operand.vmem [shape: f32[1,128], index: 4, kind: input, shape index: {}]
  %s5 = inlined_call_operand.vmem [shape: f32[1,128], index: 5, kind: input, shape index: {}]
  %s6 = inlined_call_operand.vmem [shape: f32[1,128], index: 6, kind: input, shape index: {}]
  %s7 = inlined_call_operand.vmem [shape: f32[32,128], index: 7, kind: output, shape index: {}]
  %s8 = sld [smem:[#allocation0]]
  $region38: #{post_patt_encode.10} parent=0
    _
  %s10 = ssub.s32 1, %s8
  %s11 = scalar_select 0, %s10, %s8
  // Predicated region
  $region2: #{post_patt_encode.10} parent=0 // pred_check
    _
  $region3: #{post_patt_encode.10} parent=0 // pred_check_branch
    %13 = sbr.rel (0) target = $region5
  $region4: #{post_patt_encode.10} parent=0 // pred_region
    _
  $region5: #{post_patt_encode.10} parent=0 // pred_fallthru
    _
  // Predicated region
  $region6: #{post_patt_encode.10} parent=0 // pred_check
    _
  $region7: #{post_patt_encode.10} parent=0 // pred_check_branch
    %15 = sbr.rel (0) target = $region9
  $region8: #{post_patt_encode.10} parent=0 // pred_region
    _
  $region9: #{post_patt_encode.10} parent=0 // pred_fallthru
    _
  // Predicated region
  $region10: #{post_patt_encode.10} parent=0 // pred_check
    _
  $region11: #{post_patt_encode.10} parent=0 // pred_check_branch
    %17 = sbr.rel (0) target = $region13
  $region12: #{post_patt_encode.10} parent=0 // pred_region
    _
  $region13: #{post_patt_encode.10} parent=0 // pred_fallthru
    _
  // Predicated region
  $region14: #{post_patt_encode.10} parent=0 // pred_check
    _
  $region15: #{post_patt_encode.10} parent=0 // pred_check_branch
    %19 = sbr.rel (0) target = $region17
  $region16: #{post_patt_encode.10} parent=0 // pred_region
    _
  $region17: #{post_patt_encode.10} parent=0 // pred_fallthru
    _
  // Predicated region
  $region18: #{post_patt_encode.10} parent=0 // pred_check
    _
  $region19: #{post_patt_encode.10} parent=0 // pred_check_branch
    %21 = sbr.rel (0) target = $region21
  $region20: #{post_patt_encode.10} parent=0 // pred_region
    _
  $region21: #{post_patt_encode.10} parent=0 // pred_fallthru
    _
  // Predicated region
  $region22: #{post_patt_encode.10} parent=0 // pred_check
    _
  $region23: #{post_patt_encode.10} parent=0 // pred_check_branch
    %23 = sbr.rel (0) target = $region25
  $region24: #{post_patt_encode.10} parent=0 // pred_region
    _
  $region25: #{post_patt_encode.10} parent=0 // pred_fallthru
    _
  // Predicated region
  $region26: #{post_patt_encode.10} parent=0 // pred_check
    _
  $region27: #{post_patt_encode.10} parent=0 // pred_check_branch
    %25 = sbr.rel (0) target = $region29
  $region28: #{post_patt_encode.10} parent=0 // pred_region
    _
  $region29: #{post_patt_encode.10} parent=0 // pred_fallthru
    _
  %v27 = vld [vmem:[%s0] sm:$0xff]
  %v28 = vld [vmem:[%s0 + $0x8] sm:$0xff]
  %v29 = vld [vmem:[%s0 + $0x10] sm:$0xff]
  %v30 = vld [vmem:[%s0 + $0x18] sm:$0xff]
  %v31 = vpack.c.bf16 %v28, %v27
  %v32 = vpack.c.bf16 %v30, %v29
  %v33 = vld [vmem:[%s1] sm:$0xff]
  %v34 = vld [vmem:[%s1 + $0x8] sm:$0xff]
  %v35 = vld [vmem:[%s1 + $0x10] sm:$0xff]
  %v36 = vld [vmem:[%s1 + $0x18] sm:$0xff]
  %v37 = vld [vmem:[%s1 + $0x20] sm:$0xff]
  %v38 = vld [vmem:[%s1 + $0x28] sm:$0xff]
  %v39 = vld [vmem:[%s1 + $0x30] sm:$0xff]
  %v40 = vld [vmem:[%s1 + $0x38] sm:$0xff]
  %v41 = vld [vmem:[%s1 + $0x40] sm:$0xff]
  %v42 = vld [vmem:[%s1 + $0x48] sm:$0xff]
  %v43 = vld [vmem:[%s1 + $0x50] sm:$0xff]
  %v44 = vld [vmem:[%s1 + $0x58] sm:$0xff]
  %v45 = vld [vmem:[%s1 + $0x60] sm:$0xff]
  %v46 = vld [vmem:[%s1 + $0x68] sm:$0xff]
  %v47 = vld [vmem:[%s1 + $0x70] sm:$0xff]
  %v48 = vld [vmem:[%s1 + $0x78] sm:$0xff]
  %v49 = vld [vmem:[%s2] sm:$0x3]
  %v51 = vlaneseq
  %v52 = vshrl.u32 %v51, 7
  %v53 = vsub.s32 0, %v52
  %v54 = vrot.slane %v49, %v53
  %v55 = vlaneseq
  %v56 = vshrl.u32 %v55, 7
  %v57 = vsub.s32 1, %v56
  %v58 = vrot.slane %v49, %v57
  %v77 = vunpack.c.l.b16 %v33
  %v78 = vunpack.c.h.b16 %v33
  %v79 = vunpack.c.l.b16 %v34
  %v80 = vunpack.c.h.b16 %v34
  %v81 = vunpack.c.l.b16 %v35
  %v82 = vunpack.c.h.b16 %v35
  %v83 = vunpack.c.l.b16 %v36
  %v84 = vunpack.c.h.b16 %v36
  %v85 = vunpack.c.l.b16 %v37
  %v86 = vunpack.c.h.b16 %v37
  %v87 = vunpack.c.l.b16 %v38
  %v88 = vunpack.c.h.b16 %v38
  %v89 = vunpack.c.l.b16 %v39
  %v90 = vunpack.c.h.b16 %v39
  %v91 = vunpack.c.l.b16 %v40
  %v92 = vunpack.c.h.b16 %v40
  %v93 = vunpack.c.l.b16 %v41
  %v94 = vunpack.c.h.b16 %v41
  %v95 = vunpack.c.l.b16 %v42
  %v96 = vunpack.c.h.b16 %v42
  %v97 = vunpack.c.l.b16 %v43
  %v98 = vunpack.c.h.b16 %v43
  %v99 = vunpack.c.l.b16 %v44
  %v100 = vunpack.c.h.b16 %v44
  %v101 = vunpack.c.l.b16 %v45
  %v102 = vunpack.c.h.b16 %v45
  %v103 = vunpack.c.l.b16 %v46
  %v104 = vunpack.c.h.b16 %v46
  %v105 = vunpack.c.l.b16 %v47
  %v106 = vunpack.c.h.b16 %v47
  %v107 = vunpack.c.l.b16 %v48
  %v108 = vunpack.c.h.b16 %v48
  %v109 = vpack.c.b16 %v79, %v77
  %v110 = vpack.c.b16 %v80, %v78
  %v111 = vpack.c.b16 %v83, %v81
  %v112 = vpack.c.b16 %v84, %v82
  %v113 = vpack.c.b16 %v87, %v85
  %v114 = vpack.c.b16 %v88, %v86
  %v115 = vpack.c.b16 %v91, %v89
  %v116 = vpack.c.b16 %v92, %v90
  %v117 = vpack.c.b16 %v95, %v93
  %v118 = vpack.c.b16 %v96, %v94
  %v119 = vpack.c.b16 %v99, %v97
  %v120 = vpack.c.b16 %v100, %v98
  %v121 = vpack.c.b16 %v103, %v101
  %v122 = vpack.c.b16 %v104, %v102
  %v123 = vpack.c.b16 %v107, %v105
  %v124 = vpack.c.b16 %v108, %v106
  %141 = vmatprep.subr.bf16.mxu0 %v110
  %142 = vmatpush1.bf16.msra.mxu0 %v109
  %143 = vmatprep.subr.bf16.mxu0 %v112
  %144 = vmatpush1.bf16.msra.mxu0 %v111
  %145 = vmatprep.subr.bf16.mxu0 %v114
  %146 = vmatpush1.bf16.msra.mxu0 %v113
  %147 = vmatprep.subr.bf16.mxu0 %v116
  %148 = vmatpush1.bf16.msra.mxu0 %v115
  %149 = vmatprep.subr.bf16.mxu0 %v118
  %150 = vmatpush1.bf16.msra.mxu0 %v117
  %151 = vmatprep.subr.bf16.mxu0 %v120
  %152 = vmatpush1.bf16.msra.mxu0 %v119
  %153 = vmatprep.subr.bf16.mxu0 %v122
  %154 = vmatpush1.bf16.msra.mxu0 %v121
  %155 = vmatprep.subr.bf16.mxu0 %v124
  %156 = vmatpush1.bf16.msra.mxu0 %v123
  %157 = vmatprep.subr.bf16.mxu0 0
  %158 = vmatpush1.bf16.msra.mxu0 0
  %159 = vmatprep.subr.bf16.mxu0 0
  %160 = vmatpush1.bf16.msra.mxu0 0
  %161 = vmatprep.subr.bf16.mxu0 0
  %162 = vmatpush1.bf16.msra.mxu0 0
  %163 = vmatprep.subr.bf16.mxu0 0
  %164 = vmatpush1.bf16.msra.mxu0 0
  %165 = vmatprep.subr.bf16.mxu0 0
  %166 = vmatpush1.bf16.msra.mxu0 0
  %167 = vmatprep.subr.bf16.mxu0 0
  %168 = vmatpush1.bf16.msra.mxu0 0
  %169 = vmatprep.subr.bf16.mxu0 0
  %170 = vmatpush1.bf16.msra.mxu0 0
  %171 = vmatprep.subr.bf16.mxu0 0
  %172 = vmatpush1.bf16.msra.mxu0 0
  %173 = vmatprep.mubr.bf16.mxu0 0
  %174 = vmatmul.mubr.bf16.gmra.mrb[0].mxu0 %v31
  %v175 = vpop.f32.mrb[0].mxu0
  %v176 = vadd.f32 %v54, %v175
  %v177 = vpop.f32.mrb[0].mxu0
  %v178 = vadd.f32 %v58, %v177
  %v179 = vpop.f32.mrb[0].mxu0
  %v180 = vadd.f32 %v54, %v179
  %v181 = vpop.f32.mrb[0].mxu0
  %v182 = vadd.f32 %v58, %v181
  %183 = vmatprep.mubr.bf16.mxu0 0
  %184 = vmatmul.mubr.bf16.gmra.mrb[0].mxu0 %v32
  %v185 = vpop.f32.mrb[0].mxu0
  %v186 = vadd.f32 %v54, %v185
  %v187 = vpop.f32.mrb[0].mxu0
  %v188 = vadd.f32 %v58, %v187
  %v189 = vpop.f32.mrb[0].mxu0
  %v190 = vadd.f32 %v54, %v189
  %v191 = vpop.f32.mrb[0].mxu0
  %v192 = vadd.f32 %v58, %v191
  %193 = vdwg.mxu0
  %v194 = vmul.f32 %v176, %v176
  %v195 = vmul.f32 %v178, %v178
  %v196 = vmul.f32 %v180, %v180
  %v197 = vmul.f32 %v182, %v182
  %v198 = vmul.f32 %v186, %v186
  %v199 = vmul.f32 %v188, %v188
  %v200 = vmul.f32 %v190, %v190
  %v201 = vmul.f32 %v192, %v192
  %v202 = vmul.f32 %v176, %v194
  %v203 = vmul.f32 %v178, %v195
  %v204 = vmul.f32 %v180, %v196
  %v205 = vmul.f32 %v182, %v197
  %v206 = vmul.f32 %v186, %v198
  %v207 = vmul.f32 %v188, %v199
  %v208 = vmul.f32 %v190, %v200
  %v209 = vmul.f32 %v192, %v201
  %v210 = vmul.f32 %v202, 0.044715
  %v211 = vmul.f32 %v203, 0.044715
  %v212 = vmul.f32 %v204, 0.044715
  %v213 = vmul.f32 %v205, 0.044715
  %v214 = vmul.f32 %v206, 0.044715
  %v215 = vmul.f32 %v207, 0.044715
  %v216 = vmul.f32 %v208, 0.044715
  %v217 = vmul.f32 %v209, 0.044715
  %v218 = vadd.f32 %v176, %v210
  %v219 = vadd.f32 %v178, %v211
  %v220 = vadd.f32 %v180, %v212
  %v221 = vadd.f32 %v182, %v213
  %v222 = vadd.f32 %v186, %v214
  %v223 = vadd.f32 %v188, %v215
  %v224 = vadd.f32 %v190, %v216
  %v225 = vadd.f32 %v192, %v217
  %v226 = vmul.f32 %v218, 0.7978846
  %v227 = vmul.f32 %v219, 0.7978846
  %v228 = vmul.f32 %v220, 0.7978846
  %v229 = vmul.f32 %v221, 0.7978846
  %v230 = vmul.f32 %v222, 0.7978846
  %v231 = vmul.f32 %v223, 0.7978846
  %v232 = vmul.f32 %v224, 0.7978846
  %v233 = vmul.f32 %v225, 0.7978846
  %v234 = vtanh.pop %v226
  %v235 = vtanh.pop %v227
  %v236 = vtanh.pop %v228
  %v237 = vtanh.pop %v229
  %v238 = vtanh.pop %v230
  %v239 = vtanh.pop %v231
  %v240 = vtanh.pop %v232
  %v241 = vtanh.pop %v233
  %v242 = vadd.f32 %v234, 1.0
  %v243 = vadd.f32 %v235, 1.0
  %v244 = vadd.f32 %v236, 1.0
  %v245 = vadd.f32 %v237, 1.0
  %v246 = vadd.f32 %v238, 1.0
  %v247 = vadd.f32 %v239, 1.0
  %v248 = vadd.f32 %v240, 1.0
  %v249 = vadd.f32 %v241, 1.0
  %v250 = vmul.f32 %v242, 0.5
  %v251 = vmul.f32 %v243, 0.5
  %v252 = vmul.f32 %v244, 0.5
  %v253 = vmul.f32 %v245, 0.5
  %v254 = vmul.f32 %v246, 0.5
  %v255 = vmul.f32 %v247, 0.5
  %v256 = vmul.f32 %v248, 0.5
  %v257 = vmul.f32 %v249, 0.5
  %v258 = vmul.f32 %v176, %v250
  %v259 = vmul.f32 %v178, %v251
  %v260 = vmul.f32 %v180, %v252
  %v261 = vmul.f32 %v182, %v253
  %v262 = vmul.f32 %v186, %v254
  %v263 = vmul.f32 %v188, %v255
  %v264 = vmul.f32 %v190, %v256
  %v265 = vmul.f32 %v192, %v257
  %v266 = vpack.c.bf16 %v260, %v258
  %v267 = vpack.c.bf16 %v261, %v259
  %v268 = vpack.c.bf16 %v264, %v262
  %v269 = vpack.c.bf16 %v265, %v263
  %v270 = vld [vmem:[%s3] sm:$0xf]
  %v271 = vld [vmem:[%s3 + $0x4] sm:$0xf]
  %v272 = vld [vmem:[%s3 + $0x8] sm:$0xf]
  %v273 = vld [vmem:[%s3 + $0xc] sm:$0xf]
  %v274 = vld [vmem:[%s3 + $0x10] sm:$0xf]
  %v275 = vld [vmem:[%s3 + $0x14] sm:$0xf]
  %v276 = vld [vmem:[%s3 + $0x18] sm:$0xf]
  %v277 = vld [vmem:[%s3 + $0x1c] sm:$0xf]
  %v278 = vld [vmem:[%s3 + $0x20] sm:$0xf]
  %v279 = vld [vmem:[%s3 + $0x24] sm:$0xf]
  %v280 = vld [vmem:[%s3 + $0x28] sm:$0xf]
  %v281 = vld [vmem:[%s3 + $0x2c] sm:$0xf]
  %v282 = vld [vmem:[%s3 + $0x30] sm:$0xf]
  %v283 = vld [vmem:[%s3 + $0x34] sm:$0xf]
  %v284 = vld [vmem:[%s3 + $0x38] sm:$0xf]
  %v285 = vld [vmem:[%s3 + $0x3c] sm:$0xf]
  %v286 = vld [vmem:[%s3 + $0x40] sm:$0xf]
  %v287 = vld [vmem:[%s3 + $0x44] sm:$0xf]
  %v288 = vld [vmem:[%s3 + $0x48] sm:$0xf]
  %v289 = vld [vmem:[%s3 + $0x4c] sm:$0xf]
  %v290 = vld [vmem:[%s3 + $0x50] sm:$0xf]
  %v291 = vld [vmem:[%s3 + $0x54] sm:$0xf]
  %v292 = vld [vmem:[%s3 + $0x58] sm:$0xf]
  %v293 = vld [vmem:[%s3 + $0x5c] sm:$0xf]
  %v294 = vld [vmem:[%s3 + $0x60] sm:$0xf]
  %v295 = vld [vmem:[%s3 + $0x64] sm:$0xf]
  %v296 = vld [vmem:[%s3 + $0x68] sm:$0xf]
  %v297 = vld [vmem:[%s3 + $0x6c] sm:$0xf]
  %v298 = vld [vmem:[%s3 + $0x70] sm:$0xf]
  %v299 = vld [vmem:[%s3 + $0x74] sm:$0xf]
  %v300 = vld [vmem:[%s3 + $0x78] sm:$0xf]
  %v301 = vld [vmem:[%s3 + $0x7c] sm:$0xf]
  %v302 = vld [vmem:[%s4] sm:$0x1]
  %v304 = vlaneseq
  %v305 = vshrl.u32 %v304, 7
  %v306 = vsub.s32 0, %v305
  %v307 = vrot.slane %v302, %v306
  %v341 = vunpack.c.l.b16 %v270
  %v342 = vunpack.c.l.b16 %v271
  %v343 = vunpack.c.l.b16 %v272
  %v344 = vunpack.c.l.b16 %v273
  %v345 = vunpack.c.l.b16 %v274
  %v346 = vunpack.c.l.b16 %v275
  %v347 = vunpack.c.l.b16 %v276
  %v348 = vunpack.c.l.b16 %v277
  %v349 = vunpack.c.l.b16 %v278
  %v350 = vunpack.c.l.b16 %v279
  %v351 = vunpack.c.l.b16 %v280
  %v352 = vunpack.c.l.b16 %v281
  %v353 = vunpack.c.l.b16 %v282
  %v354 = vunpack.c.l.b16 %v283
  %v355 = vunpack.c.l.b16 %v284
  %v356 = vunpack.c.l.b16 %v285
  %v357 = vunpack.c.l.b16 %v286
  %v358 = vunpack.c.l.b16 %v287
  %v359 = vunpack.c.l.b16 %v288
  %v360 = vunpack.c.l.b16 %v289
  %v361 = vunpack.c.l.b16 %v290
  %v362 = vunpack.c.l.b16 %v291
  %v363 = vunpack.c.l.b16 %v292
  %v364 = vunpack.c.l.b16 %v293
  %v365 = vunpack.c.l.b16 %v294
  %v366 = vunpack.c.l.b16 %v295
  %v367 = vunpack.c.l.b16 %v296
  %v368 = vunpack.c.l.b16 %v297
  %v369 = vunpack.c.l.b16 %v298
  %v370 = vunpack.c.l.b16 %v299
  %v371 = vunpack.c.l.b16 %v300
  %v372 = vunpack.c.l.b16 %v301
  %v373 = vpack.c.b16 %v342, %v341
  %v374 = vpack.c.b16 %v344, %v343
  %v375 = vpack.c.b16 %v346, %v345
  %v376 = vpack.c.b16 %v348, %v347
  %v377 = vpack.c.b16 %v350, %v349
  %v378 = vpack.c.b16 %v352, %v351
  %v379 = vpack.c.b16 %v354, %v353
  %v380 = vpack.c.b16 %v356, %v355
  %v381 = vpack.c.b16 %v358, %v357
  %v382 = vpack.c.b16 %v360, %v359
  %v383 = vpack.c.b16 %v362, %v361
  %v384 = vpack.c.b16 %v364, %v363
  %v385 = vpack.c.b16 %v366, %v365
  %v386 = vpack.c.b16 %v368, %v367
  %v387 = vpack.c.b16 %v370, %v369
  %v388 = vpack.c.b16 %v372, %v371
  %405 = vmatprep.subr.bf16.mxu0 0
  %406 = vmatpush1.bf16.msra.mxu0 %v373
  %407 = vmatprep.subr.bf16.mxu0 0
  %408 = vmatpush1.bf16.msra.mxu0 %v374
  %409 = vmatprep.subr.bf16.mxu0 0
  %410 = vmatpush1.bf16.msra.mxu0 %v375
  %411 = vmatprep.subr.bf16.mxu0 0
  %412 = vmatpush1.bf16.msra.mxu0 %v376
  %413 = vmatprep.subr.bf16.mxu0 0
  %414 = vmatpush1.bf16.msra.mxu0 %v377
  %415 = vmatprep.subr.bf16.mxu0 0
  %416 = vmatpush1.bf16.msra.mxu0 %v378
  %417 = vmatprep.subr.bf16.mxu0 0
  %418 = vmatpush1.bf16.msra.mxu0 %v379
  %419 = vmatprep.subr.bf16.mxu0 0
  %420 = vmatpush1.bf16.msra.mxu0 %v380
  %421 = vmatprep.subr.bf16.mxu0 0
  %422 = vmatpush1.bf16.msra.mxu0 %v381
  %423 = vmatprep.subr.bf16.mxu0 0
  %424 = vmatpush1.bf16.msra.mxu0 %v382
  %425 = vmatprep.subr.bf16.mxu0 0
  %426 = vmatpush1.bf16.msra.mxu0 %v383
  %427 = vmatprep.subr.bf16.mxu0 0
  %428 = vmatpush1.bf16.msra.mxu0 %v384
  %429 = vmatprep.subr.bf16.mxu0 0
  %430 = vmatpush1.bf16.msra.mxu0 %v385
  %431 = vmatprep.subr.bf16.mxu0 0
  %432 = vmatpush1.bf16.msra.mxu0 %v386
  %433 = vmatprep.subr.bf16.mxu0 0
  %434 = vmatpush1.bf16.msra.mxu0 %v387
  %435 = vmatprep.subr.bf16.mxu0 0
  %436 = vmatpush1.bf16.msra.mxu0 %v388
  %437 = vmatprep.mubr.bf16.mxu0 %v267
  %438 = vmatmul.mubr.bf16.gmra.mrb[0].mxu0 %v266
  %v439 = vpop.f32.mrb[0].mxu0
  %v440 = vadd.f32 %v307, %v439
  %v441 = vpop.f32.mrb[0].mxu0
  %v442 = vpop.f32.mrb[0].mxu0
  %v443 = vadd.f32 %v307, %v442
  %v444 = vpop.f32.mrb[0].mxu0
  %445 = vmatprep.mubr.bf16.mxu0 %v269
  %446 = vmatmul.mubr.bf16.gmra.mrb[0].mxu0 %v268
  %v447 = vpop.f32.mrb[0].mxu0
  %v448 = vadd.f32 %v307, %v447
  %v449 = vpop.f32.mrb[0].mxu0
  %v450 = vpop.f32.mrb[0].mxu0
  %v451 = vadd.f32 %v307, %v450
  %v452 = vpop.f32.mrb[0].mxu0
  %453 = vdwg.mxu0
  %v454 = vadd.f32 %v27, %v440
  %v455 = vadd.f32 %v28, %v443
  %v456 = vadd.f32 %v29, %v448
  %v457 = vadd.f32 %v30, %v451
  %v458 = vld [vmem:[%s5] sm:$0x1]
  %v459 = vld [vmem:[%s6] sm:$0x1]
  %460 = vadd.xlane.f32.xlu0 %v454
  %v461 = vpop.xlane.xlu0 %460
  %462 = vadd.xlane.f32.xlu0 %v455
  %v463 = vpop.xlane.xlu0 %462
  %464 = vadd.xlane.f32.xlu0 %v456
  %v465 = vpop.xlane.xlu0 %464
  %466 = vadd.xlane.f32.xlu0 %v457
  %v467 = vpop.xlane.xlu0 %466
  %v468 = vrcp.pop 128.0
  %v469 = vmul.f32 %v461, %v468
  %v470 = vmul.f32 %v463, %v468
  %v471 = vmul.f32 %v465, %v468
  %v472 = vmul.f32 %v467, %v468
  %v473 = vsub.f32 %v454, %v469
  %v474 = vsub.f32 %v455, %v470
  %v475 = vsub.f32 %v456, %v471
  %v476 = vsub.f32 %v457, %v472
  %v477 = vmul.f32 %v473, %v473
  %v478 = vmul.f32 %v474, %v474
  %v479 = vmul.f32 %v475, %v475
  %v480 = vmul.f32 %v476, %v476
  %481 = vadd.xlane.f32.xlu0 %v477
  %v482 = vpop.xlane.xlu0 %481
  %483 = vadd.xlane.f32.xlu0 %v478
  %v484 = vpop.xlane.xlu0 %483
  %485 = vadd.xlane.f32.xlu0 %v479
  %v486 = vpop.xlane.xlu0 %485
  %487 = vadd.xlane.f32.xlu0 %v480
  %v488 = vpop.xlane.xlu0 %487
  %v489 = vmul.f32 %v482, %v468
  %v490 = vmul.f32 %v484, %v468
  %v491 = vmul.f32 %v486, %v468
  %v492 = vmul.f32 %v488, %v468
  %v493 = vadd.f32 %v489, 1e-05
  %v494 = vadd.f32 %v490, 1e-05
  %v495 = vadd.f32 %v491, 1e-05
  %v496 = vadd.f32 %v492, 1e-05
  %v497 = vrsqrt.pop %v493
  %v498 = vrsqrt.pop %v494
  %v499 = vrsqrt.pop %v495
  %v500 = vrsqrt.pop %v496
  %v501 = vmul.f32 %v473, %v497
  %v502 = vmul.f32 %v474, %v498
  %v503 = vmul.f32 %v475, %v499
  %v504 = vmul.f32 %v476, %v500
  %v506 = vlaneseq
  %v507 = vshrl.u32 %v506, 7
  %v508 = vsub.s32 0, %v507
  %v509 = vrot.slane %v458, %v508
  %v511 = vmul.f32 %v501, %v509
  %v512 = vmul.f32 %v502, %v509
  %v513 = vmul.f32 %v503, %v509
  %v514 = vmul.f32 %v504, %v509
  %v516 = vlaneseq
  %v517 = vshrl.u32 %v516, 7
  %v518 = vsub.s32 0, %v517
  %v519 = vrot.slane %v459, %v518
  %v521 = vadd.f32 %v511, %v519
  %v522 = vadd.f32 %v512, %v519
  %v523 = vadd.f32 %v513, %v519
  %v524 = vadd.f32 %v514, %v519
  %525 = vst [vmem:[%s7] sm:$0xff] %v521
  %526 = vst [vmem:[%s7 + $0x8] sm:$0xff] %v522
  %527 = vst [vmem:[%s7 + $0x10] sm:$0xff] %v523
  %528 = vst [vmem:[%s7 + $0x18] sm:$0xff] %v524
  // Predicated region
  $region30: #{post_patt_encode.10} parent=0 // pred_check
    _
  $region31: #{post_patt_encode.10} parent=0 // pred_check_branch
    %530 = sbr.rel (0) target = $region33
  $region32: #{post_patt_encode.10} parent=0 // pred_region
    _
  $region33: #{post_patt_encode.10} parent=0 // pred_fallthru
    _
  // Predicated region
  $region34: #{post_patt_encode.10} parent=0 // pred_check
    _
  $region35: #{post_patt_encode.10} parent=0 // pred_check_branch
    %532 = sbr.rel (0) target = $region37
  $region36: #{post_patt_encode.10} parent=0 // pred_region
    _
  $region37: #{post_patt_encode.10} parent=0 // pred_fallthru
    _

// kernel: post_patt_encode.9
$region0: #{post_patt_encode.9}
  #allocation0 [shape = 'u32[]', space=smem, size = 0x4, offset = 0x4, fixed_abs, tag = 'smem constant byte address 0x4 - core index']
  #allocation1 [shape = 'u32[144,128]{1,0:T(1,128)}', space=vmem, size = 0x12000, scoped, tag = 'internal scratch']
  %s0 = inlined_call_operand.vmem [shape: f32[2,16,128], index: 0, kind: input, shape index: {}, may-alias: {0,1}]
  %s1 = inlined_call_operand.vmem [shape: f32[2,16,128], index: 1, kind: input, shape index: {}, may-alias: {0,1}]
  %s2 = inlined_call_operand.vmem [shape: bf16[128,128], index: 2, kind: input, shape index: {}]
  %s3 = inlined_call_operand.vmem [shape: f32[1,128], index: 3, kind: input, shape index: {}]
  %s4 = inlined_call_operand.vmem [shape: bf16[128,128], index: 4, kind: input, shape index: {}]
  %s5 = inlined_call_operand.vmem [shape: f32[1,128], index: 5, kind: input, shape index: {}]
  %s6 = inlined_call_operand.vmem [shape: bf16[128,128], index: 6, kind: input, shape index: {}]
  %s7 = inlined_call_operand.vmem [shape: f32[1,128], index: 7, kind: input, shape index: {}]
  %s8 = inlined_call_operand.vmem [shape: bf16[128,128], index: 8, kind: input, shape index: {}]
  %s9 = inlined_call_operand.vmem [shape: f32[1,128], index: 9, kind: input, shape index: {}]
  %s10 = inlined_call_operand.vmem [shape: f32[1,128], index: 10, kind: input, shape index: {}]
  %s11 = inlined_call_operand.vmem [shape: f32[1,128], index: 11, kind: input, shape index: {}]
  %s12 = inlined_call_operand.vmem [shape: f32[2,16,128], index: 12, kind: output, shape index: {}]
  %s13 = sld [smem:[#allocation0]]
  $region81: #{post_patt_encode.9} parent=0
    _
  %s15 = ssub.s32 1, %s13
  %s16 = scalar_select 0, %s15, %s13
  loop: start=0, step=1, limit=4
  $region2: #{post_patt_encode.9} parent=0 // loop_pre_header
    _
  $region3: #{post_patt_encode.9} parent=0 // loop_header
    %s18 = sphi 0, %s22
    %p19 = scmp.ge.s32.totalorder %s18, 4
    %s25 = sphi 0, %s37
    %s26 = sphi 0, %s33
    %s27 = sphi 0, %s25
    %s28 = sphi 0, %s26
    %s29 = sphi 0, %s27
    %s30 = sphi 0, %s28
    %s42 = sphi 0, %s44
    %s45 = sphi 0, %s42
    %s46 = sphi 0, %s45
    %s62 = sphi 0, %s46
    %s68 = sphi 0, %s70
    %s71 = sphi 0, %s68
    %s72 = sphi 0, %s71
    %s88 = sphi 0, %s72
    %s92 = sphi 0, %s92
    %s94 = sphi 0, %s92
    %s95 = sphi 0, %s94
    %s109 = sphi 0, %s95
    %s113 = sphi 0, %s113
    %s115 = sphi 0, %s113
    %s116 = sphi 0, %s115
    %s130 = sphi 0, %s116
    %s134 = sphi 0, %s134
    %s136 = sphi 0, %s134
    %s137 = sphi 0, %s136
    %s151 = sphi 0, %s137
    %s155 = sphi 0, %s155
    %s157 = sphi 0, %s155
    %s158 = sphi 0, %s157
    %s172 = sphi 0, %s158
    %s176 = sphi 0, %s176
    %s178 = sphi 0, %s176
    %s179 = sphi 0, %s178
    %s193 = sphi 0, %s179
    %s197 = sphi 0, %s197
    %s199 = sphi 0, %s197
    %s200 = sphi 0, %s199
    %s214 = sphi 0, %s200
    %s218 = sphi 0, %s218
    %s220 = sphi 0, %s218
    %s221 = sphi 0, %s220
    %s235 = sphi 0, %s221
    %s239 = sphi 0, %s239
    %s241 = sphi 0, %s239
    %s242 = sphi 0, %s241
    %s256 = sphi 0, %s242
    %s260 = sphi 0, %s260
    %s262 = sphi 0, %s260
    %s263 = sphi 0, %s262
    %s277 = sphi 0, %s263
    %s281 = sphi 0, %s281
    %s283 = sphi 0, %s281
    %s284 = sphi 0, %s283
    %s298 = sphi 0, %s284
    %s306 = sphi 0, %s308
    %s309 = sphi 0, %s306
    %s310 = sphi 0, %s309
    %s326 = sphi 0, %s310
  $region4: #{post_patt_encode.9} parent=0 // loop_header_branch
    %21 = sbr.rel (%p19) target = $region8
  $region5: #{post_patt_encode.9} parent=0 // loop_body
    %s23 = ssub.s32 %s18, 1
    %s24 = ssub.s32 %s18, 2
    %s31 = sadd.s32 1, %s26
    %p32 = scmp.ge.s32.totalorder %s31, 1
    %s33 = scalar_select %p32, 0, %s31
    %s34 = sadd.s32 1, %s25
    %s35 = scalar_select %p32, %s34, %s25
    %p36 = scmp.ge.s32.totalorder %s35, 2
    %s37 = scalar_select %p36, 0, %s35
    %s38 = ssub.s32 %s25, %s37
    %s39 = ssub.s32 %s26, %s33
    %s40 = sor.u32 %s38, %s39
    %p41 = scmp.eq.s32.totalorder %s40, 0
    %s43 = sadd.s32 %s42, 1
    %s44 = scalar_select %p41, %s42, %s43
    %p47 = pneg %p41
    %p48 = scmp.eq.s32.totalorder %s18, 1
    %p49 = por %p47, %p48
    %p50 = scmp.ne.s32.totalorder %s42, %s45
    %p51 = scmp.eq.s32.totalorder %s18, 0
    %p52 = por %p50, %p51
    %p53 = scmp.ne.s32.totalorder %s42, %s45
    %p54 = scmp.eq.s32.totalorder %s23, 1
    %p55 = por %p53, %p54
    %p56 = scmp.ne.s32.totalorder %s45, %s46
    %p57 = scmp.eq.s32.totalorder %s23, 0
    %p58 = por %p56, %p57
    %p59 = scmp.ne.s32.totalorder %s45, %s46
    %p60 = scmp.eq.s32.totalorder %s24, 1
    %p61 = por %p59, %p60
    %p63 = scmp.ne.s32.totalorder %s46, %s62
    %p64 = scmp.eq.s32.totalorder %s24, 0
    %p65 = por %p63, %p64
    %s66 = ssub.s32 %s25, %s37
    %p67 = scmp.eq.s32.totalorder %s66, 0
    %s69 = sadd.s32 %s68, 1
    %s70 = scalar_select %p67, %s68, %s69
    %p73 = pneg %p67
    %p74 = scmp.eq.s32.totalorder %s18, 1
    %p75 = por %p73, %p74
    %p76 = scmp.ne.s32.totalorder %s68, %s71
    %p77 = scmp.eq.s32.totalorder %s18, 0
    %p78 = por %p76, %p77
    %p79 = scmp.ne.s32.totalorder %s68, %s71
    %p80 = scmp.eq.s32.totalorder %s23, 1
    %p81 = por %p79, %p80
    %p82 = scmp.ne.s32.totalorder %s71, %s72
    %p83 = scmp.eq.s32.totalorder %s23, 0
    %p84 = por %p82, %p83
    %p85 = scmp.ne.s32.totalorder %s71, %s72
    %p86 = scmp.eq.s32.totalorder %s24, 1
    %p87 = por %p85, %p86
    %p89 = scmp.ne.s32.totalorder %s72, %s88
    %p90 = scmp.eq.s32.totalorder %s24, 0
    %p91 = por %p89, %p90
    %s93 = sadd.s32 %s92, 1
    %p96 = scmp.eq.s32.totalorder %s18, 1
    %p97 = scmp.ne.s32.totalorder %s92, %s94
    %p98 = scmp.eq.s32.totalorder %s18, 0
    %p99 = por %p97, %p98
    %p100 = scmp.ne.s32.totalorder %s92, %s94
    %p101 = scmp.eq.s32.totalorder %s23, 1
    %p102 = por %p100, %p101
    %p103 = scmp.ne.s32.totalorder %s94, %s95
    %p104 = scmp.eq.s32.totalorder %s23, 0
    %p105 = por %p103, %p104
    %p106 = scmp.ne.s32.totalorder %s94, %s95
    %p107 = scmp.eq.s32.totalorder %s24, 1
    %p108 = por %p106, %p107
    %p110 = scmp.ne.s32.totalorder %s95, %s109
    %p111 = scmp.eq.s32.totalorder %s24, 0
    %p112 = por %p110, %p111
    %s114 = sadd.s32 %s113, 1
    %p117 = scmp.eq.s32.totalorder %s18, 1
    %p118 = scmp.ne.s32.totalorder %s113, %s115
    %p119 = scmp.eq.s32.totalorder %s18, 0
    %p120 = por %p118, %p119
    %p121 = scmp.ne.s32.totalorder %s113, %s115
    %p122 = scmp.eq.s32.totalorder %s23, 1
    %p123 = por %p121, %p122
    %p124 = scmp.ne.s32.totalorder %s115, %s116
    %p125 = scmp.eq.s32.totalorder %s23, 0
    %p126 = por %p124, %p125
    %p127 = scmp.ne.s32.totalorder %s115, %s116
    %p128 = scmp.eq.s32.totalorder %s24, 1
    %p129 = por %p127, %p128
    %p131 = scmp.ne.s32.totalorder %s116, %s130
    %p132 = scmp.eq.s32.totalorder %s24, 0
    %p133 = por %p131, %p132
    %s135 = sadd.s32 %s134, 1
    %p138 = scmp.eq.s32.totalorder %s18, 1
    %p139 = scmp.ne.s32.totalorder %s134, %s136
    %p140 = scmp.eq.s32.totalorder %s18, 0
    %p141 = por %p139, %p140
    %p142 = scmp.ne.s32.totalorder %s134, %s136
    %p143 = scmp.eq.s32.totalorder %s23, 1
    %p144 = por %p142, %p143
    %p145 = scmp.ne.s32.totalorder %s136, %s137
    %p146 = scmp.eq.s32.totalorder %s23, 0
    %p147 = por %p145, %p146
    %p148 = scmp.ne.s32.totalorder %s136, %s137
    %p149 = scmp.eq.s32.totalorder %s24, 1
    %p150 = por %p148, %p149
    %p152 = scmp.ne.s32.totalorder %s137, %s151
    %p153 = scmp.eq.s32.totalorder %s24, 0
    %p154 = por %p152, %p153
    %s156 = sadd.s32 %s155, 1
    %p159 = scmp.eq.s32.totalorder %s18, 1
    %p160 = scmp.ne.s32.totalorder %s155, %s157
    %p161 = scmp.eq.s32.totalorder %s18, 0
    %p162 = por %p160, %p161
    %p163 = scmp.ne.s32.totalorder %s155, %s157
    %p164 = scmp.eq.s32.totalorder %s23, 1
    %p165 = por %p163, %p164
    %p166 = scmp.ne.s32.totalorder %s157, %s158
    %p167 = scmp.eq.s32.totalorder %s23, 0
    %p168 = por %p166, %p167
    %p169 = scmp.ne.s32.totalorder %s157, %s158
    %p170 = scmp.eq.s32.totalorder %s24, 1
    %p171 = por %p169, %p170
    %p173 = scmp.ne.s32.totalorder %s158, %s172
    %p174 = scmp.eq.s32.totalorder %s24, 0
    %p175 = por %p173, %p174
    %s177 = sadd.s32 %s176, 1
    %p180 = scmp.eq.s32.totalorder %s18, 1
    %p181 = scmp.ne.s32.totalorder %s176, %s178
    %p182 = scmp.eq.s32.totalorder %s18, 0
    %p183 = por %p181, %p182
    %p184 = scmp.ne.s32.totalorder %s176, %s178
    %p185 = scmp.eq.s32.totalorder %s23, 1
    %p186 = por %p184, %p185
    %p187 = scmp.ne.s32.totalorder %s178, %s179
    %p188 = scmp.eq.s32.totalorder %s23, 0
    %p189 = por %p187, %p188
    %p190 = scmp.ne.s32.totalorder %s178, %s179
    %p191 = scmp.eq.s32.totalorder %s24, 1
    %p192 = por %p190, %p191
    %p194 = scmp.ne.s32.totalorder %s179, %s193
    %p195 = scmp.eq.s32.totalorder %s24, 0
    %p196 = por %p194, %p195
    %s198 = sadd.s32 %s197, 1
    %p201 = scmp.eq.s32.totalorder %s18, 1
    %p202 = scmp.ne.s32.totalorder %s197, %s199
    %p203 = scmp.eq.s32.totalorder %s18, 0
    %p204 = por %p202, %p203
    %p205 = scmp.ne.s32.totalorder %s197, %s199
    %p206 = scmp.eq.s32.totalorder %s23, 1
    %p207 = por %p205, %p206
    %p208 = scmp.ne.s32.totalorder %s199, %s200
    %p209 = scmp.eq.s32.totalorder %s23, 0
    %p210 = por %p208, %p209
    %p211 = scmp.ne.s32.totalorder %s199, %s200
    %p212 = scmp.eq.s32.totalorder %s24, 1
    %p213 = por %p211, %p212
    %p215 = scmp.ne.s32.totalorder %s200, %s214
    %p216 = scmp.eq.s32.totalorder %s24, 0
    %p217 = por %p215, %p216
    %s219 = sadd.s32 %s218, 1
    %p222 = scmp.eq.s32.totalorder %s18, 1
    %p223 = scmp.ne.s32.totalorder %s218, %s220
    %p224 = scmp.eq.s32.totalorder %s18, 0
    %p225 = por %p223, %p224
    %p226 = scmp.ne.s32.totalorder %s218, %s220
    %p227 = scmp.eq.s32.totalorder %s23, 1
    %p228 = por %p226, %p227
    %p229 = scmp.ne.s32.totalorder %s220, %s221
    %p230 = scmp.eq.s32.totalorder %s23, 0
    %p231 = por %p229, %p230
    %p232 = scmp.ne.s32.totalorder %s220, %s221
    %p233 = scmp.eq.s32.totalorder %s24, 1
    %p234 = por %p232, %p233
    %p236 = scmp.ne.s32.totalorder %s221, %s235
    %p237 = scmp.eq.s32.totalorder %s24, 0
    %p238 = por %p236, %p237
    %s240 = sadd.s32 %s239, 1
    %p243 = scmp.eq.s32.totalorder %s18, 1
    %p244 = scmp.ne.s32.totalorder %s239, %s241
    %p245 = scmp.eq.s32.totalorder %s18, 0
    %p246 = por %p244, %p245
    %p247 = scmp.ne.s32.totalorder %s239, %s241
    %p248 = scmp.eq.s32.totalorder %s23, 1
    %p249 = por %p247, %p248
    %p250 = scmp.ne.s32.totalorder %s241, %s242
    %p251 = scmp.eq.s32.totalorder %s23, 0
    %p252 = por %p250, %p251
    %p253 = scmp.ne.s32.totalorder %s241, %s242
    %p254 = scmp.eq.s32.totalorder %s24, 1
    %p255 = por %p253, %p254
    %p257 = scmp.ne.s32.totalorder %s242, %s256
    %p258 = scmp.eq.s32.totalorder %s24, 0
    %p259 = por %p257, %p258
    %s261 = sadd.s32 %s260, 1
    %p264 = scmp.eq.s32.totalorder %s18, 1
    %p265 = scmp.ne.s32.totalorder %s260, %s262
    %p266 = scmp.eq.s32.totalorder %s18, 0
    %p267 = por %p265, %p266
    %p268 = scmp.ne.s32.totalorder %s260, %s262
    %p269 = scmp.eq.s32.totalorder %s23, 1
    %p270 = por %p268, %p269
    %p271 = scmp.ne.s32.totalorder %s262, %s263
    %p272 = scmp.eq.s32.totalorder %s23, 0
    %p273 = por %p271, %p272
    %p274 = scmp.ne.s32.totalorder %s262, %s263
    %p275 = scmp.eq.s32.totalorder %s24, 1
    %p276 = por %p274, %p275
    %p278 = scmp.ne.s32.totalorder %s263, %s277
    %p279 = scmp.eq.s32.totalorder %s24, 0
    %p280 = por %p278, %p279
    %s282 = sadd.s32 %s281, 1
    %p285 = scmp.eq.s32.totalorder %s18, 1
    %p286 = scmp.ne.s32.totalorder %s281, %s283
    %p287 = scmp.eq.s32.totalorder %s18, 0
    %p288 = por %p286, %p287
    %p289 = scmp.ne.s32.totalorder %s281, %s283
    %p290 = scmp.eq.s32.totalorder %s23, 1
    %p291 = por %p289, %p290
    %p292 = scmp.ne.s32.totalorder %s283, %s284
    %p293 = scmp.eq.s32.totalorder %s23, 0
    %p294 = por %p292, %p293
    %p295 = scmp.ne.s32.totalorder %s283, %s284
    %p296 = scmp.eq.s32.totalorder %s24, 1
    %p297 = por %p295, %p296
    %p299 = scmp.ne.s32.totalorder %s284, %s298
    %p300 = scmp.eq.s32.totalorder %s24, 0
    %p301 = por %p299, %p300
    %s302 = ssub.s32 %s25, %s37
    %s303 = ssub.s32 %s26, %s33
    %s304 = sor.u32 %s302, %s303
    %p305 = scmp.eq.s32.totalorder %s304, 0
    %s307 = sadd.s32 %s306, 1
    %s308 = scalar_select %p305, %s306, %s307
    %p311 = pneg %p305
    %p312 = scmp.eq.s32.totalorder %s18, 1
    %p313 = por %p311, %p312
    %p314 = scmp.ne.s32.totalorder %s306, %s309
    %p315 = scmp.eq.s32.totalorder %s18, 0
    %p316 = por %p314, %p315
    %p317 = scmp.ne.s32.totalorder %s306, %s309
    %p318 = scmp.eq.s32.totalorder %s23, 1
    %p319 = por %p317, %p318
    %p320 = scmp.ne.s32.totalorder %s309, %s310
    %p321 = scmp.eq.s32.totalorder %s23, 0
    %p322 = por %p320, %p321
    %p323 = scmp.ne.s32.totalorder %s309, %s310
    %p324 = scmp.eq.s32.totalorder %s24, 1
    %p325 = por %p323, %p324
    %p327 = scmp.ne.s32.totalorder %s310, %s326
    %p328 = scmp.eq.s32.totalorder %s24, 0
    %p329 = por %p327, %p328
    %p330 = scmp.le.s32.totalorder 1, %s18
    %p331 = scmp.lt.s32.totalorder %s18, 3
    %p332 = pnand %p330, %p331
    %p333 = pneg %p332
    // Predicated region
    $region9: #{post_patt_encode.9} parent=5 // pred_check
      _
    $region10: #{post_patt_encode.9} parent=5 // pred_check_branch
      %335 = sbr.rel (%p332) target = $region12
    $region11: #{post_patt_encode.9} parent=5 // pred_region
      %s336 = ssub.s32 %s18, 1
      // Predicated region
      $region13: #{post_patt_encode.9} parent=11 // pred_check
        %p337 = pneg %p105
      $region14: #{post_patt_encode.9} parent=11 // pred_check_branch
        %339 = sbr.rel (%p337) target = $region16
      $region15: #{post_patt_encode.9} parent=11 // pred_region
        _
      $region16: #{post_patt_encode.9} parent=11 // pred_fallthru
        _
      // Predicated region
      $region17: #{post_patt_encode.9} parent=11 // pred_check
        %p340 = pneg %p126
      $region18: #{post_patt_encode.9} parent=11 // pred_check_branch
        %342 = sbr.rel (%p340) target = $region20
      $region19: #{post_patt_encode.9} parent=11 // pred_region
        _
      $region20: #{post_patt_encode.9} parent=11 // pred_fallthru
        _
      // Predicated region
      $region21: #{post_patt_encode.9} parent=11 // pred_check
        %p343 = pneg %p147
      $region22: #{post_patt_encode.9} parent=11 // pred_check_branch
        %345 = sbr.rel (%p343) target = $region24
      $region23: #{post_patt_encode.9} parent=11 // pred_region
        _
      $region24: #{post_patt_encode.9} parent=11 // pred_fallthru
        _
      // Predicated region
      $region25: #{post_patt_encode.9} parent=11 // pred_check
        %p346 = pneg %p168
      $region26: #{post_patt_encode.9} parent=11 // pred_check_branch
        %348 = sbr.rel (%p346) target = $region28
      $region27: #{post_patt_encode.9} parent=11 // pred_region
        _
      $region28: #{post_patt_encode.9} parent=11 // pred_fallthru
        _
      // Predicated region
      $region29: #{post_patt_encode.9} parent=11 // pred_check
        %p349 = pneg %p189
      $region30: #{post_patt_encode.9} parent=11 // pred_check_branch
        %351 = sbr.rel (%p349) target = $region32
      $region31: #{post_patt_encode.9} parent=11 // pred_region
        _
      $region32: #{post_patt_encode.9} parent=11 // pred_fallthru
        _
      // Predicated region
      $region33: #{post_patt_encode.9} parent=11 // pred_check
        %p352 = pneg %p210
      $region34: #{post_patt_encode.9} parent=11 // pred_check_branch
        %354 = sbr.rel (%p352) target = $region36
      $region35: #{post_patt_encode.9} parent=11 // pred_region
        _
      $region36: #{post_patt_encode.9} parent=11 // pred_fallthru
        _
      // Predicated region
      $region37: #{post_patt_encode.9} parent=11 // pred_check
        %p355 = pneg %p231
      $region38: #{post_patt_encode.9} parent=11 // pred_check_branch
        %357 = sbr.rel (%p355) target = $region40
      $region39: #{post_patt_encode.9} parent=11 // pred_region
        _
      $region40: #{post_patt_encode.9} parent=11 // pred_fallthru
        _
      // Predicated region
      $region41: #{post_patt_encode.9} parent=11 // pred_check
        %p358 = pneg %p252
      $region42: #{post_patt_encode.9} parent=11 // pred_check_branch
        %360 = sbr.rel (%p358) target = $region44
      $region43: #{post_patt_encode.9} parent=11 // pred_region
        _
      $region44: #{post_patt_encode.9} parent=11 // pred_fallthru
        _
      // Predicated region
      $region45: #{post_patt_encode.9} parent=11 // pred_check
        %p361 = pneg %p273
      $region46: #{post_patt_encode.9} parent=11 // pred_check_branch
        %363 = sbr.rel (%p361) target = $region48
      $region47: #{post_patt_encode.9} parent=11 // pred_region
        _
      $region48: #{post_patt_encode.9} parent=11 // pred_fallthru
        _
      // Predicated region
      $region49: #{post_patt_encode.9} parent=11 // pred_check
        %p364 = pneg %p294
      $region50: #{post_patt_encode.9} parent=11 // pred_check_branch
        %366 = sbr.rel (%p364) target = $region52
      $region51: #{post_patt_encode.9} parent=11 // pred_region
        _
      $region52: #{post_patt_encode.9} parent=11 // pred_fallthru
        _
    $region12: #{post_patt_encode.9} parent=5 // pred_fallthru
      _
    %p367 = scmp.lt.s32.totalorder %s18, 2
    // Predicated region
    $region53: #{post_patt_encode.9} parent=5 // pred_check
      %p368 = pneg %p367
    $region54: #{post_patt_encode.9} parent=5 // pred_check_branch
      %370 = sbr.rel (%p368) target = $region56
    $region55: #{post_patt_encode.9} parent=5 // pred_region
      // Predicated region
      $region57: #{post_patt_encode.9} parent=55 // pred_check
        %p371 = pneg %p52
      $region58: #{post_patt_encode.9} parent=55 // pred_check_branch
        %373 = sbr.rel (%p371) target = $region60
      $region59: #{post_patt_encode.9} parent=55 // pred_region
        %s374 = smul.u32 2, %s26
        %p375 = scmp.lt.s32.totalorder %s25, 1
        %s376 = scalar_select %p375, %s25, 1
        %p377 = scmp.lt.s32.totalorder %s374, 1
        %s378 = scalar_select %p377, %s374, 1
        %s379 = smul.addr %s376, 2
        %s380 = sadd.s32 %s378, %s379
        %s381 = smul.addr %s380, 8
        %s382 = scalar_lea.vmem %s0, %s381
        %s383 = smul.u32 2, %s26
      $region60: #{post_patt_encode.9} parent=55 // pred_fallthru
        _
      // Predicated region
      $region61: #{post_patt_encode.9} parent=55 // pred_check
        %p384 = pneg %p78
      $region62: #{post_patt_encode.9} parent=55 // pred_check_branch
        %386 = sbr.rel (%p384) target = $region64
      $region63: #{post_patt_encode.9} parent=55 // pred_region
        %p387 = scmp.lt.s32.totalorder %s25, 1
        %s388 = scalar_select %p387, %s25, 1
        %s389 = smul.addr %s388, 2
        %s390 = smul.addr %s389, 8
        %s391 = scalar_lea.vmem %s1, %s390
      $region64: #{post_patt_encode.9} parent=55 // pred_fallthru
        _
    $region56: #{post_patt_encode.9} parent=5 // pred_fallthru
      _
    %p392 = scmp.le.s32.totalorder 1, %s18
    %p393 = scmp.lt.s32.totalorder %s18, 3
    %p394 = pnand %p392, %p393
    %p395 = pneg %p394
    // Predicated region
    $region65: #{post_patt_encode.9} parent=5 // pred_check
      _
    $region66: #{post_patt_encode.9} parent=5 // pred_check_branch
      %397 = sbr.rel (%p394) target = $region68
    $region67: #{post_patt_encode.9} parent=5 // pred_region
      %s398 = ssub.s32 %s18, 1
      %s399 = smul.u32 2, %s28
      %p400 = scmp.lt.s32.totalorder %s27, 1
      %s401 = scalar_select %p400, %s27, 1
      %p402 = scmp.lt.s32.totalorder %s399, 1
      %s403 = scalar_select %p402, %s399, 1
      %s404 = smul.addr %s401, 2
      %s405 = sadd.s32 %s403, %s404
      %s406 = smul.addr %s405, 8
      %s407 = scalar_lea.vmem %s0, %s406
      %p408 = pneg %p58
      %p409 = pneg %p55
      %p410 = scmp.lt.s32.totalorder %s27, 1
      %s411 = scalar_select %p410, %s27, 1
      %s412 = smul.addr %s411, 2
      %s413 = smul.addr %s412, 8
      %s414 = scalar_lea.vmem %s1, %s413
      %p415 = pneg %p84
      %p416 = pneg %p81
      %p417 = pneg %p105
      %p418 = pneg %p102
      %p419 = pneg %p126
      %p420 = pneg %p123
      %p421 = pneg %p147
      %p422 = pneg %p144
      %p423 = pneg %p168
      %p424 = pneg %p165
      %p425 = pneg %p189
      %p426 = pneg %p186
      %p427 = pneg %p210
      %p428 = pneg %p207
      %p429 = pneg %p231
      %p430 = pneg %p228
      %p431 = pneg %p252
      %p432 = pneg %p249
      %p433 = pneg %p273
      %p434 = pneg %p270
      %p435 = pneg %p294
      %p436 = pneg %p291
      %p437 = pneg %p322
      %p438 = pneg %p319
      %s439 = smul.u32 2, %s28
      %p440 = scmp.lt.s32.totalorder %s27, 1
      %s441 = scalar_select %p440, %s27, 1
      %p442 = scmp.lt.s32.totalorder %s439, 1
      %s443 = scalar_select %p442, %s439, 1
      %s444 = smul.addr %s441, 2
      %s445 = sadd.s32 %s443, %s444
      %s446 = smul.addr %s445, 8
      %s447 = scalar_lea.vmem %s12, %s446
      %s448 = smul.u32 2, %s28
      %p449 = scmp.lt.s32.totalorder %s27, 1
      %s450 = scalar_select %p449, %s27, 1
      %p451 = scmp.lt.s32.totalorder %s448, 1
      %s452 = scalar_select %p451, %s448, 1
      %s453 = smul.addr %s450, 2
      %s454 = sadd.s32 %s452, %s453
      %s455 = smul.addr %s454, 8
      %s456 = scalar_lea.vmem %s0, %s455
      %s457 = smul.u32 2, %s28
      %p458 = scmp.lt.s32.totalorder %s27, 1
      %s459 = scalar_select %p458, %s27, 1
      %s460 = smul.addr %s459, 2
      %s461 = smul.addr %s460, 8
      %s462 = scalar_lea.vmem %s1, %s461
      %s463 = smul.u32 2, %s28
      %p464 = scmp.lt.s32.totalorder %s27, 1
      %s465 = scalar_select %p464, %s27, 1
      %p466 = scmp.lt.s32.totalorder %s463, 1
      %s467 = scalar_select %p466, %s463, 1
      %s468 = smul.addr %s465, 2
      %s469 = sadd.s32 %s467, %s468
      %s470 = smul.addr %s469, 8
      %s471 = scalar_lea.vmem %s12, %s470
      %s472 = smul.u32 2, %s28
      %v474 = vld [vmem:[%s456] sm:$0xff]
      %v475 = vld [vmem:[%s456 + $0x8] sm:$0xff]
      %v476 = vpack.c.bf16 %v475, %v474
      %v477 = vld [vmem:[%s462] sm:$0xff]
      %v478 = vld [vmem:[%s462 + $0x8] sm:$0xff]
      %v479 = vpack.c.bf16 %v478, %v477
      %v480 = vld [vmem:[%s2] sm:$0xf]
      %v481 = vld [vmem:[%s2 + $0x4] sm:$0xf]
      %v482 = vld [vmem:[%s2 + $0x8] sm:$0xf]
      %v483 = vld [vmem:[%s2 + $0xc] sm:$0xf]
      %v484 = vld [vmem:[%s2 + $0x10] sm:$0xf]
      %v485 = vld [vmem:[%s2 + $0x14] sm:$0xf]
      %v486 = vld [vmem:[%s2 + $0x18] sm:$0xf]
      %v487 = vld [vmem:[%s2 + $0x1c] sm:$0xf]
      %v488 = vld [vmem:[%s2 + $0x20] sm:$0xf]
      %v489 = vld [vmem:[%s2 + $0x24] sm:$0xf]
      %v490 = vld [vmem:[%s2 + $0x28] sm:$0xf]
      %v491 = vld [vmem:[%s2 + $0x2c] sm:$0xf]
      %v492 = vld [vmem:[%s2 + $0x30] sm:$0xf]
      %v493 = vld [vmem:[%s2 + $0x34] sm:$0xf]
      %v494 = vld [vmem:[%s2 + $0x38] sm:$0xf]
      %v495 = vld [vmem:[%s2 + $0x3c] sm:$0xf]
      %v496 = vld [vmem:[%s3] sm:$0x1]
      %v498 = vlaneseq
      %v499 = vshrl.u32 %v498, 7
      %v500 = vsub.s32 0, %v499
      %v501 = vrot.slane %v496, %v500
      %v519 = vunpack.c.l.b16 %v480
      %v520 = vunpack.c.l.b16 %v481
      %v521 = vunpack.c.l.b16 %v482
      %v522 = vunpack.c.l.b16 %v483
      %v523 = vunpack.c.l.b16 %v484
      %v524 = vunpack.c.l.b16 %v485
      %v525 = vunpack.c.l.b16 %v486
      %v526 = vunpack.c.l.b16 %v487
      %v527 = vunpack.c.l.b16 %v488
      %v528 = vunpack.c.l.b16 %v489
      %v529 = vunpack.c.l.b16 %v490
      %v530 = vunpack.c.l.b16 %v491
      %v531 = vunpack.c.l.b16 %v492
      %v532 = vunpack.c.l.b16 %v493
      %v533 = vunpack.c.l.b16 %v494
      %v534 = vunpack.c.l.b16 %v495
      %v535 = vpack.c.b16 %v520, %v519
      %v536 = vpack.c.b16 %v522, %v521
      %v537 = vpack.c.b16 %v524, %v523
      %v538 = vpack.c.b16 %v526, %v525
      %v539 = vpack.c.b16 %v528, %v527
      %v540 = vpack.c.b16 %v530, %v529
      %v541 = vpack.c.b16 %v532, %v531
      %v542 = vpack.c.b16 %v534, %v533
      %551 = vmatprep.subr.bf16.mxu0 0
      %552 = vmatpush1.bf16.msra.mxu0 %v535
      %553 = vmatprep.subr.bf16.mxu0 0
      %554 = vmatpush1.bf16.msra.mxu0 %v536
      %555 = vmatprep.subr.bf16.mxu0 0
      %556 = vmatpush1.bf16.msra.mxu0 %v537
      %557 = vmatprep.subr.bf16.mxu0 0
      %558 = vmatpush1.bf16.msra.mxu0 %v538
      %559 = vmatprep.subr.bf16.mxu0 0
      %560 = vmatpush1.bf16.msra.mxu0 %v539
      %561 = vmatprep.subr.bf16.mxu0 0
      %562 = vmatpush1.bf16.msra.mxu0 %v540
      %563 = vmatprep.subr.bf16.mxu0 0
      %564 = vmatpush1.bf16.msra.mxu0 %v541
      %565 = vmatprep.subr.bf16.mxu0 0
      %566 = vmatpush1.bf16.msra.mxu0 %v542
      %567 = vmatprep.subr.bf16.mxu0 0
      %568 = vmatpush1.bf16.msra.mxu0 0
      %569 = vmatprep.subr.bf16.mxu0 0
      %570 = vmatpush1.bf16.msra.mxu0 0
      %571 = vmatprep.subr.bf16.mxu0 0
      %572 = vmatpush1.bf16.msra.mxu0 0
      %573 = vmatprep.subr.bf16.mxu0 0
      %574 = vmatpush1.bf16.msra.mxu0 0
      %575 = vmatprep.subr.bf16.mxu0 0
      %576 = vmatpush1.bf16.msra.mxu0 0
      %577 = vmatprep.subr.bf16.mxu0 0
      %578 = vmatpush1.bf16.msra.mxu0 0
      %579 = vmatprep.subr.bf16.mxu0 0
      %580 = vmatpush1.bf16.msra.mxu0 0
      %581 = vmatprep.subr.bf16.mxu0 0
      %582 = vmatpush1.bf16.msra.mxu0 0
      %583 = vmatprep.mubr.bf16.mxu0 0
      %584 = vmatmul.mubr.bf16.gmra.mrb[0].mxu0 %v476
      %v585 = vpop.f32.mrb[0].mxu0
      %v586 = vadd.f32 %v501, %v585
      %v587 = vpop.f32.mrb[0].mxu0
      %v588 = vpop.f32.mrb[0].mxu0
      %v589 = vadd.f32 %v501, %v588
      %v590 = vpop.f32.mrb[0].mxu0
      %591 = vdwg.mxu0
      %v592 = vpack.c.bf16 %v589, %v586
      %v593 = vld [vmem:[%s4] sm:$0xf]
      %v594 = vld [vmem:[%s4 + $0x4] sm:$0xf]
      %v595 = vld [vmem:[%s4 + $0x8] sm:$0xf]
      %v596 = vld [vmem:[%s4 + $0xc] sm:$0xf]
      %v597 = vld [vmem:[%s4 + $0x10] sm:$0xf]
      %v598 = vld [vmem:[%s4 + $0x14] sm:$0xf]
      %v599 = vld [vmem:[%s4 + $0x18] sm:$0xf]
      %v600 = vld [vmem:[%s4 + $0x1c] sm:$0xf]
      %v601 = vld [vmem:[%s4 + $0x20] sm:$0xf]
      %v602 = vld [vmem:[%s4 + $0x24] sm:$0xf]
      %v603 = vld [vmem:[%s4 + $0x28] sm:$0xf]
      %v604 = vld [vmem:[%s4 + $0x2c] sm:$0xf]
      %v605 = vld [vmem:[%s4 + $0x30] sm:$0xf]
      %v606 = vld [vmem:[%s4 + $0x34] sm:$0xf]
      %v607 = vld [vmem:[%s4 + $0x38] sm:$0xf]
      %v608 = vld [vmem:[%s4 + $0x3c] sm:$0xf]
      %v609 = vld [vmem:[%s5] sm:$0x1]
      %v611 = vlaneseq
      %v612 = vshrl.u32 %v611, 7
      %v613 = vsub.s32 0, %v612
      %v614 = vrot.slane %v609, %v613
      %v632 = vunpack.c.l.b16 %v593
      %v633 = vunpack.c.l.b16 %v594
      %v634 = vunpack.c.l.b16 %v595
      %v635 = vunpack.c.l.b16 %v596
      %v636 = vunpack.c.l.b16 %v597
      %v637 = vunpack.c.l.b16 %v598
      %v638 = vunpack.c.l.b16 %v599
      %v639 = vunpack.c.l.b16 %v600
      %v640 = vunpack.c.l.b16 %v601
      %v641 = vunpack.c.l.b16 %v602
      %v642 = vunpack.c.l.b16 %v603
      %v643 = vunpack.c.l.b16 %v604
      %v644 = vunpack.c.l.b16 %v605
      %v645 = vunpack.c.l.b16 %v606
      %v646 = vunpack.c.l.b16 %v607
      %v647 = vunpack.c.l.b16 %v608
      %v648 = vpack.c.b16 %v633, %v632
      %v649 = vpack.c.b16 %v635, %v634
      %v650 = vpack.c.b16 %v637, %v636
      %v651 = vpack.c.b16 %v639, %v638
      %v652 = vpack.c.b16 %v641, %v640
      %v653 = vpack.c.b16 %v643, %v642
      %v654 = vpack.c.b16 %v645, %v644
      %v655 = vpack.c.b16 %v647, %v646
      %664 = vmatprep.subr.bf16.mxu0 0
      %665 = vmatpush1.bf16.msra.mxu0 %v648
      %666 = vmatprep.subr.bf16.mxu0 0
      %667 = vmatpush1.bf16.msra.mxu0 %v649
      %668 = vmatprep.subr.bf16.mxu0 0
      %669 = vmatpush1.bf16.msra.mxu0 %v650
      %670 = vmatprep.subr.bf16.mxu0 0
      %671 = vmatpush1.bf16.msra.mxu0 %v651
      %672 = vmatprep.subr.bf16.mxu0 0
      %673 = vmatpush1.bf16.msra.mxu0 %v652
      %674 = vmatprep.subr.bf16.mxu0 0
      %675 = vmatpush1.bf16.msra.mxu0 %v653
      %676 = vmatprep.subr.bf16.mxu0 0
      %677 = vmatpush1.bf16.msra.mxu0 %v654
      %678 = vmatprep.subr.bf16.mxu0 0
      %679 = vmatpush1.bf16.msra.mxu0 %v655
      %680 = vmatprep.subr.bf16.mxu0 0
      %681 = vmatpush1.bf16.msra.mxu0 0
      %682 = vmatprep.subr.bf16.mxu0 0
      %683 = vmatpush1.bf16.msra.mxu0 0
      %684 = vmatprep.subr.bf16.mxu0 0
      %685 = vmatpush1.bf16.msra.mxu0 0
      %686 = vmatprep.subr.bf16.mxu0 0
      %687 = vmatpush1.bf16.msra.mxu0 0
      %688 = vmatprep.subr.bf16.mxu0 0
      %689 = vmatpush1.bf16.msra.mxu0 0
      %690 = vmatprep.subr.bf16.mxu0 0
      %691 = vmatpush1.bf16.msra.mxu0 0
      %692 = vmatprep.subr.bf16.mxu0 0
      %693 = vmatpush1.bf16.msra.mxu0 0
      %694 = vmatprep.subr.bf16.mxu0 0
      %695 = vmatpush1.bf16.msra.mxu0 0
      %696 = vmatprep.mubr.bf16.mxu0 0
      %697 = vmatmul.mubr.bf16.gmra.mrb[0].mxu0 %v479
      %v698 = vpop.f32.mrb[0].mxu0
      %v699 = vadd.f32 %v614, %v698
      %v700 = vpop.f32.mrb[0].mxu0
      %v701 = vpop.f32.mrb[0].mxu0
      %v702 = vadd.f32 %v614, %v701
      %v703 = vpop.f32.mrb[0].mxu0
      %704 = vdwg.mxu0
      %v705 = vpack.c.bf16 %v702, %v699
      %v706 = vld [vmem:[%s6] sm:$0xf]
      %v707 = vld [vmem:[%s6 + $0x4] sm:$0xf]
      %v708 = vld [vmem:[%s6 + $0x8] sm:$0xf]
      %v709 = vld [vmem:[%s6 + $0xc] sm:$0xf]
      %v710 = vld [vmem:[%s6 + $0x10] sm:$0xf]
      %v711 = vld [vmem:[%s6 + $0x14] sm:$0xf]
      %v712 = vld [vmem:[%s6 + $0x18] sm:$0xf]
      %v713 = vld [vmem:[%s6 + $0x1c] sm:$0xf]
      %v714 = vld [vmem:[%s6 + $0x20] sm:$0xf]
      %v715 = vld [vmem:[%s6 + $0x24] sm:$0xf]
      %v716 = vld [vmem:[%s6 + $0x28] sm:$0xf]
      %v717 = vld [vmem:[%s6 + $0x2c] sm:$0xf]
      %v718 = vld [vmem:[%s6 + $0x30] sm:$0xf]
      %v719 = vld [vmem:[%s6 + $0x34] sm:$0xf]
      %v720 = vld [vmem:[%s6 + $0x38] sm:$0xf]
      %v721 = vld [vmem:[%s6 + $0x3c] sm:$0xf]
      %v722 = vld [vmem:[%s7] sm:$0x1]
      %v724 = vlaneseq
      %v725 = vshrl.u32 %v724, 7
      %v726 = vsub.s32 0, %v725
      %v727 = vrot.slane %v722, %v726
      %v745 = vunpack.c.l.b16 %v706
      %v746 = vunpack.c.l.b16 %v707
      %v747 = vunpack.c.l.b16 %v708
      %v748 = vunpack.c.l.b16 %v709
      %v749 = vunpack.c.l.b16 %v710
      %v750 = vunpack.c.l.b16 %v711
      %v751 = vunpack.c.l.b16 %v712
      %v752 = vunpack.c.l.b16 %v713
      %v753 = vunpack.c.l.b16 %v714
      %v754 = vunpack.c.l.b16 %v715
      %v755 = vunpack.c.l.b16 %v716
      %v756 = vunpack.c.l.b16 %v717
      %v757 = vunpack.c.l.b16 %v718
      %v758 = vunpack.c.l.b16 %v719
      %v759 = vunpack.c.l.b16 %v720
      %v760 = vunpack.c.l.b16 %v721
      %v761 = vpack.c.b16 %v746, %v745
      %v762 = vpack.c.b16 %v748, %v747
      %v763 = vpack.c.b16 %v750, %v749
      %v764 = vpack.c.b16 %v752, %v751
      %v765 = vpack.c.b16 %v754, %v753
      %v766 = vpack.c.b16 %v756, %v755
      %v767 = vpack.c.b16 %v758, %v757
      %v768 = vpack.c.b16 %v760, %v759
      %777 = vmatprep.subr.bf16.mxu0 0
      %778 = vmatpush1.bf16.msra.mxu0 %v761
      %779 = vmatprep.subr.bf16.mxu0 0
      %780 = vmatpush1.bf16.msra.mxu0 %v762
      %781 = vmatprep.subr.bf16.mxu0 0
      %782 = vmatpush1.bf16.msra.mxu0 %v763
      %783 = vmatprep.subr.bf16.mxu0 0
      %784 = vmatpush1.bf16.msra.mxu0 %v764
      %785 = vmatprep.subr.bf16.mxu0 0
      %786 = vmatpush1.bf16.msra.mxu0 %v765
      %787 = vmatprep.subr.bf16.mxu0 0
      %788 = vmatpush1.bf16.msra.mxu0 %v766
      %789 = vmatprep.subr.bf16.mxu0 0
      %790 = vmatpush1.bf16.msra.mxu0 %v767
      %791 = vmatprep.subr.bf16.mxu0 0
      %792 = vmatpush1.bf16.msra.mxu0 %v768
      %793 = vmatprep.subr.bf16.mxu0 0
      %794 = vmatpush1.bf16.msra.mxu0 0
      %795 = vmatprep.subr.bf16.mxu0 0
      %796 = vmatpush1.bf16.msra.mxu0 0
      %797 = vmatprep.subr.bf16.mxu0 0
      %798 = vmatpush1.bf16.msra.mxu0 0
      %799 = vmatprep.subr.bf16.mxu0 0
      %800 = vmatpush1.bf16.msra.mxu0 0
      %801 = vmatprep.subr.bf16.mxu0 0
      %802 = vmatpush1.bf16.msra.mxu0 0
      %803 = vmatprep.subr.bf16.mxu0 0
      %804 = vmatpush1.bf16.msra.mxu0 0
      %805 = vmatprep.subr.bf16.mxu0 0
      %806 = vmatpush1.bf16.msra.mxu0 0
      %807 = vmatprep.subr.bf16.mxu0 0
      %808 = vmatpush1.bf16.msra.mxu0 0
      %809 = vmatprep.mubr.bf16.mxu0 0
      %810 = vmatmul.mubr.bf16.gmra.mrb[0].mxu0 %v479
      %v811 = vpop.f32.mrb[0].mxu0
      %v812 = vadd.f32 %v727, %v811
      %v813 = vpop.f32.mrb[0].mxu0
      %v814 = vpop.f32.mrb[0].mxu0
      %v815 = vadd.f32 %v727, %v814
      %v816 = vpop.f32.mrb[0].mxu0
      %817 = vdwg.mxu0
      %v818 = vpack.c.bf16 %v815, %v812
      %vm819 = vcmask 261120
      %v821 = vsel %vm819, %v592, 0
      %v824 = vsel %vm819, %v705, 0
      %826 = vmatprep.subr.bf16.mxu0 0
      %827 = vmatpush1.bf16.xpose.msra.mxu0 %v824
      %828 = vmatprep.subr.bf16.mxu0 0
      %829 = vmatpush1.bf16.xpose.msra.mxu0 0
      %830 = vmatprep.subr.bf16.mxu0 0
      %831 = vmatpush1.bf16.xpose.msra.mxu0 0
      %832 = vmatprep.subr.bf16.mxu0 0
      %833 = vmatpush1.bf16.xpose.msra.mxu0 0
      %834 = vmatprep.subr.bf16.mxu0 0
      %835 = vmatpush1.bf16.xpose.msra.mxu0 0
      %836 = vmatprep.subr.bf16.mxu0 0
      %837 = vmatpush1.bf16.xpose.msra.mxu0 0
      %838 = vmatprep.subr.bf16.mxu0 0
      %839 = vmatpush1.bf16.xpose.msra.mxu0 0
      %840 = vmatprep.subr.bf16.mxu0 0
      %841 = vmatpush1.bf16.xpose.msra.mxu0 0
      %842 = vmatprep.subr.bf16.mxu0 0
      %843 = vmatpush1.bf16.xpose.msra.mxu0 0
      %844 = vmatprep.subr.bf16.mxu0 0
      %845 = vmatpush1.bf16.xpose.msra.mxu0 0
      %846 = vmatprep.subr.bf16.mxu0 0
      %847 = vmatpush1.bf16.xpose.msra.mxu0 0
      %848 = vmatprep.subr.bf16.mxu0 0
      %849 = vmatpush1.bf16.xpose.msra.mxu0 0
      %850 = vmatprep.subr.bf16.mxu0 0
      %851 = vmatpush1.bf16.xpose.msra.mxu0 0
      %852 = vmatprep.subr.bf16.mxu0 0
      %853 = vmatpush1.bf16.xpose.msra.mxu0 0
      %854 = vmatprep.subr.bf16.mxu0 0
      %855 = vmatpush1.bf16.xpose.msra.mxu0 0
      %856 = vmatprep.subr.bf16.mxu0 0
      %857 = vmatpush1.bf16.xpose.msra.mxu0 0
      %858 = vmatprep.mubr.bf16.mxu0 0
      %859 = vmatmul.mubr.bf16.gmra.mrb[0].mxu0 %v821
      %v860 = vpop.f32.mrb[0].mxu0
      %v861 = vadd.f32 0.0, %v860
      %v862 = vpop.f32.mrb[0].mxu0
      %v863 = vpop.f32.mrb[0].mxu0
      %v864 = vadd.f32 0.0, %v863
      %v865 = vpop.f32.mrb[0].mxu0
      %866 = vdwg.mxu0
      %vm867 = vcmask 130048
      %v868 = vsel %vm867, %v861, -inf
      %869 = vmax.xlane.f32.xlu0 %v868
      %v870 = vpop.xlane.xlu0 %869
      %v871 = vsel %vm867, %v864, -inf
      %872 = vmax.xlane.f32.xlu0 %v871
      %v873 = vpop.xlane.xlu0 %872
      %v874 = vsub.f32 %v861, %v870
      %v875 = vsub.f32 %v864, %v873
      %v876 = vmul.f32 %v874, 1.442695
      %v877 = vpow.pop %v876
      %v878 = vmul.f32 %v875, 1.442695
      %v879 = vpow.pop %v878
      %v880 = vsel %vm867, %v877, 0.0
      %881 = vadd.xlane.f32.xlu0 %v880
      %v882 = vpop.xlane.xlu0 %881
      %v883 = vsel %vm867, %v879, 0.0
      %884 = vadd.xlane.f32.xlu0 %v883
      %v885 = vpop.xlane.xlu0 %884
      %v886 = vrcp.pop %v882
      %v887 = vrcp.pop %v885
      %v888 = vpack.c.bf16 %v879, %v877
      %v890 = vsel %vm867, %v888, 0
      %892 = vmatprep.subr.bf16.mxu0 0
      %893 = vmatpush1.bf16.msra.mxu0 %v818
      %894 = vmatprep.subr.bf16.mxu0 0
      %895 = vmatpush1.bf16.msra.mxu0 0
      %896 = vmatprep.subr.bf16.mxu0 0
      %897 = vmatpush1.bf16.msra.mxu0 0
      %898 = vmatprep.subr.bf16.mxu0 0
      %899 = vmatpush1.bf16.msra.mxu0 0
      %900 = vmatprep.subr.bf16.mxu0 0
      %901 = vmatpush1.bf16.msra.mxu0 0
      %902 = vmatprep.subr.bf16.mxu0 0
      %903 = vmatpush1.bf16.msra.mxu0 0
      %904 = vmatprep.subr.bf16.mxu0 0
      %905 = vmatpush1.bf16.msra.mxu0 0
      %906 = vmatprep.subr.bf16.mxu0 0
      %907 = vmatpush1.bf16.msra.mxu0 0
      %908 = vmatprep.subr.bf16.mxu0 0
      %909 = vmatpush1.bf16.msra.mxu0 0
      %910 = vmatprep.subr.bf16.mxu0 0
      %911 = vmatpush1.bf16.msra.mxu0 0
      %912 = vmatprep.subr.bf16.mxu0 0
      %913 = vmatpush1.bf16.msra.mxu0 0
      %914 = vmatprep.subr.bf16.mxu0 0
      %915 = vmatpush1.bf16.msra.mxu0 0
      %916 = vmatprep.subr.bf16.mxu0 0
      %917 = vmatpush1.bf16.msra.mxu0 0
      %918 = vmatprep.subr.bf16.mxu0 0
      %919 = vmatpush1.bf16.msra.mxu0 0
      %920 = vmatprep.subr.bf16.mxu0 0
      %921 = vmatpush1.bf16.msra.mxu0 0
      %922 = vmatprep.subr.bf16.mxu0 0
      %923 = vmatpush1.bf16.msra.mxu0 0
      %924 = vmatprep.mubr.bf16.mxu0 0
      %925 = vmatmul.mubr.bf16.gmra.mrb[0].mxu0 %v890
      %v926 = vpop.f32.mrb[0].mxu0
      %v927 = vadd.f32 0.0, %v926
      %v928 = vpop.f32.mrb[0].mxu0
      %v929 = vpop.f32.mrb[0].mxu0
      %v930 = vadd.f32 0.0, %v929
      %v931 = vpop.f32.mrb[0].mxu0
      %932 = vdwg.mxu0
      %v933 = vmul.f32 %v927, %v886
      %v934 = vmul.f32 %v930, %v887
      %v935 = vpack.c.bf16 %v934, %v933
      %937 = vrot.lane.b32.xlu0 %v592, 96
      %v938 = vpop.permute.xlu0 %937
      %940 = vrot.lane.b32.xlu0 %v705, 96
      %v941 = vpop.permute.xlu0 %940
      %v943 = vsel %vm819, %v938, 0
      %v946 = vsel %vm819, %v941, 0
      %948 = vmatprep.subr.bf16.mxu0 0
      %949 = vmatpush1.bf16.xpose.msra.mxu0 %v946
      %950 = vmatprep.subr.bf16.mxu0 0
      %951 = vmatpush1.bf16.xpose.msra.mxu0 0
      %952 = vmatprep.subr.bf16.mxu0 0
      %953 = vmatpush1.bf16.xpose.msra.mxu0 0
      %954 = vmatprep.subr.bf16.mxu0 0
      %955 = vmatpush1.bf16.xpose.msra.mxu0 0
      %956 = vmatprep.subr.bf16.mxu0 0
      %957 = vmatpush1.bf16.xpose.msra.mxu0 0
      %958 = vmatprep.subr.bf16.mxu0 0
      %959 = vmatpush1.bf16.xpose.msra.mxu0 0
      %960 = vmatprep.subr.bf16.mxu0 0
      %961 = vmatpush1.bf16.xpose.msra.mxu0 0
      %962 = vmatprep.subr.bf16.mxu0 0
      %963 = vmatpush1.bf16.xpose.msra.mxu0 0
      %964 = vmatprep.subr.bf16.mxu0 0
      %965 = vmatpush1.bf16.xpose.msra.mxu0 0
      %966 = vmatprep.subr.bf16.mxu0 0
      %967 = vmatpush1.bf16.xpose.msra.mxu0 0
      %968 = vmatprep.subr.bf16.mxu0 0
      %969 = vmatpush1.bf16.xpose.msra.mxu0 0
      %970 = vmatprep.subr.bf16.mxu0 0
      %971 = vmatpush1.bf16.xpose.msra.mxu0 0
      %972 = vmatprep.subr.bf16.mxu0 0
      %973 = vmatpush1.bf16.xpose.msra.mxu0 0
      %974 = vmatprep.subr.bf16.mxu0 0
      %975 = vmatpush1.bf16.xpose.msra.mxu0 0
      %976 = vmatprep.subr.bf16.mxu0 0
      %977 = vmatpush1.bf16.xpose.msra.mxu0 0
      %978 = vmatprep.subr.bf16.mxu0 0
      %979 = vmatpush1.bf16.xpose.msra.mxu0 0
      %980 = vmatprep.mubr.bf16.mxu0 0
      %981 = vmatmul.mubr.bf16.gmra.mrb[0].mxu0 %v943
      %v982 = vpop.f32.mrb[0].mxu0
      %v983 = vadd.f32 0.0, %v982
      %v984 = vpop.f32.mrb[0].mxu0
      %v985 = vpop.f32.mrb[0].mxu0
      %v986 = vadd.f32 0.0, %v985
      %v987 = vpop.f32.mrb[0].mxu0
      %988 = vdwg.mxu0
      %v989 = vsel %vm867, %v983, -inf
      %990 = vmax.xlane.f32.xlu0 %v989
      %v991 = vpop.xlane.xlu0 %990
      %v992 = vsel %vm867, %v986, -inf
      %993 = vmax.xlane.f32.xlu0 %v992
      %v994 = vpop.xlane.xlu0 %993
      %v995 = vsub.f32 %v983, %v991
      %v996 = vsub.f32 %v986, %v994
      %v997 = vmul.f32 %v995, 1.442695
      %v998 = vpow.pop %v997
      %v999 = vmul.f32 %v996, 1.442695
      %v1000 = vpow.pop %v999
      %v1001 = vsel %vm867, %v998, 0.0
      %1002 = vadd.xlane.f32.xlu0 %v1001
      %v1003 = vpop.xlane.xlu0 %1002
      %v1004 = vsel %vm867, %v1000, 0.0
      %1005 = vadd.xlane.f32.xlu0 %v1004
      %v1006 = vpop.xlane.xlu0 %1005
      %v1007 = vrcp.pop %v1003
      %v1008 = vrcp.pop %v1006
      %v1009 = vpack.c.bf16 %v1000, %v998
      %1011 = vrot.lane.b32.xlu0 %v818, 96
      %v1012 = vpop.permute.xlu0 %1011
      %v1015 = vsel %vm867, %v1009, 0
      %1017 = vmatprep.subr.bf16.mxu0 0
      %1018 = vmatpush1.bf16.msra.mxu0 %v1012
      %1019 = vmatprep.subr.bf16.mxu0 0
      %1020 = vmatpush1.bf16.msra.mxu0 0
      %1021 = vmatprep.subr.bf16.mxu0 0
      %1022 = vmatpush1.bf16.msra.mxu0 0
      %1023 = vmatprep.subr.bf16.mxu0 0
      %1024 = vmatpush1.bf16.msra.mxu0 0
      %1025 = vmatprep.subr.bf16.mxu0 0
      %1026 = vmatpush1.bf16.msra.mxu0 0
      %1027 = vmatprep.subr.bf16.mxu0 0
      %1028 = vmatpush1.bf16.msra.mxu0 0
      %1029 = vmatprep.subr.bf16.mxu0 0
      %1030 = vmatpush1.bf16.msra.mxu0 0
      %1031 = vmatprep.subr.bf16.mxu0 0
      %1032 = vmatpush1.bf16.msra.mxu0 0
      %1033 = vmatprep.subr.bf16.mxu0 0
      %1034 = vmatpush1.bf16.msra.mxu0 0
      %1035 = vmatprep.subr.bf16.mxu0 0
      %1036 = vmatpush1.bf16.msra.mxu0 0
      %1037 = vmatprep.subr.bf16.mxu0 0
      %1038 = vmatpush1.bf16.msra.mxu0 0
      %1039 = vmatprep.subr.bf16.mxu0 0
      %1040 = vmatpush1.bf16.msra.mxu0 0
      %1041 = vmatprep.subr.bf16.mxu0 0
      %1042 = vmatpush1.bf16.msra.mxu0 0
      %1043 = vmatprep.subr.bf16.mxu0 0
      %1044 = vmatpush1.bf16.msra.mxu0 0
      %1045 = vmatprep.subr.bf16.mxu0 0
      %1046 = vmatpush1.bf16.msra.mxu0 0
      %1047 = vmatprep.subr.bf16.mxu0 0
      %1048 = vmatpush1.bf16.msra.mxu0 0
      %1049 = vmatprep.mubr.bf16.mxu0 0
      %1050 = vmatmul.mubr.bf16.gmra.mrb[0].mxu0 %v1015
      %v1051 = vpop.f32.mrb[0].mxu0
      %v1052 = vadd.f32 0.0, %v1051
      %v1053 = vpop.f32.mrb[0].mxu0
      %v1054 = vpop.f32.mrb[0].mxu0
      %v1055 = vadd.f32 0.0, %v1054
      %v1056 = vpop.f32.mrb[0].mxu0
      %1057 = vdwg.mxu0
      %v1058 = vmul.f32 %v1052, %v1007
      %v1059 = vmul.f32 %v1055, %v1008
      %v1060 = vpack.c.bf16 %v1059, %v1058
      %1061 = vrot.lane.b32.xlu0 %v592, 64
      %v1062 = vpop.permute.xlu0 %1061
      %1063 = vrot.lane.b32.xlu0 %v705, 64
      %v1064 = vpop.permute.xlu0 %1063
      %v1066 = vsel %vm819, %v1062, 0
      %v1069 = vsel %vm819, %v1064, 0
      %1071 = vmatprep.subr.bf16.mxu0 0
      %1072 = vmatpush1.bf16.xpose.msra.mxu0 %v1069
      %1073 = vmatprep.subr.bf16.mxu0 0
      %1074 = vmatpush1.bf16.xpose.msra.mxu0 0
      %1075 = vmatprep.subr.bf16.mxu0 0
      %1076 = vmatpush1.bf16.xpose.msra.mxu0 0
      %1077 = vmatprep.subr.bf16.mxu0 0
      %1078 = vmatpush1.bf16.xpose.msra.mxu0 0
      %1079 = vmatprep.subr.bf16.mxu0 0
      %1080 = vmatpush1.bf16.xpose.msra.mxu0 0
      %1081 = vmatprep.subr.bf16.mxu0 0
      %1082 = vmatpush1.bf16.xpose.msra.mxu0 0
      %1083 = vmatprep.subr.bf16.mxu0 0
      %1084 = vmatpush1.bf16.xpose.msra.mxu0 0
      %1085 = vmatprep.subr.bf16.mxu0 0
      %1086 = vmatpush1.bf16.xpose.msra.mxu0 0
      %1087 = vmatprep.subr.bf16.mxu0 0
      %1088 = vmatpush1.bf16.xpose.msra.mxu0 0
      %1089 = vmatprep.subr.bf16.mxu0 0
      %1090 = vmatpush1.bf16.xpose.msra.mxu0 0
      %1091 = vmatprep.subr.bf16.mxu0 0
      %1092 = vmatpush1.bf16.xpose.msra.mxu0 0
      %1093 = vmatprep.subr.bf16.mxu0 0
      %1094 = vmatpush1.bf16.xpose.msra.mxu0 0
      %1095 = vmatprep.subr.bf16.mxu0 0
      %1096 = vmatpush1.bf16.xpose.msra.mxu0 0
      %1097 = vmatprep.subr.bf16.mxu0 0
      %1098 = vmatpush1.bf16.xpose.msra.mxu0 0
      %1099 = vmatprep.subr.bf16.mxu0 0
      %1100 = vmatpush1.bf16.xpose.msra.mxu0 0
      %1101 = vmatprep.subr.bf16.mxu0 0
      %1102 = vmatpush1.bf16.xpose.msra.mxu0 0
      %1103 = vmatprep.mubr.bf16.mxu0 0
      %1104 = vmatmul.mubr.bf16.gmra.mrb[0].mxu0 %v1066
      %v1105 = vpop.f32.mrb[0].mxu0
      %v1106 = vadd.f32 0.0, %v1105
      %v1107 = vpop.f32.mrb[0].mxu0
      %v1108 = vpop.f32.mrb[0].mxu0
      %v1109 = vadd.f32 0.0, %v1108
      %v1110 = vpop.f32.mrb[0].mxu0
      %1111 = vdwg.mxu0
      %v1112 = vsel %vm867, %v1106, -inf
      %1113 = vmax.xlane.f32.xlu0 %v1112
      %v1114 = vpop.xlane.xlu0 %1113
      %v1115 = vsel %vm867, %v1109, -inf
      %1116 = vmax.xlane.f32.xlu0 %v1115
      %v1117 = vpop.xlane.xlu0 %1116
      %v1118 = vsub.f32 %v1106, %v1114
      %v1119 = vsub.f32 %v1109, %v1117
      %v1120 = vmul.f32 %v1118, 1.442695
      %v1121 = vpow.pop %v1120
      %v1122 = vmul.f32 %v1119, 1.442695
      %v1123 = vpow.pop %v1122
      %v1124 = vsel %vm867, %v1121, 0.0
      %1125 = vadd.xlane.f32.xlu0 %v1124
      %v1126 = vpop.xlane.xlu0 %1125
      %v1127 = vsel %vm867, %v1123, 0.0
      %1128 = vadd.xlane.f32.xlu0 %v1127
      %v1129 = vpop.xlane.xlu0 %1128
      %v1130 = vrcp.pop %v1126
      %v1131 = vrcp.pop %v1129
      %v1132 = vpack.c.bf16 %v1123, %v1121
      %1133 = vrot.lane.b32.xlu0 %v818, 64
      %v1134 = vpop.permute.xlu0 %1133
      %v1137 = vsel %vm867, %v1132, 0
      %1139 = vmatprep.subr.bf16.mxu0 0
      %1140 = vmatpush1.bf16.msra.mxu0 %v1134
      %1141 = vmatprep.subr.bf16.mxu0 0
      %1142 = vmatpush1.bf16.msra.mxu0 0
      %1143 = vmatprep.subr.bf16.mxu0 0
      %1144 = vmatpush1.bf16.msra.mxu0 0
      %1145 = vmatprep.subr.bf16.mxu0 0
      %1146 = vmatpush1.bf16.msra.mxu0 0
      %1147 = vmatprep.subr.bf16.mxu0 0
      %1148 = vmatpush1.bf16.msra.mxu0 0
      %1149 = vmatprep.subr.bf16.mxu0 0
      %1150 = vmatpush1.bf16.msra.mxu0 0
      %1151 = vmatprep.subr.bf16.mxu0 0
      %1152 = vmatpush1.bf16.msra.mxu0 0
      %1153 = vmatprep.subr.bf16.mxu0 0
      %1154 = vmatpush1.bf16.msra.mxu0 0
      %1155 = vmatprep.subr.bf16.mxu0 0
      %1156 = vmatpush1.bf16.msra.mxu0 0
      %1157 = vmatprep.subr.bf16.mxu0 0
      %1158 = vmatpush1.bf16.msra.mxu0 0
      %1159 = vmatprep.subr.bf16.mxu0 0
      %1160 = vmatpush1.bf16.msra.mxu0 0
      %1161 = vmatprep.subr.bf16.mxu0 0
      %1162 = vmatpush1.bf16.msra.mxu0 0
      %1163 = vmatprep.subr.bf16.mxu0 0
      %1164 = vmatpush1.bf16.msra.mxu0 0
      %1165 = vmatprep.subr.bf16.mxu0 0
      %1166 = vmatpush1.bf16.msra.mxu0 0
      %1167 = vmatprep.subr.bf16.mxu0 0
      %1168 = vmatpush1.bf16.msra.mxu0 0
      %1169 = vmatprep.subr.bf16.mxu0 0
      %1170 = vmatpush1.bf16.msra.mxu0 0
      %1171 = vmatprep.mubr.bf16.mxu0 0
      %1172 = vmatmul.mubr.bf16.gmra.mrb[0].mxu0 %v1137
      %v1173 = vpop.f32.mrb[0].mxu0
      %v1174 = vadd.f32 0.0, %v1173
      %v1175 = vpop.f32.mrb[0].mxu0
      %v1176 = vpop.f32.mrb[0].mxu0
      %v1177 = vadd.f32 0.0, %v1176
      %v1178 = vpop.f32.mrb[0].mxu0
      %1179 = vdwg.mxu0
      %v1180 = vmul.f32 %v1174, %v1130
      %v1181 = vmul.f32 %v1177, %v1131
      %v1182 = vpack.c.bf16 %v1181, %v1180
      %1183 = vrot.lane.b32.xlu0 %v592, 32
      %v1184 = vpop.permute.xlu0 %1183
      %1185 = vrot.lane.b32.xlu0 %v705, 32
      %v1186 = vpop.permute.xlu0 %1185
      %v1188 = vsel %vm819, %v1184, 0
      %v1191 = vsel %vm819, %v1186, 0
      %1193 = vmatprep.subr.bf16.mxu0 0
      %1194 = vmatpush1.bf16.xpose.msra.mxu0 %v1191
      %1195 = vmatprep.subr.bf16.mxu0 0
      %1196 = vmatpush1.bf16.xpose.msra.mxu0 0
      %1197 = vmatprep.subr.bf16.mxu0 0
      %1198 = vmatpush1.bf16.xpose.msra.mxu0 0
      %1199 = vmatprep.subr.bf16.mxu0 0
      %1200 = vmatpush1.bf16.xpose.msra.mxu0 0
      %1201 = vmatprep.subr.bf16.mxu0 0
      %1202 = vmatpush1.bf16.xpose.msra.mxu0 0
      %1203 = vmatprep.subr.bf16.mxu0 0
      %1204 = vmatpush1.bf16.xpose.msra.mxu0 0
      %1205 = vmatprep.subr.bf16.mxu0 0
      %1206 = vmatpush1.bf16.xpose.msra.mxu0 0
      %1207 = vmatprep.subr.bf16.mxu0 0
      %1208 = vmatpush1.bf16.xpose.msra.mxu0 0
      %1209 = vmatprep.subr.bf16.mxu0 0
      %1210 = vmatpush1.bf16.xpose.msra.mxu0 0
      %1211 = vmatprep.subr.bf16.mxu0 0
      %1212 = vmatpush1.bf16.xpose.msra.mxu0 0
      %1213 = vmatprep.subr.bf16.mxu0 0
      %1214 = vmatpush1.bf16.xpose.msra.mxu0 0
      %1215 = vmatprep.subr.bf16.mxu0 0
      %1216 = vmatpush1.bf16.xpose.msra.mxu0 0
      %1217 = vmatprep.subr.bf16.mxu0 0
      %1218 = vmatpush1.bf16.xpose.msra.mxu0 0
      %1219 = vmatprep.subr.bf16.mxu0 0
      %1220 = vmatpush1.bf16.xpose.msra.mxu0 0
      %1221 = vmatprep.subr.bf16.mxu0 0
      %1222 = vmatpush1.bf16.xpose.msra.mxu0 0
      %1223 = vmatprep.subr.bf16.mxu0 0
      %1224 = vmatpush1.bf16.xpose.msra.mxu0 0
      %1225 = vmatprep.mubr.bf16.mxu0 0
      %1226 = vmatmul.mubr.bf16.gmra.mrb[0].mxu0 %v1188
      %v1227 = vpop.f32.mrb[0].mxu0
      %v1228 = vadd.f32 0.0, %v1227
      %v1229 = vpop.f32.mrb[0].mxu0
      %v1230 = vpop.f32.mrb[0].mxu0
      %v1231 = vadd.f32 0.0, %v1230
      %v1232 = vpop.f32.mrb[0].mxu0
      %1233 = vdwg.mxu0
      %v1234 = vsel %vm867, %v1228, -inf
      %1235 = vmax.xlane.f32.xlu0 %v1234
      %v1236 = vpop.xlane.xlu0 %1235
      %v1237 = vsel %vm867, %v1231, -inf
      %1238 = vmax.xlane.f32.xlu0 %v1237
      %v1239 = vpop.xlane.xlu0 %1238
      %v1240 = vsub.f32 %v1228, %v1236
      %v1241 = vsub.f32 %v1231, %v1239
      %v1242 = vmul.f32 %v1240, 1.442695
      %v1243 = vpow.pop %v1242
      %v1244 = vmul.f32 %v1241, 1.442695
      %v1245 = vpow.pop %v1244
      %v1246 = vsel %vm867, %v1243, 0.0
      %1247 = vadd.xlane.f32.xlu0 %v1246
      %v1248 = vpop.xlane.xlu0 %1247
      %v1249 = vsel %vm867, %v1245, 0.0
      %1250 = vadd.xlane.f32.xlu0 %v1249
      %v1251 = vpop.xlane.xlu0 %1250
      %v1252 = vrcp.pop %v1248
      %v1253 = vrcp.pop %v1251
      %v1254 = vpack.c.bf16 %v1245, %v1243
      %1255 = vrot.lane.b32.xlu0 %v818, 32
      %v1256 = vpop.permute.xlu0 %1255
      %v1259 = vsel %vm867, %v1254, 0
      %1261 = vmatprep.subr.bf16.mxu0 0
      %1262 = vmatpush1.bf16.msra.mxu0 %v1256
      %1263 = vmatprep.subr.bf16.mxu0 0
      %1264 = vmatpush1.bf16.msra.mxu0 0
      %1265 = vmatprep.subr.bf16.mxu0 0
      %1266 = vmatpush1.bf16.msra.mxu0 0
      %1267 = vmatprep.subr.bf16.mxu0 0
      %1268 = vmatpush1.bf16.msra.mxu0 0
      %1269 = vmatprep.subr.bf16.mxu0 0
      %1270 = vmatpush1.bf16.msra.mxu0 0
      %1271 = vmatprep.subr.bf16.mxu0 0
      %1272 = vmatpush1.bf16.msra.mxu0 0
      %1273 = vmatprep.subr.bf16.mxu0 0
      %1274 = vmatpush1.bf16.msra.mxu0 0
      %1275 = vmatprep.subr.bf16.mxu0 0
      %1276 = vmatpush1.bf16.msra.mxu0 0
      %1277 = vmatprep.subr.bf16.mxu0 0
      %1278 = vmatpush1.bf16.msra.mxu0 0
      %1279 = vmatprep.subr.bf16.mxu0 0
      %1280 = vmatpush1.bf16.msra.mxu0 0
      %1281 = vmatprep.subr.bf16.mxu0 0
      %1282 = vmatpush1.bf16.msra.mxu0 0
      %1283 = vmatprep.subr.bf16.mxu0 0
      %1284 = vmatpush1.bf16.msra.mxu0 0
      %1285 = vmatprep.subr.bf16.mxu0 0
      %1286 = vmatpush1.bf16.msra.mxu0 0
      %1287 = vmatprep.subr.bf16.mxu0 0
      %1288 = vmatpush1.bf16.msra.mxu0 0
      %1289 = vmatprep.subr.bf16.mxu0 0
      %1290 = vmatpush1.bf16.msra.mxu0 0
      %1291 = vmatprep.subr.bf16.mxu0 0
      %1292 = vmatpush1.bf16.msra.mxu0 0
      %1293 = vmatprep.mubr.bf16.mxu0 0
      %1294 = vmatmul.mubr.bf16.gmra.mrb[0].mxu0 %v1259
      %v1295 = vpop.f32.mrb[0].mxu0
      %v1296 = vadd.f32 0.0, %v1295
      %v1297 = vpop.f32.mrb[0].mxu0
      %v1298 = vpop.f32.mrb[0].mxu0
      %v1299 = vadd.f32 0.0, %v1298
      %v1300 = vpop.f32.mrb[0].mxu0
      %1301 = vdwg.mxu0
      %v1302 = vmul.f32 %v1296, %v1252
      %v1303 = vmul.f32 %v1299, %v1253
      %v1304 = vpack.c.bf16 %v1303, %v1302
      %1306 = vrot.lane.b32.xlu0 %v1060, 32
      %v1307 = vpop.permute.xlu0 %1306
      %1309 = vrot.lane.b32.xlu0 %v1182, 64
      %v1310 = vpop.permute.xlu0 %1309
      %1312 = vrot.lane.b32.xlu0 %v1304, 96
      %v1313 = vpop.permute.xlu0 %1312
      %v1316 = vsel %vm819, %v935, %v1307
      %vm1317 = vcmask 523264
      %v1319 = vsel %vm1317, %v1316, %v1310
      %vm1320 = vcmask 785408
      %v1322 = vsel %vm1320, %v1319, %v1313
      %v1324 = vld [vmem:[%s8] sm:$0xf]
      %v1325 = vld [vmem:[%s8 + $0x4] sm:$0xf]
      %v1326 = vld [vmem:[%s8 + $0x8] sm:$0xf]
      %v1327 = vld [vmem:[%s8 + $0xc] sm:$0xf]
      %v1328 = vld [vmem:[%s8 + $0x10] sm:$0xf]
      %v1329 = vld [vmem:[%s8 + $0x14] sm:$0xf]
      %v1330 = vld [vmem:[%s8 + $0x18] sm:$0xf]
      %v1331 = vld [vmem:[%s8 + $0x1c] sm:$0xf]
      %v1332 = vld [vmem:[%s8 + $0x20] sm:$0xf]
      %v1333 = vld [vmem:[%s8 + $0x24] sm:$0xf]
      %v1334 = vld [vmem:[%s8 + $0x28] sm:$0xf]
      %v1335 = vld [vmem:[%s8 + $0x2c] sm:$0xf]
      %v1336 = vld [vmem:[%s8 + $0x30] sm:$0xf]
      %v1337 = vld [vmem:[%s8 + $0x34] sm:$0xf]
      %v1338 = vld [vmem:[%s8 + $0x38] sm:$0xf]
      %v1339 = vld [vmem:[%s8 + $0x3c] sm:$0xf]
      %v1340 = vld [vmem:[%s9] sm:$0x1]
      %v1342 = vlaneseq
      %v1343 = vshrl.u32 %v1342, 7
      %v1344 = vsub.s32 0, %v1343
      %v1345 = vrot.slane %v1340, %v1344
      %v1363 = vunpack.c.l.b16 %v1324
      %v1364 = vunpack.c.l.b16 %v1325
      %v1365 = vunpack.c.l.b16 %v1326
      %v1366 = vunpack.c.l.b16 %v1327
      %v1367 = vunpack.c.l.b16 %v1328
      %v1368 = vunpack.c.l.b16 %v1329
      %v1369 = vunpack.c.l.b16 %v1330
      %v1370 = vunpack.c.l.b16 %v1331
      %v1371 = vunpack.c.l.b16 %v1332
      %v1372 = vunpack.c.l.b16 %v1333
      %v1373 = vunpack.c.l.b16 %v1334
      %v1374 = vunpack.c.l.b16 %v1335
      %v1375 = vunpack.c.l.b16 %v1336
      %v1376 = vunpack.c.l.b16 %v1337
      %v1377 = vunpack.c.l.b16 %v1338
      %v1378 = vunpack.c.l.b16 %v1339
      %v1379 = vpack.c.b16 %v1364, %v1363
      %v1380 = vpack.c.b16 %v1366, %v1365
      %v1381 = vpack.c.b16 %v1368, %v1367
      %v1382 = vpack.c.b16 %v1370, %v1369
      %v1383 = vpack.c.b16 %v1372, %v1371
      %v1384 = vpack.c.b16 %v1374, %v1373
      %v1385 = vpack.c.b16 %v1376, %v1375
      %v1386 = vpack.c.b16 %v1378, %v1377
      %1395 = vmatprep.subr.bf16.mxu0 0
      %1396 = vmatpush1.bf16.msra.mxu0 %v1379
      %1397 = vmatprep.subr.bf16.mxu0 0
      %1398 = vmatpush1.bf16.msra.mxu0 %v1380
      %1399 = vmatprep.subr.bf16.mxu0 0
      %1400 = vmatpush1.bf16.msra.mxu0 %v1381
      %1401 = vmatprep.subr.bf16.mxu0 0
      %1402 = vmatpush1.bf16.msra.mxu0 %v1382
      %1403 = vmatprep.subr.bf16.mxu0 0
      %1404 = vmatpush1.bf16.msra.mxu0 %v1383
      %1405 = vmatprep.subr.bf16.mxu0 0
      %1406 = vmatpush1.bf16.msra.mxu0 %v1384
      %1407 = vmatprep.subr.bf16.mxu0 0
      %1408 = vmatpush1.bf16.msra.mxu0 %v1385
      %1409 = vmatprep.subr.bf16.mxu0 0
      %1410 = vmatpush1.bf16.msra.mxu0 %v1386
      %1411 = vmatprep.subr.bf16.mxu0 0
      %1412 = vmatpush1.bf16.msra.mxu0 0
      %1413 = vmatprep.subr.bf16.mxu0 0
      %1414 = vmatpush1.bf16.msra.mxu0 0
      %1415 = vmatprep.subr.bf16.mxu0 0
      %1416 = vmatpush1.bf16.msra.mxu0 0
      %1417 = vmatprep.subr.bf16.mxu0 0
      %1418 = vmatpush1.bf16.msra.mxu0 0
      %1419 = vmatprep.subr.bf16.mxu0 0
      %1420 = vmatpush1.bf16.msra.mxu0 0
      %1421 = vmatprep.subr.bf16.mxu0 0
      %1422 = vmatpush1.bf16.msra.mxu0 0
      %1423 = vmatprep.subr.bf16.mxu0 0
      %1424 = vmatpush1.bf16.msra.mxu0 0
      %1425 = vmatprep.subr.bf16.mxu0 0
      %1426 = vmatpush1.bf16.msra.mxu0 0
      %1427 = vmatprep.mubr.bf16.mxu0 0
      %1428 = vmatmul.mubr.bf16.gmra.mrb[0].mxu0 %v1322
      %v1429 = vpop.f32.mrb[0].mxu0
      %v1430 = vadd.f32 %v1345, %v1429
      %v1431 = vpop.f32.mrb[0].mxu0
      %v1432 = vpop.f32.mrb[0].mxu0
      %v1433 = vadd.f32 %v1345, %v1432
      %v1434 = vpop.f32.mrb[0].mxu0
      %1435 = vdwg.mxu0
      %v1436 = vadd.f32 %v1430, %v474
      %v1437 = vadd.f32 %v1433, %v475
      %v1438 = vld [vmem:[%s10] sm:$0x1]
      %v1439 = vld [vmem:[%s11] sm:$0x1]
      %1440 = vadd.xlane.f32.xlu0 %v1436
      %v1441 = vpop.xlane.xlu0 %1440
      %1442 = vadd.xlane.f32.xlu0 %v1437
      %v1443 = vpop.xlane.xlu0 %1442
      %v1444 = vrcp.pop 128.0
      %v1445 = vmul.f32 %v1441, %v1444
      %v1446 = vmul.f32 %v1443, %v1444
      %v1447 = vsub.f32 %v1436, %v1445
      %v1448 = vsub.f32 %v1437, %v1446
      %v1449 = vmul.f32 %v1447, %v1447
      %v1450 = vmul.f32 %v1448, %v1448
      %1451 = vadd.xlane.f32.xlu0 %v1449
      %v1452 = vpop.xlane.xlu0 %1451
      %1453 = vadd.xlane.f32.xlu0 %v1450
      %v1454 = vpop.xlane.xlu0 %1453
      %v1455 = vmul.f32 %v1452, %v1444
      %v1456 = vmul.f32 %v1454, %v1444
      %v1457 = vadd.f32 %v1455, 1e-05
      %v1458 = vadd.f32 %v1456, 1e-05
      %v1459 = vrsqrt.pop %v1457
      %v1460 = vrsqrt.pop %v1458
      %v1461 = vmul.f32 %v1447, %v1459
      %v1462 = vmul.f32 %v1448, %v1460
      %v1464 = vlaneseq
      %v1465 = vshrl.u32 %v1464, 7
      %v1466 = vsub.s32 0, %v1465
      %v1467 = vrot.slane %v1438, %v1466
      %v1469 = vmul.f32 %v1461, %v1467
      %v1470 = vmul.f32 %v1462, %v1467
      %v1472 = vlaneseq
      %v1473 = vshrl.u32 %v1472, 7
      %v1474 = vsub.s32 0, %v1473
      %v1475 = vrot.slane %v1439, %v1474
      %v1477 = vadd.f32 %v1469, %v1475
      %v1478 = vadd.f32 %v1470, %v1475
      %1479 = vst [vmem:[%s471] sm:$0xff] %v1477
      %1480 = vst [vmem:[%s471 + $0x8] sm:$0xff] %v1478
      %s1481 = smul.u32 2, %s28
      %p1482 = scmp.lt.s32.totalorder %s27, 1
      %s1483 = scalar_select %p1482, %s27, 1
      %p1484 = scmp.lt.s32.totalorder %s1481, 1
      %s1485 = scalar_select %p1484, %s1481, 1
      %s1486 = smul.addr %s1483, 2
      %s1487 = sadd.s32 %s1485, %s1486
      %s1488 = smul.addr %s1487, 8
      %s1489 = scalar_lea.vmem %s12, %s1488
      // Predicated region
      $region69: #{post_patt_encode.9} parent=67 // pred_check
        %p1490 = pneg %p319
      $region70: #{post_patt_encode.9} parent=67 // pred_check_branch
        %1492 = sbr.rel (%p1490) target = $region72
      $region71: #{post_patt_encode.9} parent=67 // pred_region
        %s1493 = smul.u32 2, %s28
      $region72: #{post_patt_encode.9} parent=67 // pred_fallthru
        _
    $region68: #{post_patt_encode.9} parent=5 // pred_fallthru
      _
    %p1494 = scmp.le.s32.totalorder 2, %s18
    // Predicated region
    $region73: #{post_patt_encode.9} parent=5 // pred_check
      %p1495 = pneg %p1494
    $region74: #{post_patt_encode.9} parent=5 // pred_check_branch
      %1497 = sbr.rel (%p1495) target = $region76
    $region75: #{post_patt_encode.9} parent=5 // pred_region
      %s1498 = ssub.s32 %s18, 2
      // Predicated region
      $region77: #{post_patt_encode.9} parent=75 // pred_check
        %p1499 = pneg %p325
      $region78: #{post_patt_encode.9} parent=75 // pred_check_branch
        %1501 = sbr.rel (%p1499) target = $region80
      $region79: #{post_patt_encode.9} parent=75 // pred_region
        %s1502 = smul.u32 2, %s30
        %p1503 = scmp.lt.s32.totalorder %s29, 1
        %s1504 = scalar_select %p1503, %s29, 1
        %p1505 = scmp.lt.s32.totalorder %s1502, 1
        %s1506 = scalar_select %p1505, %s1502, 1
        %s1507 = smul.addr %s1504, 2
        %s1508 = sadd.s32 %s1506, %s1507
        %s1509 = smul.addr %s1508, 8
        %s1510 = scalar_lea.vmem %s12, %s1509
      $region80: #{post_patt_encode.9} parent=75 // pred_fallthru
        _
    $region76: #{post_patt_encode.9} parent=5 // pred_fallthru
      _
  $region6: #{post_patt_encode.9} parent=0 // loop_footer
    %s22 = sadd.s32 1, %s18
  $region7: #{post_patt_encode.9} parent=0 // loop_footer_branch
    %17 = sbr.rel target = $region3
  $region8: #{post_patt_encode.9} parent=0 // loop_exit
    _

// kernel: post_patt_encode.11
$region0: #{post_patt_encode.11}
  #allocation0 [shape = 'u32[]', space=smem, size = 0x4, offset = 0x4, fixed_abs, tag = 'smem constant byte address 0x4 - core index']
  #allocation1 [shape = 'u32[144,128]{1,0:T(1,128)}', space=vmem, size = 0x12000, scoped, tag = 'internal scratch']
  %s0 = inlined_call_operand.vmem [shape: f32[2,8,128], index: 0, kind: input, shape index: {}, may-alias: {0,1}]
  %s1 = inlined_call_operand.vmem [shape: f32[2,8,128], index: 1, kind: input, shape index: {}, may-alias: {0,1}]
  %s2 = inlined_call_operand.vmem [shape: bf16[128,128], index: 2, kind: input, shape index: {}]
  %s3 = inlined_call_operand.vmem [shape: f32[1,128], index: 3, kind: input, shape index: {}]
  %s4 = inlined_call_operand.vmem [shape: bf16[128,128], index: 4, kind: input, shape index: {}]
  %s5 = inlined_call_operand.vmem [shape: f32[1,128], index: 5, kind: input, shape index: {}]
  %s6 = inlined_call_operand.hbm [shape: bf16[128,128], index: 6, kind: input, shape index: {}]
  %s7 = inlined_call_operand.vmem [shape: f32[1,128], index: 7, kind: input, shape index: {}]
  %s8 = inlined_call_operand.hbm [shape: bf16[128,128], index: 8, kind: input, shape index: {}]
  %s9 = inlined_call_operand.hbm [shape: f32[1,128], index: 9, kind: input, shape index: {}]
  %s10 = inlined_call_operand.vmem [shape: f32[1,128], index: 10, kind: input, shape index: {}]
  %s11 = inlined_call_operand.vmem [shape: f32[1,128], index: 11, kind: input, shape index: {}]
  %s12 = inlined_call_operand.vmem [shape: f32[2,8,128], index: 12, kind: output, shape index: {}]
  %s13 = sld [smem:[#allocation0]]
  $region93: #{post_patt_encode.11} parent=0
    _
  %s15 = ssub.s32 1, %s13
  %s16 = scalar_select 0, %s15, %s13
  $region1: #{post_patt_encode.11} parent=0
    #allocation2 [shape = 'u8[32768]{0}', space=vmem, size = 0x8000, scoped, tag = 'input window, operand 6, single buffered']
    #allocation3 [shape = 's32[2]{0}', space=sflag, size = 0x8, scoped, tag = 'scoped memory for post_patt_encode.11']
    #allocation4 [shape = 'u8[32768]{0}', space=vmem, size = 0x8000, scoped, tag = 'input window, operand 8, single buffered']
    #allocation5 [shape = 's32[1]{0}', space=sflag, size = 0x4, scoped, tag = 'scoped memory for post_patt_encode.11']
    #allocation6 [shape = 'u8[512]{0}', space=vmem, size = 0x400, scoped, tag = 'input window, operand 9, single buffered']
    %17 = vsyncpa [#allocation3], 0
    %18 = vsyncpa [#allocation5], 0
    loop: start=0, step=1, limit=4
    $region2: #{post_patt_encode.11} parent=1 // loop_pre_header
      _
    $region3: #{post_patt_encode.11} parent=1 // loop_header
      %s20 = sphi 0, %s24
      %p21 = scmp.ge.s32.totalorder %s20, 4
      %s27 = sphi 0, %s39
      %s28 = sphi 0, %s35
      %s29 = sphi 0, %s27
      %s30 = sphi 0, %s28
      %s31 = sphi 0, %s29
      %s32 = sphi 0, %s30
      %s44 = sphi 0, %s46
      %s47 = sphi 0, %s44
      %s48 = sphi 0, %s47
      %s64 = sphi 0, %s48
      %s70 = sphi 0, %s72
      %s73 = sphi 0, %s70
      %s74 = sphi 0, %s73
      %s90 = sphi 0, %s74
      %s94 = sphi 0, %s94
      %s96 = sphi 0, %s94
      %s97 = sphi 0, %s96
      %s111 = sphi 0, %s97
      %s115 = sphi 0, %s115
      %s117 = sphi 0, %s115
      %s118 = sphi 0, %s117
      %s132 = sphi 0, %s118
      %s136 = sphi 0, %s136
      %s138 = sphi 0, %s136
      %s139 = sphi 0, %s138
      %s153 = sphi 0, %s139
      %s157 = sphi 0, %s157
      %s159 = sphi 0, %s157
      %s160 = sphi 0, %s159
      %s174 = sphi 0, %s160
      %s178 = sphi 0, %s178
      %s180 = sphi 0, %s178
      %s181 = sphi 0, %s180
      %s195 = sphi 0, %s181
      %s199 = sphi 0, %s199
      %s201 = sphi 0, %s199
      %s202 = sphi 0, %s201
      %s216 = sphi 0, %s202
      %s220 = sphi 0, %s220
      %s222 = sphi 0, %s220
      %s223 = sphi 0, %s222
      %s237 = sphi 0, %s223
      %s241 = sphi 0, %s241
      %s243 = sphi 0, %s241
      %s244 = sphi 0, %s243
      %s258 = sphi 0, %s244
      %s262 = sphi 0, %s262
      %s264 = sphi 0, %s262
      %s265 = sphi 0, %s264
      %s279 = sphi 0, %s265
      %s283 = sphi 0, %s283
      %s285 = sphi 0, %s283
      %s286 = sphi 0, %s285
      %s300 = sphi 0, %s286
      %s308 = sphi 0, %s310
      %s311 = sphi 0, %s308
      %s312 = sphi 0, %s311
      %s328 = sphi 0, %s312
    $region4: #{post_patt_encode.11} parent=1 // loop_header_branch
      %23 = sbr.rel (%p21) target = $region8
    $region5: #{post_patt_encode.11} parent=1 // loop_body
      %s25 = ssub.s32 %s20, 1
      %s26 = ssub.s32 %s20, 2
      %s33 = sadd.s32 1, %s28
      %p34 = scmp.ge.s32.totalorder %s33, 1
      %s35 = scalar_select %p34, 0, %s33
      %s36 = sadd.s32 1, %s27
      %s37 = scalar_select %p34, %s36, %s27
      %p38 = scmp.ge.s32.totalorder %s37, 2
      %s39 = scalar_select %p38, 0, %s37
      %s40 = ssub.s32 %s27, %s39
      %s41 = ssub.s32 %s28, %s35
      %s42 = sor.u32 %s40, %s41
      %p43 = scmp.eq.s32.totalorder %s42, 0
      %s45 = sadd.s32 %s44, 1
      %s46 = scalar_select %p43, %s44, %s45
      %p49 = pneg %p43
      %p50 = scmp.eq.s32.totalorder %s20, 1
      %p51 = por %p49, %p50
      %p52 = scmp.ne.s32.totalorder %s44, %s47
      %p53 = scmp.eq.s32.totalorder %s20, 0
      %p54 = por %p52, %p53
      %p55 = scmp.ne.s32.totalorder %s44, %s47
      %p56 = scmp.eq.s32.totalorder %s25, 1
      %p57 = por %p55, %p56
      %p58 = scmp.ne.s32.totalorder %s47, %s48
      %p59 = scmp.eq.s32.totalorder %s25, 0
      %p60 = por %p58, %p59
      %p61 = scmp.ne.s32.totalorder %s47, %s48
      %p62 = scmp.eq.s32.totalorder %s26, 1
      %p63 = por %p61, %p62
      %p65 = scmp.ne.s32.totalorder %s48, %s64
      %p66 = scmp.eq.s32.totalorder %s26, 0
      %p67 = por %p65, %p66
      %s68 = ssub.s32 %s27, %s39
      %p69 = scmp.eq.s32.totalorder %s68, 0
      %s71 = sadd.s32 %s70, 1
      %s72 = scalar_select %p69, %s70, %s71
      %p75 = pneg %p69
      %p76 = scmp.eq.s32.totalorder %s20, 1
      %p77 = por %p75, %p76
      %p78 = scmp.ne.s32.totalorder %s70, %s73
      %p79 = scmp.eq.s32.totalorder %s20, 0
      %p80 = por %p78, %p79
      %p81 = scmp.ne.s32.totalorder %s70, %s73
      %p82 = scmp.eq.s32.totalorder %s25, 1
      %p83 = por %p81, %p82
      %p84 = scmp.ne.s32.totalorder %s73, %s74
      %p85 = scmp.eq.s32.totalorder %s25, 0
      %p86 = por %p84, %p85
      %p87 = scmp.ne.s32.totalorder %s73, %s74
      %p88 = scmp.eq.s32.totalorder %s26, 1
      %p89 = por %p87, %p88
      %p91 = scmp.ne.s32.totalorder %s74, %s90
      %p92 = scmp.eq.s32.totalorder %s26, 0
      %p93 = por %p91, %p92
      %s95 = sadd.s32 %s94, 1
      %p98 = scmp.eq.s32.totalorder %s20, 1
      %p99 = scmp.ne.s32.totalorder %s94, %s96
      %p100 = scmp.eq.s32.totalorder %s20, 0
      %p101 = por %p99, %p100
      %p102 = scmp.ne.s32.totalorder %s94, %s96
      %p103 = scmp.eq.s32.totalorder %s25, 1
      %p104 = por %p102, %p103
      %p105 = scmp.ne.s32.totalorder %s96, %s97
      %p106 = scmp.eq.s32.totalorder %s25, 0
      %p107 = por %p105, %p106
      %p108 = scmp.ne.s32.totalorder %s96, %s97
      %p109 = scmp.eq.s32.totalorder %s26, 1
      %p110 = por %p108, %p109
      %p112 = scmp.ne.s32.totalorder %s97, %s111
      %p113 = scmp.eq.s32.totalorder %s26, 0
      %p114 = por %p112, %p113
      %s116 = sadd.s32 %s115, 1
      %p119 = scmp.eq.s32.totalorder %s20, 1
      %p120 = scmp.ne.s32.totalorder %s115, %s117
      %p121 = scmp.eq.s32.totalorder %s20, 0
      %p122 = por %p120, %p121
      %p123 = scmp.ne.s32.totalorder %s115, %s117
      %p124 = scmp.eq.s32.totalorder %s25, 1
      %p125 = por %p123, %p124
      %p126 = scmp.ne.s32.totalorder %s117, %s118
      %p127 = scmp.eq.s32.totalorder %s25, 0
      %p128 = por %p126, %p127
      %p129 = scmp.ne.s32.totalorder %s117, %s118
      %p130 = scmp.eq.s32.totalorder %s26, 1
      %p131 = por %p129, %p130
      %p133 = scmp.ne.s32.totalorder %s118, %s132
      %p134 = scmp.eq.s32.totalorder %s26, 0
      %p135 = por %p133, %p134
      %s137 = sadd.s32 %s136, 1
      %p140 = scmp.eq.s32.totalorder %s20, 1
      %p141 = scmp.ne.s32.totalorder %s136, %s138
      %p142 = scmp.eq.s32.totalorder %s20, 0
      %p143 = por %p141, %p142
      %p144 = scmp.ne.s32.totalorder %s136, %s138
      %p145 = scmp.eq.s32.totalorder %s25, 1
      %p146 = por %p144, %p145
      %p147 = scmp.ne.s32.totalorder %s138, %s139
      %p148 = scmp.eq.s32.totalorder %s25, 0
      %p149 = por %p147, %p148
      %p150 = scmp.ne.s32.totalorder %s138, %s139
      %p151 = scmp.eq.s32.totalorder %s26, 1
      %p152 = por %p150, %p151
      %p154 = scmp.ne.s32.totalorder %s139, %s153
      %p155 = scmp.eq.s32.totalorder %s26, 0
      %p156 = por %p154, %p155
      %s158 = sadd.s32 %s157, 1
      %p161 = scmp.eq.s32.totalorder %s20, 1
      %p162 = scmp.ne.s32.totalorder %s157, %s159
      %p163 = scmp.eq.s32.totalorder %s20, 0
      %p164 = por %p162, %p163
      %p165 = scmp.ne.s32.totalorder %s157, %s159
      %p166 = scmp.eq.s32.totalorder %s25, 1
      %p167 = por %p165, %p166
      %p168 = scmp.ne.s32.totalorder %s159, %s160
      %p169 = scmp.eq.s32.totalorder %s25, 0
      %p170 = por %p168, %p169
      %p171 = scmp.ne.s32.totalorder %s159, %s160
      %p172 = scmp.eq.s32.totalorder %s26, 1
      %p173 = por %p171, %p172
      %p175 = scmp.ne.s32.totalorder %s160, %s174
      %p176 = scmp.eq.s32.totalorder %s26, 0
      %p177 = por %p175, %p176
      %s179 = sadd.s32 %s178, 1
      %p182 = scmp.eq.s32.totalorder %s20, 1
      %p183 = scmp.ne.s32.totalorder %s178, %s180
      %p184 = scmp.eq.s32.totalorder %s20, 0
      %p185 = por %p183, %p184
      %p186 = scmp.ne.s32.totalorder %s178, %s180
      %p187 = scmp.eq.s32.totalorder %s25, 1
      %p188 = por %p186, %p187
      %p189 = scmp.ne.s32.totalorder %s180, %s181
      %p190 = scmp.eq.s32.totalorder %s25, 0
      %p191 = por %p189, %p190
      %p192 = scmp.ne.s32.totalorder %s180, %s181
      %p193 = scmp.eq.s32.totalorder %s26, 1
      %p194 = por %p192, %p193
      %p196 = scmp.ne.s32.totalorder %s181, %s195
      %p197 = scmp.eq.s32.totalorder %s26, 0
      %p198 = por %p196, %p197
      %s200 = sadd.s32 %s199, 1
      %p203 = scmp.eq.s32.totalorder %s20, 1
      %p204 = scmp.ne.s32.totalorder %s199, %s201
      %p205 = scmp.eq.s32.totalorder %s20, 0
      %p206 = por %p204, %p205
      %p207 = scmp.ne.s32.totalorder %s199, %s201
      %p208 = scmp.eq.s32.totalorder %s25, 1
      %p209 = por %p207, %p208
      %p210 = scmp.ne.s32.totalorder %s201, %s202
      %p211 = scmp.eq.s32.totalorder %s25, 0
      %p212 = por %p210, %p211
      %p213 = scmp.ne.s32.totalorder %s201, %s202
      %p214 = scmp.eq.s32.totalorder %s26, 1
      %p215 = por %p213, %p214
      %p217 = scmp.ne.s32.totalorder %s202, %s216
      %p218 = scmp.eq.s32.totalorder %s26, 0
      %p219 = por %p217, %p218
      %s221 = sadd.s32 %s220, 1
      %p224 = scmp.eq.s32.totalorder %s20, 1
      %p225 = scmp.ne.s32.totalorder %s220, %s222
      %p226 = scmp.eq.s32.totalorder %s20, 0
      %p227 = por %p225, %p226
      %p228 = scmp.ne.s32.totalorder %s220, %s222
      %p229 = scmp.eq.s32.totalorder %s25, 1
      %p230 = por %p228, %p229
      %p231 = scmp.ne.s32.totalorder %s222, %s223
      %p232 = scmp.eq.s32.totalorder %s25, 0
      %p233 = por %p231, %p232
      %p234 = scmp.ne.s32.totalorder %s222, %s223
      %p235 = scmp.eq.s32.totalorder %s26, 1
      %p236 = por %p234, %p235
      %p238 = scmp.ne.s32.totalorder %s223, %s237
      %p239 = scmp.eq.s32.totalorder %s26, 0
      %p240 = por %p238, %p239
      %s242 = sadd.s32 %s241, 1
      %p245 = scmp.eq.s32.totalorder %s20, 1
      %p246 = scmp.ne.s32.totalorder %s241, %s243
      %p247 = scmp.eq.s32.totalorder %s20, 0
      %p248 = por %p246, %p247
      %p249 = scmp.ne.s32.totalorder %s241, %s243
      %p250 = scmp.eq.s32.totalorder %s25, 1
      %p251 = por %p249, %p250
      %p252 = scmp.ne.s32.totalorder %s243, %s244
      %p253 = scmp.eq.s32.totalorder %s25, 0
      %p254 = por %p252, %p253
      %p255 = scmp.ne.s32.totalorder %s243, %s244
      %p256 = scmp.eq.s32.totalorder %s26, 1
      %p257 = por %p255, %p256
      %p259 = scmp.ne.s32.totalorder %s244, %s258
      %p260 = scmp.eq.s32.totalorder %s26, 0
      %p261 = por %p259, %p260
      %s263 = sadd.s32 %s262, 1
      %p266 = scmp.eq.s32.totalorder %s20, 1
      %p267 = scmp.ne.s32.totalorder %s262, %s264
      %p268 = scmp.eq.s32.totalorder %s20, 0
      %p269 = por %p267, %p268
      %p270 = scmp.ne.s32.totalorder %s262, %s264
      %p271 = scmp.eq.s32.totalorder %s25, 1
      %p272 = por %p270, %p271
      %p273 = scmp.ne.s32.totalorder %s264, %s265
      %p274 = scmp.eq.s32.totalorder %s25, 0
      %p275 = por %p273, %p274
      %p276 = scmp.ne.s32.totalorder %s264, %s265
      %p277 = scmp.eq.s32.totalorder %s26, 1
      %p278 = por %p276, %p277
      %p280 = scmp.ne.s32.totalorder %s265, %s279
      %p281 = scmp.eq.s32.totalorder %s26, 0
      %p282 = por %p280, %p281
      %s284 = sadd.s32 %s283, 1
      %p287 = scmp.eq.s32.totalorder %s20, 1
      %p288 = scmp.ne.s32.totalorder %s283, %s285
      %p289 = scmp.eq.s32.totalorder %s20, 0
      %p290 = por %p288, %p289
      %p291 = scmp.ne.s32.totalorder %s283, %s285
      %p292 = scmp.eq.s32.totalorder %s25, 1
      %p293 = por %p291, %p292
      %p294 = scmp.ne.s32.totalorder %s285, %s286
      %p295 = scmp.eq.s32.totalorder %s25, 0
      %p296 = por %p294, %p295
      %p297 = scmp.ne.s32.totalorder %s285, %s286
      %p298 = scmp.eq.s32.totalorder %s26, 1
      %p299 = por %p297, %p298
      %p301 = scmp.ne.s32.totalorder %s286, %s300
      %p302 = scmp.eq.s32.totalorder %s26, 0
      %p303 = por %p301, %p302
      %s304 = ssub.s32 %s27, %s39
      %s305 = ssub.s32 %s28, %s35
      %s306 = sor.u32 %s304, %s305
      %p307 = scmp.eq.s32.totalorder %s306, 0
      %s309 = sadd.s32 %s308, 1
      %s310 = scalar_select %p307, %s308, %s309
      %p313 = pneg %p307
      %p314 = scmp.eq.s32.totalorder %s20, 1
      %p315 = por %p313, %p314
      %p316 = scmp.ne.s32.totalorder %s308, %s311
      %p317 = scmp.eq.s32.totalorder %s20, 0
      %p318 = por %p316, %p317
      %p319 = scmp.ne.s32.totalorder %s308, %s311
      %p320 = scmp.eq.s32.totalorder %s25, 1
      %p321 = por %p319, %p320
      %p322 = scmp.ne.s32.totalorder %s311, %s312
      %p323 = scmp.eq.s32.totalorder %s25, 0
      %p324 = por %p322, %p323
      %p325 = scmp.ne.s32.totalorder %s311, %s312
      %p326 = scmp.eq.s32.totalorder %s26, 1
      %p327 = por %p325, %p326
      %p329 = scmp.ne.s32.totalorder %s312, %s328
      %p330 = scmp.eq.s32.totalorder %s26, 0
      %p331 = por %p329, %p330
      %p332 = scmp.le.s32.totalorder 1, %s20
      %p333 = scmp.lt.s32.totalorder %s20, 3
      %p334 = pnand %p332, %p333
      %p335 = pneg %p334
      // Predicated region
      $region9: #{post_patt_encode.11} parent=5 // pred_check
        _
      $region10: #{post_patt_encode.11} parent=5 // pred_check_branch
        %337 = sbr.rel (%p334) target = $region12
      $region11: #{post_patt_encode.11} parent=5 // pred_region
        %s338 = ssub.s32 %s20, 1
        // Predicated region
        $region13: #{post_patt_encode.11} parent=11 // pred_check
          %p339 = pneg %p107
        $region14: #{post_patt_encode.11} parent=11 // pred_check_branch
          %341 = sbr.rel (%p339) target = $region16
        $region15: #{post_patt_encode.11} parent=11 // pred_region
          _
        $region16: #{post_patt_encode.11} parent=11 // pred_fallthru
          _
        // Predicated region
        $region17: #{post_patt_encode.11} parent=11 // pred_check
          %p342 = pneg %p128
        $region18: #{post_patt_encode.11} parent=11 // pred_check_branch
          %344 = sbr.rel (%p342) target = $region20
        $region19: #{post_patt_encode.11} parent=11 // pred_region
          _
        $region20: #{post_patt_encode.11} parent=11 // pred_fallthru
          _
        // Predicated region
        $region21: #{post_patt_encode.11} parent=11 // pred_check
          %p345 = pneg %p149
        $region22: #{post_patt_encode.11} parent=11 // pred_check_branch
          %347 = sbr.rel (%p345) target = $region24
        $region23: #{post_patt_encode.11} parent=11 // pred_region
          _
        $region24: #{post_patt_encode.11} parent=11 // pred_fallthru
          _
        // Predicated region
        $region25: #{post_patt_encode.11} parent=11 // pred_check
          %p348 = pneg %p170
        $region26: #{post_patt_encode.11} parent=11 // pred_check_branch
          %350 = sbr.rel (%p348) target = $region28
        $region27: #{post_patt_encode.11} parent=11 // pred_region
          _
        $region28: #{post_patt_encode.11} parent=11 // pred_fallthru
          _
        // Predicated region
        $region29: #{post_patt_encode.11} parent=11 // pred_check
          %p351 = pneg %p191
        $region30: #{post_patt_encode.11} parent=11 // pred_check_branch
          %353 = sbr.rel (%p351) target = $region32
        $region31: #{post_patt_encode.11} parent=11 // pred_region
          %s355 = ssub.s32 1024, 1024
          %356 = vsyncadd [#allocation3], %s355
          %s357 = sshll.u32 [#allocation2], 4
          %s358 = int_to_ptr.vmem [resolvable:$true] %s357
          %363 = dma.hbm_to_vmem [thread:$0]  %s6, 1024, %s358, [#allocation3], 64, 64, 4
        $region32: #{post_patt_encode.11} parent=11 // pred_fallthru
          _
        // Predicated region
        $region33: #{post_patt_encode.11} parent=11 // pred_check
          %p364 = pneg %p212
        $region34: #{post_patt_encode.11} parent=11 // pred_check_branch
          %366 = sbr.rel (%p364) target = $region36
        $region35: #{post_patt_encode.11} parent=11 // pred_region
          _
        $region36: #{post_patt_encode.11} parent=11 // pred_fallthru
          _
        // Predicated region
        $region37: #{post_patt_encode.11} parent=11 // pred_check
          %p367 = pneg %p233
        $region38: #{post_patt_encode.11} parent=11 // pred_check_branch
          %369 = sbr.rel (%p367) target = $region40
        $region39: #{post_patt_encode.11} parent=11 // pred_region
          %s371 = ssub.s32 1024, 1024
          %372 = vsyncadd [#allocation5], %s371
          %s373 = sshll.u32 [#allocation4], 4
          %s374 = int_to_ptr.vmem [resolvable:$true] %s373
          %379 = dma.hbm_to_vmem [thread:$0]  %s8, 1024, %s374, [#allocation5], 64, 64, 4
        $region40: #{post_patt_encode.11} parent=11 // pred_fallthru
          _
        // Predicated region
        $region41: #{post_patt_encode.11} parent=11 // pred_check
          %p380 = pneg %p254
        $region42: #{post_patt_encode.11} parent=11 // pred_check_branch
          %382 = sbr.rel (%p380) target = $region44
        $region43: #{post_patt_encode.11} parent=11 // pred_region
          %s384 = ssub.s32 16, 16
          %385 = vsyncadd [#allocation5], %s384
          %s387 = sshll.u32 [#allocation6], 4
          %s388 = int_to_ptr.vmem [resolvable:$true] %s387
          %390 = dma.hbm_to_vmem [thread:$0]  %s9, 16, %s388, [#allocation5]
        $region44: #{post_patt_encode.11} parent=11 // pred_fallthru
          _
        // Predicated region
        $region45: #{post_patt_encode.11} parent=11 // pred_check
          %p391 = pneg %p275
        $region46: #{post_patt_encode.11} parent=11 // pred_check_branch
          %393 = sbr.rel (%p391) target = $region48
        $region47: #{post_patt_encode.11} parent=11 // pred_region
          _
        $region48: #{post_patt_encode.11} parent=11 // pred_fallthru
          _
        // Predicated region
        $region49: #{post_patt_encode.11} parent=11 // pred_check
          %p394 = pneg %p296
        $region50: #{post_patt_encode.11} parent=11 // pred_check_branch
          %396 = sbr.rel (%p394) target = $region52
        $region51: #{post_patt_encode.11} parent=11 // pred_region
          _
        $region52: #{post_patt_encode.11} parent=11 // pred_fallthru
          _
      $region12: #{post_patt_encode.11} parent=5 // pred_fallthru
        _
      %p397 = scmp.lt.s32.totalorder %s20, 2
      // Predicated region
      $region53: #{post_patt_encode.11} parent=5 // pred_check
        %p398 = pneg %p397
      $region54: #{post_patt_encode.11} parent=5 // pred_check_branch
        %400 = sbr.rel (%p398) target = $region56
      $region55: #{post_patt_encode.11} parent=5 // pred_region
        // Predicated region
        $region57: #{post_patt_encode.11} parent=55 // pred_check
          %p401 = pneg %p54
        $region58: #{post_patt_encode.11} parent=55 // pred_check_branch
          %403 = sbr.rel (%p401) target = $region60
        $region59: #{post_patt_encode.11} parent=55 // pred_region
          %p404 = scmp.lt.s32.totalorder %s27, 1
          %s405 = scalar_select %p404, %s27, 1
          %p406 = scmp.lt.s32.totalorder %s28, 0
          %s407 = scalar_select %p406, %s28, 0
          %s408 = sadd.s32 %s407, %s405
          %s409 = smul.addr %s408, 8
          %s410 = scalar_lea.vmem %s0, %s409
        $region60: #{post_patt_encode.11} parent=55 // pred_fallthru
          _
        // Predicated region
        $region61: #{post_patt_encode.11} parent=55 // pred_check
          %p411 = pneg %p80
        $region62: #{post_patt_encode.11} parent=55 // pred_check_branch
          %413 = sbr.rel (%p411) target = $region64
        $region63: #{post_patt_encode.11} parent=55 // pred_region
          %p414 = scmp.lt.s32.totalorder %s27, 1
          %s415 = scalar_select %p414, %s27, 1
          %s416 = smul.addr %s415, 8
          %s417 = scalar_lea.vmem %s1, %s416
        $region64: #{post_patt_encode.11} parent=55 // pred_fallthru
          _
      $region56: #{post_patt_encode.11} parent=5 // pred_fallthru
        _
      %p418 = scmp.le.s32.totalorder 1, %s20
      %p419 = scmp.lt.s32.totalorder %s20, 3
      %p420 = pnand %p418, %p419
      %p421 = pneg %p420
      // Predicated region
      $region65: #{post_patt_encode.11} parent=5 // pred_check
        _
      $region66: #{post_patt_encode.11} parent=5 // pred_check_branch
        %423 = sbr.rel (%p420) target = $region68
      $region67: #{post_patt_encode.11} parent=5 // pred_region
        %s424 = ssub.s32 %s20, 1
        // Predicated region
        $region69: #{post_patt_encode.11} parent=67 // pred_check
          %p425 = pneg %p191
        $region70: #{post_patt_encode.11} parent=67 // pred_check_branch
          %427 = sbr.rel (%p425) target = $region72
        $region71: #{post_patt_encode.11} parent=67 // pred_region
          %428 = dma.done [#allocation3], 1024
        $region72: #{post_patt_encode.11} parent=67 // pred_fallthru
          _
        // Predicated region
        $region73: #{post_patt_encode.11} parent=67 // pred_check
          %p429 = pneg %p233
        $region74: #{post_patt_encode.11} parent=67 // pred_check_branch
          %431 = sbr.rel (%p429) target = $region76
        $region75: #{post_patt_encode.11} parent=67 // pred_region
          %432 = dma.done [#allocation5], 1024
        $region76: #{post_patt_encode.11} parent=67 // pred_fallthru
          _
        // Predicated region
        $region77: #{post_patt_encode.11} parent=67 // pred_check
          %p433 = pneg %p254
        $region78: #{post_patt_encode.11} parent=67 // pred_check_branch
          %435 = sbr.rel (%p433) target = $region80
        $region79: #{post_patt_encode.11} parent=67 // pred_region
          %436 = dma.done [#allocation5], 16
        $region80: #{post_patt_encode.11} parent=67 // pred_fallthru
          _
        %p437 = scmp.lt.s32.totalorder %s29, 1
        %s438 = scalar_select %p437, %s29, 1
        %p439 = scmp.lt.s32.totalorder %s30, 0
        %s440 = scalar_select %p439, %s30, 0
        %s441 = sadd.s32 %s440, %s438
        %s442 = smul.addr %s441, 8
        %s443 = scalar_lea.vmem %s0, %s442
        %p444 = pneg %p60
        %p445 = pneg %p57
        %p446 = scmp.lt.s32.totalorder %s29, 1
        %s447 = scalar_select %p446, %s29, 1
        %s448 = smul.addr %s447, 8
        %s449 = scalar_lea.vmem %s1, %s448
        %p450 = pneg %p86
        %p451 = pneg %p83
        %p452 = pneg %p107
        %p453 = pneg %p104
        %p454 = pneg %p128
        %p455 = pneg %p125
        %p456 = pneg %p149
        %p457 = pneg %p146
        %p458 = pneg %p170
        %p459 = pneg %p167
        %p460 = pneg %p191
        %p461 = pneg %p188
        %p462 = pneg %p212
        %p463 = pneg %p209
        %p464 = pneg %p233
        %p465 = pneg %p230
        %p466 = pneg %p254
        %p467 = pneg %p251
        %p468 = pneg %p275
        %p469 = pneg %p272
        %p470 = pneg %p296
        %p471 = pneg %p293
        %p472 = pneg %p324
        %p473 = pneg %p321
        %p474 = scmp.lt.s32.totalorder %s29, 1
        %s475 = scalar_select %p474, %s29, 1
        %p476 = scmp.lt.s32.totalorder %s30, 0
        %s477 = scalar_select %p476, %s30, 0
        %s478 = sadd.s32 %s477, %s475
        %s479 = smul.addr %s478, 8
        %s480 = scalar_lea.vmem %s12, %s479
        %p481 = scmp.lt.s32.totalorder %s29, 1
        %s482 = scalar_select %p481, %s29, 1
        %p483 = scmp.lt.s32.totalorder %s30, 0
        %s484 = scalar_select %p483, %s30, 0
        %s485 = sadd.s32 %s484, %s482
        %s486 = smul.addr %s485, 8
        %s487 = scalar_lea.vmem %s0, %s486
        %p488 = scmp.lt.s32.totalorder %s29, 1
        %s489 = scalar_select %p488, %s29, 1
        %s490 = smul.addr %s489, 8
        %s491 = scalar_lea.vmem %s1, %s490
        %p492 = scmp.lt.s32.totalorder %s29, 1
        %s493 = scalar_select %p492, %s29, 1
        %p494 = scmp.lt.s32.totalorder %s30, 0
        %s495 = scalar_select %p494, %s30, 0
        %s496 = sadd.s32 %s495, %s493
        %s497 = smul.addr %s496, 8
        %s498 = scalar_lea.vmem %s12, %s497
        %v500 = vld [vmem:[%s487] sm:$0xff]
        %v501 = vpack.c.bf16 %v500, %v500
        %v502 = vld [vmem:[%s491] sm:$0xff]
        %v503 = vpack.c.bf16 %v502, %v502
        %v504 = vld [vmem:[%s2] sm:$0xf]
        %v505 = vld [vmem:[%s2 + $0x4] sm:$0xf]
        %v506 = vld [vmem:[%s2 + $0x8] sm:$0xf]
        %v507 = vld [vmem:[%s2 + $0xc] sm:$0xf]
        %v508 = vld [vmem:[%s2 + $0x10] sm:$0xf]
        %v509 = vld [vmem:[%s2 + $0x14] sm:$0xf]
        %v510 = vld [vmem:[%s2 + $0x18] sm:$0xf]
        %v511 = vld [vmem:[%s2 + $0x1c] sm:$0xf]
        %v512 = vld [vmem:[%s2 + $0x20] sm:$0xf]
        %v513 = vld [vmem:[%s2 + $0x24] sm:$0xf]
        %v514 = vld [vmem:[%s2 + $0x28] sm:$0xf]
        %v515 = vld [vmem:[%s2 + $0x2c] sm:$0xf]
        %v516 = vld [vmem:[%s2 + $0x30] sm:$0xf]
        %v517 = vld [vmem:[%s2 + $0x34] sm:$0xf]
        %v518 = vld [vmem:[%s2 + $0x38] sm:$0xf]
        %v519 = vld [vmem:[%s2 + $0x3c] sm:$0xf]
        %v520 = vld [vmem:[%s3] sm:$0x1]
        %v522 = vlaneseq
        %v523 = vshrl.u32 %v522, 7
        %v524 = vsub.s32 0, %v523
        %v525 = vrot.slane %v520, %v524
        %v543 = vunpack.c.l.b16 %v504
        %v544 = vunpack.c.l.b16 %v505
        %v545 = vunpack.c.l.b16 %v506
        %v546 = vunpack.c.l.b16 %v507
        %v547 = vunpack.c.l.b16 %v508
        %v548 = vunpack.c.l.b16 %v509
        %v549 = vunpack.c.l.b16 %v510
        %v550 = vunpack.c.l.b16 %v511
        %v551 = vunpack.c.l.b16 %v512
        %v552 = vunpack.c.l.b16 %v513
        %v553 = vunpack.c.l.b16 %v514
        %v554 = vunpack.c.l.b16 %v515
        %v555 = vunpack.c.l.b16 %v516
        %v556 = vunpack.c.l.b16 %v517
        %v557 = vunpack.c.l.b16 %v518
        %v558 = vunpack.c.l.b16 %v519
        %v559 = vpack.c.b16 %v544, %v543
        %v560 = vpack.c.b16 %v546, %v545
        %v561 = vpack.c.b16 %v548, %v547
        %v562 = vpack.c.b16 %v550, %v549
        %v563 = vpack.c.b16 %v552, %v551
        %v564 = vpack.c.b16 %v554, %v553
        %v565 = vpack.c.b16 %v556, %v555
        %v566 = vpack.c.b16 %v558, %v557
        %575 = vmatprep.subr.bf16.mxu0 0
        %576 = vmatpush1.bf16.msra.mxu0 %v559
        %577 = vmatprep.subr.bf16.mxu0 0
        %578 = vmatpush1.bf16.msra.mxu0 %v560
        %579 = vmatprep.subr.bf16.mxu0 0
        %580 = vmatpush1.bf16.msra.mxu0 %v561
        %581 = vmatprep.subr.bf16.mxu0 0
        %582 = vmatpush1.bf16.msra.mxu0 %v562
        %583 = vmatprep.subr.bf16.mxu0 0
        %584 = vmatpush1.bf16.msra.mxu0 %v563
        %585 = vmatprep.subr.bf16.mxu0 0
        %586 = vmatpush1.bf16.msra.mxu0 %v564
        %587 = vmatprep.subr.bf16.mxu0 0
        %588 = vmatpush1.bf16.msra.mxu0 %v565
        %589 = vmatprep.subr.bf16.mxu0 0
        %590 = vmatpush1.bf16.msra.mxu0 %v566
        %591 = vmatprep.subr.bf16.mxu0 0
        %592 = vmatpush1.bf16.msra.mxu0 0
        %593 = vmatprep.subr.bf16.mxu0 0
        %594 = vmatpush1.bf16.msra.mxu0 0
        %595 = vmatprep.subr.bf16.mxu0 0
        %596 = vmatpush1.bf16.msra.mxu0 0
        %597 = vmatprep.subr.bf16.mxu0 0
        %598 = vmatpush1.bf16.msra.mxu0 0
        %599 = vmatprep.subr.bf16.mxu0 0
        %600 = vmatpush1.bf16.msra.mxu0 0
        %601 = vmatprep.subr.bf16.mxu0 0
        %602 = vmatpush1.bf16.msra.mxu0 0
        %603 = vmatprep.subr.bf16.mxu0 0
        %604 = vmatpush1.bf16.msra.mxu0 0
        %605 = vmatprep.subr.bf16.mxu0 0
        %606 = vmatpush1.bf16.msra.mxu0 0
        %607 = vmatprep.mubr.bf16.mxu0 0
        %608 = vmatmul.mubr.bf16.gmra.mrb[0].mxu0 %v501
        %v609 = vpop.f32.mrb[0].mxu0
        %v610 = vadd.f32 %v525, %v609
        %v611 = vpop.f32.mrb[0].mxu0
        %v612 = vpop.f32.mrb[0].mxu0
        %v613 = vpop.f32.mrb[0].mxu0
        %614 = vdwg.mxu0
        %v615 = vpack.c.bf16 %v610, %v610
        %v616 = vld [vmem:[%s4] sm:$0xf]
        %v617 = vld [vmem:[%s4 + $0x4] sm:$0xf]
        %v618 = vld [vmem:[%s4 + $0x8] sm:$0xf]
        %v619 = vld [vmem:[%s4 + $0xc] sm:$0xf]
        %v620 = vld [vmem:[%s4 + $0x10] sm:$0xf]
        %v621 = vld [vmem:[%s4 + $0x14] sm:$0xf]
        %v622 = vld [vmem:[%s4 + $0x18] sm:$0xf]
        %v623 = vld [vmem:[%s4 + $0x1c] sm:$0xf]
        %v624 = vld [vmem:[%s4 + $0x20] sm:$0xf]
        %v625 = vld [vmem:[%s4 + $0x24] sm:$0xf]
        %v626 = vld [vmem:[%s4 + $0x28] sm:$0xf]
        %v627 = vld [vmem:[%s4 + $0x2c] sm:$0xf]
        %v628 = vld [vmem:[%s4 + $0x30] sm:$0xf]
        %v629 = vld [vmem:[%s4 + $0x34] sm:$0xf]
        %v630 = vld [vmem:[%s4 + $0x38] sm:$0xf]
        %v631 = vld [vmem:[%s4 + $0x3c] sm:$0xf]
        %v632 = vld [vmem:[%s5] sm:$0x1]
        %v634 = vlaneseq
        %v635 = vshrl.u32 %v634, 7
        %v636 = vsub.s32 0, %v635
        %v637 = vrot.slane %v632, %v636
        %v655 = vunpack.c.l.b16 %v616
        %v656 = vunpack.c.l.b16 %v617
        %v657 = vunpack.c.l.b16 %v618
        %v658 = vunpack.c.l.b16 %v619
        %v659 = vunpack.c.l.b16 %v620
        %v660 = vunpack.c.l.b16 %v621
        %v661 = vunpack.c.l.b16 %v622
        %v662 = vunpack.c.l.b16 %v623
        %v663 = vunpack.c.l.b16 %v624
        %v664 = vunpack.c.l.b16 %v625
        %v665 = vunpack.c.l.b16 %v626
        %v666 = vunpack.c.l.b16 %v627
        %v667 = vunpack.c.l.b16 %v628
        %v668 = vunpack.c.l.b16 %v629
        %v669 = vunpack.c.l.b16 %v630
        %v670 = vunpack.c.l.b16 %v631
        %v671 = vpack.c.b16 %v656, %v655
        %v672 = vpack.c.b16 %v658, %v657
        %v673 = vpack.c.b16 %v660, %v659
        %v674 = vpack.c.b16 %v662, %v661
        %v675 = vpack.c.b16 %v664, %v663
        %v676 = vpack.c.b16 %v666, %v665
        %v677 = vpack.c.b16 %v668, %v667
        %v678 = vpack.c.b16 %v670, %v669
        %687 = vmatprep.subr.bf16.mxu0 0
        %688 = vmatpush1.bf16.msra.mxu0 %v671
        %689 = vmatprep.subr.bf16.mxu0 0
        %690 = vmatpush1.bf16.msra.mxu0 %v672
        %691 = vmatprep.subr.bf16.mxu0 0
        %692 = vmatpush1.bf16.msra.mxu0 %v673
        %693 = vmatprep.subr.bf16.mxu0 0
        %694 = vmatpush1.bf16.msra.mxu0 %v674
        %695 = vmatprep.subr.bf16.mxu0 0
        %696 = vmatpush1.bf16.msra.mxu0 %v675
        %697 = vmatprep.subr.bf16.mxu0 0
        %698 = vmatpush1.bf16.msra.mxu0 %v676
        %699 = vmatprep.subr.bf16.mxu0 0
        %700 = vmatpush1.bf16.msra.mxu0 %v677
        %701 = vmatprep.subr.bf16.mxu0 0
        %702 = vmatpush1.bf16.msra.mxu0 %v678
        %703 = vmatprep.subr.bf16.mxu0 0
        %704 = vmatpush1.bf16.msra.mxu0 0
        %705 = vmatprep.subr.bf16.mxu0 0
        %706 = vmatpush1.bf16.msra.mxu0 0
        %707 = vmatprep.subr.bf16.mxu0 0
        %708 = vmatpush1.bf16.msra.mxu0 0
        %709 = vmatprep.subr.bf16.mxu0 0
        %710 = vmatpush1.bf16.msra.mxu0 0
        %711 = vmatprep.subr.bf16.mxu0 0
        %712 = vmatpush1.bf16.msra.mxu0 0
        %713 = vmatprep.subr.bf16.mxu0 0
        %714 = vmatpush1.bf16.msra.mxu0 0
        %715 = vmatprep.subr.bf16.mxu0 0
        %716 = vmatpush1.bf16.msra.mxu0 0
        %717 = vmatprep.subr.bf16.mxu0 0
        %718 = vmatpush1.bf16.msra.mxu0 0
        %719 = vmatprep.mubr.bf16.mxu0 0
        %720 = vmatmul.mubr.bf16.gmra.mrb[0].mxu0 %v503
        %v721 = vpop.f32.mrb[0].mxu0
        %v722 = vadd.f32 %v637, %v721
        %v723 = vpop.f32.mrb[0].mxu0
        %v724 = vpop.f32.mrb[0].mxu0
        %v725 = vpop.f32.mrb[0].mxu0
        %726 = vdwg.mxu0
        %v727 = vpack.c.bf16 %v722, %v722
        %v728 = vld [vmem:[#allocation2] sm:$0xf]
        %v729 = vld [vmem:[#allocation2 + $0x4] sm:$0xf]
        %v730 = vld [vmem:[#allocation2 + $0x8] sm:$0xf]
        %v731 = vld [vmem:[#allocation2 + $0xc] sm:$0xf]
        %v732 = vld [vmem:[#allocation2 + $0x10] sm:$0xf]
        %v733 = vld [vmem:[#allocation2 + $0x14] sm:$0xf]
        %v734 = vld [vmem:[#allocation2 + $0x18] sm:$0xf]
        %v735 = vld [vmem:[#allocation2 + $0x1c] sm:$0xf]
        %v736 = vld [vmem:[#allocation2 + $0x20] sm:$0xf]
        %v737 = vld [vmem:[#allocation2 + $0x24] sm:$0xf]
        %v738 = vld [vmem:[#allocation2 + $0x28] sm:$0xf]
        %v739 = vld [vmem:[#allocation2 + $0x2c] sm:$0xf]
        %v740 = vld [vmem:[#allocation2 + $0x30] sm:$0xf]
        %v741 = vld [vmem:[#allocation2 + $0x34] sm:$0xf]
        %v742 = vld [vmem:[#allocation2 + $0x38] sm:$0xf]
        %v743 = vld [vmem:[#allocation2 + $0x3c] sm:$0xf]
        %v744 = vld [vmem:[%s7] sm:$0x1]
        %v746 = vlaneseq
        %v747 = vshrl.u32 %v746, 7
        %v748 = vsub.s32 0, %v747
        %v749 = vrot.slane %v744, %v748
        %v767 = vunpack.c.l.b16 %v728
        %v768 = vunpack.c.l.b16 %v729
        %v769 = vunpack.c.l.b16 %v730
        %v770 = vunpack.c.l.b16 %v731
        %v771 = vunpack.c.l.b16 %v732
        %v772 = vunpack.c.l.b16 %v733
        %v773 = vunpack.c.l.b16 %v734
        %v774 = vunpack.c.l.b16 %v735
        %v775 = vunpack.c.l.b16 %v736
        %v776 = vunpack.c.l.b16 %v737
        %v777 = vunpack.c.l.b16 %v738
        %v778 = vunpack.c.l.b16 %v739
        %v779 = vunpack.c.l.b16 %v740
        %v780 = vunpack.c.l.b16 %v741
        %v781 = vunpack.c.l.b16 %v742
        %v782 = vunpack.c.l.b16 %v743
        %v783 = vpack.c.b16 %v768, %v767
        %v784 = vpack.c.b16 %v770, %v769
        %v785 = vpack.c.b16 %v772, %v771
        %v786 = vpack.c.b16 %v774, %v773
        %v787 = vpack.c.b16 %v776, %v775
        %v788 = vpack.c.b16 %v778, %v777
        %v789 = vpack.c.b16 %v780, %v779
        %v790 = vpack.c.b16 %v782, %v781
        %799 = vmatprep.subr.bf16.mxu0 0
        %800 = vmatpush1.bf16.msra.mxu0 %v783
        %801 = vmatprep.subr.bf16.mxu0 0
        %802 = vmatpush1.bf16.msra.mxu0 %v784
        %803 = vmatprep.subr.bf16.mxu0 0
        %804 = vmatpush1.bf16.msra.mxu0 %v785
        %805 = vmatprep.subr.bf16.mxu0 0
        %806 = vmatpush1.bf16.msra.mxu0 %v786
        %807 = vmatprep.subr.bf16.mxu0 0
        %808 = vmatpush1.bf16.msra.mxu0 %v787
        %809 = vmatprep.subr.bf16.mxu0 0
        %810 = vmatpush1.bf16.msra.mxu0 %v788
        %811 = vmatprep.subr.bf16.mxu0 0
        %812 = vmatpush1.bf16.msra.mxu0 %v789
        %813 = vmatprep.subr.bf16.mxu0 0
        %814 = vmatpush1.bf16.msra.mxu0 %v790
        %815 = vmatprep.subr.bf16.mxu0 0
        %816 = vmatpush1.bf16.msra.mxu0 0
        %817 = vmatprep.subr.bf16.mxu0 0
        %818 = vmatpush1.bf16.msra.mxu0 0
        %819 = vmatprep.subr.bf16.mxu0 0
        %820 = vmatpush1.bf16.msra.mxu0 0
        %821 = vmatprep.subr.bf16.mxu0 0
        %822 = vmatpush1.bf16.msra.mxu0 0
        %823 = vmatprep.subr.bf16.mxu0 0
        %824 = vmatpush1.bf16.msra.mxu0 0
        %825 = vmatprep.subr.bf16.mxu0 0
        %826 = vmatpush1.bf16.msra.mxu0 0
        %827 = vmatprep.subr.bf16.mxu0 0
        %828 = vmatpush1.bf16.msra.mxu0 0
        %829 = vmatprep.subr.bf16.mxu0 0
        %830 = vmatpush1.bf16.msra.mxu0 0
        %831 = vmatprep.mubr.bf16.mxu0 0
        %832 = vmatmul.mubr.bf16.gmra.mrb[0].mxu0 %v503
        %v833 = vpop.f32.mrb[0].mxu0
        %v834 = vadd.f32 %v749, %v833
        %v835 = vpop.f32.mrb[0].mxu0
        %v836 = vpop.f32.mrb[0].mxu0
        %v837 = vpop.f32.mrb[0].mxu0
        %838 = vdwg.mxu0
        %v839 = vpack.c.bf16 %v834, %v834
        %vm840 = vcmask 261120
        %v842 = vsel %vm840, %v615, 0
        %v845 = vsel %vm840, %v727, 0
        %847 = vmatprep.subr.bf16.mxu0 0
        %848 = vmatpush1.bf16.xpose.msra.mxu0 %v845
        %849 = vmatprep.subr.bf16.mxu0 0
        %850 = vmatpush1.bf16.xpose.msra.mxu0 0
        %851 = vmatprep.subr.bf16.mxu0 0
        %852 = vmatpush1.bf16.xpose.msra.mxu0 0
        %853 = vmatprep.subr.bf16.mxu0 0
        %854 = vmatpush1.bf16.xpose.msra.mxu0 0
        %855 = vmatprep.subr.bf16.mxu0 0
        %856 = vmatpush1.bf16.xpose.msra.mxu0 0
        %857 = vmatprep.subr.bf16.mxu0 0
        %858 = vmatpush1.bf16.xpose.msra.mxu0 0
        %859 = vmatprep.subr.bf16.mxu0 0
        %860 = vmatpush1.bf16.xpose.msra.mxu0 0
        %861 = vmatprep.subr.bf16.mxu0 0
        %862 = vmatpush1.bf16.xpose.msra.mxu0 0
        %863 = vmatprep.subr.bf16.mxu0 0
        %864 = vmatpush1.bf16.xpose.msra.mxu0 0
        %865 = vmatprep.subr.bf16.mxu0 0
        %866 = vmatpush1.bf16.xpose.msra.mxu0 0
        %867 = vmatprep.subr.bf16.mxu0 0
        %868 = vmatpush1.bf16.xpose.msra.mxu0 0
        %869 = vmatprep.subr.bf16.mxu0 0
        %870 = vmatpush1.bf16.xpose.msra.mxu0 0
        %871 = vmatprep.subr.bf16.mxu0 0
        %872 = vmatpush1.bf16.xpose.msra.mxu0 0
        %873 = vmatprep.subr.bf16.mxu0 0
        %874 = vmatpush1.bf16.xpose.msra.mxu0 0
        %875 = vmatprep.subr.bf16.mxu0 0
        %876 = vmatpush1.bf16.xpose.msra.mxu0 0
        %877 = vmatprep.subr.bf16.mxu0 0
        %878 = vmatpush1.bf16.xpose.msra.mxu0 0
        %879 = vmatprep.mubr.bf16.mxu0 0
        %880 = vmatmul.mubr.bf16.gmra.mrb[0].mxu0 %v842
        %v881 = vpop.f32.mrb[0].mxu0
        %v882 = vadd.f32 0.0, %v881
        %v883 = vpop.f32.mrb[0].mxu0
        %v884 = vpop.f32.mrb[0].mxu0
        %v885 = vpop.f32.mrb[0].mxu0
        %886 = vdwg.mxu0
        %vm887 = vcmask 64512
        %v888 = vsel %vm887, %v882, -inf
        %889 = vmax.xlane.f32.xlu0 %v888
        %v890 = vpop.xlane.xlu0 %889
        %v891 = vsub.f32 %v882, %v890
        %v892 = vmul.f32 %v891, 1.442695
        %v893 = vpow.pop %v892
        %v894 = vsel %vm887, %v893, 0.0
        %895 = vadd.xlane.f32.xlu0 %v894
        %v896 = vpop.xlane.xlu0 %895
        %v897 = vrcp.pop %v896
        %v898 = vpack.c.bf16 %v893, %v893
        %v900 = vsel %vm887, %v898, 0
        %vm902 = vcmask 1043456
        %v904 = vsel %vm902, %v839, 0
        %906 = vmatprep.subr.bf16.mxu0 0
        %907 = vmatpush1.bf16.msra.mxu0 %v904
        %908 = vmatprep.subr.bf16.mxu0 0
        %909 = vmatpush1.bf16.msra.mxu0 0
        %910 = vmatprep.subr.bf16.mxu0 0
        %911 = vmatpush1.bf16.msra.mxu0 0
        %912 = vmatprep.subr.bf16.mxu0 0
        %913 = vmatpush1.bf16.msra.mxu0 0
        %914 = vmatprep.subr.bf16.mxu0 0
        %915 = vmatpush1.bf16.msra.mxu0 0
        %916 = vmatprep.subr.bf16.mxu0 0
        %917 = vmatpush1.bf16.msra.mxu0 0
        %918 = vmatprep.subr.bf16.mxu0 0
        %919 = vmatpush1.bf16.msra.mxu0 0
        %920 = vmatprep.subr.bf16.mxu0 0
        %921 = vmatpush1.bf16.msra.mxu0 0
        %922 = vmatprep.subr.bf16.mxu0 0
        %923 = vmatpush1.bf16.msra.mxu0 0
        %924 = vmatprep.subr.bf16.mxu0 0
        %925 = vmatpush1.bf16.msra.mxu0 0
        %926 = vmatprep.subr.bf16.mxu0 0
        %927 = vmatpush1.bf16.msra.mxu0 0
        %928 = vmatprep.subr.bf16.mxu0 0
        %929 = vmatpush1.bf16.msra.mxu0 0
        %930 = vmatprep.subr.bf16.mxu0 0
        %931 = vmatpush1.bf16.msra.mxu0 0
        %932 = vmatprep.subr.bf16.mxu0 0
        %933 = vmatpush1.bf16.msra.mxu0 0
        %934 = vmatprep.subr.bf16.mxu0 0
        %935 = vmatpush1.bf16.msra.mxu0 0
        %936 = vmatprep.subr.bf16.mxu0 0
        %937 = vmatpush1.bf16.msra.mxu0 0
        %938 = vmatprep.mubr.bf16.mxu0 0
        %939 = vmatmul.mubr.bf16.gmra.mrb[0].mxu0 %v900
        %v940 = vpop.f32.mrb[0].mxu0
        %v941 = vadd.f32 0.0, %v940
        %v942 = vpop.f32.mrb[0].mxu0
        %v943 = vpop.f32.mrb[0].mxu0
        %v944 = vpop.f32.mrb[0].mxu0
        %945 = vdwg.mxu0
        %v946 = vmul.f32 %v941, %v897
        %v947 = vpack.c.bf16 %v946, %v946
        %949 = vrot.lane.b32.xlu0 %v615, 96
        %v950 = vpop.permute.xlu0 %949
        %952 = vrot.lane.b32.xlu0 %v727, 96
        %v953 = vpop.permute.xlu0 %952
        %v955 = vsel %vm840, %v950, 0
        %v958 = vsel %vm840, %v953, 0
        %960 = vmatprep.subr.bf16.mxu0 0
        %961 = vmatpush1.bf16.xpose.msra.mxu0 %v958
        %962 = vmatprep.subr.bf16.mxu0 0
        %963 = vmatpush1.bf16.xpose.msra.mxu0 0
        %964 = vmatprep.subr.bf16.mxu0 0
        %965 = vmatpush1.bf16.xpose.msra.mxu0 0
        %966 = vmatprep.subr.bf16.mxu0 0
        %967 = vmatpush1.bf16.xpose.msra.mxu0 0
        %968 = vmatprep.subr.bf16.mxu0 0
        %969 = vmatpush1.bf16.xpose.msra.mxu0 0
        %970 = vmatprep.subr.bf16.mxu0 0
        %971 = vmatpush1.bf16.xpose.msra.mxu0 0
        %972 = vmatprep.subr.bf16.mxu0 0
        %973 = vmatpush1.bf16.xpose.msra.mxu0 0
        %974 = vmatprep.subr.bf16.mxu0 0
        %975 = vmatpush1.bf16.xpose.msra.mxu0 0
        %976 = vmatprep.subr.bf16.mxu0 0
        %977 = vmatpush1.bf16.xpose.msra.mxu0 0
        %978 = vmatprep.subr.bf16.mxu0 0
        %979 = vmatpush1.bf16.xpose.msra.mxu0 0
        %980 = vmatprep.subr.bf16.mxu0 0
        %981 = vmatpush1.bf16.xpose.msra.mxu0 0
        %982 = vmatprep.subr.bf16.mxu0 0
        %983 = vmatpush1.bf16.xpose.msra.mxu0 0
        %984 = vmatprep.subr.bf16.mxu0 0
        %985 = vmatpush1.bf16.xpose.msra.mxu0 0
        %986 = vmatprep.subr.bf16.mxu0 0
        %987 = vmatpush1.bf16.xpose.msra.mxu0 0
        %988 = vmatprep.subr.bf16.mxu0 0
        %989 = vmatpush1.bf16.xpose.msra.mxu0 0
        %990 = vmatprep.subr.bf16.mxu0 0
        %991 = vmatpush1.bf16.xpose.msra.mxu0 0
        %992 = vmatprep.mubr.bf16.mxu0 0
        %993 = vmatmul.mubr.bf16.gmra.mrb[0].mxu0 %v955
        %v994 = vpop.f32.mrb[0].mxu0
        %v995 = vadd.f32 0.0, %v994
        %v996 = vpop.f32.mrb[0].mxu0
        %v997 = vpop.f32.mrb[0].mxu0
        %v998 = vpop.f32.mrb[0].mxu0
        %999 = vdwg.mxu0
        %v1000 = vsel %vm887, %v995, -inf
        %1001 = vmax.xlane.f32.xlu0 %v1000
        %v1002 = vpop.xlane.xlu0 %1001
        %v1003 = vsub.f32 %v995, %v1002
        %v1004 = vmul.f32 %v1003, 1.442695
        %v1005 = vpow.pop %v1004
        %v1006 = vsel %vm887, %v1005, 0.0
        %1007 = vadd.xlane.f32.xlu0 %v1006
        %v1008 = vpop.xlane.xlu0 %1007
        %v1009 = vrcp.pop %v1008
        %v1010 = vpack.c.bf16 %v1005, %v1005
        %1012 = vrot.lane.b32.xlu0 %v839, 96
        %v1013 = vpop.permute.xlu0 %1012
        %v1015 = vsel %vm887, %v1010, 0
        %v1018 = vsel %vm902, %v1013, 0
        %1020 = vmatprep.subr.bf16.mxu0 0
        %1021 = vmatpush1.bf16.msra.mxu0 %v1018
        %1022 = vmatprep.subr.bf16.mxu0 0
        %1023 = vmatpush1.bf16.msra.mxu0 0
        %1024 = vmatprep.subr.bf16.mxu0 0
        %1025 = vmatpush1.bf16.msra.mxu0 0
        %1026 = vmatprep.subr.bf16.mxu0 0
        %1027 = vmatpush1.bf16.msra.mxu0 0
        %1028 = vmatprep.subr.bf16.mxu0 0
        %1029 = vmatpush1.bf16.msra.mxu0 0
        %1030 = vmatprep.subr.bf16.mxu0 0
        %1031 = vmatpush1.bf16.msra.mxu0 0
        %1032 = vmatprep.subr.bf16.mxu0 0
        %1033 = vmatpush1.bf16.msra.mxu0 0
        %1034 = vmatprep.subr.bf16.mxu0 0
        %1035 = vmatpush1.bf16.msra.mxu0 0
        %1036 = vmatprep.subr.bf16.mxu0 0
        %1037 = vmatpush1.bf16.msra.mxu0 0
        %1038 = vmatprep.subr.bf16.mxu0 0
        %1039 = vmatpush1.bf16.msra.mxu0 0
        %1040 = vmatprep.subr.bf16.mxu0 0
        %1041 = vmatpush1.bf16.msra.mxu0 0
        %1042 = vmatprep.subr.bf16.mxu0 0
        %1043 = vmatpush1.bf16.msra.mxu0 0
        %1044 = vmatprep.subr.bf16.mxu0 0
        %1045 = vmatpush1.bf16.msra.mxu0 0
        %1046 = vmatprep.subr.bf16.mxu0 0
        %1047 = vmatpush1.bf16.msra.mxu0 0
        %1048 = vmatprep.subr.bf16.mxu0 0
        %1049 = vmatpush1.bf16.msra.mxu0 0
        %1050 = vmatprep.subr.bf16.mxu0 0
        %1051 = vmatpush1.bf16.msra.mxu0 0
        %1052 = vmatprep.mubr.bf16.mxu0 0
        %1053 = vmatmul.mubr.bf16.gmra.mrb[0].mxu0 %v1015
        %v1054 = vpop.f32.mrb[0].mxu0
        %v1055 = vadd.f32 0.0, %v1054
        %v1056 = vpop.f32.mrb[0].mxu0
        %v1057 = vpop.f32.mrb[0].mxu0
        %v1058 = vpop.f32.mrb[0].mxu0
        %1059 = vdwg.mxu0
        %v1060 = vmul.f32 %v1055, %v1009
        %v1061 = vpack.c.bf16 %v1060, %v1060
        %1062 = vrot.lane.b32.xlu0 %v615, 64
        %v1063 = vpop.permute.xlu0 %1062
        %1064 = vrot.lane.b32.xlu0 %v727, 64
        %v1065 = vpop.permute.xlu0 %1064
        %v1067 = vsel %vm840, %v1063, 0
        %v1070 = vsel %vm840, %v1065, 0
        %1072 = vmatprep.subr.bf16.mxu0 0
        %1073 = vmatpush1.bf16.xpose.msra.mxu0 %v1070
        %1074 = vmatprep.subr.bf16.mxu0 0
        %1075 = vmatpush1.bf16.xpose.msra.mxu0 0
        %1076 = vmatprep.subr.bf16.mxu0 0
        %1077 = vmatpush1.bf16.xpose.msra.mxu0 0
        %1078 = vmatprep.subr.bf16.mxu0 0
        %1079 = vmatpush1.bf16.xpose.msra.mxu0 0
        %1080 = vmatprep.subr.bf16.mxu0 0
        %1081 = vmatpush1.bf16.xpose.msra.mxu0 0
        %1082 = vmatprep.subr.bf16.mxu0 0
        %1083 = vmatpush1.bf16.xpose.msra.mxu0 0
        %1084 = vmatprep.subr.bf16.mxu0 0
        %1085 = vmatpush1.bf16.xpose.msra.mxu0 0
        %1086 = vmatprep.subr.bf16.mxu0 0
        %1087 = vmatpush1.bf16.xpose.msra.mxu0 0
        %1088 = vmatprep.subr.bf16.mxu0 0
        %1089 = vmatpush1.bf16.xpose.msra.mxu0 0
        %1090 = vmatprep.subr.bf16.mxu0 0
        %1091 = vmatpush1.bf16.xpose.msra.mxu0 0
        %1092 = vmatprep.subr.bf16.mxu0 0
        %1093 = vmatpush1.bf16.xpose.msra.mxu0 0
        %1094 = vmatprep.subr.bf16.mxu0 0
        %1095 = vmatpush1.bf16.xpose.msra.mxu0 0
        %1096 = vmatprep.subr.bf16.mxu0 0
        %1097 = vmatpush1.bf16.xpose.msra.mxu0 0
        %1098 = vmatprep.subr.bf16.mxu0 0
        %1099 = vmatpush1.bf16.xpose.msra.mxu0 0
        %1100 = vmatprep.subr.bf16.mxu0 0
        %1101 = vmatpush1.bf16.xpose.msra.mxu0 0
        %1102 = vmatprep.subr.bf16.mxu0 0
        %1103 = vmatpush1.bf16.xpose.msra.mxu0 0
        %1104 = vmatprep.mubr.bf16.mxu0 0
        %1105 = vmatmul.mubr.bf16.gmra.mrb[0].mxu0 %v1067
        %v1106 = vpop.f32.mrb[0].mxu0
        %v1107 = vadd.f32 0.0, %v1106
        %v1108 = vpop.f32.mrb[0].mxu0
        %v1109 = vpop.f32.mrb[0].mxu0
        %v1110 = vpop.f32.mrb[0].mxu0
        %1111 = vdwg.mxu0
        %v1112 = vsel %vm887, %v1107, -inf
        %1113 = vmax.xlane.f32.xlu0 %v1112
        %v1114 = vpop.xlane.xlu0 %1113
        %v1115 = vsub.f32 %v1107, %v1114
        %v1116 = vmul.f32 %v1115, 1.442695
        %v1117 = vpow.pop %v1116
        %v1118 = vsel %vm887, %v1117, 0.0
        %1119 = vadd.xlane.f32.xlu0 %v1118
        %v1120 = vpop.xlane.xlu0 %1119
        %v1121 = vrcp.pop %v1120
        %v1122 = vpack.c.bf16 %v1117, %v1117
        %1123 = vrot.lane.b32.xlu0 %v839, 64
        %v1124 = vpop.permute.xlu0 %1123
        %v1126 = vsel %vm887, %v1122, 0
        %v1129 = vsel %vm902, %v1124, 0
        %1131 = vmatprep.subr.bf16.mxu0 0
        %1132 = vmatpush1.bf16.msra.mxu0 %v1129
        %1133 = vmatprep.subr.bf16.mxu0 0
        %1134 = vmatpush1.bf16.msra.mxu0 0
        %1135 = vmatprep.subr.bf16.mxu0 0
        %1136 = vmatpush1.bf16.msra.mxu0 0
        %1137 = vmatprep.subr.bf16.mxu0 0
        %1138 = vmatpush1.bf16.msra.mxu0 0
        %1139 = vmatprep.subr.bf16.mxu0 0
        %1140 = vmatpush1.bf16.msra.mxu0 0
        %1141 = vmatprep.subr.bf16.mxu0 0
        %1142 = vmatpush1.bf16.msra.mxu0 0
        %1143 = vmatprep.subr.bf16.mxu0 0
        %1144 = vmatpush1.bf16.msra.mxu0 0
        %1145 = vmatprep.subr.bf16.mxu0 0
        %1146 = vmatpush1.bf16.msra.mxu0 0
        %1147 = vmatprep.subr.bf16.mxu0 0
        %1148 = vmatpush1.bf16.msra.mxu0 0
        %1149 = vmatprep.subr.bf16.mxu0 0
        %1150 = vmatpush1.bf16.msra.mxu0 0
        %1151 = vmatprep.subr.bf16.mxu0 0
        %1152 = vmatpush1.bf16.msra.mxu0 0
        %1153 = vmatprep.subr.bf16.mxu0 0
        %1154 = vmatpush1.bf16.msra.mxu0 0
        %1155 = vmatprep.subr.bf16.mxu0 0
        %1156 = vmatpush1.bf16.msra.mxu0 0
        %1157 = vmatprep.subr.bf16.mxu0 0
        %1158 = vmatpush1.bf16.msra.mxu0 0
        %1159 = vmatprep.subr.bf16.mxu0 0
        %1160 = vmatpush1.bf16.msra.mxu0 0
        %1161 = vmatprep.subr.bf16.mxu0 0
        %1162 = vmatpush1.bf16.msra.mxu0 0
        %1163 = vmatprep.mubr.bf16.mxu0 0
        %1164 = vmatmul.mubr.bf16.gmra.mrb[0].mxu0 %v1126
        %v1165 = vpop.f32.mrb[0].mxu0
        %v1166 = vadd.f32 0.0, %v1165
        %v1167 = vpop.f32.mrb[0].mxu0
        %v1168 = vpop.f32.mrb[0].mxu0
        %v1169 = vpop.f32.mrb[0].mxu0
        %1170 = vdwg.mxu0
        %v1171 = vmul.f32 %v1166, %v1121
        %v1172 = vpack.c.bf16 %v1171, %v1171
        %1173 = vrot.lane.b32.xlu0 %v615, 32
        %v1174 = vpop.permute.xlu0 %1173
        %1175 = vrot.lane.b32.xlu0 %v727, 32
        %v1176 = vpop.permute.xlu0 %1175
        %v1178 = vsel %vm840, %v1174, 0
        %v1181 = vsel %vm840, %v1176, 0
        %1183 = vmatprep.subr.bf16.mxu0 0
        %1184 = vmatpush1.bf16.xpose.msra.mxu0 %v1181
        %1185 = vmatprep.subr.bf16.mxu0 0
        %1186 = vmatpush1.bf16.xpose.msra.mxu0 0
        %1187 = vmatprep.subr.bf16.mxu0 0
        %1188 = vmatpush1.bf16.xpose.msra.mxu0 0
        %1189 = vmatprep.subr.bf16.mxu0 0
        %1190 = vmatpush1.bf16.xpose.msra.mxu0 0
        %1191 = vmatprep.subr.bf16.mxu0 0
        %1192 = vmatpush1.bf16.xpose.msra.mxu0 0
        %1193 = vmatprep.subr.bf16.mxu0 0
        %1194 = vmatpush1.bf16.xpose.msra.mxu0 0
        %1195 = vmatprep.subr.bf16.mxu0 0
        %1196 = vmatpush1.bf16.xpose.msra.mxu0 0
        %1197 = vmatprep.subr.bf16.mxu0 0
        %1198 = vmatpush1.bf16.xpose.msra.mxu0 0
        %1199 = vmatprep.subr.bf16.mxu0 0
        %1200 = vmatpush1.bf16.xpose.msra.mxu0 0
        %1201 = vmatprep.subr.bf16.mxu0 0
        %1202 = vmatpush1.bf16.xpose.msra.mxu0 0
        %1203 = vmatprep.subr.bf16.mxu0 0
        %1204 = vmatpush1.bf16.xpose.msra.mxu0 0
        %1205 = vmatprep.subr.bf16.mxu0 0
        %1206 = vmatpush1.bf16.xpose.msra.mxu0 0
        %1207 = vmatprep.subr.bf16.mxu0 0
        %1208 = vmatpush1.bf16.xpose.msra.mxu0 0
        %1209 = vmatprep.subr.bf16.mxu0 0
        %1210 = vmatpush1.bf16.xpose.msra.mxu0 0
        %1211 = vmatprep.subr.bf16.mxu0 0
        %1212 = vmatpush1.bf16.xpose.msra.mxu0 0
        %1213 = vmatprep.subr.bf16.mxu0 0
        %1214 = vmatpush1.bf16.xpose.msra.mxu0 0
        %1215 = vmatprep.mubr.bf16.mxu0 0
        %1216 = vmatmul.mubr.bf16.gmra.mrb[0].mxu0 %v1178
        %v1217 = vpop.f32.mrb[0].mxu0
        %v1218 = vadd.f32 0.0, %v1217
        %v1219 = vpop.f32.mrb[0].mxu0
        %v1220 = vpop.f32.mrb[0].mxu0
        %v1221 = vpop.f32.mrb[0].mxu0
        %1222 = vdwg.mxu0
        %v1223 = vsel %vm887, %v1218, -inf
        %1224 = vmax.xlane.f32.xlu0 %v1223
        %v1225 = vpop.xlane.xlu0 %1224
        %v1226 = vsub.f32 %v1218, %v1225
        %v1227 = vmul.f32 %v1226, 1.442695
        %v1228 = vpow.pop %v1227
        %v1229 = vsel %vm887, %v1228, 0.0
        %1230 = vadd.xlane.f32.xlu0 %v1229
        %v1231 = vpop.xlane.xlu0 %1230
        %v1232 = vrcp.pop %v1231
        %v1233 = vpack.c.bf16 %v1228, %v1228
        %1234 = vrot.lane.b32.xlu0 %v839, 32
        %v1235 = vpop.permute.xlu0 %1234
        %v1237 = vsel %vm887, %v1233, 0
        %v1240 = vsel %vm902, %v1235, 0
        %1242 = vmatprep.subr.bf16.mxu0 0
        %1243 = vmatpush1.bf16.msra.mxu0 %v1240
        %1244 = vmatprep.subr.bf16.mxu0 0
        %1245 = vmatpush1.bf16.msra.mxu0 0
        %1246 = vmatprep.subr.bf16.mxu0 0
        %1247 = vmatpush1.bf16.msra.mxu0 0
        %1248 = vmatprep.subr.bf16.mxu0 0
        %1249 = vmatpush1.bf16.msra.mxu0 0
        %1250 = vmatprep.subr.bf16.mxu0 0
        %1251 = vmatpush1.bf16.msra.mxu0 0
        %1252 = vmatprep.subr.bf16.mxu0 0
        %1253 = vmatpush1.bf16.msra.mxu0 0
        %1254 = vmatprep.subr.bf16.mxu0 0
        %1255 = vmatpush1.bf16.msra.mxu0 0
        %1256 = vmatprep.subr.bf16.mxu0 0
        %1257 = vmatpush1.bf16.msra.mxu0 0
        %1258 = vmatprep.subr.bf16.mxu0 0
        %1259 = vmatpush1.bf16.msra.mxu0 0
        %1260 = vmatprep.subr.bf16.mxu0 0
        %1261 = vmatpush1.bf16.msra.mxu0 0
        %1262 = vmatprep.subr.bf16.mxu0 0
        %1263 = vmatpush1.bf16.msra.mxu0 0
        %1264 = vmatprep.subr.bf16.mxu0 0
        %1265 = vmatpush1.bf16.msra.mxu0 0
        %1266 = vmatprep.subr.bf16.mxu0 0
        %1267 = vmatpush1.bf16.msra.mxu0 0
        %1268 = vmatprep.subr.bf16.mxu0 0
        %1269 = vmatpush1.bf16.msra.mxu0 0
        %1270 = vmatprep.subr.bf16.mxu0 0
        %1271 = vmatpush1.bf16.msra.mxu0 0
        %1272 = vmatprep.subr.bf16.mxu0 0
        %1273 = vmatpush1.bf16.msra.mxu0 0
        %1274 = vmatprep.mubr.bf16.mxu0 0
        %1275 = vmatmul.mubr.bf16.gmra.mrb[0].mxu0 %v1237
        %v1276 = vpop.f32.mrb[0].mxu0
        %v1277 = vadd.f32 0.0, %v1276
        %v1278 = vpop.f32.mrb[0].mxu0
        %v1279 = vpop.f32.mrb[0].mxu0
        %v1280 = vpop.f32.mrb[0].mxu0
        %1281 = vdwg.mxu0
        %v1282 = vmul.f32 %v1277, %v1232
        %v1283 = vpack.c.bf16 %v1282, %v1282
        %1285 = vrot.lane.b32.xlu0 %v1061, 32
        %v1286 = vpop.permute.xlu0 %1285
        %1288 = vrot.lane.b32.xlu0 %v1172, 64
        %v1289 = vpop.permute.xlu0 %1288
        %1291 = vrot.lane.b32.xlu0 %v1283, 96
        %v1292 = vpop.permute.xlu0 %1291
        %v1295 = vsel %vm840, %v947, %v1286
        %vm1296 = vcmask 523264
        %v1298 = vsel %vm1296, %v1295, %v1289
        %vm1299 = vcmask 785408
        %v1301 = vsel %vm1299, %v1298, %v1292
        %v1303 = vld [vmem:[#allocation4] sm:$0xf]
        %v1304 = vld [vmem:[#allocation4 + $0x4] sm:$0xf]
        %v1305 = vld [vmem:[#allocation4 + $0x8] sm:$0xf]
        %v1306 = vld [vmem:[#allocation4 + $0xc] sm:$0xf]
        %v1307 = vld [vmem:[#allocation4 + $0x10] sm:$0xf]
        %v1308 = vld [vmem:[#allocation4 + $0x14] sm:$0xf]
        %v1309 = vld [vmem:[#allocation4 + $0x18] sm:$0xf]
        %v1310 = vld [vmem:[#allocation4 + $0x1c] sm:$0xf]
        %v1311 = vld [vmem:[#allocation4 + $0x20] sm:$0xf]
        %v1312 = vld [vmem:[#allocation4 + $0x24] sm:$0xf]
        %v1313 = vld [vmem:[#allocation4 + $0x28] sm:$0xf]
        %v1314 = vld [vmem:[#allocation4 + $0x2c] sm:$0xf]
        %v1315 = vld [vmem:[#allocation4 + $0x30] sm:$0xf]
        %v1316 = vld [vmem:[#allocation4 + $0x34] sm:$0xf]
        %v1317 = vld [vmem:[#allocation4 + $0x38] sm:$0xf]
        %v1318 = vld [vmem:[#allocation4 + $0x3c] sm:$0xf]
        %v1319 = vld [vmem:[#allocation6] sm:$0x1]
        %v1321 = vlaneseq
        %v1322 = vshrl.u32 %v1321, 7
        %v1323 = vsub.s32 0, %v1322
        %v1324 = vrot.slane %v1319, %v1323
        %v1342 = vunpack.c.l.b16 %v1303
        %v1343 = vunpack.c.l.b16 %v1304
        %v1344 = vunpack.c.l.b16 %v1305
        %v1345 = vunpack.c.l.b16 %v1306
        %v1346 = vunpack.c.l.b16 %v1307
        %v1347 = vunpack.c.l.b16 %v1308
        %v1348 = vunpack.c.l.b16 %v1309
        %v1349 = vunpack.c.l.b16 %v1310
        %v1350 = vunpack.c.l.b16 %v1311
        %v1351 = vunpack.c.l.b16 %v1312
        %v1352 = vunpack.c.l.b16 %v1313
        %v1353 = vunpack.c.l.b16 %v1314
        %v1354 = vunpack.c.l.b16 %v1315
        %v1355 = vunpack.c.l.b16 %v1316
        %v1356 = vunpack.c.l.b16 %v1317
        %v1357 = vunpack.c.l.b16 %v1318
        %v1358 = vpack.c.b16 %v1343, %v1342
        %v1359 = vpack.c.b16 %v1345, %v1344
        %v1360 = vpack.c.b16 %v1347, %v1346
        %v1361 = vpack.c.b16 %v1349, %v1348
        %v1362 = vpack.c.b16 %v1351, %v1350
        %v1363 = vpack.c.b16 %v1353, %v1352
        %v1364 = vpack.c.b16 %v1355, %v1354
        %v1365 = vpack.c.b16 %v1357, %v1356
        %1374 = vmatprep.subr.bf16.mxu0 0
        %1375 = vmatpush1.bf16.msra.mxu0 %v1358
        %1376 = vmatprep.subr.bf16.mxu0 0
        %1377 = vmatpush1.bf16.msra.mxu0 %v1359
        %1378 = vmatprep.subr.bf16.mxu0 0
        %1379 = vmatpush1.bf16.msra.mxu0 %v1360
        %1380 = vmatprep.subr.bf16.mxu0 0
        %1381 = vmatpush1.bf16.msra.mxu0 %v1361
        %1382 = vmatprep.subr.bf16.mxu0 0
        %1383 = vmatpush1.bf16.msra.mxu0 %v1362
        %1384 = vmatprep.subr.bf16.mxu0 0
        %1385 = vmatpush1.bf16.msra.mxu0 %v1363
        %1386 = vmatprep.subr.bf16.mxu0 0
        %1387 = vmatpush1.bf16.msra.mxu0 %v1364
        %1388 = vmatprep.subr.bf16.mxu0 0
        %1389 = vmatpush1.bf16.msra.mxu0 %v1365
        %1390 = vmatprep.subr.bf16.mxu0 0
        %1391 = vmatpush1.bf16.msra.mxu0 0
        %1392 = vmatprep.subr.bf16.mxu0 0
        %1393 = vmatpush1.bf16.msra.mxu0 0
        %1394 = vmatprep.subr.bf16.mxu0 0
        %1395 = vmatpush1.bf16.msra.mxu0 0
        %1396 = vmatprep.subr.bf16.mxu0 0
        %1397 = vmatpush1.bf16.msra.mxu0 0
        %1398 = vmatprep.subr.bf16.mxu0 0
        %1399 = vmatpush1.bf16.msra.mxu0 0
        %1400 = vmatprep.subr.bf16.mxu0 0
        %1401 = vmatpush1.bf16.msra.mxu0 0
        %1402 = vmatprep.subr.bf16.mxu0 0
        %1403 = vmatpush1.bf16.msra.mxu0 0
        %1404 = vmatprep.subr.bf16.mxu0 0
        %1405 = vmatpush1.bf16.msra.mxu0 0
        %1406 = vmatprep.mubr.bf16.mxu0 0
        %1407 = vmatmul.mubr.bf16.gmra.mrb[0].mxu0 %v1301
        %v1408 = vpop.f32.mrb[0].mxu0
        %v1409 = vadd.f32 %v1324, %v1408
        %v1410 = vpop.f32.mrb[0].mxu0
        %v1411 = vpop.f32.mrb[0].mxu0
        %v1412 = vpop.f32.mrb[0].mxu0
        %1413 = vdwg.mxu0
        %v1414 = vadd.f32 %v1409, %v500
        %v1415 = vld [vmem:[%s10] sm:$0x1]
        %v1416 = vld [vmem:[%s11] sm:$0x1]
        %1417 = vadd.xlane.f32.xlu0 %v1414
        %v1418 = vpop.xlane.xlu0 %1417
        %v1419 = vrcp.pop 128.0
        %v1420 = vmul.f32 %v1418, %v1419
        %v1421 = vsub.f32 %v1414, %v1420
        %v1422 = vmul.f32 %v1421, %v1421
        %1423 = vadd.xlane.f32.xlu0 %v1422
        %v1424 = vpop.xlane.xlu0 %1423
        %v1425 = vmul.f32 %v1424, %v1419
        %v1426 = vadd.f32 %v1425, 1e-05
        %v1427 = vrsqrt.pop %v1426
        %v1428 = vmul.f32 %v1421, %v1427
        %v1430 = vlaneseq
        %v1431 = vshrl.u32 %v1430, 7
        %v1432 = vsub.s32 0, %v1431
        %v1433 = vrot.slane %v1415, %v1432
        %v1435 = vmul.f32 %v1428, %v1433
        %v1437 = vlaneseq
        %v1438 = vshrl.u32 %v1437, 7
        %v1439 = vsub.s32 0, %v1438
        %v1440 = vrot.slane %v1416, %v1439
        %v1442 = vadd.f32 %v1435, %v1440
        %1443 = vst [vmem:[%s498] sm:$0xff] %v1442
        %p1444 = scmp.lt.s32.totalorder %s29, 1
        %s1445 = scalar_select %p1444, %s29, 1
        %p1446 = scmp.lt.s32.totalorder %s30, 0
        %s1447 = scalar_select %p1446, %s30, 0
        %s1448 = sadd.s32 %s1447, %s1445
        %s1449 = smul.addr %s1448, 8
        %s1450 = scalar_lea.vmem %s12, %s1449
        // Predicated region
        $region81: #{post_patt_encode.11} parent=67 // pred_check
          %p1451 = pneg %p321
        $region82: #{post_patt_encode.11} parent=67 // pred_check_branch
          %1453 = sbr.rel (%p1451) target = $region84
        $region83: #{post_patt_encode.11} parent=67 // pred_region
          _
        $region84: #{post_patt_encode.11} parent=67 // pred_fallthru
          _
      $region68: #{post_patt_encode.11} parent=5 // pred_fallthru
        _
      %p1454 = scmp.le.s32.totalorder 2, %s20
      // Predicated region
      $region85: #{post_patt_encode.11} parent=5 // pred_check
        %p1455 = pneg %p1454
      $region86: #{post_patt_encode.11} parent=5 // pred_check_branch
        %1457 = sbr.rel (%p1455) target = $region88
      $region87: #{post_patt_encode.11} parent=5 // pred_region
        %s1458 = ssub.s32 %s20, 2
        // Predicated region
        $region89: #{post_patt_encode.11} parent=87 // pred_check
          %p1459 = pneg %p327
        $region90: #{post_patt_encode.11} parent=87 // pred_check_branch
          %1461 = sbr.rel (%p1459) target = $region92
        $region91: #{post_patt_encode.11} parent=87 // pred_region
          %p1462 = scmp.lt.s32.totalorder %s31, 1
          %s1463 = scalar_select %p1462, %s31, 1
          %p1464 = scmp.lt.s32.totalorder %s32, 0
          %s1465 = scalar_select %p1464, %s32, 0
          %s1466 = sadd.s32 %s1465, %s1463
          %s1467 = smul.addr %s1466, 8
          %s1468 = scalar_lea.vmem %s12, %s1467
        $region92: #{post_patt_encode.11} parent=87 // pred_fallthru
          _
      $region88: #{post_patt_encode.11} parent=5 // pred_fallthru
        _
    $region6: #{post_patt_encode.11} parent=1 // loop_footer
      %s24 = sadd.s32 1, %s20
    $region7: #{post_patt_encode.11} parent=1 // loop_footer_branch
      %19 = sbr.rel target = $region3
    $region8: #{post_patt_encode.11} parent=1 // loop_exit
      _
    %1469 = vsyncpa [#allocation3], 1
    %s1470 = scalar_lea.sflag [#allocation3], 1
    %1471 = vsyncpa %s1470, 1
    %1472 = vsyncpa [#allocation5], 1

// kernel: post_patt_encode.17
$region0: #{post_patt_encode.17}
  #allocation0 [shape = 'u32[]', space=smem, size = 0x4, offset = 0x4, fixed_abs, tag = 'smem constant byte address 0x4 - core index']
  #allocation1 [shape = 'u32[144,128]{1,0:T(1,128)}', space=vmem, size = 0x12000, scoped, tag = 'internal scratch']
  %s0 = inlined_call_operand.vmem [shape: f32[16,128], index: 0, kind: input, shape index: {}]
  %s1 = inlined_call_operand.vmem [shape: bf16[128,256], index: 1, kind: input, shape index: {}]
  %s2 = inlined_call_operand.vmem [shape: f32[1,256], index: 2, kind: input, shape index: {}]
  %s3 = inlined_call_operand.vmem [shape: bf16[128,256], index: 3, kind: input, shape index: {}]
  %s4 = inlined_call_operand.vmem [shape: f32[1,256], index: 4, kind: input, shape index: {}]
  %s5 = inlined_call_operand.vmem [shape: bf16[256,128], index: 5, kind: input, shape index: {}]
  %s6 = inlined_call_operand.vmem [shape: f32[1,128], index: 6, kind: input, shape index: {}]
  %s7 = inlined_call_operand.hbm [shape: f32[16,128], index: 7, kind: output, shape index: {}]
  %s8 = sld [smem:[#allocation0]]
  $region38: #{post_patt_encode.17} parent=0
    _
  %s10 = ssub.s32 1, %s8
  %s11 = scalar_select 0, %s10, %s8
  $region1: #{post_patt_encode.17} parent=0
    #allocation2 [shape = 'u8[8192]{0}', space=vmem, size = 0x2000, scoped, tag = 'output window, operand 0, single buffered']
    #allocation3 [shape = 's32[1]{0}', space=sflag, size = 0x4, scoped, tag = 'scoped memory for post_patt_encode.17']
    %12 = vsyncpa [#allocation3], 0
    // Predicated region
    $region2: #{post_patt_encode.17} parent=1 // pred_check
      _
    $region3: #{post_patt_encode.17} parent=1 // pred_check_branch
      %14 = sbr.rel (0) target = $region5
    $region4: #{post_patt_encode.17} parent=1 // pred_region
      _
    $region5: #{post_patt_encode.17} parent=1 // pred_fallthru
      _
    // Predicated region
    $region6: #{post_patt_encode.17} parent=1 // pred_check
      _
    $region7: #{post_patt_encode.17} parent=1 // pred_check_branch
      %16 = sbr.rel (0) target = $region9
    $region8: #{post_patt_encode.17} parent=1 // pred_region
      _
    $region9: #{post_patt_encode.17} parent=1 // pred_fallthru
      _
    // Predicated region
    $region10: #{post_patt_encode.17} parent=1 // pred_check
      _
    $region11: #{post_patt_encode.17} parent=1 // pred_check_branch
      %18 = sbr.rel (0) target = $region13
    $region12: #{post_patt_encode.17} parent=1 // pred_region
      _
    $region13: #{post_patt_encode.17} parent=1 // pred_fallthru
      _
    // Predicated region
    $region14: #{post_patt_encode.17} parent=1 // pred_check
      _
    $region15: #{post_patt_encode.17} parent=1 // pred_check_branch
      %20 = sbr.rel (0) target = $region17
    $region16: #{post_patt_encode.17} parent=1 // pred_region
      _
    $region17: #{post_patt_encode.17} parent=1 // pred_fallthru
      _
    // Predicated region
    $region18: #{post_patt_encode.17} parent=1 // pred_check
      _
    $region19: #{post_patt_encode.17} parent=1 // pred_check_branch
      %22 = sbr.rel (0) target = $region21
    $region20: #{post_patt_encode.17} parent=1 // pred_region
      _
    $region21: #{post_patt_encode.17} parent=1 // pred_fallthru
      _
    // Predicated region
    $region22: #{post_patt_encode.17} parent=1 // pred_check
      _
    $region23: #{post_patt_encode.17} parent=1 // pred_check_branch
      %24 = sbr.rel (0) target = $region25
    $region24: #{post_patt_encode.17} parent=1 // pred_region
      _
    $region25: #{post_patt_encode.17} parent=1 // pred_fallthru
      _
    // Predicated region
    $region26: #{post_patt_encode.17} parent=1 // pred_check
      _
    $region27: #{post_patt_encode.17} parent=1 // pred_check_branch
      %26 = sbr.rel (0) target = $region29
    $region28: #{post_patt_encode.17} parent=1 // pred_region
      _
    $region29: #{post_patt_encode.17} parent=1 // pred_fallthru
      _
    %v28 = vld [vmem:[%s0] sm:$0xff]
    %v29 = vld [vmem:[%s0 + $0x8] sm:$0xff]
    %v30 = vpack.c.bf16 %v29, %v28
    %v31 = vld [vmem:[%s1] sm:$0xff]
    %v32 = vld [vmem:[%s1 + $0x8] sm:$0xff]
    %v33 = vld [vmem:[%s1 + $0x10] sm:$0xff]
    %v34 = vld [vmem:[%s1 + $0x18] sm:$0xff]
    %v35 = vld [vmem:[%s1 + $0x20] sm:$0xff]
    %v36 = vld [vmem:[%s1 + $0x28] sm:$0xff]
    %v37 = vld [vmem:[%s1 + $0x30] sm:$0xff]
    %v38 = vld [vmem:[%s1 + $0x38] sm:$0xff]
    %v39 = vld [vmem:[%s1 + $0x40] sm:$0xff]
    %v40 = vld [vmem:[%s1 + $0x48] sm:$0xff]
    %v41 = vld [vmem:[%s1 + $0x50] sm:$0xff]
    %v42 = vld [vmem:[%s1 + $0x58] sm:$0xff]
    %v43 = vld [vmem:[%s1 + $0x60] sm:$0xff]
    %v44 = vld [vmem:[%s1 + $0x68] sm:$0xff]
    %v45 = vld [vmem:[%s1 + $0x70] sm:$0xff]
    %v46 = vld [vmem:[%s1 + $0x78] sm:$0xff]
    %v47 = vld [vmem:[%s2] sm:$0x3]
    %v49 = vlaneseq
    %v50 = vshrl.u32 %v49, 7
    %v51 = vsub.s32 0, %v50
    %v52 = vrot.slane %v47, %v51
    %v53 = vlaneseq
    %v54 = vshrl.u32 %v53, 7
    %v55 = vsub.s32 1, %v54
    %v56 = vrot.slane %v47, %v55
    %v75 = vunpack.c.l.b16 %v31
    %v76 = vunpack.c.h.b16 %v31
    %v77 = vunpack.c.l.b16 %v32
    %v78 = vunpack.c.h.b16 %v32
    %v79 = vunpack.c.l.b16 %v33
    %v80 = vunpack.c.h.b16 %v33
    %v81 = vunpack.c.l.b16 %v34
    %v82 = vunpack.c.h.b16 %v34
    %v83 = vunpack.c.l.b16 %v35
    %v84 = vunpack.c.h.b16 %v35
    %v85 = vunpack.c.l.b16 %v36
    %v86 = vunpack.c.h.b16 %v36
    %v87 = vunpack.c.l.b16 %v37
    %v88 = vunpack.c.h.b16 %v37
    %v89 = vunpack.c.l.b16 %v38
    %v90 = vunpack.c.h.b16 %v38
    %v91 = vunpack.c.l.b16 %v39
    %v92 = vunpack.c.h.b16 %v39
    %v93 = vunpack.c.l.b16 %v40
    %v94 = vunpack.c.h.b16 %v40
    %v95 = vunpack.c.l.b16 %v41
    %v96 = vunpack.c.h.b16 %v41
    %v97 = vunpack.c.l.b16 %v42
    %v98 = vunpack.c.h.b16 %v42
    %v99 = vunpack.c.l.b16 %v43
    %v100 = vunpack.c.h.b16 %v43
    %v101 = vunpack.c.l.b16 %v44
    %v102 = vunpack.c.h.b16 %v44
    %v103 = vunpack.c.l.b16 %v45
    %v104 = vunpack.c.h.b16 %v45
    %v105 = vunpack.c.l.b16 %v46
    %v106 = vunpack.c.h.b16 %v46
    %v107 = vpack.c.b16 %v77, %v75
    %v108 = vpack.c.b16 %v78, %v76
    %v109 = vpack.c.b16 %v81, %v79
    %v110 = vpack.c.b16 %v82, %v80
    %v111 = vpack.c.b16 %v85, %v83
    %v112 = vpack.c.b16 %v86, %v84
    %v113 = vpack.c.b16 %v89, %v87
    %v114 = vpack.c.b16 %v90, %v88
    %v115 = vpack.c.b16 %v93, %v91
    %v116 = vpack.c.b16 %v94, %v92
    %v117 = vpack.c.b16 %v97, %v95
    %v118 = vpack.c.b16 %v98, %v96
    %v119 = vpack.c.b16 %v101, %v99
    %v120 = vpack.c.b16 %v102, %v100
    %v121 = vpack.c.b16 %v105, %v103
    %v122 = vpack.c.b16 %v106, %v104
    %139 = vmatprep.subr.bf16.mxu0 %v108
    %140 = vmatpush1.bf16.msra.mxu0 %v107
    %141 = vmatprep.subr.bf16.mxu0 %v110
    %142 = vmatpush1.bf16.msra.mxu0 %v109
    %143 = vmatprep.subr.bf16.mxu0 %v112
    %144 = vmatpush1.bf16.msra.mxu0 %v111
    %145 = vmatprep.subr.bf16.mxu0 %v114
    %146 = vmatpush1.bf16.msra.mxu0 %v113
    %147 = vmatprep.subr.bf16.mxu0 %v116
    %148 = vmatpush1.bf16.msra.mxu0 %v115
    %149 = vmatprep.subr.bf16.mxu0 %v118
    %150 = vmatpush1.bf16.msra.mxu0 %v117
    %151 = vmatprep.subr.bf16.mxu0 %v120
    %152 = vmatpush1.bf16.msra.mxu0 %v119
    %153 = vmatprep.subr.bf16.mxu0 %v122
    %154 = vmatpush1.bf16.msra.mxu0 %v121
    %155 = vmatprep.subr.bf16.mxu0 0
    %156 = vmatpush1.bf16.msra.mxu0 0
    %157 = vmatprep.subr.bf16.mxu0 0
    %158 = vmatpush1.bf16.msra.mxu0 0
    %159 = vmatprep.subr.bf16.mxu0 0
    %160 = vmatpush1.bf16.msra.mxu0 0
    %161 = vmatprep.subr.bf16.mxu0 0
    %162 = vmatpush1.bf16.msra.mxu0 0
    %163 = vmatprep.subr.bf16.mxu0 0
    %164 = vmatpush1.bf16.msra.mxu0 0
    %165 = vmatprep.subr.bf16.mxu0 0
    %166 = vmatpush1.bf16.msra.mxu0 0
    %167 = vmatprep.subr.bf16.mxu0 0
    %168 = vmatpush1.bf16.msra.mxu0 0
    %169 = vmatprep.subr.bf16.mxu0 0
    %170 = vmatpush1.bf16.msra.mxu0 0
    %171 = vmatprep.mubr.bf16.mxu0 0
    %172 = vmatmul.mubr.bf16.gmra.mrb[0].mxu0 %v30
    %v173 = vpop.f32.mrb[0].mxu0
    %v174 = vadd.f32 %v52, %v173
    %v175 = vpop.f32.mrb[0].mxu0
    %v176 = vadd.f32 %v56, %v175
    %v177 = vpop.f32.mrb[0].mxu0
    %v178 = vadd.f32 %v52, %v177
    %v179 = vpop.f32.mrb[0].mxu0
    %v180 = vadd.f32 %v56, %v179
    %181 = vdwg.mxu0
    %v182 = vld [vmem:[%s3] sm:$0xff]
    %v183 = vld [vmem:[%s3 + $0x8] sm:$0xff]
    %v184 = vld [vmem:[%s3 + $0x10] sm:$0xff]
    %v185 = vld [vmem:[%s3 + $0x18] sm:$0xff]
    %v186 = vld [vmem:[%s3 + $0x20] sm:$0xff]
    %v187 = vld [vmem:[%s3 + $0x28] sm:$0xff]
    %v188 = vld [vmem:[%s3 + $0x30] sm:$0xff]
    %v189 = vld [vmem:[%s3 + $0x38] sm:$0xff]
    %v190 = vld [vmem:[%s3 + $0x40] sm:$0xff]
    %v191 = vld [vmem:[%s3 + $0x48] sm:$0xff]
    %v192 = vld [vmem:[%s3 + $0x50] sm:$0xff]
    %v193 = vld [vmem:[%s3 + $0x58] sm:$0xff]
    %v194 = vld [vmem:[%s3 + $0x60] sm:$0xff]
    %v195 = vld [vmem:[%s3 + $0x68] sm:$0xff]
    %v196 = vld [vmem:[%s3 + $0x70] sm:$0xff]
    %v197 = vld [vmem:[%s3 + $0x78] sm:$0xff]
    %v198 = vld [vmem:[%s4] sm:$0x3]
    %v200 = vlaneseq
    %v201 = vshrl.u32 %v200, 7
    %v202 = vsub.s32 0, %v201
    %v203 = vrot.slane %v198, %v202
    %v204 = vlaneseq
    %v205 = vshrl.u32 %v204, 7
    %v206 = vsub.s32 1, %v205
    %v207 = vrot.slane %v198, %v206
    %v226 = vunpack.c.l.b16 %v182
    %v227 = vunpack.c.h.b16 %v182
    %v228 = vunpack.c.l.b16 %v183
    %v229 = vunpack.c.h.b16 %v183
    %v230 = vunpack.c.l.b16 %v184
    %v231 = vunpack.c.h.b16 %v184
    %v232 = vunpack.c.l.b16 %v185
    %v233 = vunpack.c.h.b16 %v185
    %v234 = vunpack.c.l.b16 %v186
    %v235 = vunpack.c.h.b16 %v186
    %v236 = vunpack.c.l.b16 %v187
    %v237 = vunpack.c.h.b16 %v187
    %v238 = vunpack.c.l.b16 %v188
    %v239 = vunpack.c.h.b16 %v188
    %v240 = vunpack.c.l.b16 %v189
    %v241 = vunpack.c.h.b16 %v189
    %v242 = vunpack.c.l.b16 %v190
    %v243 = vunpack.c.h.b16 %v190
    %v244 = vunpack.c.l.b16 %v191
    %v245 = vunpack.c.h.b16 %v191
    %v246 = vunpack.c.l.b16 %v192
    %v247 = vunpack.c.h.b16 %v192
    %v248 = vunpack.c.l.b16 %v193
    %v249 = vunpack.c.h.b16 %v193
    %v250 = vunpack.c.l.b16 %v194
    %v251 = vunpack.c.h.b16 %v194
    %v252 = vunpack.c.l.b16 %v195
    %v253 = vunpack.c.h.b16 %v195
    %v254 = vunpack.c.l.b16 %v196
    %v255 = vunpack.c.h.b16 %v196
    %v256 = vunpack.c.l.b16 %v197
    %v257 = vunpack.c.h.b16 %v197
    %v258 = vpack.c.b16 %v228, %v226
    %v259 = vpack.c.b16 %v229, %v227
    %v260 = vpack.c.b16 %v232, %v230
    %v261 = vpack.c.b16 %v233, %v231
    %v262 = vpack.c.b16 %v236, %v234
    %v263 = vpack.c.b16 %v237, %v235
    %v264 = vpack.c.b16 %v240, %v238
    %v265 = vpack.c.b16 %v241, %v239
    %v266 = vpack.c.b16 %v244, %v242
    %v267 = vpack.c.b16 %v245, %v243
    %v268 = vpack.c.b16 %v248, %v246
    %v269 = vpack.c.b16 %v249, %v247
    %v270 = vpack.c.b16 %v252, %v250
    %v271 = vpack.c.b16 %v253, %v251
    %v272 = vpack.c.b16 %v256, %v254
    %v273 = vpack.c.b16 %v257, %v255
    %290 = vmatprep.subr.bf16.mxu0 %v259
    %291 = vmatpush1.bf16.msra.mxu0 %v258
    %292 = vmatprep.subr.bf16.mxu0 %v261
    %293 = vmatpush1.bf16.msra.mxu0 %v260
    %294 = vmatprep.subr.bf16.mxu0 %v263
    %295 = vmatpush1.bf16.msra.mxu0 %v262
    %296 = vmatprep.subr.bf16.mxu0 %v265
    %297 = vmatpush1.bf16.msra.mxu0 %v264
    %298 = vmatprep.subr.bf16.mxu0 %v267
    %299 = vmatpush1.bf16.msra.mxu0 %v266
    %300 = vmatprep.subr.bf16.mxu0 %v269
    %301 = vmatpush1.bf16.msra.mxu0 %v268
    %302 = vmatprep.subr.bf16.mxu0 %v271
    %303 = vmatpush1.bf16.msra.mxu0 %v270
    %304 = vmatprep.subr.bf16.mxu0 %v273
    %305 = vmatpush1.bf16.msra.mxu0 %v272
    %306 = vmatprep.subr.bf16.mxu0 0
    %307 = vmatpush1.bf16.msra.mxu0 0
    %308 = vmatprep.subr.bf16.mxu0 0
    %309 = vmatpush1.bf16.msra.mxu0 0
    %310 = vmatprep.subr.bf16.mxu0 0
    %311 = vmatpush1.bf16.msra.mxu0 0
    %312 = vmatprep.subr.bf16.mxu0 0
    %313 = vmatpush1.bf16.msra.mxu0 0
    %314 = vmatprep.subr.bf16.mxu0 0
    %315 = vmatpush1.bf16.msra.mxu0 0
    %316 = vmatprep.subr.bf16.mxu0 0
    %317 = vmatpush1.bf16.msra.mxu0 0
    %318 = vmatprep.subr.bf16.mxu0 0
    %319 = vmatpush1.bf16.msra.mxu0 0
    %320 = vmatprep.subr.bf16.mxu0 0
    %321 = vmatpush1.bf16.msra.mxu0 0
    %322 = vmatprep.mubr.bf16.mxu0 0
    %323 = vmatmul.mubr.bf16.gmra.mrb[0].mxu0 %v30
    %v324 = vpop.f32.mrb[0].mxu0
    %v325 = vadd.f32 %v203, %v324
    %v326 = vpop.f32.mrb[0].mxu0
    %v327 = vadd.f32 %v207, %v326
    %v328 = vpop.f32.mrb[0].mxu0
    %v329 = vadd.f32 %v203, %v328
    %v330 = vpop.f32.mrb[0].mxu0
    %v331 = vadd.f32 %v207, %v330
    %332 = vdwg.mxu0
    %v333 = vxor.u32 %v325, 2147483648
    %v334 = vxor.u32 %v327, 2147483648
    %v335 = vxor.u32 %v329, 2147483648
    %v336 = vxor.u32 %v331, 2147483648
    %v337 = vmul.f32 %v333, 1.442695
    %v338 = vpow.pop %v337
    %v339 = vmul.f32 %v334, 1.442695
    %v340 = vpow.pop %v339
    %v341 = vmul.f32 %v335, 1.442695
    %v342 = vpow.pop %v341
    %v343 = vmul.f32 %v336, 1.442695
    %v344 = vpow.pop %v343
    %v345 = vadd.f32 %v338, 1.0
    %v346 = vadd.f32 %v340, 1.0
    %v347 = vadd.f32 %v342, 1.0
    %v348 = vadd.f32 %v344, 1.0
    %v349 = vrcp.pop %v345
    %v350 = vmul.f32 1.0, %v349
    %v351 = vrcp.pop %v346
    %v352 = vmul.f32 1.0, %v351
    %v353 = vrcp.pop %v347
    %v354 = vmul.f32 1.0, %v353
    %v355 = vrcp.pop %v348
    %v356 = vmul.f32 1.0, %v355
    %v357 = vmul.f32 %v174, %v350
    %v358 = vmul.f32 %v176, %v352
    %v359 = vmul.f32 %v178, %v354
    %v360 = vmul.f32 %v180, %v356
    %v361 = vpack.c.bf16 %v359, %v357
    %v362 = vpack.c.bf16 %v360, %v358
    %v363 = vld [vmem:[%s5] sm:$0xf]
    %v364 = vld [vmem:[%s5 + $0x4] sm:$0xf]
    %v365 = vld [vmem:[%s5 + $0x8] sm:$0xf]
    %v366 = vld [vmem:[%s5 + $0xc] sm:$0xf]
    %v367 = vld [vmem:[%s5 + $0x10] sm:$0xf]
    %v368 = vld [vmem:[%s5 + $0x14] sm:$0xf]
    %v369 = vld [vmem:[%s5 + $0x18] sm:$0xf]
    %v370 = vld [vmem:[%s5 + $0x1c] sm:$0xf]
    %v371 = vld [vmem:[%s5 + $0x20] sm:$0xf]
    %v372 = vld [vmem:[%s5 + $0x24] sm:$0xf]
    %v373 = vld [vmem:[%s5 + $0x28] sm:$0xf]
    %v374 = vld [vmem:[%s5 + $0x2c] sm:$0xf]
    %v375 = vld [vmem:[%s5 + $0x30] sm:$0xf]
    %v376 = vld [vmem:[%s5 + $0x34] sm:$0xf]
    %v377 = vld [vmem:[%s5 + $0x38] sm:$0xf]
    %v378 = vld [vmem:[%s5 + $0x3c] sm:$0xf]
    %v379 = vld [vmem:[%s5 + $0x40] sm:$0xf]
    %v380 = vld [vmem:[%s5 + $0x44] sm:$0xf]
    %v381 = vld [vmem:[%s5 + $0x48] sm:$0xf]
    %v382 = vld [vmem:[%s5 + $0x4c] sm:$0xf]
    %v383 = vld [vmem:[%s5 + $0x50] sm:$0xf]
    %v384 = vld [vmem:[%s5 + $0x54] sm:$0xf]
    %v385 = vld [vmem:[%s5 + $0x58] sm:$0xf]
    %v386 = vld [vmem:[%s5 + $0x5c] sm:$0xf]
    %v387 = vld [vmem:[%s5 + $0x60] sm:$0xf]
    %v388 = vld [vmem:[%s5 + $0x64] sm:$0xf]
    %v389 = vld [vmem:[%s5 + $0x68] sm:$0xf]
    %v390 = vld [vmem:[%s5 + $0x6c] sm:$0xf]
    %v391 = vld [vmem:[%s5 + $0x70] sm:$0xf]
    %v392 = vld [vmem:[%s5 + $0x74] sm:$0xf]
    %v393 = vld [vmem:[%s5 + $0x78] sm:$0xf]
    %v394 = vld [vmem:[%s5 + $0x7c] sm:$0xf]
    %v395 = vld [vmem:[%s6] sm:$0x1]
    %v397 = vlaneseq
    %v398 = vshrl.u32 %v397, 7
    %v399 = vsub.s32 0, %v398
    %v400 = vrot.slane %v395, %v399
    %v434 = vunpack.c.l.b16 %v363
    %v435 = vunpack.c.l.b16 %v364
    %v436 = vunpack.c.l.b16 %v365
    %v437 = vunpack.c.l.b16 %v366
    %v438 = vunpack.c.l.b16 %v367
    %v439 = vunpack.c.l.b16 %v368
    %v440 = vunpack.c.l.b16 %v369
    %v441 = vunpack.c.l.b16 %v370
    %v442 = vunpack.c.l.b16 %v371
    %v443 = vunpack.c.l.b16 %v372
    %v444 = vunpack.c.l.b16 %v373
    %v445 = vunpack.c.l.b16 %v374
    %v446 = vunpack.c.l.b16 %v375
    %v447 = vunpack.c.l.b16 %v376
    %v448 = vunpack.c.l.b16 %v377
    %v449 = vunpack.c.l.b16 %v378
    %v450 = vunpack.c.l.b16 %v379
    %v451 = vunpack.c.l.b16 %v380
    %v452 = vunpack.c.l.b16 %v381
    %v453 = vunpack.c.l.b16 %v382
    %v454 = vunpack.c.l.b16 %v383
    %v455 = vunpack.c.l.b16 %v384
    %v456 = vunpack.c.l.b16 %v385
    %v457 = vunpack.c.l.b16 %v386
    %v458 = vunpack.c.l.b16 %v387
    %v459 = vunpack.c.l.b16 %v388
    %v460 = vunpack.c.l.b16 %v389
    %v461 = vunpack.c.l.b16 %v390
    %v462 = vunpack.c.l.b16 %v391
    %v463 = vunpack.c.l.b16 %v392
    %v464 = vunpack.c.l.b16 %v393
    %v465 = vunpack.c.l.b16 %v394
    %v466 = vpack.c.b16 %v435, %v434
    %v467 = vpack.c.b16 %v437, %v436
    %v468 = vpack.c.b16 %v439, %v438
    %v469 = vpack.c.b16 %v441, %v440
    %v470 = vpack.c.b16 %v443, %v442
    %v471 = vpack.c.b16 %v445, %v444
    %v472 = vpack.c.b16 %v447, %v446
    %v473 = vpack.c.b16 %v449, %v448
    %v474 = vpack.c.b16 %v451, %v450
    %v475 = vpack.c.b16 %v453, %v452
    %v476 = vpack.c.b16 %v455, %v454
    %v477 = vpack.c.b16 %v457, %v456
    %v478 = vpack.c.b16 %v459, %v458
    %v479 = vpack.c.b16 %v461, %v460
    %v480 = vpack.c.b16 %v463, %v462
    %v481 = vpack.c.b16 %v465, %v464
    %498 = vmatprep.subr.bf16.mxu0 0
    %499 = vmatpush1.bf16.msra.mxu0 %v466
    %500 = vmatprep.subr.bf16.mxu0 0
    %501 = vmatpush1.bf16.msra.mxu0 %v467
    %502 = vmatprep.subr.bf16.mxu0 0
    %503 = vmatpush1.bf16.msra.mxu0 %v468
    %504 = vmatprep.subr.bf16.mxu0 0
    %505 = vmatpush1.bf16.msra.mxu0 %v469
    %506 = vmatprep.subr.bf16.mxu0 0
    %507 = vmatpush1.bf16.msra.mxu0 %v470
    %508 = vmatprep.subr.bf16.mxu0 0
    %509 = vmatpush1.bf16.msra.mxu0 %v471
    %510 = vmatprep.subr.bf16.mxu0 0
    %511 = vmatpush1.bf16.msra.mxu0 %v472
    %512 = vmatprep.subr.bf16.mxu0 0
    %513 = vmatpush1.bf16.msra.mxu0 %v473
    %514 = vmatprep.subr.bf16.mxu0 0
    %515 = vmatpush1.bf16.msra.mxu0 %v474
    %516 = vmatprep.subr.bf16.mxu0 0
    %517 = vmatpush1.bf16.msra.mxu0 %v475
    %518 = vmatprep.subr.bf16.mxu0 0
    %519 = vmatpush1.bf16.msra.mxu0 %v476
    %520 = vmatprep.subr.bf16.mxu0 0
    %521 = vmatpush1.bf16.msra.mxu0 %v477
    %522 = vmatprep.subr.bf16.mxu0 0
    %523 = vmatpush1.bf16.msra.mxu0 %v478
    %524 = vmatprep.subr.bf16.mxu0 0
    %525 = vmatpush1.bf16.msra.mxu0 %v479
    %526 = vmatprep.subr.bf16.mxu0 0
    %527 = vmatpush1.bf16.msra.mxu0 %v480
    %528 = vmatprep.subr.bf16.mxu0 0
    %529 = vmatpush1.bf16.msra.mxu0 %v481
    %530 = vmatprep.mubr.bf16.mxu0 %v362
    %531 = vmatmul.mubr.bf16.gmra.mrb[0].mxu0 %v361
    %v532 = vpop.f32.mrb[0].mxu0
    %v533 = vadd.f32 %v400, %v532
    %v534 = vpop.f32.mrb[0].mxu0
    %v535 = vpop.f32.mrb[0].mxu0
    %v536 = vadd.f32 %v400, %v535
    %v537 = vpop.f32.mrb[0].mxu0
    %538 = vdwg.mxu0
    %539 = vst [vmem:[#allocation2] sm:$0xff] %v533
    %540 = vst [vmem:[#allocation2 + $0x8] sm:$0xff] %v536
    // Predicated region
    $region30: #{post_patt_encode.17} parent=1 // pred_check
      _
    $region31: #{post_patt_encode.17} parent=1 // pred_check_branch
      %542 = sbr.rel (0) target = $region33
    $region32: #{post_patt_encode.17} parent=1 // pred_region
      %s544 = ssub.s32 256, 256
      %545 = vsyncadd [#allocation3], %s544
      %s546 = sshll.u32 [#allocation2], 4
      %s547 = int_to_ptr.vmem [resolvable:$true] %s546
      %552 = dma.vmem_to_hbm [thread:$0]  %s547, 256, %s7, [#allocation3], 128, 128, 8
    $region33: #{post_patt_encode.17} parent=1 // pred_fallthru
      _
    // Predicated region
    $region34: #{post_patt_encode.17} parent=1 // pred_check
      _
    $region35: #{post_patt_encode.17} parent=1 // pred_check_branch
      %554 = sbr.rel (0) target = $region37
    $region36: #{post_patt_encode.17} parent=1 // pred_region
      %555 = dma.done [#allocation3], 256
    $region37: #{post_patt_encode.17} parent=1 // pred_fallthru
      _
    %556 = vsyncpa [#allocation3], 1

// kernel: post_patt_encode.15
$region0: #{post_patt_encode.15}
  #allocation0 [shape = 'u32[]', space=smem, size = 0x4, offset = 0x4, fixed_abs, tag = 'smem constant byte address 0x4 - core index']
  #allocation1 [shape = 'u32[144,128]{1,0:T(1,128)}', space=vmem, size = 0x12000, scoped, tag = 'internal scratch']
  %s0 = inlined_call_operand.vmem [shape: f32[32,128], index: 0, kind: input, shape index: {}]
  %s1 = inlined_call_operand.vmem [shape: bf16[128,256], index: 1, kind: input, shape index: {}]
  %s2 = inlined_call_operand.vmem [shape: f32[1,256], index: 2, kind: input, shape index: {}]
  %s3 = inlined_call_operand.vmem [shape: bf16[256,128], index: 3, kind: input, shape index: {}]
  %s4 = inlined_call_operand.vmem [shape: f32[1,128], index: 4, kind: input, shape index: {}]
  %s5 = inlined_call_operand.vmem [shape: f32[1,128], index: 5, kind: input, shape index: {}]
  %s6 = inlined_call_operand.vmem [shape: f32[1,128], index: 6, kind: input, shape index: {}]
  %s7 = inlined_call_operand.hbm [shape: f32[32,128], index: 7, kind: output, shape index: {}]
  %s8 = sld [smem:[#allocation0]]
  $region38: #{post_patt_encode.15} parent=0
    _
  %s10 = ssub.s32 1, %s8
  %s11 = scalar_select 0, %s10, %s8
  $region1: #{post_patt_encode.15} parent=0
    #allocation2 [shape = 'u8[16384]{0}', space=vmem, size = 0x4000, scoped, tag = 'output window, operand 0, single buffered']
    #allocation3 [shape = 's32[1]{0}', space=sflag, size = 0x4, scoped, tag = 'scoped memory for post_patt_encode.15']
    %12 = vsyncpa [#allocation3], 0
    // Predicated region
    $region2: #{post_patt_encode.15} parent=1 // pred_check
      _
    $region3: #{post_patt_encode.15} parent=1 // pred_check_branch
      %14 = sbr.rel (0) target = $region5
    $region4: #{post_patt_encode.15} parent=1 // pred_region
      _
    $region5: #{post_patt_encode.15} parent=1 // pred_fallthru
      _
    // Predicated region
    $region6: #{post_patt_encode.15} parent=1 // pred_check
      _
    $region7: #{post_patt_encode.15} parent=1 // pred_check_branch
      %16 = sbr.rel (0) target = $region9
    $region8: #{post_patt_encode.15} parent=1 // pred_region
      _
    $region9: #{post_patt_encode.15} parent=1 // pred_fallthru
      _
    // Predicated region
    $region10: #{post_patt_encode.15} parent=1 // pred_check
      _
    $region11: #{post_patt_encode.15} parent=1 // pred_check_branch
      %18 = sbr.rel (0) target = $region13
    $region12: #{post_patt_encode.15} parent=1 // pred_region
      _
    $region13: #{post_patt_encode.15} parent=1 // pred_fallthru
      _
    // Predicated region
    $region14: #{post_patt_encode.15} parent=1 // pred_check
      _
    $region15: #{post_patt_encode.15} parent=1 // pred_check_branch
      %20 = sbr.rel (0) target = $region17
    $region16: #{post_patt_encode.15} parent=1 // pred_region
      _
    $region17: #{post_patt_encode.15} parent=1 // pred_fallthru
      _
    // Predicated region
    $region18: #{post_patt_encode.15} parent=1 // pred_check
      _
    $region19: #{post_patt_encode.15} parent=1 // pred_check_branch
      %22 = sbr.rel (0) target = $region21
    $region20: #{post_patt_encode.15} parent=1 // pred_region
      _
    $region21: #{post_patt_encode.15} parent=1 // pred_fallthru
      _
    // Predicated region
    $region22: #{post_patt_encode.15} parent=1 // pred_check
      _
    $region23: #{post_patt_encode.15} parent=1 // pred_check_branch
      %24 = sbr.rel (0) target = $region25
    $region24: #{post_patt_encode.15} parent=1 // pred_region
      _
    $region25: #{post_patt_encode.15} parent=1 // pred_fallthru
      _
    // Predicated region
    $region26: #{post_patt_encode.15} parent=1 // pred_check
      _
    $region27: #{post_patt_encode.15} parent=1 // pred_check_branch
      %26 = sbr.rel (0) target = $region29
    $region28: #{post_patt_encode.15} parent=1 // pred_region
      _
    $region29: #{post_patt_encode.15} parent=1 // pred_fallthru
      _
    %v28 = vld [vmem:[%s0] sm:$0xff]
    %v29 = vld [vmem:[%s0 + $0x8] sm:$0xff]
    %v30 = vld [vmem:[%s0 + $0x10] sm:$0xff]
    %v31 = vld [vmem:[%s0 + $0x18] sm:$0xff]
    %v32 = vpack.c.bf16 %v29, %v28
    %v33 = vpack.c.bf16 %v31, %v30
    %v34 = vld [vmem:[%s1] sm:$0xff]
    %v35 = vld [vmem:[%s1 + $0x8] sm:$0xff]
    %v36 = vld [vmem:[%s1 + $0x10] sm:$0xff]
    %v37 = vld [vmem:[%s1 + $0x18] sm:$0xff]
    %v38 = vld [vmem:[%s1 + $0x20] sm:$0xff]
    %v39 = vld [vmem:[%s1 + $0x28] sm:$0xff]
    %v40 = vld [vmem:[%s1 + $0x30] sm:$0xff]
    %v41 = vld [vmem:[%s1 + $0x38] sm:$0xff]
    %v42 = vld [vmem:[%s1 + $0x40] sm:$0xff]
    %v43 = vld [vmem:[%s1 + $0x48] sm:$0xff]
    %v44 = vld [vmem:[%s1 + $0x50] sm:$0xff]
    %v45 = vld [vmem:[%s1 + $0x58] sm:$0xff]
    %v46 = vld [vmem:[%s1 + $0x60] sm:$0xff]
    %v47 = vld [vmem:[%s1 + $0x68] sm:$0xff]
    %v48 = vld [vmem:[%s1 + $0x70] sm:$0xff]
    %v49 = vld [vmem:[%s1 + $0x78] sm:$0xff]
    %v50 = vld [vmem:[%s2] sm:$0x3]
    %v52 = vlaneseq
    %v53 = vshrl.u32 %v52, 7
    %v54 = vsub.s32 0, %v53
    %v55 = vrot.slane %v50, %v54
    %v56 = vlaneseq
    %v57 = vshrl.u32 %v56, 7
    %v58 = vsub.s32 1, %v57
    %v59 = vrot.slane %v50, %v58
    %v78 = vunpack.c.l.b16 %v34
    %v79 = vunpack.c.h.b16 %v34
    %v80 = vunpack.c.l.b16 %v35
    %v81 = vunpack.c.h.b16 %v35
    %v82 = vunpack.c.l.b16 %v36
    %v83 = vunpack.c.h.b16 %v36
    %v84 = vunpack.c.l.b16 %v37
    %v85 = vunpack.c.h.b16 %v37
    %v86 = vunpack.c.l.b16 %v38
    %v87 = vunpack.c.h.b16 %v38
    %v88 = vunpack.c.l.b16 %v39
    %v89 = vunpack.c.h.b16 %v39
    %v90 = vunpack.c.l.b16 %v40
    %v91 = vunpack.c.h.b16 %v40
    %v92 = vunpack.c.l.b16 %v41
    %v93 = vunpack.c.h.b16 %v41
    %v94 = vunpack.c.l.b16 %v42
    %v95 = vunpack.c.h.b16 %v42
    %v96 = vunpack.c.l.b16 %v43
    %v97 = vunpack.c.h.b16 %v43
    %v98 = vunpack.c.l.b16 %v44
    %v99 = vunpack.c.h.b16 %v44
    %v100 = vunpack.c.l.b16 %v45
    %v101 = vunpack.c.h.b16 %v45
    %v102 = vunpack.c.l.b16 %v46
    %v103 = vunpack.c.h.b16 %v46
    %v104 = vunpack.c.l.b16 %v47
    %v105 = vunpack.c.h.b16 %v47
    %v106 = vunpack.c.l.b16 %v48
    %v107 = vunpack.c.h.b16 %v48
    %v108 = vunpack.c.l.b16 %v49
    %v109 = vunpack.c.h.b16 %v49
    %v110 = vpack.c.b16 %v80, %v78
    %v111 = vpack.c.b16 %v81, %v79
    %v112 = vpack.c.b16 %v84, %v82
    %v113 = vpack.c.b16 %v85, %v83
    %v114 = vpack.c.b16 %v88, %v86
    %v115 = vpack.c.b16 %v89, %v87
    %v116 = vpack.c.b16 %v92, %v90
    %v117 = vpack.c.b16 %v93, %v91
    %v118 = vpack.c.b16 %v96, %v94
    %v119 = vpack.c.b16 %v97, %v95
    %v120 = vpack.c.b16 %v100, %v98
    %v121 = vpack.c.b16 %v101, %v99
    %v122 = vpack.c.b16 %v104, %v102
    %v123 = vpack.c.b16 %v105, %v103
    %v124 = vpack.c.b16 %v108, %v106
    %v125 = vpack.c.b16 %v109, %v107
    %142 = vmatprep.subr.bf16.mxu0 %v111
    %143 = vmatpush1.bf16.msra.mxu0 %v110
    %144 = vmatprep.subr.bf16.mxu0 %v113
    %145 = vmatpush1.bf16.msra.mxu0 %v112
    %146 = vmatprep.subr.bf16.mxu0 %v115
    %147 = vmatpush1.bf16.msra.mxu0 %v114
    %148 = vmatprep.subr.bf16.mxu0 %v117
    %149 = vmatpush1.bf16.msra.mxu0 %v116
    %150 = vmatprep.subr.bf16.mxu0 %v119
    %151 = vmatpush1.bf16.msra.mxu0 %v118
    %152 = vmatprep.subr.bf16.mxu0 %v121
    %153 = vmatpush1.bf16.msra.mxu0 %v120
    %154 = vmatprep.subr.bf16.mxu0 %v123
    %155 = vmatpush1.bf16.msra.mxu0 %v122
    %156 = vmatprep.subr.bf16.mxu0 %v125
    %157 = vmatpush1.bf16.msra.mxu0 %v124
    %158 = vmatprep.subr.bf16.mxu0 0
    %159 = vmatpush1.bf16.msra.mxu0 0
    %160 = vmatprep.subr.bf16.mxu0 0
    %161 = vmatpush1.bf16.msra.mxu0 0
    %162 = vmatprep.subr.bf16.mxu0 0
    %163 = vmatpush1.bf16.msra.mxu0 0
    %164 = vmatprep.subr.bf16.mxu0 0
    %165 = vmatpush1.bf16.msra.mxu0 0
    %166 = vmatprep.subr.bf16.mxu0 0
    %167 = vmatpush1.bf16.msra.mxu0 0
    %168 = vmatprep.subr.bf16.mxu0 0
    %169 = vmatpush1.bf16.msra.mxu0 0
    %170 = vmatprep.subr.bf16.mxu0 0
    %171 = vmatpush1.bf16.msra.mxu0 0
    %172 = vmatprep.subr.bf16.mxu0 0
    %173 = vmatpush1.bf16.msra.mxu0 0
    %174 = vmatprep.mubr.bf16.mxu0 0
    %175 = vmatmul.mubr.bf16.gmra.mrb[0].mxu0 %v32
    %v176 = vpop.f32.mrb[0].mxu0
    %v177 = vadd.f32 %v55, %v176
    %v178 = vpop.f32.mrb[0].mxu0
    %v179 = vadd.f32 %v59, %v178
    %v180 = vpop.f32.mrb[0].mxu0
    %v181 = vadd.f32 %v55, %v180
    %v182 = vpop.f32.mrb[0].mxu0
    %v183 = vadd.f32 %v59, %v182
    %184 = vmatprep.mubr.bf16.mxu0 0
    %185 = vmatmul.mubr.bf16.gmra.mrb[0].mxu0 %v33
    %v186 = vpop.f32.mrb[0].mxu0
    %v187 = vadd.f32 %v55, %v186
    %v188 = vpop.f32.mrb[0].mxu0
    %v189 = vadd.f32 %v59, %v188
    %v190 = vpop.f32.mrb[0].mxu0
    %v191 = vadd.f32 %v55, %v190
    %v192 = vpop.f32.mrb[0].mxu0
    %v193 = vadd.f32 %v59, %v192
    %194 = vdwg.mxu0
    %v195 = vmul.f32 %v177, %v177
    %v196 = vmul.f32 %v179, %v179
    %v197 = vmul.f32 %v181, %v181
    %v198 = vmul.f32 %v183, %v183
    %v199 = vmul.f32 %v187, %v187
    %v200 = vmul.f32 %v189, %v189
    %v201 = vmul.f32 %v191, %v191
    %v202 = vmul.f32 %v193, %v193
    %v203 = vmul.f32 %v177, %v195
    %v204 = vmul.f32 %v179, %v196
    %v205 = vmul.f32 %v181, %v197
    %v206 = vmul.f32 %v183, %v198
    %v207 = vmul.f32 %v187, %v199
    %v208 = vmul.f32 %v189, %v200
    %v209 = vmul.f32 %v191, %v201
    %v210 = vmul.f32 %v193, %v202
    %v211 = vmul.f32 %v203, 0.044715
    %v212 = vmul.f32 %v204, 0.044715
    %v213 = vmul.f32 %v205, 0.044715
    %v214 = vmul.f32 %v206, 0.044715
    %v215 = vmul.f32 %v207, 0.044715
    %v216 = vmul.f32 %v208, 0.044715
    %v217 = vmul.f32 %v209, 0.044715
    %v218 = vmul.f32 %v210, 0.044715
    %v219 = vadd.f32 %v177, %v211
    %v220 = vadd.f32 %v179, %v212
    %v221 = vadd.f32 %v181, %v213
    %v222 = vadd.f32 %v183, %v214
    %v223 = vadd.f32 %v187, %v215
    %v224 = vadd.f32 %v189, %v216
    %v225 = vadd.f32 %v191, %v217
    %v226 = vadd.f32 %v193, %v218
    %v227 = vmul.f32 %v219, 0.7978846
    %v228 = vmul.f32 %v220, 0.7978846
    %v229 = vmul.f32 %v221, 0.7978846
    %v230 = vmul.f32 %v222, 0.7978846
    %v231 = vmul.f32 %v223, 0.7978846
    %v232 = vmul.f32 %v224, 0.7978846
    %v233 = vmul.f32 %v225, 0.7978846
    %v234 = vmul.f32 %v226, 0.7978846
    %v235 = vtanh.pop %v227
    %v236 = vtanh.pop %v228
    %v237 = vtanh.pop %v229
    %v238 = vtanh.pop %v230
    %v239 = vtanh.pop %v231
    %v240 = vtanh.pop %v232
    %v241 = vtanh.pop %v233
    %v242 = vtanh.pop %v234
    %v243 = vadd.f32 %v235, 1.0
    %v244 = vadd.f32 %v236, 1.0
    %v245 = vadd.f32 %v237, 1.0
    %v246 = vadd.f32 %v238, 1.0
    %v247 = vadd.f32 %v239, 1.0
    %v248 = vadd.f32 %v240, 1.0
    %v249 = vadd.f32 %v241, 1.0
    %v250 = vadd.f32 %v242, 1.0
    %v251 = vmul.f32 %v243, 0.5
    %v252 = vmul.f32 %v244, 0.5
    %v253 = vmul.f32 %v245, 0.5
    %v254 = vmul.f32 %v246, 0.5
    %v255 = vmul.f32 %v247, 0.5
    %v256 = vmul.f32 %v248, 0.5
    %v257 = vmul.f32 %v249, 0.5
    %v258 = vmul.f32 %v250, 0.5
    %v259 = vmul.f32 %v177, %v251
    %v260 = vmul.f32 %v179, %v252
    %v261 = vmul.f32 %v181, %v253
    %v262 = vmul.f32 %v183, %v254
    %v263 = vmul.f32 %v187, %v255
    %v264 = vmul.f32 %v189, %v256
    %v265 = vmul.f32 %v191, %v257
    %v266 = vmul.f32 %v193, %v258
    %v267 = vpack.c.bf16 %v261, %v259
    %v268 = vpack.c.bf16 %v262, %v260
    %v269 = vpack.c.bf16 %v265, %v263
    %v270 = vpack.c.bf16 %v266, %v264
    %v271 = vld [vmem:[%s3] sm:$0xf]
    %v272 = vld [vmem:[%s3 + $0x4] sm:$0xf]
    %v273 = vld [vmem:[%s3 + $0x8] sm:$0xf]
    %v274 = vld [vmem:[%s3 + $0xc] sm:$0xf]
    %v275 = vld [vmem:[%s3 + $0x10] sm:$0xf]
    %v276 = vld [vmem:[%s3 + $0x14] sm:$0xf]
    %v277 = vld [vmem:[%s3 + $0x18] sm:$0xf]
    %v278 = vld [vmem:[%s3 + $0x1c] sm:$0xf]
    %v279 = vld [vmem:[%s3 + $0x20] sm:$0xf]
    %v280 = vld [vmem:[%s3 + $0x24] sm:$0xf]
    %v281 = vld [vmem:[%s3 + $0x28] sm:$0xf]
    %v282 = vld [vmem:[%s3 + $0x2c] sm:$0xf]
    %v283 = vld [vmem:[%s3 + $0x30] sm:$0xf]
    %v284 = vld [vmem:[%s3 + $0x34] sm:$0xf]
    %v285 = vld [vmem:[%s3 + $0x38] sm:$0xf]
    %v286 = vld [vmem:[%s3 + $0x3c] sm:$0xf]
    %v287 = vld [vmem:[%s3 + $0x40] sm:$0xf]
    %v288 = vld [vmem:[%s3 + $0x44] sm:$0xf]
    %v289 = vld [vmem:[%s3 + $0x48] sm:$0xf]
    %v290 = vld [vmem:[%s3 + $0x4c] sm:$0xf]
    %v291 = vld [vmem:[%s3 + $0x50] sm:$0xf]
    %v292 = vld [vmem:[%s3 + $0x54] sm:$0xf]
    %v293 = vld [vmem:[%s3 + $0x58] sm:$0xf]
    %v294 = vld [vmem:[%s3 + $0x5c] sm:$0xf]
    %v295 = vld [vmem:[%s3 + $0x60] sm:$0xf]
    %v296 = vld [vmem:[%s3 + $0x64] sm:$0xf]
    %v297 = vld [vmem:[%s3 + $0x68] sm:$0xf]
    %v298 = vld [vmem:[%s3 + $0x6c] sm:$0xf]
    %v299 = vld [vmem:[%s3 + $0x70] sm:$0xf]
    %v300 = vld [vmem:[%s3 + $0x74] sm:$0xf]
    %v301 = vld [vmem:[%s3 + $0x78] sm:$0xf]
    %v302 = vld [vmem:[%s3 + $0x7c] sm:$0xf]
    %v303 = vld [vmem:[%s4] sm:$0x1]
    %v305 = vlaneseq
    %v306 = vshrl.u32 %v305, 7
    %v307 = vsub.s32 0, %v306
    %v308 = vrot.slane %v303, %v307
    %v342 = vunpack.c.l.b16 %v271
    %v343 = vunpack.c.l.b16 %v272
    %v344 = vunpack.c.l.b16 %v273
    %v345 = vunpack.c.l.b16 %v274
    %v346 = vunpack.c.l.b16 %v275
    %v347 = vunpack.c.l.b16 %v276
    %v348 = vunpack.c.l.b16 %v277
    %v349 = vunpack.c.l.b16 %v278
    %v350 = vunpack.c.l.b16 %v279
    %v351 = vunpack.c.l.b16 %v280
    %v352 = vunpack.c.l.b16 %v281
    %v353 = vunpack.c.l.b16 %v282
    %v354 = vunpack.c.l.b16 %v283
    %v355 = vunpack.c.l.b16 %v284
    %v356 = vunpack.c.l.b16 %v285
    %v357 = vunpack.c.l.b16 %v286
    %v358 = vunpack.c.l.b16 %v287
    %v359 = vunpack.c.l.b16 %v288
    %v360 = vunpack.c.l.b16 %v289
    %v361 = vunpack.c.l.b16 %v290
    %v362 = vunpack.c.l.b16 %v291
    %v363 = vunpack.c.l.b16 %v292
    %v364 = vunpack.c.l.b16 %v293
    %v365 = vunpack.c.l.b16 %v294
    %v366 = vunpack.c.l.b16 %v295
    %v367 = vunpack.c.l.b16 %v296
    %v368 = vunpack.c.l.b16 %v297
    %v369 = vunpack.c.l.b16 %v298
    %v370 = vunpack.c.l.b16 %v299
    %v371 = vunpack.c.l.b16 %v300
    %v372 = vunpack.c.l.b16 %v301
    %v373 = vunpack.c.l.b16 %v302
    %v374 = vpack.c.b16 %v343, %v342
    %v375 = vpack.c.b16 %v345, %v344
    %v376 = vpack.c.b16 %v347, %v346
    %v377 = vpack.c.b16 %v349, %v348
    %v378 = vpack.c.b16 %v351, %v350
    %v379 = vpack.c.b16 %v353, %v352
    %v380 = vpack.c.b16 %v355, %v354
    %v381 = vpack.c.b16 %v357, %v356
    %v382 = vpack.c.b16 %v359, %v358
    %v383 = vpack.c.b16 %v361, %v360
    %v384 = vpack.c.b16 %v363, %v362
    %v385 = vpack.c.b16 %v365, %v364
    %v386 = vpack.c.b16 %v367, %v366
    %v387 = vpack.c.b16 %v369, %v368
    %v388 = vpack.c.b16 %v371, %v370
    %v389 = vpack.c.b16 %v373, %v372
    %406 = vmatprep.subr.bf16.mxu0 0
    %407 = vmatpush1.bf16.msra.mxu0 %v374
    %408 = vmatprep.subr.bf16.mxu0 0
    %409 = vmatpush1.bf16.msra.mxu0 %v375
    %410 = vmatprep.subr.bf16.mxu0 0
    %411 = vmatpush1.bf16.msra.mxu0 %v376
    %412 = vmatprep.subr.bf16.mxu0 0
    %413 = vmatpush1.bf16.msra.mxu0 %v377
    %414 = vmatprep.subr.bf16.mxu0 0
    %415 = vmatpush1.bf16.msra.mxu0 %v378
    %416 = vmatprep.subr.bf16.mxu0 0
    %417 = vmatpush1.bf16.msra.mxu0 %v379
    %418 = vmatprep.subr.bf16.mxu0 0
    %419 = vmatpush1.bf16.msra.mxu0 %v380
    %420 = vmatprep.subr.bf16.mxu0 0
    %421 = vmatpush1.bf16.msra.mxu0 %v381
    %422 = vmatprep.subr.bf16.mxu0 0
    %423 = vmatpush1.bf16.msra.mxu0 %v382
    %424 = vmatprep.subr.bf16.mxu0 0
    %425 = vmatpush1.bf16.msra.mxu0 %v383
    %426 = vmatprep.subr.bf16.mxu0 0
    %427 = vmatpush1.bf16.msra.mxu0 %v384
    %428 = vmatprep.subr.bf16.mxu0 0
    %429 = vmatpush1.bf16.msra.mxu0 %v385
    %430 = vmatprep.subr.bf16.mxu0 0
    %431 = vmatpush1.bf16.msra.mxu0 %v386
    %432 = vmatprep.subr.bf16.mxu0 0
    %433 = vmatpush1.bf16.msra.mxu0 %v387
    %434 = vmatprep.subr.bf16.mxu0 0
    %435 = vmatpush1.bf16.msra.mxu0 %v388
    %436 = vmatprep.subr.bf16.mxu0 0
    %437 = vmatpush1.bf16.msra.mxu0 %v389
    %438 = vmatprep.mubr.bf16.mxu0 %v268
    %439 = vmatmul.mubr.bf16.gmra.mrb[0].mxu0 %v267
    %v440 = vpop.f32.mrb[0].mxu0
    %v441 = vadd.f32 %v308, %v440
    %v442 = vpop.f32.mrb[0].mxu0
    %v443 = vpop.f32.mrb[0].mxu0
    %v444 = vadd.f32 %v308, %v443
    %v445 = vpop.f32.mrb[0].mxu0
    %446 = vmatprep.mubr.bf16.mxu0 %v270
    %447 = vmatmul.mubr.bf16.gmra.mrb[0].mxu0 %v269
    %v448 = vpop.f32.mrb[0].mxu0
    %v449 = vadd.f32 %v308, %v448
    %v450 = vpop.f32.mrb[0].mxu0
    %v451 = vpop.f32.mrb[0].mxu0
    %v452 = vadd.f32 %v308, %v451
    %v453 = vpop.f32.mrb[0].mxu0
    %454 = vdwg.mxu0
    %v455 = vadd.f32 %v28, %v441
    %v456 = vadd.f32 %v29, %v444
    %v457 = vadd.f32 %v30, %v449
    %v458 = vadd.f32 %v31, %v452
    %v459 = vld [vmem:[%s5] sm:$0x1]
    %v460 = vld [vmem:[%s6] sm:$0x1]
    %461 = vadd.xlane.f32.xlu0 %v455
    %v462 = vpop.xlane.xlu0 %461
    %463 = vadd.xlane.f32.xlu0 %v456
    %v464 = vpop.xlane.xlu0 %463
    %465 = vadd.xlane.f32.xlu0 %v457
    %v466 = vpop.xlane.xlu0 %465
    %467 = vadd.xlane.f32.xlu0 %v458
    %v468 = vpop.xlane.xlu0 %467
    %v469 = vrcp.pop 128.0
    %v470 = vmul.f32 %v462, %v469
    %v471 = vmul.f32 %v464, %v469
    %v472 = vmul.f32 %v466, %v469
    %v473 = vmul.f32 %v468, %v469
    %v474 = vsub.f32 %v455, %v470
    %v475 = vsub.f32 %v456, %v471
    %v476 = vsub.f32 %v457, %v472
    %v477 = vsub.f32 %v458, %v473
    %v478 = vmul.f32 %v474, %v474
    %v479 = vmul.f32 %v475, %v475
    %v480 = vmul.f32 %v476, %v476
    %v481 = vmul.f32 %v477, %v477
    %482 = vadd.xlane.f32.xlu0 %v478
    %v483 = vpop.xlane.xlu0 %482
    %484 = vadd.xlane.f32.xlu0 %v479
    %v485 = vpop.xlane.xlu0 %484
    %486 = vadd.xlane.f32.xlu0 %v480
    %v487 = vpop.xlane.xlu0 %486
    %488 = vadd.xlane.f32.xlu0 %v481
    %v489 = vpop.xlane.xlu0 %488
    %v490 = vmul.f32 %v483, %v469
    %v491 = vmul.f32 %v485, %v469
    %v492 = vmul.f32 %v487, %v469
    %v493 = vmul.f32 %v489, %v469
    %v494 = vadd.f32 %v490, 1e-05
    %v495 = vadd.f32 %v491, 1e-05
    %v496 = vadd.f32 %v492, 1e-05
    %v497 = vadd.f32 %v493, 1e-05
    %v498 = vrsqrt.pop %v494
    %v499 = vrsqrt.pop %v495
    %v500 = vrsqrt.pop %v496
    %v501 = vrsqrt.pop %v497
    %v502 = vmul.f32 %v474, %v498
    %v503 = vmul.f32 %v475, %v499
    %v504 = vmul.f32 %v476, %v500
    %v505 = vmul.f32 %v477, %v501
    %v507 = vlaneseq
    %v508 = vshrl.u32 %v507, 7
    %v509 = vsub.s32 0, %v508
    %v510 = vrot.slane %v459, %v509
    %v512 = vmul.f32 %v502, %v510
    %v513 = vmul.f32 %v503, %v510
    %v514 = vmul.f32 %v504, %v510
    %v515 = vmul.f32 %v505, %v510
    %v517 = vlaneseq
    %v518 = vshrl.u32 %v517, 7
    %v519 = vsub.s32 0, %v518
    %v520 = vrot.slane %v460, %v519
    %v522 = vadd.f32 %v512, %v520
    %v523 = vadd.f32 %v513, %v520
    %v524 = vadd.f32 %v514, %v520
    %v525 = vadd.f32 %v515, %v520
    %526 = vst [vmem:[#allocation2] sm:$0xff] %v522
    %527 = vst [vmem:[#allocation2 + $0x8] sm:$0xff] %v523
    %528 = vst [vmem:[#allocation2 + $0x10] sm:$0xff] %v524
    %529 = vst [vmem:[#allocation2 + $0x18] sm:$0xff] %v525
    // Predicated region
    $region30: #{post_patt_encode.15} parent=1 // pred_check
      _
    $region31: #{post_patt_encode.15} parent=1 // pred_check_branch
      %531 = sbr.rel (0) target = $region33
    $region32: #{post_patt_encode.15} parent=1 // pred_region
      %s533 = ssub.s32 512, 512
      %534 = vsyncadd [#allocation3], %s533
      %s535 = sshll.u32 [#allocation2], 4
      %s536 = int_to_ptr.vmem [resolvable:$true] %s535
      %541 = dma.vmem_to_hbm [thread:$0]  %s536, 512, %s7, [#allocation3], 128, 128, 8
    $region33: #{post_patt_encode.15} parent=1 // pred_fallthru
      _
    // Predicated region
    $region34: #{post_patt_encode.15} parent=1 // pred_check
      _
    $region35: #{post_patt_encode.15} parent=1 // pred_check_branch
      %543 = sbr.rel (0) target = $region37
    $region36: #{post_patt_encode.15} parent=1 // pred_region
      %544 = dma.done [#allocation3], 512
    $region37: #{post_patt_encode.15} parent=1 // pred_fallthru
      _
    %545 = vsyncpa [#allocation3], 1

// kernel: post_patt_encode.13
$region0: #{post_patt_encode.13}
  #allocation0 [shape = 'u32[]', space=smem, size = 0x4, offset = 0x4, fixed_abs, tag = 'smem constant byte address 0x4 - core index']
  #allocation1 [shape = 'u32[144,128]{1,0:T(1,128)}', space=vmem, size = 0x12000, scoped, tag = 'internal scratch']
  %s0 = inlined_call_operand.vmem [shape: f32[2,16,128], index: 0, kind: input, shape index: {}]
  %s1 = inlined_call_operand.vmem [shape: f32[2,8,128], index: 1, kind: input, shape index: {}]
  %s2 = inlined_call_operand.vmem [shape: bf16[128,128], index: 2, kind: input, shape index: {}]
  %s3 = inlined_call_operand.vmem [shape: f32[1,128], index: 3, kind: input, shape index: {}]
  %s4 = inlined_call_operand.vmem [shape: bf16[128,128], index: 4, kind: input, shape index: {}]
  %s5 = inlined_call_operand.vmem [shape: f32[1,128], index: 5, kind: input, shape index: {}]
  %s6 = inlined_call_operand.vmem [shape: bf16[128,128], index: 6, kind: input, shape index: {}]
  %s7 = inlined_call_operand.vmem [shape: f32[1,128], index: 7, kind: input, shape index: {}]
  %s8 = inlined_call_operand.vmem [shape: bf16[128,128], index: 8, kind: input, shape index: {}]
  %s9 = inlined_call_operand.vmem [shape: f32[1,128], index: 9, kind: input, shape index: {}]
  %s10 = inlined_call_operand.vmem [shape: f32[1,128], index: 10, kind: input, shape index: {}]
  %s11 = inlined_call_operand.vmem [shape: f32[1,128], index: 11, kind: input, shape index: {}]
  %s12 = inlined_call_operand.vmem [shape: f32[2,16,128], index: 12, kind: output, shape index: {}]
  %s13 = sld [smem:[#allocation0]]
  $region81: #{post_patt_encode.13} parent=0
    _
  %s15 = ssub.s32 1, %s13
  %s16 = scalar_select 0, %s15, %s13
  loop: start=0, step=1, limit=4
  $region2: #{post_patt_encode.13} parent=0 // loop_pre_header
    _
  $region3: #{post_patt_encode.13} parent=0 // loop_header
    %s18 = sphi 0, %s22
    %p19 = scmp.ge.s32.totalorder %s18, 4
    %s25 = sphi 0, %s37
    %s26 = sphi 0, %s33
    %s27 = sphi 0, %s25
    %s28 = sphi 0, %s26
    %s29 = sphi 0, %s27
    %s30 = sphi 0, %s28
    %s42 = sphi 0, %s44
    %s45 = sphi 0, %s42
    %s46 = sphi 0, %s45
    %s62 = sphi 0, %s46
    %s68 = sphi 0, %s70
    %s71 = sphi 0, %s68
    %s72 = sphi 0, %s71
    %s88 = sphi 0, %s72
    %s92 = sphi 0, %s92
    %s94 = sphi 0, %s92
    %s95 = sphi 0, %s94
    %s109 = sphi 0, %s95
    %s113 = sphi 0, %s113
    %s115 = sphi 0, %s113
    %s116 = sphi 0, %s115
    %s130 = sphi 0, %s116
    %s134 = sphi 0, %s134
    %s136 = sphi 0, %s134
    %s137 = sphi 0, %s136
    %s151 = sphi 0, %s137
    %s155 = sphi 0, %s155
    %s157 = sphi 0, %s155
    %s158 = sphi 0, %s157
    %s172 = sphi 0, %s158
    %s176 = sphi 0, %s176
    %s178 = sphi 0, %s176
    %s179 = sphi 0, %s178
    %s193 = sphi 0, %s179
    %s197 = sphi 0, %s197
    %s199 = sphi 0, %s197
    %s200 = sphi 0, %s199
    %s214 = sphi 0, %s200
    %s218 = sphi 0, %s218
    %s220 = sphi 0, %s218
    %s221 = sphi 0, %s220
    %s235 = sphi 0, %s221
    %s239 = sphi 0, %s239
    %s241 = sphi 0, %s239
    %s242 = sphi 0, %s241
    %s256 = sphi 0, %s242
    %s260 = sphi 0, %s260
    %s262 = sphi 0, %s260
    %s263 = sphi 0, %s262
    %s277 = sphi 0, %s263
    %s281 = sphi 0, %s281
    %s283 = sphi 0, %s281
    %s284 = sphi 0, %s283
    %s298 = sphi 0, %s284
    %s306 = sphi 0, %s308
    %s309 = sphi 0, %s306
    %s310 = sphi 0, %s309
    %s326 = sphi 0, %s310
  $region4: #{post_patt_encode.13} parent=0 // loop_header_branch
    %21 = sbr.rel (%p19) target = $region8
  $region5: #{post_patt_encode.13} parent=0 // loop_body
    %s23 = ssub.s32 %s18, 1
    %s24 = ssub.s32 %s18, 2
    %s31 = sadd.s32 1, %s26
    %p32 = scmp.ge.s32.totalorder %s31, 1
    %s33 = scalar_select %p32, 0, %s31
    %s34 = sadd.s32 1, %s25
    %s35 = scalar_select %p32, %s34, %s25
    %p36 = scmp.ge.s32.totalorder %s35, 2
    %s37 = scalar_select %p36, 0, %s35
    %s38 = ssub.s32 %s25, %s37
    %s39 = ssub.s32 %s26, %s33
    %s40 = sor.u32 %s38, %s39
    %p41 = scmp.eq.s32.totalorder %s40, 0
    %s43 = sadd.s32 %s42, 1
    %s44 = scalar_select %p41, %s42, %s43
    %p47 = pneg %p41
    %p48 = scmp.eq.s32.totalorder %s18, 1
    %p49 = por %p47, %p48
    %p50 = scmp.ne.s32.totalorder %s42, %s45
    %p51 = scmp.eq.s32.totalorder %s18, 0
    %p52 = por %p50, %p51
    %p53 = scmp.ne.s32.totalorder %s42, %s45
    %p54 = scmp.eq.s32.totalorder %s23, 1
    %p55 = por %p53, %p54
    %p56 = scmp.ne.s32.totalorder %s45, %s46
    %p57 = scmp.eq.s32.totalorder %s23, 0
    %p58 = por %p56, %p57
    %p59 = scmp.ne.s32.totalorder %s45, %s46
    %p60 = scmp.eq.s32.totalorder %s24, 1
    %p61 = por %p59, %p60
    %p63 = scmp.ne.s32.totalorder %s46, %s62
    %p64 = scmp.eq.s32.totalorder %s24, 0
    %p65 = por %p63, %p64
    %s66 = ssub.s32 %s25, %s37
    %p67 = scmp.eq.s32.totalorder %s66, 0
    %s69 = sadd.s32 %s68, 1
    %s70 = scalar_select %p67, %s68, %s69
    %p73 = pneg %p67
    %p74 = scmp.eq.s32.totalorder %s18, 1
    %p75 = por %p73, %p74
    %p76 = scmp.ne.s32.totalorder %s68, %s71
    %p77 = scmp.eq.s32.totalorder %s18, 0
    %p78 = por %p76, %p77
    %p79 = scmp.ne.s32.totalorder %s68, %s71
    %p80 = scmp.eq.s32.totalorder %s23, 1
    %p81 = por %p79, %p80
    %p82 = scmp.ne.s32.totalorder %s71, %s72
    %p83 = scmp.eq.s32.totalorder %s23, 0
    %p84 = por %p82, %p83
    %p85 = scmp.ne.s32.totalorder %s71, %s72
    %p86 = scmp.eq.s32.totalorder %s24, 1
    %p87 = por %p85, %p86
    %p89 = scmp.ne.s32.totalorder %s72, %s88
    %p90 = scmp.eq.s32.totalorder %s24, 0
    %p91 = por %p89, %p90
    %s93 = sadd.s32 %s92, 1
    %p96 = scmp.eq.s32.totalorder %s18, 1
    %p97 = scmp.ne.s32.totalorder %s92, %s94
    %p98 = scmp.eq.s32.totalorder %s18, 0
    %p99 = por %p97, %p98
    %p100 = scmp.ne.s32.totalorder %s92, %s94
    %p101 = scmp.eq.s32.totalorder %s23, 1
    %p102 = por %p100, %p101
    %p103 = scmp.ne.s32.totalorder %s94, %s95
    %p104 = scmp.eq.s32.totalorder %s23, 0
    %p105 = por %p103, %p104
    %p106 = scmp.ne.s32.totalorder %s94, %s95
    %p107 = scmp.eq.s32.totalorder %s24, 1
    %p108 = por %p106, %p107
    %p110 = scmp.ne.s32.totalorder %s95, %s109
    %p111 = scmp.eq.s32.totalorder %s24, 0
    %p112 = por %p110, %p111
    %s114 = sadd.s32 %s113, 1
    %p117 = scmp.eq.s32.totalorder %s18, 1
    %p118 = scmp.ne.s32.totalorder %s113, %s115
    %p119 = scmp.eq.s32.totalorder %s18, 0
    %p120 = por %p118, %p119
    %p121 = scmp.ne.s32.totalorder %s113, %s115
    %p122 = scmp.eq.s32.totalorder %s23, 1
    %p123 = por %p121, %p122
    %p124 = scmp.ne.s32.totalorder %s115, %s116
    %p125 = scmp.eq.s32.totalorder %s23, 0
    %p126 = por %p124, %p125
    %p127 = scmp.ne.s32.totalorder %s115, %s116
    %p128 = scmp.eq.s32.totalorder %s24, 1
    %p129 = por %p127, %p128
    %p131 = scmp.ne.s32.totalorder %s116, %s130
    %p132 = scmp.eq.s32.totalorder %s24, 0
    %p133 = por %p131, %p132
    %s135 = sadd.s32 %s134, 1
    %p138 = scmp.eq.s32.totalorder %s18, 1
    %p139 = scmp.ne.s32.totalorder %s134, %s136
    %p140 = scmp.eq.s32.totalorder %s18, 0
    %p141 = por %p139, %p140
    %p142 = scmp.ne.s32.totalorder %s134, %s136
    %p143 = scmp.eq.s32.totalorder %s23, 1
    %p144 = por %p142, %p143
    %p145 = scmp.ne.s32.totalorder %s136, %s137
    %p146 = scmp.eq.s32.totalorder %s23, 0
    %p147 = por %p145, %p146
    %p148 = scmp.ne.s32.totalorder %s136, %s137
    %p149 = scmp.eq.s32.totalorder %s24, 1
    %p150 = por %p148, %p149
    %p152 = scmp.ne.s32.totalorder %s137, %s151
    %p153 = scmp.eq.s32.totalorder %s24, 0
    %p154 = por %p152, %p153
    %s156 = sadd.s32 %s155, 1
    %p159 = scmp.eq.s32.totalorder %s18, 1
    %p160 = scmp.ne.s32.totalorder %s155, %s157
    %p161 = scmp.eq.s32.totalorder %s18, 0
    %p162 = por %p160, %p161
    %p163 = scmp.ne.s32.totalorder %s155, %s157
    %p164 = scmp.eq.s32.totalorder %s23, 1
    %p165 = por %p163, %p164
    %p166 = scmp.ne.s32.totalorder %s157, %s158
    %p167 = scmp.eq.s32.totalorder %s23, 0
    %p168 = por %p166, %p167
    %p169 = scmp.ne.s32.totalorder %s157, %s158
    %p170 = scmp.eq.s32.totalorder %s24, 1
    %p171 = por %p169, %p170
    %p173 = scmp.ne.s32.totalorder %s158, %s172
    %p174 = scmp.eq.s32.totalorder %s24, 0
    %p175 = por %p173, %p174
    %s177 = sadd.s32 %s176, 1
    %p180 = scmp.eq.s32.totalorder %s18, 1
    %p181 = scmp.ne.s32.totalorder %s176, %s178
    %p182 = scmp.eq.s32.totalorder %s18, 0
    %p183 = por %p181, %p182
    %p184 = scmp.ne.s32.totalorder %s176, %s178
    %p185 = scmp.eq.s32.totalorder %s23, 1
    %p186 = por %p184, %p185
    %p187 = scmp.ne.s32.totalorder %s178, %s179
    %p188 = scmp.eq.s32.totalorder %s23, 0
    %p189 = por %p187, %p188
    %p190 = scmp.ne.s32.totalorder %s178, %s179
    %p191 = scmp.eq.s32.totalorder %s24, 1
    %p192 = por %p190, %p191
    %p194 = scmp.ne.s32.totalorder %s179, %s193
    %p195 = scmp.eq.s32.totalorder %s24, 0
    %p196 = por %p194, %p195
    %s198 = sadd.s32 %s197, 1
    %p201 = scmp.eq.s32.totalorder %s18, 1
    %p202 = scmp.ne.s32.totalorder %s197, %s199
    %p203 = scmp.eq.s32.totalorder %s18, 0
    %p204 = por %p202, %p203
    %p205 = scmp.ne.s32.totalorder %s197, %s199
    %p206 = scmp.eq.s32.totalorder %s23, 1
    %p207 = por %p205, %p206
    %p208 = scmp.ne.s32.totalorder %s199, %s200
    %p209 = scmp.eq.s32.totalorder %s23, 0
    %p210 = por %p208, %p209
    %p211 = scmp.ne.s32.totalorder %s199, %s200
    %p212 = scmp.eq.s32.totalorder %s24, 1
    %p213 = por %p211, %p212
    %p215 = scmp.ne.s32.totalorder %s200, %s214
    %p216 = scmp.eq.s32.totalorder %s24, 0
    %p217 = por %p215, %p216
    %s219 = sadd.s32 %s218, 1
    %p222 = scmp.eq.s32.totalorder %s18, 1
    %p223 = scmp.ne.s32.totalorder %s218, %s220
    %p224 = scmp.eq.s32.totalorder %s18, 0
    %p225 = por %p223, %p224
    %p226 = scmp.ne.s32.totalorder %s218, %s220
    %p227 = scmp.eq.s32.totalorder %s23, 1
    %p228 = por %p226, %p227
    %p229 = scmp.ne.s32.totalorder %s220, %s221
    %p230 = scmp.eq.s32.totalorder %s23, 0
    %p231 = por %p229, %p230
    %p232 = scmp.ne.s32.totalorder %s220, %s221
    %p233 = scmp.eq.s32.totalorder %s24, 1
    %p234 = por %p232, %p233
    %p236 = scmp.ne.s32.totalorder %s221, %s235
    %p237 = scmp.eq.s32.totalorder %s24, 0
    %p238 = por %p236, %p237
    %s240 = sadd.s32 %s239, 1
    %p243 = scmp.eq.s32.totalorder %s18, 1
    %p244 = scmp.ne.s32.totalorder %s239, %s241
    %p245 = scmp.eq.s32.totalorder %s18, 0
    %p246 = por %p244, %p245
    %p247 = scmp.ne.s32.totalorder %s239, %s241
    %p248 = scmp.eq.s32.totalorder %s23, 1
    %p249 = por %p247, %p248
    %p250 = scmp.ne.s32.totalorder %s241, %s242
    %p251 = scmp.eq.s32.totalorder %s23, 0
    %p252 = por %p250, %p251
    %p253 = scmp.ne.s32.totalorder %s241, %s242
    %p254 = scmp.eq.s32.totalorder %s24, 1
    %p255 = por %p253, %p254
    %p257 = scmp.ne.s32.totalorder %s242, %s256
    %p258 = scmp.eq.s32.totalorder %s24, 0
    %p259 = por %p257, %p258
    %s261 = sadd.s32 %s260, 1
    %p264 = scmp.eq.s32.totalorder %s18, 1
    %p265 = scmp.ne.s32.totalorder %s260, %s262
    %p266 = scmp.eq.s32.totalorder %s18, 0
    %p267 = por %p265, %p266
    %p268 = scmp.ne.s32.totalorder %s260, %s262
    %p269 = scmp.eq.s32.totalorder %s23, 1
    %p270 = por %p268, %p269
    %p271 = scmp.ne.s32.totalorder %s262, %s263
    %p272 = scmp.eq.s32.totalorder %s23, 0
    %p273 = por %p271, %p272
    %p274 = scmp.ne.s32.totalorder %s262, %s263
    %p275 = scmp.eq.s32.totalorder %s24, 1
    %p276 = por %p274, %p275
    %p278 = scmp.ne.s32.totalorder %s263, %s277
    %p279 = scmp.eq.s32.totalorder %s24, 0
    %p280 = por %p278, %p279
    %s282 = sadd.s32 %s281, 1
    %p285 = scmp.eq.s32.totalorder %s18, 1
    %p286 = scmp.ne.s32.totalorder %s281, %s283
    %p287 = scmp.eq.s32.totalorder %s18, 0
    %p288 = por %p286, %p287
    %p289 = scmp.ne.s32.totalorder %s281, %s283
    %p290 = scmp.eq.s32.totalorder %s23, 1
    %p291 = por %p289, %p290
    %p292 = scmp.ne.s32.totalorder %s283, %s284
    %p293 = scmp.eq.s32.totalorder %s23, 0
    %p294 = por %p292, %p293
    %p295 = scmp.ne.s32.totalorder %s283, %s284
    %p296 = scmp.eq.s32.totalorder %s24, 1
    %p297 = por %p295, %p296
    %p299 = scmp.ne.s32.totalorder %s284, %s298
    %p300 = scmp.eq.s32.totalorder %s24, 0
    %p301 = por %p299, %p300
    %s302 = ssub.s32 %s25, %s37
    %s303 = ssub.s32 %s26, %s33
    %s304 = sor.u32 %s302, %s303
    %p305 = scmp.eq.s32.totalorder %s304, 0
    %s307 = sadd.s32 %s306, 1
    %s308 = scalar_select %p305, %s306, %s307
    %p311 = pneg %p305
    %p312 = scmp.eq.s32.totalorder %s18, 1
    %p313 = por %p311, %p312
    %p314 = scmp.ne.s32.totalorder %s306, %s309
    %p315 = scmp.eq.s32.totalorder %s18, 0
    %p316 = por %p314, %p315
    %p317 = scmp.ne.s32.totalorder %s306, %s309
    %p318 = scmp.eq.s32.totalorder %s23, 1
    %p319 = por %p317, %p318
    %p320 = scmp.ne.s32.totalorder %s309, %s310
    %p321 = scmp.eq.s32.totalorder %s23, 0
    %p322 = por %p320, %p321
    %p323 = scmp.ne.s32.totalorder %s309, %s310
    %p324 = scmp.eq.s32.totalorder %s24, 1
    %p325 = por %p323, %p324
    %p327 = scmp.ne.s32.totalorder %s310, %s326
    %p328 = scmp.eq.s32.totalorder %s24, 0
    %p329 = por %p327, %p328
    %p330 = scmp.le.s32.totalorder 1, %s18
    %p331 = scmp.lt.s32.totalorder %s18, 3
    %p332 = pnand %p330, %p331
    %p333 = pneg %p332
    // Predicated region
    $region9: #{post_patt_encode.13} parent=5 // pred_check
      _
    $region10: #{post_patt_encode.13} parent=5 // pred_check_branch
      %335 = sbr.rel (%p332) target = $region12
    $region11: #{post_patt_encode.13} parent=5 // pred_region
      %s336 = ssub.s32 %s18, 1
      // Predicated region
      $region13: #{post_patt_encode.13} parent=11 // pred_check
        %p337 = pneg %p105
      $region14: #{post_patt_encode.13} parent=11 // pred_check_branch
        %339 = sbr.rel (%p337) target = $region16
      $region15: #{post_patt_encode.13} parent=11 // pred_region
        _
      $region16: #{post_patt_encode.13} parent=11 // pred_fallthru
        _
      // Predicated region
      $region17: #{post_patt_encode.13} parent=11 // pred_check
        %p340 = pneg %p126
      $region18: #{post_patt_encode.13} parent=11 // pred_check_branch
        %342 = sbr.rel (%p340) target = $region20
      $region19: #{post_patt_encode.13} parent=11 // pred_region
        _
      $region20: #{post_patt_encode.13} parent=11 // pred_fallthru
        _
      // Predicated region
      $region21: #{post_patt_encode.13} parent=11 // pred_check
        %p343 = pneg %p147
      $region22: #{post_patt_encode.13} parent=11 // pred_check_branch
        %345 = sbr.rel (%p343) target = $region24
      $region23: #{post_patt_encode.13} parent=11 // pred_region
        _
      $region24: #{post_patt_encode.13} parent=11 // pred_fallthru
        _
      // Predicated region
      $region25: #{post_patt_encode.13} parent=11 // pred_check
        %p346 = pneg %p168
      $region26: #{post_patt_encode.13} parent=11 // pred_check_branch
        %348 = sbr.rel (%p346) target = $region28
      $region27: #{post_patt_encode.13} parent=11 // pred_region
        _
      $region28: #{post_patt_encode.13} parent=11 // pred_fallthru
        _
      // Predicated region
      $region29: #{post_patt_encode.13} parent=11 // pred_check
        %p349 = pneg %p189
      $region30: #{post_patt_encode.13} parent=11 // pred_check_branch
        %351 = sbr.rel (%p349) target = $region32
      $region31: #{post_patt_encode.13} parent=11 // pred_region
        _
      $region32: #{post_patt_encode.13} parent=11 // pred_fallthru
        _
      // Predicated region
      $region33: #{post_patt_encode.13} parent=11 // pred_check
        %p352 = pneg %p210
      $region34: #{post_patt_encode.13} parent=11 // pred_check_branch
        %354 = sbr.rel (%p352) target = $region36
      $region35: #{post_patt_encode.13} parent=11 // pred_region
        _
      $region36: #{post_patt_encode.13} parent=11 // pred_fallthru
        _
      // Predicated region
      $region37: #{post_patt_encode.13} parent=11 // pred_check
        %p355 = pneg %p231
      $region38: #{post_patt_encode.13} parent=11 // pred_check_branch
        %357 = sbr.rel (%p355) target = $region40
      $region39: #{post_patt_encode.13} parent=11 // pred_region
        _
      $region40: #{post_patt_encode.13} parent=11 // pred_fallthru
        _
      // Predicated region
      $region41: #{post_patt_encode.13} parent=11 // pred_check
        %p358 = pneg %p252
      $region42: #{post_patt_encode.13} parent=11 // pred_check_branch
        %360 = sbr.rel (%p358) target = $region44
      $region43: #{post_patt_encode.13} parent=11 // pred_region
        _
      $region44: #{post_patt_encode.13} parent=11 // pred_fallthru
        _
      // Predicated region
      $region45: #{post_patt_encode.13} parent=11 // pred_check
        %p361 = pneg %p273
      $region46: #{post_patt_encode.13} parent=11 // pred_check_branch
        %363 = sbr.rel (%p361) target = $region48
      $region47: #{post_patt_encode.13} parent=11 // pred_region
        _
      $region48: #{post_patt_encode.13} parent=11 // pred_fallthru
        _
      // Predicated region
      $region49: #{post_patt_encode.13} parent=11 // pred_check
        %p364 = pneg %p294
      $region50: #{post_patt_encode.13} parent=11 // pred_check_branch
        %366 = sbr.rel (%p364) target = $region52
      $region51: #{post_patt_encode.13} parent=11 // pred_region
        _
      $region52: #{post_patt_encode.13} parent=11 // pred_fallthru
        _
    $region12: #{post_patt_encode.13} parent=5 // pred_fallthru
      _
    %p367 = scmp.lt.s32.totalorder %s18, 2
    // Predicated region
    $region53: #{post_patt_encode.13} parent=5 // pred_check
      %p368 = pneg %p367
    $region54: #{post_patt_encode.13} parent=5 // pred_check_branch
      %370 = sbr.rel (%p368) target = $region56
    $region55: #{post_patt_encode.13} parent=5 // pred_region
      // Predicated region
      $region57: #{post_patt_encode.13} parent=55 // pred_check
        %p371 = pneg %p52
      $region58: #{post_patt_encode.13} parent=55 // pred_check_branch
        %373 = sbr.rel (%p371) target = $region60
      $region59: #{post_patt_encode.13} parent=55 // pred_region
        %s374 = smul.u32 2, %s26
        %p375 = scmp.lt.s32.totalorder %s25, 1
        %s376 = scalar_select %p375, %s25, 1
        %p377 = scmp.lt.s32.totalorder %s374, 1
        %s378 = scalar_select %p377, %s374, 1
        %s379 = smul.addr %s376, 2
        %s380 = sadd.s32 %s378, %s379
        %s381 = smul.addr %s380, 8
        %s382 = scalar_lea.vmem %s0, %s381
        %s383 = smul.u32 2, %s26
      $region60: #{post_patt_encode.13} parent=55 // pred_fallthru
        _
      // Predicated region
      $region61: #{post_patt_encode.13} parent=55 // pred_check
        %p384 = pneg %p78
      $region62: #{post_patt_encode.13} parent=55 // pred_check_branch
        %386 = sbr.rel (%p384) target = $region64
      $region63: #{post_patt_encode.13} parent=55 // pred_region
        %p387 = scmp.lt.s32.totalorder %s25, 1
        %s388 = scalar_select %p387, %s25, 1
        %s389 = smul.addr %s388, 8
        %s390 = scalar_lea.vmem %s1, %s389
      $region64: #{post_patt_encode.13} parent=55 // pred_fallthru
        _
    $region56: #{post_patt_encode.13} parent=5 // pred_fallthru
      _
    %p391 = scmp.le.s32.totalorder 1, %s18
    %p392 = scmp.lt.s32.totalorder %s18, 3
    %p393 = pnand %p391, %p392
    %p394 = pneg %p393
    // Predicated region
    $region65: #{post_patt_encode.13} parent=5 // pred_check
      _
    $region66: #{post_patt_encode.13} parent=5 // pred_check_branch
      %396 = sbr.rel (%p393) target = $region68
    $region67: #{post_patt_encode.13} parent=5 // pred_region
      %s397 = ssub.s32 %s18, 1
      %s398 = smul.u32 2, %s28
      %p399 = scmp.lt.s32.totalorder %s27, 1
      %s400 = scalar_select %p399, %s27, 1
      %p401 = scmp.lt.s32.totalorder %s398, 1
      %s402 = scalar_select %p401, %s398, 1
      %s403 = smul.addr %s400, 2
      %s404 = sadd.s32 %s402, %s403
      %s405 = smul.addr %s404, 8
      %s406 = scalar_lea.vmem %s0, %s405
      %p407 = pneg %p58
      %p408 = pneg %p55
      %p409 = scmp.lt.s32.totalorder %s27, 1
      %s410 = scalar_select %p409, %s27, 1
      %s411 = smul.addr %s410, 8
      %s412 = scalar_lea.vmem %s1, %s411
      %p413 = pneg %p84
      %p414 = pneg %p81
      %p415 = pneg %p105
      %p416 = pneg %p102
      %p417 = pneg %p126
      %p418 = pneg %p123
      %p419 = pneg %p147
      %p420 = pneg %p144
      %p421 = pneg %p168
      %p422 = pneg %p165
      %p423 = pneg %p189
      %p424 = pneg %p186
      %p425 = pneg %p210
      %p426 = pneg %p207
      %p427 = pneg %p231
      %p428 = pneg %p228
      %p429 = pneg %p252
      %p430 = pneg %p249
      %p431 = pneg %p273
      %p432 = pneg %p270
      %p433 = pneg %p294
      %p434 = pneg %p291
      %p435 = pneg %p322
      %p436 = pneg %p319
      %s437 = smul.u32 2, %s28
      %p438 = scmp.lt.s32.totalorder %s27, 1
      %s439 = scalar_select %p438, %s27, 1
      %p440 = scmp.lt.s32.totalorder %s437, 1
      %s441 = scalar_select %p440, %s437, 1
      %s442 = smul.addr %s439, 2
      %s443 = sadd.s32 %s441, %s442
      %s444 = smul.addr %s443, 8
      %s445 = scalar_lea.vmem %s12, %s444
      %s446 = smul.u32 2, %s28
      %p447 = scmp.lt.s32.totalorder %s27, 1
      %s448 = scalar_select %p447, %s27, 1
      %p449 = scmp.lt.s32.totalorder %s446, 1
      %s450 = scalar_select %p449, %s446, 1
      %s451 = smul.addr %s448, 2
      %s452 = sadd.s32 %s450, %s451
      %s453 = smul.addr %s452, 8
      %s454 = scalar_lea.vmem %s0, %s453
      %s455 = smul.u32 2, %s28
      %p456 = scmp.lt.s32.totalorder %s27, 1
      %s457 = scalar_select %p456, %s27, 1
      %s458 = smul.addr %s457, 8
      %s459 = scalar_lea.vmem %s1, %s458
      %s460 = smul.u32 2, %s28
      %p461 = scmp.lt.s32.totalorder %s27, 1
      %s462 = scalar_select %p461, %s27, 1
      %p463 = scmp.lt.s32.totalorder %s460, 1
      %s464 = scalar_select %p463, %s460, 1
      %s465 = smul.addr %s462, 2
      %s466 = sadd.s32 %s464, %s465
      %s467 = smul.addr %s466, 8
      %s468 = scalar_lea.vmem %s12, %s467
      %s469 = smul.u32 2, %s28
      %v471 = vld [vmem:[%s454] sm:$0xff]
      %v472 = vld [vmem:[%s454 + $0x8] sm:$0xff]
      %v473 = vpack.c.bf16 %v472, %v471
      %v474 = vld [vmem:[%s459] sm:$0xff]
      %v475 = vpack.c.bf16 %v474, %v474
      %v476 = vld [vmem:[%s2] sm:$0xf]
      %v477 = vld [vmem:[%s2 + $0x4] sm:$0xf]
      %v478 = vld [vmem:[%s2 + $0x8] sm:$0xf]
      %v479 = vld [vmem:[%s2 + $0xc] sm:$0xf]
      %v480 = vld [vmem:[%s2 + $0x10] sm:$0xf]
      %v481 = vld [vmem:[%s2 + $0x14] sm:$0xf]
      %v482 = vld [vmem:[%s2 + $0x18] sm:$0xf]
      %v483 = vld [vmem:[%s2 + $0x1c] sm:$0xf]
      %v484 = vld [vmem:[%s2 + $0x20] sm:$0xf]
      %v485 = vld [vmem:[%s2 + $0x24] sm:$0xf]
      %v486 = vld [vmem:[%s2 + $0x28] sm:$0xf]
      %v487 = vld [vmem:[%s2 + $0x2c] sm:$0xf]
      %v488 = vld [vmem:[%s2 + $0x30] sm:$0xf]
      %v489 = vld [vmem:[%s2 + $0x34] sm:$0xf]
      %v490 = vld [vmem:[%s2 + $0x38] sm:$0xf]
      %v491 = vld [vmem:[%s2 + $0x3c] sm:$0xf]
      %v492 = vld [vmem:[%s3] sm:$0x1]
      %v494 = vlaneseq
      %v495 = vshrl.u32 %v494, 7
      %v496 = vsub.s32 0, %v495
      %v497 = vrot.slane %v492, %v496
      %v515 = vunpack.c.l.b16 %v476
      %v516 = vunpack.c.l.b16 %v477
      %v517 = vunpack.c.l.b16 %v478
      %v518 = vunpack.c.l.b16 %v479
      %v519 = vunpack.c.l.b16 %v480
      %v520 = vunpack.c.l.b16 %v481
      %v521 = vunpack.c.l.b16 %v482
      %v522 = vunpack.c.l.b16 %v483
      %v523 = vunpack.c.l.b16 %v484
      %v524 = vunpack.c.l.b16 %v485
      %v525 = vunpack.c.l.b16 %v486
      %v526 = vunpack.c.l.b16 %v487
      %v527 = vunpack.c.l.b16 %v488
      %v528 = vunpack.c.l.b16 %v489
      %v529 = vunpack.c.l.b16 %v490
      %v530 = vunpack.c.l.b16 %v491
      %v531 = vpack.c.b16 %v516, %v515
      %v532 = vpack.c.b16 %v518, %v517
      %v533 = vpack.c.b16 %v520, %v519
      %v534 = vpack.c.b16 %v522, %v521
      %v535 = vpack.c.b16 %v524, %v523
      %v536 = vpack.c.b16 %v526, %v525
      %v537 = vpack.c.b16 %v528, %v527
      %v538 = vpack.c.b16 %v530, %v529
      %547 = vmatprep.subr.bf16.mxu0 0
      %548 = vmatpush1.bf16.msra.mxu0 %v531
      %549 = vmatprep.subr.bf16.mxu0 0
      %550 = vmatpush1.bf16.msra.mxu0 %v532
      %551 = vmatprep.subr.bf16.mxu0 0
      %552 = vmatpush1.bf16.msra.mxu0 %v533
      %553 = vmatprep.subr.bf16.mxu0 0
      %554 = vmatpush1.bf16.msra.mxu0 %v534
      %555 = vmatprep.subr.bf16.mxu0 0
      %556 = vmatpush1.bf16.msra.mxu0 %v535
      %557 = vmatprep.subr.bf16.mxu0 0
      %558 = vmatpush1.bf16.msra.mxu0 %v536
      %559 = vmatprep.subr.bf16.mxu0 0
      %560 = vmatpush1.bf16.msra.mxu0 %v537
      %561 = vmatprep.subr.bf16.mxu0 0
      %562 = vmatpush1.bf16.msra.mxu0 %v538
      %563 = vmatprep.subr.bf16.mxu0 0
      %564 = vmatpush1.bf16.msra.mxu0 0
      %565 = vmatprep.subr.bf16.mxu0 0
      %566 = vmatpush1.bf16.msra.mxu0 0
      %567 = vmatprep.subr.bf16.mxu0 0
      %568 = vmatpush1.bf16.msra.mxu0 0
      %569 = vmatprep.subr.bf16.mxu0 0
      %570 = vmatpush1.bf16.msra.mxu0 0
      %571 = vmatprep.subr.bf16.mxu0 0
      %572 = vmatpush1.bf16.msra.mxu0 0
      %573 = vmatprep.subr.bf16.mxu0 0
      %574 = vmatpush1.bf16.msra.mxu0 0
      %575 = vmatprep.subr.bf16.mxu0 0
      %576 = vmatpush1.bf16.msra.mxu0 0
      %577 = vmatprep.subr.bf16.mxu0 0
      %578 = vmatpush1.bf16.msra.mxu0 0
      %579 = vmatprep.mubr.bf16.mxu0 0
      %580 = vmatmul.mubr.bf16.gmra.mrb[0].mxu0 %v473
      %v581 = vpop.f32.mrb[0].mxu0
      %v582 = vadd.f32 %v497, %v581
      %v583 = vpop.f32.mrb[0].mxu0
      %v584 = vpop.f32.mrb[0].mxu0
      %v585 = vadd.f32 %v497, %v584
      %v586 = vpop.f32.mrb[0].mxu0
      %587 = vdwg.mxu0
      %v588 = vpack.c.bf16 %v585, %v582
      %v589 = vld [vmem:[%s4] sm:$0xf]
      %v590 = vld [vmem:[%s4 + $0x4] sm:$0xf]
      %v591 = vld [vmem:[%s4 + $0x8] sm:$0xf]
      %v592 = vld [vmem:[%s4 + $0xc] sm:$0xf]
      %v593 = vld [vmem:[%s4 + $0x10] sm:$0xf]
      %v594 = vld [vmem:[%s4 + $0x14] sm:$0xf]
      %v595 = vld [vmem:[%s4 + $0x18] sm:$0xf]
      %v596 = vld [vmem:[%s4 + $0x1c] sm:$0xf]
      %v597 = vld [vmem:[%s4 + $0x20] sm:$0xf]
      %v598 = vld [vmem:[%s4 + $0x24] sm:$0xf]
      %v599 = vld [vmem:[%s4 + $0x28] sm:$0xf]
      %v600 = vld [vmem:[%s4 + $0x2c] sm:$0xf]
      %v601 = vld [vmem:[%s4 + $0x30] sm:$0xf]
      %v602 = vld [vmem:[%s4 + $0x34] sm:$0xf]
      %v603 = vld [vmem:[%s4 + $0x38] sm:$0xf]
      %v604 = vld [vmem:[%s4 + $0x3c] sm:$0xf]
      %v605 = vld [vmem:[%s5] sm:$0x1]
      %v607 = vlaneseq
      %v608 = vshrl.u32 %v607, 7
      %v609 = vsub.s32 0, %v608
      %v610 = vrot.slane %v605, %v609
      %v628 = vunpack.c.l.b16 %v589
      %v629 = vunpack.c.l.b16 %v590
      %v630 = vunpack.c.l.b16 %v591
      %v631 = vunpack.c.l.b16 %v592
      %v632 = vunpack.c.l.b16 %v593
      %v633 = vunpack.c.l.b16 %v594
      %v634 = vunpack.c.l.b16 %v595
      %v635 = vunpack.c.l.b16 %v596
      %v636 = vunpack.c.l.b16 %v597
      %v637 = vunpack.c.l.b16 %v598
      %v638 = vunpack.c.l.b16 %v599
      %v639 = vunpack.c.l.b16 %v600
      %v640 = vunpack.c.l.b16 %v601
      %v641 = vunpack.c.l.b16 %v602
      %v642 = vunpack.c.l.b16 %v603
      %v643 = vunpack.c.l.b16 %v604
      %v644 = vpack.c.b16 %v629, %v628
      %v645 = vpack.c.b16 %v631, %v630
      %v646 = vpack.c.b16 %v633, %v632
      %v647 = vpack.c.b16 %v635, %v634
      %v648 = vpack.c.b16 %v637, %v636
      %v649 = vpack.c.b16 %v639, %v638
      %v650 = vpack.c.b16 %v641, %v640
      %v651 = vpack.c.b16 %v643, %v642
      %660 = vmatprep.subr.bf16.mxu0 0
      %661 = vmatpush1.bf16.msra.mxu0 %v644
      %662 = vmatprep.subr.bf16.mxu0 0
      %663 = vmatpush1.bf16.msra.mxu0 %v645
      %664 = vmatprep.subr.bf16.mxu0 0
      %665 = vmatpush1.bf16.msra.mxu0 %v646
      %666 = vmatprep.subr.bf16.mxu0 0
      %667 = vmatpush1.bf16.msra.mxu0 %v647
      %668 = vmatprep.subr.bf16.mxu0 0
      %669 = vmatpush1.bf16.msra.mxu0 %v648
      %670 = vmatprep.subr.bf16.mxu0 0
      %671 = vmatpush1.bf16.msra.mxu0 %v649
      %672 = vmatprep.subr.bf16.mxu0 0
      %673 = vmatpush1.bf16.msra.mxu0 %v650
      %674 = vmatprep.subr.bf16.mxu0 0
      %675 = vmatpush1.bf16.msra.mxu0 %v651
      %676 = vmatprep.subr.bf16.mxu0 0
      %677 = vmatpush1.bf16.msra.mxu0 0
      %678 = vmatprep.subr.bf16.mxu0 0
      %679 = vmatpush1.bf16.msra.mxu0 0
      %680 = vmatprep.subr.bf16.mxu0 0
      %681 = vmatpush1.bf16.msra.mxu0 0
      %682 = vmatprep.subr.bf16.mxu0 0
      %683 = vmatpush1.bf16.msra.mxu0 0
      %684 = vmatprep.subr.bf16.mxu0 0
      %685 = vmatpush1.bf16.msra.mxu0 0
      %686 = vmatprep.subr.bf16.mxu0 0
      %687 = vmatpush1.bf16.msra.mxu0 0
      %688 = vmatprep.subr.bf16.mxu0 0
      %689 = vmatpush1.bf16.msra.mxu0 0
      %690 = vmatprep.subr.bf16.mxu0 0
      %691 = vmatpush1.bf16.msra.mxu0 0
      %692 = vmatprep.mubr.bf16.mxu0 0
      %693 = vmatmul.mubr.bf16.gmra.mrb[0].mxu0 %v475
      %v694 = vpop.f32.mrb[0].mxu0
      %v695 = vadd.f32 %v610, %v694
      %v696 = vpop.f32.mrb[0].mxu0
      %v697 = vpop.f32.mrb[0].mxu0
      %v698 = vpop.f32.mrb[0].mxu0
      %699 = vdwg.mxu0
      %v700 = vpack.c.bf16 %v695, %v695
      %v701 = vld [vmem:[%s6] sm:$0xf]
      %v702 = vld [vmem:[%s6 + $0x4] sm:$0xf]
      %v703 = vld [vmem:[%s6 + $0x8] sm:$0xf]
      %v704 = vld [vmem:[%s6 + $0xc] sm:$0xf]
      %v705 = vld [vmem:[%s6 + $0x10] sm:$0xf]
      %v706 = vld [vmem:[%s6 + $0x14] sm:$0xf]
      %v707 = vld [vmem:[%s6 + $0x18] sm:$0xf]
      %v708 = vld [vmem:[%s6 + $0x1c] sm:$0xf]
      %v709 = vld [vmem:[%s6 + $0x20] sm:$0xf]
      %v710 = vld [vmem:[%s6 + $0x24] sm:$0xf]
      %v711 = vld [vmem:[%s6 + $0x28] sm:$0xf]
      %v712 = vld [vmem:[%s6 + $0x2c] sm:$0xf]
      %v713 = vld [vmem:[%s6 + $0x30] sm:$0xf]
      %v714 = vld [vmem:[%s6 + $0x34] sm:$0xf]
      %v715 = vld [vmem:[%s6 + $0x38] sm:$0xf]
      %v716 = vld [vmem:[%s6 + $0x3c] sm:$0xf]
      %v717 = vld [vmem:[%s7] sm:$0x1]
      %v719 = vlaneseq
      %v720 = vshrl.u32 %v719, 7
      %v721 = vsub.s32 0, %v720
      %v722 = vrot.slane %v717, %v721
      %v740 = vunpack.c.l.b16 %v701
      %v741 = vunpack.c.l.b16 %v702
      %v742 = vunpack.c.l.b16 %v703
      %v743 = vunpack.c.l.b16 %v704
      %v744 = vunpack.c.l.b16 %v705
      %v745 = vunpack.c.l.b16 %v706
      %v746 = vunpack.c.l.b16 %v707
      %v747 = vunpack.c.l.b16 %v708
      %v748 = vunpack.c.l.b16 %v709
      %v749 = vunpack.c.l.b16 %v710
      %v750 = vunpack.c.l.b16 %v711
      %v751 = vunpack.c.l.b16 %v712
      %v752 = vunpack.c.l.b16 %v713
      %v753 = vunpack.c.l.b16 %v714
      %v754 = vunpack.c.l.b16 %v715
      %v755 = vunpack.c.l.b16 %v716
      %v756 = vpack.c.b16 %v741, %v740
      %v757 = vpack.c.b16 %v743, %v742
      %v758 = vpack.c.b16 %v745, %v744
      %v759 = vpack.c.b16 %v747, %v746
      %v760 = vpack.c.b16 %v749, %v748
      %v761 = vpack.c.b16 %v751, %v750
      %v762 = vpack.c.b16 %v753, %v752
      %v763 = vpack.c.b16 %v755, %v754
      %772 = vmatprep.subr.bf16.mxu0 0
      %773 = vmatpush1.bf16.msra.mxu0 %v756
      %774 = vmatprep.subr.bf16.mxu0 0
      %775 = vmatpush1.bf16.msra.mxu0 %v757
      %776 = vmatprep.subr.bf16.mxu0 0
      %777 = vmatpush1.bf16.msra.mxu0 %v758
      %778 = vmatprep.subr.bf16.mxu0 0
      %779 = vmatpush1.bf16.msra.mxu0 %v759
      %780 = vmatprep.subr.bf16.mxu0 0
      %781 = vmatpush1.bf16.msra.mxu0 %v760
      %782 = vmatprep.subr.bf16.mxu0 0
      %783 = vmatpush1.bf16.msra.mxu0 %v761
      %784 = vmatprep.subr.bf16.mxu0 0
      %785 = vmatpush1.bf16.msra.mxu0 %v762
      %786 = vmatprep.subr.bf16.mxu0 0
      %787 = vmatpush1.bf16.msra.mxu0 %v763
      %788 = vmatprep.subr.bf16.mxu0 0
      %789 = vmatpush1.bf16.msra.mxu0 0
      %790 = vmatprep.subr.bf16.mxu0 0
      %791 = vmatpush1.bf16.msra.mxu0 0
      %792 = vmatprep.subr.bf16.mxu0 0
      %793 = vmatpush1.bf16.msra.mxu0 0
      %794 = vmatprep.subr.bf16.mxu0 0
      %795 = vmatpush1.bf16.msra.mxu0 0
      %796 = vmatprep.subr.bf16.mxu0 0
      %797 = vmatpush1.bf16.msra.mxu0 0
      %798 = vmatprep.subr.bf16.mxu0 0
      %799 = vmatpush1.bf16.msra.mxu0 0
      %800 = vmatprep.subr.bf16.mxu0 0
      %801 = vmatpush1.bf16.msra.mxu0 0
      %802 = vmatprep.subr.bf16.mxu0 0
      %803 = vmatpush1.bf16.msra.mxu0 0
      %804 = vmatprep.mubr.bf16.mxu0 0
      %805 = vmatmul.mubr.bf16.gmra.mrb[0].mxu0 %v475
      %v806 = vpop.f32.mrb[0].mxu0
      %v807 = vadd.f32 %v722, %v806
      %v808 = vpop.f32.mrb[0].mxu0
      %v809 = vpop.f32.mrb[0].mxu0
      %v810 = vpop.f32.mrb[0].mxu0
      %811 = vdwg.mxu0
      %v812 = vpack.c.bf16 %v807, %v807
      %vm813 = vcmask 261120
      %v815 = vsel %vm813, %v588, 0
      %v818 = vsel %vm813, %v700, 0
      %820 = vmatprep.subr.bf16.mxu0 0
      %821 = vmatpush1.bf16.xpose.msra.mxu0 %v818
      %822 = vmatprep.subr.bf16.mxu0 0
      %823 = vmatpush1.bf16.xpose.msra.mxu0 0
      %824 = vmatprep.subr.bf16.mxu0 0
      %825 = vmatpush1.bf16.xpose.msra.mxu0 0
      %826 = vmatprep.subr.bf16.mxu0 0
      %827 = vmatpush1.bf16.xpose.msra.mxu0 0
      %828 = vmatprep.subr.bf16.mxu0 0
      %829 = vmatpush1.bf16.xpose.msra.mxu0 0
      %830 = vmatprep.subr.bf16.mxu0 0
      %831 = vmatpush1.bf16.xpose.msra.mxu0 0
      %832 = vmatprep.subr.bf16.mxu0 0
      %833 = vmatpush1.bf16.xpose.msra.mxu0 0
      %834 = vmatprep.subr.bf16.mxu0 0
      %835 = vmatpush1.bf16.xpose.msra.mxu0 0
      %836 = vmatprep.subr.bf16.mxu0 0
      %837 = vmatpush1.bf16.xpose.msra.mxu0 0
      %838 = vmatprep.subr.bf16.mxu0 0
      %839 = vmatpush1.bf16.xpose.msra.mxu0 0
      %840 = vmatprep.subr.bf16.mxu0 0
      %841 = vmatpush1.bf16.xpose.msra.mxu0 0
      %842 = vmatprep.subr.bf16.mxu0 0
      %843 = vmatpush1.bf16.xpose.msra.mxu0 0
      %844 = vmatprep.subr.bf16.mxu0 0
      %845 = vmatpush1.bf16.xpose.msra.mxu0 0
      %846 = vmatprep.subr.bf16.mxu0 0
      %847 = vmatpush1.bf16.xpose.msra.mxu0 0
      %848 = vmatprep.subr.bf16.mxu0 0
      %849 = vmatpush1.bf16.xpose.msra.mxu0 0
      %850 = vmatprep.subr.bf16.mxu0 0
      %851 = vmatpush1.bf16.xpose.msra.mxu0 0
      %852 = vmatprep.mubr.bf16.mxu0 0
      %853 = vmatmul.mubr.bf16.gmra.mrb[0].mxu0 %v815
      %v854 = vpop.f32.mrb[0].mxu0
      %v855 = vadd.f32 0.0, %v854
      %v856 = vpop.f32.mrb[0].mxu0
      %v857 = vpop.f32.mrb[0].mxu0
      %v858 = vadd.f32 0.0, %v857
      %v859 = vpop.f32.mrb[0].mxu0
      %860 = vdwg.mxu0
      %vm861 = vcmask 64512
      %v862 = vsel %vm861, %v855, -inf
      %863 = vmax.xlane.f32.xlu0 %v862
      %v864 = vpop.xlane.xlu0 %863
      %v865 = vsel %vm861, %v858, -inf
      %866 = vmax.xlane.f32.xlu0 %v865
      %v867 = vpop.xlane.xlu0 %866
      %v868 = vsub.f32 %v855, %v864
      %v869 = vsub.f32 %v858, %v867
      %v870 = vmul.f32 %v868, 1.442695
      %v871 = vpow.pop %v870
      %v872 = vmul.f32 %v869, 1.442695
      %v873 = vpow.pop %v872
      %v874 = vsel %vm861, %v871, 0.0
      %875 = vadd.xlane.f32.xlu0 %v874
      %v876 = vpop.xlane.xlu0 %875
      %v877 = vsel %vm861, %v873, 0.0
      %878 = vadd.xlane.f32.xlu0 %v877
      %v879 = vpop.xlane.xlu0 %878
      %v880 = vrcp.pop %v876
      %v881 = vrcp.pop %v879
      %v882 = vpack.c.bf16 %v873, %v871
      %v884 = vsel %vm861, %v882, 0
      %vm886 = vcmask 1043456
      %v888 = vsel %vm886, %v812, 0
      %890 = vmatprep.subr.bf16.mxu0 0
      %891 = vmatpush1.bf16.msra.mxu0 %v888
      %892 = vmatprep.subr.bf16.mxu0 0
      %893 = vmatpush1.bf16.msra.mxu0 0
      %894 = vmatprep.subr.bf16.mxu0 0
      %895 = vmatpush1.bf16.msra.mxu0 0
      %896 = vmatprep.subr.bf16.mxu0 0
      %897 = vmatpush1.bf16.msra.mxu0 0
      %898 = vmatprep.subr.bf16.mxu0 0
      %899 = vmatpush1.bf16.msra.mxu0 0
      %900 = vmatprep.subr.bf16.mxu0 0
      %901 = vmatpush1.bf16.msra.mxu0 0
      %902 = vmatprep.subr.bf16.mxu0 0
      %903 = vmatpush1.bf16.msra.mxu0 0
      %904 = vmatprep.subr.bf16.mxu0 0
      %905 = vmatpush1.bf16.msra.mxu0 0
      %906 = vmatprep.subr.bf16.mxu0 0
      %907 = vmatpush1.bf16.msra.mxu0 0
      %908 = vmatprep.subr.bf16.mxu0 0
      %909 = vmatpush1.bf16.msra.mxu0 0
      %910 = vmatprep.subr.bf16.mxu0 0
      %911 = vmatpush1.bf16.msra.mxu0 0
      %912 = vmatprep.subr.bf16.mxu0 0
      %913 = vmatpush1.bf16.msra.mxu0 0
      %914 = vmatprep.subr.bf16.mxu0 0
      %915 = vmatpush1.bf16.msra.mxu0 0
      %916 = vmatprep.subr.bf16.mxu0 0
      %917 = vmatpush1.bf16.msra.mxu0 0
      %918 = vmatprep.subr.bf16.mxu0 0
      %919 = vmatpush1.bf16.msra.mxu0 0
      %920 = vmatprep.subr.bf16.mxu0 0
      %921 = vmatpush1.bf16.msra.mxu0 0
      %922 = vmatprep.mubr.bf16.mxu0 0
      %923 = vmatmul.mubr.bf16.gmra.mrb[0].mxu0 %v884
      %v924 = vpop.f32.mrb[0].mxu0
      %v925 = vadd.f32 0.0, %v924
      %v926 = vpop.f32.mrb[0].mxu0
      %v927 = vpop.f32.mrb[0].mxu0
      %v928 = vadd.f32 0.0, %v927
      %v929 = vpop.f32.mrb[0].mxu0
      %930 = vdwg.mxu0
      %v931 = vmul.f32 %v925, %v880
      %v932 = vmul.f32 %v928, %v881
      %v933 = vpack.c.bf16 %v932, %v931
      %935 = vrot.lane.b32.xlu0 %v588, 96
      %v936 = vpop.permute.xlu0 %935
      %938 = vrot.lane.b32.xlu0 %v700, 96
      %v939 = vpop.permute.xlu0 %938
      %v941 = vsel %vm813, %v936, 0
      %v944 = vsel %vm813, %v939, 0
      %946 = vmatprep.subr.bf16.mxu0 0
      %947 = vmatpush1.bf16.xpose.msra.mxu0 %v944
      %948 = vmatprep.subr.bf16.mxu0 0
      %949 = vmatpush1.bf16.xpose.msra.mxu0 0
      %950 = vmatprep.subr.bf16.mxu0 0
      %951 = vmatpush1.bf16.xpose.msra.mxu0 0
      %952 = vmatprep.subr.bf16.mxu0 0
      %953 = vmatpush1.bf16.xpose.msra.mxu0 0
      %954 = vmatprep.subr.bf16.mxu0 0
      %955 = vmatpush1.bf16.xpose.msra.mxu0 0
      %956 = vmatprep.subr.bf16.mxu0 0
      %957 = vmatpush1.bf16.xpose.msra.mxu0 0
      %958 = vmatprep.subr.bf16.mxu0 0
      %959 = vmatpush1.bf16.xpose.msra.mxu0 0
      %960 = vmatprep.subr.bf16.mxu0 0
      %961 = vmatpush1.bf16.xpose.msra.mxu0 0
      %962 = vmatprep.subr.bf16.mxu0 0
      %963 = vmatpush1.bf16.xpose.msra.mxu0 0
      %964 = vmatprep.subr.bf16.mxu0 0
      %965 = vmatpush1.bf16.xpose.msra.mxu0 0
      %966 = vmatprep.subr.bf16.mxu0 0
      %967 = vmatpush1.bf16.xpose.msra.mxu0 0
      %968 = vmatprep.subr.bf16.mxu0 0
      %969 = vmatpush1.bf16.xpose.msra.mxu0 0
      %970 = vmatprep.subr.bf16.mxu0 0
      %971 = vmatpush1.bf16.xpose.msra.mxu0 0
      %972 = vmatprep.subr.bf16.mxu0 0
      %973 = vmatpush1.bf16.xpose.msra.mxu0 0
      %974 = vmatprep.subr.bf16.mxu0 0
      %975 = vmatpush1.bf16.xpose.msra.mxu0 0
      %976 = vmatprep.subr.bf16.mxu0 0
      %977 = vmatpush1.bf16.xpose.msra.mxu0 0
      %978 = vmatprep.mubr.bf16.mxu0 0
      %979 = vmatmul.mubr.bf16.gmra.mrb[0].mxu0 %v941
      %v980 = vpop.f32.mrb[0].mxu0
      %v981 = vadd.f32 0.0, %v980
      %v982 = vpop.f32.mrb[0].mxu0
      %v983 = vpop.f32.mrb[0].mxu0
      %v984 = vadd.f32 0.0, %v983
      %v985 = vpop.f32.mrb[0].mxu0
      %986 = vdwg.mxu0
      %v987 = vsel %vm861, %v981, -inf
      %988 = vmax.xlane.f32.xlu0 %v987
      %v989 = vpop.xlane.xlu0 %988
      %v990 = vsel %vm861, %v984, -inf
      %991 = vmax.xlane.f32.xlu0 %v990
      %v992 = vpop.xlane.xlu0 %991
      %v993 = vsub.f32 %v981, %v989
      %v994 = vsub.f32 %v984, %v992
      %v995 = vmul.f32 %v993, 1.442695
      %v996 = vpow.pop %v995
      %v997 = vmul.f32 %v994, 1.442695
      %v998 = vpow.pop %v997
      %v999 = vsel %vm861, %v996, 0.0
      %1000 = vadd.xlane.f32.xlu0 %v999
      %v1001 = vpop.xlane.xlu0 %1000
      %v1002 = vsel %vm861, %v998, 0.0
      %1003 = vadd.xlane.f32.xlu0 %v1002
      %v1004 = vpop.xlane.xlu0 %1003
      %v1005 = vrcp.pop %v1001
      %v1006 = vrcp.pop %v1004
      %v1007 = vpack.c.bf16 %v998, %v996
      %1009 = vrot.lane.b32.xlu0 %v812, 96
      %v1010 = vpop.permute.xlu0 %1009
      %v1012 = vsel %vm861, %v1007, 0
      %v1015 = vsel %vm886, %v1010, 0
      %1017 = vmatprep.subr.bf16.mxu0 0
      %1018 = vmatpush1.bf16.msra.mxu0 %v1015
      %1019 = vmatprep.subr.bf16.mxu0 0
      %1020 = vmatpush1.bf16.msra.mxu0 0
      %1021 = vmatprep.subr.bf16.mxu0 0
      %1022 = vmatpush1.bf16.msra.mxu0 0
      %1023 = vmatprep.subr.bf16.mxu0 0
      %1024 = vmatpush1.bf16.msra.mxu0 0
      %1025 = vmatprep.subr.bf16.mxu0 0
      %1026 = vmatpush1.bf16.msra.mxu0 0
      %1027 = vmatprep.subr.bf16.mxu0 0
      %1028 = vmatpush1.bf16.msra.mxu0 0
      %1029 = vmatprep.subr.bf16.mxu0 0
      %1030 = vmatpush1.bf16.msra.mxu0 0
      %1031 = vmatprep.subr.bf16.mxu0 0
      %1032 = vmatpush1.bf16.msra.mxu0 0
      %1033 = vmatprep.subr.bf16.mxu0 0
      %1034 = vmatpush1.bf16.msra.mxu0 0
      %1035 = vmatprep.subr.bf16.mxu0 0
      %1036 = vmatpush1.bf16.msra.mxu0 0
      %1037 = vmatprep.subr.bf16.mxu0 0
      %1038 = vmatpush1.bf16.msra.mxu0 0
      %1039 = vmatprep.subr.bf16.mxu0 0
      %1040 = vmatpush1.bf16.msra.mxu0 0
      %1041 = vmatprep.subr.bf16.mxu0 0
      %1042 = vmatpush1.bf16.msra.mxu0 0
      %1043 = vmatprep.subr.bf16.mxu0 0
      %1044 = vmatpush1.bf16.msra.mxu0 0
      %1045 = vmatprep.subr.bf16.mxu0 0
      %1046 = vmatpush1.bf16.msra.mxu0 0
      %1047 = vmatprep.subr.bf16.mxu0 0
      %1048 = vmatpush1.bf16.msra.mxu0 0
      %1049 = vmatprep.mubr.bf16.mxu0 0
      %1050 = vmatmul.mubr.bf16.gmra.mrb[0].mxu0 %v1012
      %v1051 = vpop.f32.mrb[0].mxu0
      %v1052 = vadd.f32 0.0, %v1051
      %v1053 = vpop.f32.mrb[0].mxu0
      %v1054 = vpop.f32.mrb[0].mxu0
      %v1055 = vadd.f32 0.0, %v1054
      %v1056 = vpop.f32.mrb[0].mxu0
      %1057 = vdwg.mxu0
      %v1058 = vmul.f32 %v1052, %v1005
      %v1059 = vmul.f32 %v1055, %v1006
      %v1060 = vpack.c.bf16 %v1059, %v1058
      %1061 = vrot.lane.b32.xlu0 %v588, 64
      %v1062 = vpop.permute.xlu0 %1061
      %1063 = vrot.lane.b32.xlu0 %v700, 64
      %v1064 = vpop.permute.xlu0 %1063
      %v1066 = vsel %vm813, %v1062, 0
      %v1069 = vsel %vm813, %v1064, 0
      %1071 = vmatprep.subr.bf16.mxu0 0
      %1072 = vmatpush1.bf16.xpose.msra.mxu0 %v1069
      %1073 = vmatprep.subr.bf16.mxu0 0
      %1074 = vmatpush1.bf16.xpose.msra.mxu0 0
      %1075 = vmatprep.subr.bf16.mxu0 0
      %1076 = vmatpush1.bf16.xpose.msra.mxu0 0
      %1077 = vmatprep.subr.bf16.mxu0 0
      %1078 = vmatpush1.bf16.xpose.msra.mxu0 0
      %1079 = vmatprep.subr.bf16.mxu0 0
      %1080 = vmatpush1.bf16.xpose.msra.mxu0 0
      %1081 = vmatprep.subr.bf16.mxu0 0
      %1082 = vmatpush1.bf16.xpose.msra.mxu0 0
      %1083 = vmatprep.subr.bf16.mxu0 0
      %1084 = vmatpush1.bf16.xpose.msra.mxu0 0
      %1085 = vmatprep.subr.bf16.mxu0 0
      %1086 = vmatpush1.bf16.xpose.msra.mxu0 0
      %1087 = vmatprep.subr.bf16.mxu0 0
      %1088 = vmatpush1.bf16.xpose.msra.mxu0 0
      %1089 = vmatprep.subr.bf16.mxu0 0
      %1090 = vmatpush1.bf16.xpose.msra.mxu0 0
      %1091 = vmatprep.subr.bf16.mxu0 0
      %1092 = vmatpush1.bf16.xpose.msra.mxu0 0
      %1093 = vmatprep.subr.bf16.mxu0 0
      %1094 = vmatpush1.bf16.xpose.msra.mxu0 0
      %1095 = vmatprep.subr.bf16.mxu0 0
      %1096 = vmatpush1.bf16.xpose.msra.mxu0 0
      %1097 = vmatprep.subr.bf16.mxu0 0
      %1098 = vmatpush1.bf16.xpose.msra.mxu0 0
      %1099 = vmatprep.subr.bf16.mxu0 0
      %1100 = vmatpush1.bf16.xpose.msra.mxu0 0
      %1101 = vmatprep.subr.bf16.mxu0 0
      %1102 = vmatpush1.bf16.xpose.msra.mxu0 0
      %1103 = vmatprep.mubr.bf16.mxu0 0
      %1104 = vmatmul.mubr.bf16.gmra.mrb[0].mxu0 %v1066
      %v1105 = vpop.f32.mrb[0].mxu0
      %v1106 = vadd.f32 0.0, %v1105
      %v1107 = vpop.f32.mrb[0].mxu0
      %v1108 = vpop.f32.mrb[0].mxu0
      %v1109 = vadd.f32 0.0, %v1108
      %v1110 = vpop.f32.mrb[0].mxu0
      %1111 = vdwg.mxu0
      %v1112 = vsel %vm861, %v1106, -inf
      %1113 = vmax.xlane.f32.xlu0 %v1112
      %v1114 = vpop.xlane.xlu0 %1113
      %v1115 = vsel %vm861, %v1109, -inf
      %1116 = vmax.xlane.f32.xlu0 %v1115
      %v1117 = vpop.xlane.xlu0 %1116
      %v1118 = vsub.f32 %v1106, %v1114
      %v1119 = vsub.f32 %v1109, %v1117
      %v1120 = vmul.f32 %v1118, 1.442695
      %v1121 = vpow.pop %v1120
      %v1122 = vmul.f32 %v1119, 1.442695
      %v1123 = vpow.pop %v1122
      %v1124 = vsel %vm861, %v1121, 0.0
      %1125 = vadd.xlane.f32.xlu0 %v1124
      %v1126 = vpop.xlane.xlu0 %1125
      %v1127 = vsel %vm861, %v1123, 0.0
      %1128 = vadd.xlane.f32.xlu0 %v1127
      %v1129 = vpop.xlane.xlu0 %1128
      %v1130 = vrcp.pop %v1126
      %v1131 = vrcp.pop %v1129
      %v1132 = vpack.c.bf16 %v1123, %v1121
      %1133 = vrot.lane.b32.xlu0 %v812, 64
      %v1134 = vpop.permute.xlu0 %1133
      %v1136 = vsel %vm861, %v1132, 0
      %v1139 = vsel %vm886, %v1134, 0
      %1141 = vmatprep.subr.bf16.mxu0 0
      %1142 = vmatpush1.bf16.msra.mxu0 %v1139
      %1143 = vmatprep.subr.bf16.mxu0 0
      %1144 = vmatpush1.bf16.msra.mxu0 0
      %1145 = vmatprep.subr.bf16.mxu0 0
      %1146 = vmatpush1.bf16.msra.mxu0 0
      %1147 = vmatprep.subr.bf16.mxu0 0
      %1148 = vmatpush1.bf16.msra.mxu0 0
      %1149 = vmatprep.subr.bf16.mxu0 0
      %1150 = vmatpush1.bf16.msra.mxu0 0
      %1151 = vmatprep.subr.bf16.mxu0 0
      %1152 = vmatpush1.bf16.msra.mxu0 0
      %1153 = vmatprep.subr.bf16.mxu0 0
      %1154 = vmatpush1.bf16.msra.mxu0 0
      %1155 = vmatprep.subr.bf16.mxu0 0
      %1156 = vmatpush1.bf16.msra.mxu0 0
      %1157 = vmatprep.subr.bf16.mxu0 0
      %1158 = vmatpush1.bf16.msra.mxu0 0
      %1159 = vmatprep.subr.bf16.mxu0 0
      %1160 = vmatpush1.bf16.msra.mxu0 0
      %1161 = vmatprep.subr.bf16.mxu0 0
      %1162 = vmatpush1.bf16.msra.mxu0 0
      %1163 = vmatprep.subr.bf16.mxu0 0
      %1164 = vmatpush1.bf16.msra.mxu0 0
      %1165 = vmatprep.subr.bf16.mxu0 0
      %1166 = vmatpush1.bf16.msra.mxu0 0
      %1167 = vmatprep.subr.bf16.mxu0 0
      %1168 = vmatpush1.bf16.msra.mxu0 0
      %1169 = vmatprep.subr.bf16.mxu0 0
      %1170 = vmatpush1.bf16.msra.mxu0 0
      %1171 = vmatprep.subr.bf16.mxu0 0
      %1172 = vmatpush1.bf16.msra.mxu0 0
      %1173 = vmatprep.mubr.bf16.mxu0 0
      %1174 = vmatmul.mubr.bf16.gmra.mrb[0].mxu0 %v1136
      %v1175 = vpop.f32.mrb[0].mxu0
      %v1176 = vadd.f32 0.0, %v1175
      %v1177 = vpop.f32.mrb[0].mxu0
      %v1178 = vpop.f32.mrb[0].mxu0
      %v1179 = vadd.f32 0.0, %v1178
      %v1180 = vpop.f32.mrb[0].mxu0
      %1181 = vdwg.mxu0
      %v1182 = vmul.f32 %v1176, %v1130
      %v1183 = vmul.f32 %v1179, %v1131
      %v1184 = vpack.c.bf16 %v1183, %v1182
      %1185 = vrot.lane.b32.xlu0 %v588, 32
      %v1186 = vpop.permute.xlu0 %1185
      %1187 = vrot.lane.b32.xlu0 %v700, 32
      %v1188 = vpop.permute.xlu0 %1187
      %v1190 = vsel %vm813, %v1186, 0
      %v1193 = vsel %vm813, %v1188, 0
      %1195 = vmatprep.subr.bf16.mxu0 0
      %1196 = vmatpush1.bf16.xpose.msra.mxu0 %v1193
      %1197 = vmatprep.subr.bf16.mxu0 0
      %1198 = vmatpush1.bf16.xpose.msra.mxu0 0
      %1199 = vmatprep.subr.bf16.mxu0 0
      %1200 = vmatpush1.bf16.xpose.msra.mxu0 0
      %1201 = vmatprep.subr.bf16.mxu0 0
      %1202 = vmatpush1.bf16.xpose.msra.mxu0 0
      %1203 = vmatprep.subr.bf16.mxu0 0
      %1204 = vmatpush1.bf16.xpose.msra.mxu0 0
      %1205 = vmatprep.subr.bf16.mxu0 0
      %1206 = vmatpush1.bf16.xpose.msra.mxu0 0
      %1207 = vmatprep.subr.bf16.mxu0 0
      %1208 = vmatpush1.bf16.xpose.msra.mxu0 0
      %1209 = vmatprep.subr.bf16.mxu0 0
      %1210 = vmatpush1.bf16.xpose.msra.mxu0 0
      %1211 = vmatprep.subr.bf16.mxu0 0
      %1212 = vmatpush1.bf16.xpose.msra.mxu0 0
      %1213 = vmatprep.subr.bf16.mxu0 0
      %1214 = vmatpush1.bf16.xpose.msra.mxu0 0
      %1215 = vmatprep.subr.bf16.mxu0 0
      %1216 = vmatpush1.bf16.xpose.msra.mxu0 0
      %1217 = vmatprep.subr.bf16.mxu0 0
      %1218 = vmatpush1.bf16.xpose.msra.mxu0 0
      %1219 = vmatprep.subr.bf16.mxu0 0
      %1220 = vmatpush1.bf16.xpose.msra.mxu0 0
      %1221 = vmatprep.subr.bf16.mxu0 0
      %1222 = vmatpush1.bf16.xpose.msra.mxu0 0
      %1223 = vmatprep.subr.bf16.mxu0 0
      %1224 = vmatpush1.bf16.xpose.msra.mxu0 0
      %1225 = vmatprep.subr.bf16.mxu0 0
      %1226 = vmatpush1.bf16.xpose.msra.mxu0 0
      %1227 = vmatprep.mubr.bf16.mxu0 0
      %1228 = vmatmul.mubr.bf16.gmra.mrb[0].mxu0 %v1190
      %v1229 = vpop.f32.mrb[0].mxu0
      %v1230 = vadd.f32 0.0, %v1229
      %v1231 = vpop.f32.mrb[0].mxu0
      %v1232 = vpop.f32.mrb[0].mxu0
      %v1233 = vadd.f32 0.0, %v1232
      %v1234 = vpop.f32.mrb[0].mxu0
      %1235 = vdwg.mxu0
      %v1236 = vsel %vm861, %v1230, -inf
      %1237 = vmax.xlane.f32.xlu0 %v1236
      %v1238 = vpop.xlane.xlu0 %1237
      %v1239 = vsel %vm861, %v1233, -inf
      %1240 = vmax.xlane.f32.xlu0 %v1239
      %v1241 = vpop.xlane.xlu0 %1240
      %v1242 = vsub.f32 %v1230, %v1238
      %v1243 = vsub.f32 %v1233, %v1241
      %v1244 = vmul.f32 %v1242, 1.442695
      %v1245 = vpow.pop %v1244
      %v1246 = vmul.f32 %v1243, 1.442695
      %v1247 = vpow.pop %v1246
      %v1248 = vsel %vm861, %v1245, 0.0
      %1249 = vadd.xlane.f32.xlu0 %v1248
      %v1250 = vpop.xlane.xlu0 %1249
      %v1251 = vsel %vm861, %v1247, 0.0
      %1252 = vadd.xlane.f32.xlu0 %v1251
      %v1253 = vpop.xlane.xlu0 %1252
      %v1254 = vrcp.pop %v1250
      %v1255 = vrcp.pop %v1253
      %v1256 = vpack.c.bf16 %v1247, %v1245
      %1257 = vrot.lane.b32.xlu0 %v812, 32
      %v1258 = vpop.permute.xlu0 %1257
      %v1260 = vsel %vm861, %v1256, 0
      %v1263 = vsel %vm886, %v1258, 0
      %1265 = vmatprep.subr.bf16.mxu0 0
      %1266 = vmatpush1.bf16.msra.mxu0 %v1263
      %1267 = vmatprep.subr.bf16.mxu0 0
      %1268 = vmatpush1.bf16.msra.mxu0 0
      %1269 = vmatprep.subr.bf16.mxu0 0
      %1270 = vmatpush1.bf16.msra.mxu0 0
      %1271 = vmatprep.subr.bf16.mxu0 0
      %1272 = vmatpush1.bf16.msra.mxu0 0
      %1273 = vmatprep.subr.bf16.mxu0 0
      %1274 = vmatpush1.bf16.msra.mxu0 0
      %1275 = vmatprep.subr.bf16.mxu0 0
      %1276 = vmatpush1.bf16.msra.mxu0 0
      %1277 = vmatprep.subr.bf16.mxu0 0
      %1278 = vmatpush1.bf16.msra.mxu0 0
      %1279 = vmatprep.subr.bf16.mxu0 0
      %1280 = vmatpush1.bf16.msra.mxu0 0
      %1281 = vmatprep.subr.bf16.mxu0 0
      %1282 = vmatpush1.bf16.msra.mxu0 0
      %1283 = vmatprep.subr.bf16.mxu0 0
      %1284 = vmatpush1.bf16.msra.mxu0 0
      %1285 = vmatprep.subr.bf16.mxu0 0
      %1286 = vmatpush1.bf16.msra.mxu0 0
      %1287 = vmatprep.subr.bf16.mxu0 0
      %1288 = vmatpush1.bf16.msra.mxu0 0
      %1289 = vmatprep.subr.bf16.mxu0 0
      %1290 = vmatpush1.bf16.msra.mxu0 0
      %1291 = vmatprep.subr.bf16.mxu0 0
      %1292 = vmatpush1.bf16.msra.mxu0 0
      %1293 = vmatprep.subr.bf16.mxu0 0
      %1294 = vmatpush1.bf16.msra.mxu0 0
      %1295 = vmatprep.subr.bf16.mxu0 0
      %1296 = vmatpush1.bf16.msra.mxu0 0
      %1297 = vmatprep.mubr.bf16.mxu0 0
      %1298 = vmatmul.mubr.bf16.gmra.mrb[0].mxu0 %v1260
      %v1299 = vpop.f32.mrb[0].mxu0
      %v1300 = vadd.f32 0.0, %v1299
      %v1301 = vpop.f32.mrb[0].mxu0
      %v1302 = vpop.f32.mrb[0].mxu0
      %v1303 = vadd.f32 0.0, %v1302
      %v1304 = vpop.f32.mrb[0].mxu0
      %1305 = vdwg.mxu0
      %v1306 = vmul.f32 %v1300, %v1254
      %v1307 = vmul.f32 %v1303, %v1255
      %v1308 = vpack.c.bf16 %v1307, %v1306
      %1310 = vrot.lane.b32.xlu0 %v1060, 32
      %v1311 = vpop.permute.xlu0 %1310
      %1313 = vrot.lane.b32.xlu0 %v1184, 64
      %v1314 = vpop.permute.xlu0 %1313
      %1316 = vrot.lane.b32.xlu0 %v1308, 96
      %v1317 = vpop.permute.xlu0 %1316
      %v1320 = vsel %vm813, %v933, %v1311
      %vm1321 = vcmask 523264
      %v1323 = vsel %vm1321, %v1320, %v1314
      %vm1324 = vcmask 785408
      %v1326 = vsel %vm1324, %v1323, %v1317
      %v1328 = vld [vmem:[%s8] sm:$0xf]
      %v1329 = vld [vmem:[%s8 + $0x4] sm:$0xf]
      %v1330 = vld [vmem:[%s8 + $0x8] sm:$0xf]
      %v1331 = vld [vmem:[%s8 + $0xc] sm:$0xf]
      %v1332 = vld [vmem:[%s8 + $0x10] sm:$0xf]
      %v1333 = vld [vmem:[%s8 + $0x14] sm:$0xf]
      %v1334 = vld [vmem:[%s8 + $0x18] sm:$0xf]
      %v1335 = vld [vmem:[%s8 + $0x1c] sm:$0xf]
      %v1336 = vld [vmem:[%s8 + $0x20] sm:$0xf]
      %v1337 = vld [vmem:[%s8 + $0x24] sm:$0xf]
      %v1338 = vld [vmem:[%s8 + $0x28] sm:$0xf]
      %v1339 = vld [vmem:[%s8 + $0x2c] sm:$0xf]
      %v1340 = vld [vmem:[%s8 + $0x30] sm:$0xf]
      %v1341 = vld [vmem:[%s8 + $0x34] sm:$0xf]
      %v1342 = vld [vmem:[%s8 + $0x38] sm:$0xf]
      %v1343 = vld [vmem:[%s8 + $0x3c] sm:$0xf]
      %v1344 = vld [vmem:[%s9] sm:$0x1]
      %v1346 = vlaneseq
      %v1347 = vshrl.u32 %v1346, 7
      %v1348 = vsub.s32 0, %v1347
      %v1349 = vrot.slane %v1344, %v1348
      %v1367 = vunpack.c.l.b16 %v1328
      %v1368 = vunpack.c.l.b16 %v1329
      %v1369 = vunpack.c.l.b16 %v1330
      %v1370 = vunpack.c.l.b16 %v1331
      %v1371 = vunpack.c.l.b16 %v1332
      %v1372 = vunpack.c.l.b16 %v1333
      %v1373 = vunpack.c.l.b16 %v1334
      %v1374 = vunpack.c.l.b16 %v1335
      %v1375 = vunpack.c.l.b16 %v1336
      %v1376 = vunpack.c.l.b16 %v1337
      %v1377 = vunpack.c.l.b16 %v1338
      %v1378 = vunpack.c.l.b16 %v1339
      %v1379 = vunpack.c.l.b16 %v1340
      %v1380 = vunpack.c.l.b16 %v1341
      %v1381 = vunpack.c.l.b16 %v1342
      %v1382 = vunpack.c.l.b16 %v1343
      %v1383 = vpack.c.b16 %v1368, %v1367
      %v1384 = vpack.c.b16 %v1370, %v1369
      %v1385 = vpack.c.b16 %v1372, %v1371
      %v1386 = vpack.c.b16 %v1374, %v1373
      %v1387 = vpack.c.b16 %v1376, %v1375
      %v1388 = vpack.c.b16 %v1378, %v1377
      %v1389 = vpack.c.b16 %v1380, %v1379
      %v1390 = vpack.c.b16 %v1382, %v1381
      %1399 = vmatprep.subr.bf16.mxu0 0
      %1400 = vmatpush1.bf16.msra.mxu0 %v1383
      %1401 = vmatprep.subr.bf16.mxu0 0
      %1402 = vmatpush1.bf16.msra.mxu0 %v1384
      %1403 = vmatprep.subr.bf16.mxu0 0
      %1404 = vmatpush1.bf16.msra.mxu0 %v1385
      %1405 = vmatprep.subr.bf16.mxu0 0
      %1406 = vmatpush1.bf16.msra.mxu0 %v1386
      %1407 = vmatprep.subr.bf16.mxu0 0
      %1408 = vmatpush1.bf16.msra.mxu0 %v1387
      %1409 = vmatprep.subr.bf16.mxu0 0
      %1410 = vmatpush1.bf16.msra.mxu0 %v1388
      %1411 = vmatprep.subr.bf16.mxu0 0
      %1412 = vmatpush1.bf16.msra.mxu0 %v1389
      %1413 = vmatprep.subr.bf16.mxu0 0
      %1414 = vmatpush1.bf16.msra.mxu0 %v1390
      %1415 = vmatprep.subr.bf16.mxu0 0
      %1416 = vmatpush1.bf16.msra.mxu0 0
      %1417 = vmatprep.subr.bf16.mxu0 0
      %1418 = vmatpush1.bf16.msra.mxu0 0
      %1419 = vmatprep.subr.bf16.mxu0 0
      %1420 = vmatpush1.bf16.msra.mxu0 0
      %1421 = vmatprep.subr.bf16.mxu0 0
      %1422 = vmatpush1.bf16.msra.mxu0 0
      %1423 = vmatprep.subr.bf16.mxu0 0
      %1424 = vmatpush1.bf16.msra.mxu0 0
      %1425 = vmatprep.subr.bf16.mxu0 0
      %1426 = vmatpush1.bf16.msra.mxu0 0
      %1427 = vmatprep.subr.bf16.mxu0 0
      %1428 = vmatpush1.bf16.msra.mxu0 0
      %1429 = vmatprep.subr.bf16.mxu0 0
      %1430 = vmatpush1.bf16.msra.mxu0 0
      %1431 = vmatprep.mubr.bf16.mxu0 0
      %1432 = vmatmul.mubr.bf16.gmra.mrb[0].mxu0 %v1326
      %v1433 = vpop.f32.mrb[0].mxu0
      %v1434 = vadd.f32 %v1349, %v1433
      %v1435 = vpop.f32.mrb[0].mxu0
      %v1436 = vpop.f32.mrb[0].mxu0
      %v1437 = vadd.f32 %v1349, %v1436
      %v1438 = vpop.f32.mrb[0].mxu0
      %1439 = vdwg.mxu0
      %v1440 = vadd.f32 %v1434, %v471
      %v1441 = vadd.f32 %v1437, %v472
      %v1442 = vld [vmem:[%s10] sm:$0x1]
      %v1443 = vld [vmem:[%s11] sm:$0x1]
      %1444 = vadd.xlane.f32.xlu0 %v1440
      %v1445 = vpop.xlane.xlu0 %1444
      %1446 = vadd.xlane.f32.xlu0 %v1441
      %v1447 = vpop.xlane.xlu0 %1446
      %v1448 = vrcp.pop 128.0
      %v1449 = vmul.f32 %v1445, %v1448
      %v1450 = vmul.f32 %v1447, %v1448
      %v1451 = vsub.f32 %v1440, %v1449
      %v1452 = vsub.f32 %v1441, %v1450
      %v1453 = vmul.f32 %v1451, %v1451
      %v1454 = vmul.f32 %v1452, %v1452
      %1455 = vadd.xlane.f32.xlu0 %v1453
      %v1456 = vpop.xlane.xlu0 %1455
      %1457 = vadd.xlane.f32.xlu0 %v1454
      %v1458 = vpop.xlane.xlu0 %1457
      %v1459 = vmul.f32 %v1456, %v1448
      %v1460 = vmul.f32 %v1458, %v1448
      %v1461 = vadd.f32 %v1459, 1e-05
      %v1462 = vadd.f32 %v1460, 1e-05
      %v1463 = vrsqrt.pop %v1461
      %v1464 = vrsqrt.pop %v1462
      %v1465 = vmul.f32 %v1451, %v1463
      %v1466 = vmul.f32 %v1452, %v1464
      %v1468 = vlaneseq
      %v1469 = vshrl.u32 %v1468, 7
      %v1470 = vsub.s32 0, %v1469
      %v1471 = vrot.slane %v1442, %v1470
      %v1473 = vmul.f32 %v1465, %v1471
      %v1474 = vmul.f32 %v1466, %v1471
      %v1476 = vlaneseq
      %v1477 = vshrl.u32 %v1476, 7
      %v1478 = vsub.s32 0, %v1477
      %v1479 = vrot.slane %v1443, %v1478
      %v1481 = vadd.f32 %v1473, %v1479
      %v1482 = vadd.f32 %v1474, %v1479
      %1483 = vst [vmem:[%s468] sm:$0xff] %v1481
      %1484 = vst [vmem:[%s468 + $0x8] sm:$0xff] %v1482
      %s1485 = smul.u32 2, %s28
      %p1486 = scmp.lt.s32.totalorder %s27, 1
      %s1487 = scalar_select %p1486, %s27, 1
      %p1488 = scmp.lt.s32.totalorder %s1485, 1
      %s1489 = scalar_select %p1488, %s1485, 1
      %s1490 = smul.addr %s1487, 2
      %s1491 = sadd.s32 %s1489, %s1490
      %s1492 = smul.addr %s1491, 8
      %s1493 = scalar_lea.vmem %s12, %s1492
      // Predicated region
      $region69: #{post_patt_encode.13} parent=67 // pred_check
        %p1494 = pneg %p319
      $region70: #{post_patt_encode.13} parent=67 // pred_check_branch
        %1496 = sbr.rel (%p1494) target = $region72
      $region71: #{post_patt_encode.13} parent=67 // pred_region
        %s1497 = smul.u32 2, %s28
      $region72: #{post_patt_encode.13} parent=67 // pred_fallthru
        _
    $region68: #{post_patt_encode.13} parent=5 // pred_fallthru
      _
    %p1498 = scmp.le.s32.totalorder 2, %s18
    // Predicated region
    $region73: #{post_patt_encode.13} parent=5 // pred_check
      %p1499 = pneg %p1498
    $region74: #{post_patt_encode.13} parent=5 // pred_check_branch
      %1501 = sbr.rel (%p1499) target = $region76
    $region75: #{post_patt_encode.13} parent=5 // pred_region
      %s1502 = ssub.s32 %s18, 2
      // Predicated region
      $region77: #{post_patt_encode.13} parent=75 // pred_check
        %p1503 = pneg %p325
      $region78: #{post_patt_encode.13} parent=75 // pred_check_branch
        %1505 = sbr.rel (%p1503) target = $region80
      $region79: #{post_patt_encode.13} parent=75 // pred_region
        %s1506 = smul.u32 2, %s30
        %p1507 = scmp.lt.s32.totalorder %s29, 1
        %s1508 = scalar_select %p1507, %s29, 1
        %p1509 = scmp.lt.s32.totalorder %s1506, 1
        %s1510 = scalar_select %p1509, %s1506, 1
        %s1511 = smul.addr %s1508, 2
        %s1512 = sadd.s32 %s1510, %s1511
        %s1513 = smul.addr %s1512, 8
        %s1514 = scalar_lea.vmem %s12, %s1513
      $region80: #{post_patt_encode.13} parent=75 // pred_fallthru
        _
    $region76: #{post_patt_encode.13} parent=5 // pred_fallthru
      _
  $region6: #{post_patt_encode.13} parent=0 // loop_footer
    %s22 = sadd.s32 1, %s18
  $region7: #{post_patt_encode.13} parent=0 // loop_footer_branch
    %17 = sbr.rel target = $region3
  $region8: #{post_patt_encode.13} parent=0 // loop_exit
    _

// kernel: post_patt_encode.14
$region0: #{post_patt_encode.14}
  #allocation0 [shape = 'u32[]', space=smem, size = 0x4, offset = 0x4, fixed_abs, tag = 'smem constant byte address 0x4 - core index']
  #allocation1 [shape = 'u32[144,128]{1,0:T(1,128)}', space=vmem, size = 0x12000, scoped, tag = 'internal scratch']
  %s0 = inlined_call_operand.vmem [shape: f32[2,8,128], index: 0, kind: input, shape index: {}]
  %s1 = inlined_call_operand.vmem [shape: f32[2,16,128], index: 1, kind: input, shape index: {}]
  %s2 = inlined_call_operand.vmem [shape: bf16[128,128], index: 2, kind: input, shape index: {}]
  %s3 = inlined_call_operand.vmem [shape: f32[1,128], index: 3, kind: input, shape index: {}]
  %s4 = inlined_call_operand.vmem [shape: bf16[128,128], index: 4, kind: input, shape index: {}]
  %s5 = inlined_call_operand.vmem [shape: f32[1,128], index: 5, kind: input, shape index: {}]
  %s6 = inlined_call_operand.vmem [shape: bf16[128,128], index: 6, kind: input, shape index: {}]
  %s7 = inlined_call_operand.vmem [shape: f32[1,128], index: 7, kind: input, shape index: {}]
  %s8 = inlined_call_operand.vmem [shape: bf16[128,128], index: 8, kind: input, shape index: {}]
  %s9 = inlined_call_operand.vmem [shape: f32[1,128], index: 9, kind: input, shape index: {}]
  %s10 = inlined_call_operand.vmem [shape: f32[1,128], index: 10, kind: input, shape index: {}]
  %s11 = inlined_call_operand.vmem [shape: f32[1,128], index: 11, kind: input, shape index: {}]
  %s12 = inlined_call_operand.vmem [shape: f32[2,8,128], index: 12, kind: output, shape index: {}]
  %s13 = sld [smem:[#allocation0]]
  $region81: #{post_patt_encode.14} parent=0
    _
  %s15 = ssub.s32 1, %s13
  %s16 = scalar_select 0, %s15, %s13
  loop: start=0, step=1, limit=4
  $region2: #{post_patt_encode.14} parent=0 // loop_pre_header
    _
  $region3: #{post_patt_encode.14} parent=0 // loop_header
    %s18 = sphi 0, %s22
    %p19 = scmp.ge.s32.totalorder %s18, 4
    %s25 = sphi 0, %s37
    %s26 = sphi 0, %s33
    %s27 = sphi 0, %s25
    %s28 = sphi 0, %s26
    %s29 = sphi 0, %s27
    %s30 = sphi 0, %s28
    %s42 = sphi 0, %s44
    %s45 = sphi 0, %s42
    %s46 = sphi 0, %s45
    %s62 = sphi 0, %s46
    %s68 = sphi 0, %s70
    %s71 = sphi 0, %s68
    %s72 = sphi 0, %s71
    %s88 = sphi 0, %s72
    %s92 = sphi 0, %s92
    %s94 = sphi 0, %s92
    %s95 = sphi 0, %s94
    %s109 = sphi 0, %s95
    %s113 = sphi 0, %s113
    %s115 = sphi 0, %s113
    %s116 = sphi 0, %s115
    %s130 = sphi 0, %s116
    %s134 = sphi 0, %s134
    %s136 = sphi 0, %s134
    %s137 = sphi 0, %s136
    %s151 = sphi 0, %s137
    %s155 = sphi 0, %s155
    %s157 = sphi 0, %s155
    %s158 = sphi 0, %s157
    %s172 = sphi 0, %s158
    %s176 = sphi 0, %s176
    %s178 = sphi 0, %s176
    %s179 = sphi 0, %s178
    %s193 = sphi 0, %s179
    %s197 = sphi 0, %s197
    %s199 = sphi 0, %s197
    %s200 = sphi 0, %s199
    %s214 = sphi 0, %s200
    %s218 = sphi 0, %s218
    %s220 = sphi 0, %s218
    %s221 = sphi 0, %s220
    %s235 = sphi 0, %s221
    %s239 = sphi 0, %s239
    %s241 = sphi 0, %s239
    %s242 = sphi 0, %s241
    %s256 = sphi 0, %s242
    %s260 = sphi 0, %s260
    %s262 = sphi 0, %s260
    %s263 = sphi 0, %s262
    %s277 = sphi 0, %s263
    %s281 = sphi 0, %s281
    %s283 = sphi 0, %s281
    %s284 = sphi 0, %s283
    %s298 = sphi 0, %s284
    %s306 = sphi 0, %s308
    %s309 = sphi 0, %s306
    %s310 = sphi 0, %s309
    %s326 = sphi 0, %s310
  $region4: #{post_patt_encode.14} parent=0 // loop_header_branch
    %21 = sbr.rel (%p19) target = $region8
  $region5: #{post_patt_encode.14} parent=0 // loop_body
    %s23 = ssub.s32 %s18, 1
    %s24 = ssub.s32 %s18, 2
    %s31 = sadd.s32 1, %s26
    %p32 = scmp.ge.s32.totalorder %s31, 1
    %s33 = scalar_select %p32, 0, %s31
    %s34 = sadd.s32 1, %s25
    %s35 = scalar_select %p32, %s34, %s25
    %p36 = scmp.ge.s32.totalorder %s35, 2
    %s37 = scalar_select %p36, 0, %s35
    %s38 = ssub.s32 %s25, %s37
    %s39 = ssub.s32 %s26, %s33
    %s40 = sor.u32 %s38, %s39
    %p41 = scmp.eq.s32.totalorder %s40, 0
    %s43 = sadd.s32 %s42, 1
    %s44 = scalar_select %p41, %s42, %s43
    %p47 = pneg %p41
    %p48 = scmp.eq.s32.totalorder %s18, 1
    %p49 = por %p47, %p48
    %p50 = scmp.ne.s32.totalorder %s42, %s45
    %p51 = scmp.eq.s32.totalorder %s18, 0
    %p52 = por %p50, %p51
    %p53 = scmp.ne.s32.totalorder %s42, %s45
    %p54 = scmp.eq.s32.totalorder %s23, 1
    %p55 = por %p53, %p54
    %p56 = scmp.ne.s32.totalorder %s45, %s46
    %p57 = scmp.eq.s32.totalorder %s23, 0
    %p58 = por %p56, %p57
    %p59 = scmp.ne.s32.totalorder %s45, %s46
    %p60 = scmp.eq.s32.totalorder %s24, 1
    %p61 = por %p59, %p60
    %p63 = scmp.ne.s32.totalorder %s46, %s62
    %p64 = scmp.eq.s32.totalorder %s24, 0
    %p65 = por %p63, %p64
    %s66 = ssub.s32 %s25, %s37
    %p67 = scmp.eq.s32.totalorder %s66, 0
    %s69 = sadd.s32 %s68, 1
    %s70 = scalar_select %p67, %s68, %s69
    %p73 = pneg %p67
    %p74 = scmp.eq.s32.totalorder %s18, 1
    %p75 = por %p73, %p74
    %p76 = scmp.ne.s32.totalorder %s68, %s71
    %p77 = scmp.eq.s32.totalorder %s18, 0
    %p78 = por %p76, %p77
    %p79 = scmp.ne.s32.totalorder %s68, %s71
    %p80 = scmp.eq.s32.totalorder %s23, 1
    %p81 = por %p79, %p80
    %p82 = scmp.ne.s32.totalorder %s71, %s72
    %p83 = scmp.eq.s32.totalorder %s23, 0
    %p84 = por %p82, %p83
    %p85 = scmp.ne.s32.totalorder %s71, %s72
    %p86 = scmp.eq.s32.totalorder %s24, 1
    %p87 = por %p85, %p86
    %p89 = scmp.ne.s32.totalorder %s72, %s88
    %p90 = scmp.eq.s32.totalorder %s24, 0
    %p91 = por %p89, %p90
    %s93 = sadd.s32 %s92, 1
    %p96 = scmp.eq.s32.totalorder %s18, 1
    %p97 = scmp.ne.s32.totalorder %s92, %s94
    %p98 = scmp.eq.s32.totalorder %s18, 0
    %p99 = por %p97, %p98
    %p100 = scmp.ne.s32.totalorder %s92, %s94
    %p101 = scmp.eq.s32.totalorder %s23, 1
    %p102 = por %p100, %p101
    %p103 = scmp.ne.s32.totalorder %s94, %s95
    %p104 = scmp.eq.s32.totalorder %s23, 0
    %p105 = por %p103, %p104
    %p106 = scmp.ne.s32.totalorder %s94, %s95
    %p107 = scmp.eq.s32.totalorder %s24, 1
    %p108 = por %p106, %p107
    %p110 = scmp.ne.s32.totalorder %s95, %s109
    %p111 = scmp.eq.s32.totalorder %s24, 0
    %p112 = por %p110, %p111
    %s114 = sadd.s32 %s113, 1
    %p117 = scmp.eq.s32.totalorder %s18, 1
    %p118 = scmp.ne.s32.totalorder %s113, %s115
    %p119 = scmp.eq.s32.totalorder %s18, 0
    %p120 = por %p118, %p119
    %p121 = scmp.ne.s32.totalorder %s113, %s115
    %p122 = scmp.eq.s32.totalorder %s23, 1
    %p123 = por %p121, %p122
    %p124 = scmp.ne.s32.totalorder %s115, %s116
    %p125 = scmp.eq.s32.totalorder %s23, 0
    %p126 = por %p124, %p125
    %p127 = scmp.ne.s32.totalorder %s115, %s116
    %p128 = scmp.eq.s32.totalorder %s24, 1
    %p129 = por %p127, %p128
    %p131 = scmp.ne.s32.totalorder %s116, %s130
    %p132 = scmp.eq.s32.totalorder %s24, 0
    %p133 = por %p131, %p132
    %s135 = sadd.s32 %s134, 1
    %p138 = scmp.eq.s32.totalorder %s18, 1
    %p139 = scmp.ne.s32.totalorder %s134, %s136
    %p140 = scmp.eq.s32.totalorder %s18, 0
    %p141 = por %p139, %p140
    %p142 = scmp.ne.s32.totalorder %s134, %s136
    %p143 = scmp.eq.s32.totalorder %s23, 1
    %p144 = por %p142, %p143
    %p145 = scmp.ne.s32.totalorder %s136, %s137
    %p146 = scmp.eq.s32.totalorder %s23, 0
    %p147 = por %p145, %p146
    %p148 = scmp.ne.s32.totalorder %s136, %s137
    %p149 = scmp.eq.s32.totalorder %s24, 1
    %p150 = por %p148, %p149
    %p152 = scmp.ne.s32.totalorder %s137, %s151
    %p153 = scmp.eq.s32.totalorder %s24, 0
    %p154 = por %p152, %p153
    %s156 = sadd.s32 %s155, 1
    %p159 = scmp.eq.s32.totalorder %s18, 1
    %p160 = scmp.ne.s32.totalorder %s155, %s157
    %p161 = scmp.eq.s32.totalorder %s18, 0
    %p162 = por %p160, %p161
    %p163 = scmp.ne.s32.totalorder %s155, %s157
    %p164 = scmp.eq.s32.totalorder %s23, 1
    %p165 = por %p163, %p164
    %p166 = scmp.ne.s32.totalorder %s157, %s158
    %p167 = scmp.eq.s32.totalorder %s23, 0
    %p168 = por %p166, %p167
    %p169 = scmp.ne.s32.totalorder %s157, %s158
    %p170 = scmp.eq.s32.totalorder %s24, 1
    %p171 = por %p169, %p170
    %p173 = scmp.ne.s32.totalorder %s158, %s172
    %p174 = scmp.eq.s32.totalorder %s24, 0
    %p175 = por %p173, %p174
    %s177 = sadd.s32 %s176, 1
    %p180 = scmp.eq.s32.totalorder %s18, 1
    %p181 = scmp.ne.s32.totalorder %s176, %s178
    %p182 = scmp.eq.s32.totalorder %s18, 0
    %p183 = por %p181, %p182
    %p184 = scmp.ne.s32.totalorder %s176, %s178
    %p185 = scmp.eq.s32.totalorder %s23, 1
    %p186 = por %p184, %p185
    %p187 = scmp.ne.s32.totalorder %s178, %s179
    %p188 = scmp.eq.s32.totalorder %s23, 0
    %p189 = por %p187, %p188
    %p190 = scmp.ne.s32.totalorder %s178, %s179
    %p191 = scmp.eq.s32.totalorder %s24, 1
    %p192 = por %p190, %p191
    %p194 = scmp.ne.s32.totalorder %s179, %s193
    %p195 = scmp.eq.s32.totalorder %s24, 0
    %p196 = por %p194, %p195
    %s198 = sadd.s32 %s197, 1
    %p201 = scmp.eq.s32.totalorder %s18, 1
    %p202 = scmp.ne.s32.totalorder %s197, %s199
    %p203 = scmp.eq.s32.totalorder %s18, 0
    %p204 = por %p202, %p203
    %p205 = scmp.ne.s32.totalorder %s197, %s199
    %p206 = scmp.eq.s32.totalorder %s23, 1
    %p207 = por %p205, %p206
    %p208 = scmp.ne.s32.totalorder %s199, %s200
    %p209 = scmp.eq.s32.totalorder %s23, 0
    %p210 = por %p208, %p209
    %p211 = scmp.ne.s32.totalorder %s199, %s200
    %p212 = scmp.eq.s32.totalorder %s24, 1
    %p213 = por %p211, %p212
    %p215 = scmp.ne.s32.totalorder %s200, %s214
    %p216 = scmp.eq.s32.totalorder %s24, 0
    %p217 = por %p215, %p216
    %s219 = sadd.s32 %s218, 1
    %p222 = scmp.eq.s32.totalorder %s18, 1
    %p223 = scmp.ne.s32.totalorder %s218, %s220
    %p224 = scmp.eq.s32.totalorder %s18, 0
    %p225 = por %p223, %p224
    %p226 = scmp.ne.s32.totalorder %s218, %s220
    %p227 = scmp.eq.s32.totalorder %s23, 1
    %p228 = por %p226, %p227
    %p229 = scmp.ne.s32.totalorder %s220, %s221
    %p230 = scmp.eq.s32.totalorder %s23, 0
    %p231 = por %p229, %p230
    %p232 = scmp.ne.s32.totalorder %s220, %s221
    %p233 = scmp.eq.s32.totalorder %s24, 1
    %p234 = por %p232, %p233
    %p236 = scmp.ne.s32.totalorder %s221, %s235
    %p237 = scmp.eq.s32.totalorder %s24, 0
    %p238 = por %p236, %p237
    %s240 = sadd.s32 %s239, 1
    %p243 = scmp.eq.s32.totalorder %s18, 1
    %p244 = scmp.ne.s32.totalorder %s239, %s241
    %p245 = scmp.eq.s32.totalorder %s18, 0
    %p246 = por %p244, %p245
    %p247 = scmp.ne.s32.totalorder %s239, %s241
    %p248 = scmp.eq.s32.totalorder %s23, 1
    %p249 = por %p247, %p248
    %p250 = scmp.ne.s32.totalorder %s241, %s242
    %p251 = scmp.eq.s32.totalorder %s23, 0
    %p252 = por %p250, %p251
    %p253 = scmp.ne.s32.totalorder %s241, %s242
    %p254 = scmp.eq.s32.totalorder %s24, 1
    %p255 = por %p253, %p254
    %p257 = scmp.ne.s32.totalorder %s242, %s256
    %p258 = scmp.eq.s32.totalorder %s24, 0
    %p259 = por %p257, %p258
    %s261 = sadd.s32 %s260, 1
    %p264 = scmp.eq.s32.totalorder %s18, 1
    %p265 = scmp.ne.s32.totalorder %s260, %s262
    %p266 = scmp.eq.s32.totalorder %s18, 0
    %p267 = por %p265, %p266
    %p268 = scmp.ne.s32.totalorder %s260, %s262
    %p269 = scmp.eq.s32.totalorder %s23, 1
    %p270 = por %p268, %p269
    %p271 = scmp.ne.s32.totalorder %s262, %s263
    %p272 = scmp.eq.s32.totalorder %s23, 0
    %p273 = por %p271, %p272
    %p274 = scmp.ne.s32.totalorder %s262, %s263
    %p275 = scmp.eq.s32.totalorder %s24, 1
    %p276 = por %p274, %p275
    %p278 = scmp.ne.s32.totalorder %s263, %s277
    %p279 = scmp.eq.s32.totalorder %s24, 0
    %p280 = por %p278, %p279
    %s282 = sadd.s32 %s281, 1
    %p285 = scmp.eq.s32.totalorder %s18, 1
    %p286 = scmp.ne.s32.totalorder %s281, %s283
    %p287 = scmp.eq.s32.totalorder %s18, 0
    %p288 = por %p286, %p287
    %p289 = scmp.ne.s32.totalorder %s281, %s283
    %p290 = scmp.eq.s32.totalorder %s23, 1
    %p291 = por %p289, %p290
    %p292 = scmp.ne.s32.totalorder %s283, %s284
    %p293 = scmp.eq.s32.totalorder %s23, 0
    %p294 = por %p292, %p293
    %p295 = scmp.ne.s32.totalorder %s283, %s284
    %p296 = scmp.eq.s32.totalorder %s24, 1
    %p297 = por %p295, %p296
    %p299 = scmp.ne.s32.totalorder %s284, %s298
    %p300 = scmp.eq.s32.totalorder %s24, 0
    %p301 = por %p299, %p300
    %s302 = ssub.s32 %s25, %s37
    %s303 = ssub.s32 %s26, %s33
    %s304 = sor.u32 %s302, %s303
    %p305 = scmp.eq.s32.totalorder %s304, 0
    %s307 = sadd.s32 %s306, 1
    %s308 = scalar_select %p305, %s306, %s307
    %p311 = pneg %p305
    %p312 = scmp.eq.s32.totalorder %s18, 1
    %p313 = por %p311, %p312
    %p314 = scmp.ne.s32.totalorder %s306, %s309
    %p315 = scmp.eq.s32.totalorder %s18, 0
    %p316 = por %p314, %p315
    %p317 = scmp.ne.s32.totalorder %s306, %s309
    %p318 = scmp.eq.s32.totalorder %s23, 1
    %p319 = por %p317, %p318
    %p320 = scmp.ne.s32.totalorder %s309, %s310
    %p321 = scmp.eq.s32.totalorder %s23, 0
    %p322 = por %p320, %p321
    %p323 = scmp.ne.s32.totalorder %s309, %s310
    %p324 = scmp.eq.s32.totalorder %s24, 1
    %p325 = por %p323, %p324
    %p327 = scmp.ne.s32.totalorder %s310, %s326
    %p328 = scmp.eq.s32.totalorder %s24, 0
    %p329 = por %p327, %p328
    %p330 = scmp.le.s32.totalorder 1, %s18
    %p331 = scmp.lt.s32.totalorder %s18, 3
    %p332 = pnand %p330, %p331
    %p333 = pneg %p332
    // Predicated region
    $region9: #{post_patt_encode.14} parent=5 // pred_check
      _
    $region10: #{post_patt_encode.14} parent=5 // pred_check_branch
      %335 = sbr.rel (%p332) target = $region12
    $region11: #{post_patt_encode.14} parent=5 // pred_region
      %s336 = ssub.s32 %s18, 1
      // Predicated region
      $region13: #{post_patt_encode.14} parent=11 // pred_check
        %p337 = pneg %p105
      $region14: #{post_patt_encode.14} parent=11 // pred_check_branch
        %339 = sbr.rel (%p337) target = $region16
      $region15: #{post_patt_encode.14} parent=11 // pred_region
        _
      $region16: #{post_patt_encode.14} parent=11 // pred_fallthru
        _
      // Predicated region
      $region17: #{post_patt_encode.14} parent=11 // pred_check
        %p340 = pneg %p126
      $region18: #{post_patt_encode.14} parent=11 // pred_check_branch
        %342 = sbr.rel (%p340) target = $region20
      $region19: #{post_patt_encode.14} parent=11 // pred_region
        _
      $region20: #{post_patt_encode.14} parent=11 // pred_fallthru
        _
      // Predicated region
      $region21: #{post_patt_encode.14} parent=11 // pred_check
        %p343 = pneg %p147
      $region22: #{post_patt_encode.14} parent=11 // pred_check_branch
        %345 = sbr.rel (%p343) target = $region24
      $region23: #{post_patt_encode.14} parent=11 // pred_region
        _
      $region24: #{post_patt_encode.14} parent=11 // pred_fallthru
        _
      // Predicated region
      $region25: #{post_patt_encode.14} parent=11 // pred_check
        %p346 = pneg %p168
      $region26: #{post_patt_encode.14} parent=11 // pred_check_branch
        %348 = sbr.rel (%p346) target = $region28
      $region27: #{post_patt_encode.14} parent=11 // pred_region
        _
      $region28: #{post_patt_encode.14} parent=11 // pred_fallthru
        _
      // Predicated region
      $region29: #{post_patt_encode.14} parent=11 // pred_check
        %p349 = pneg %p189
      $region30: #{post_patt_encode.14} parent=11 // pred_check_branch
        %351 = sbr.rel (%p349) target = $region32
      $region31: #{post_patt_encode.14} parent=11 // pred_region
        _
      $region32: #{post_patt_encode.14} parent=11 // pred_fallthru
        _
      // Predicated region
      $region33: #{post_patt_encode.14} parent=11 // pred_check
        %p352 = pneg %p210
      $region34: #{post_patt_encode.14} parent=11 // pred_check_branch
        %354 = sbr.rel (%p352) target = $region36
      $region35: #{post_patt_encode.14} parent=11 // pred_region
        _
      $region36: #{post_patt_encode.14} parent=11 // pred_fallthru
        _
      // Predicated region
      $region37: #{post_patt_encode.14} parent=11 // pred_check
        %p355 = pneg %p231
      $region38: #{post_patt_encode.14} parent=11 // pred_check_branch
        %357 = sbr.rel (%p355) target = $region40
      $region39: #{post_patt_encode.14} parent=11 // pred_region
        _
      $region40: #{post_patt_encode.14} parent=11 // pred_fallthru
        _
      // Predicated region
      $region41: #{post_patt_encode.14} parent=11 // pred_check
        %p358 = pneg %p252
      $region42: #{post_patt_encode.14} parent=11 // pred_check_branch
        %360 = sbr.rel (%p358) target = $region44
      $region43: #{post_patt_encode.14} parent=11 // pred_region
        _
      $region44: #{post_patt_encode.14} parent=11 // pred_fallthru
        _
      // Predicated region
      $region45: #{post_patt_encode.14} parent=11 // pred_check
        %p361 = pneg %p273
      $region46: #{post_patt_encode.14} parent=11 // pred_check_branch
        %363 = sbr.rel (%p361) target = $region48
      $region47: #{post_patt_encode.14} parent=11 // pred_region
        _
      $region48: #{post_patt_encode.14} parent=11 // pred_fallthru
        _
      // Predicated region
      $region49: #{post_patt_encode.14} parent=11 // pred_check
        %p364 = pneg %p294
      $region50: #{post_patt_encode.14} parent=11 // pred_check_branch
        %366 = sbr.rel (%p364) target = $region52
      $region51: #{post_patt_encode.14} parent=11 // pred_region
        _
      $region52: #{post_patt_encode.14} parent=11 // pred_fallthru
        _
    $region12: #{post_patt_encode.14} parent=5 // pred_fallthru
      _
    %p367 = scmp.lt.s32.totalorder %s18, 2
    // Predicated region
    $region53: #{post_patt_encode.14} parent=5 // pred_check
      %p368 = pneg %p367
    $region54: #{post_patt_encode.14} parent=5 // pred_check_branch
      %370 = sbr.rel (%p368) target = $region56
    $region55: #{post_patt_encode.14} parent=5 // pred_region
      // Predicated region
      $region57: #{post_patt_encode.14} parent=55 // pred_check
        %p371 = pneg %p52
      $region58: #{post_patt_encode.14} parent=55 // pred_check_branch
        %373 = sbr.rel (%p371) target = $region60
      $region59: #{post_patt_encode.14} parent=55 // pred_region
        %p374 = scmp.lt.s32.totalorder %s25, 1
        %s375 = scalar_select %p374, %s25, 1
        %p376 = scmp.lt.s32.totalorder %s26, 0
        %s377 = scalar_select %p376, %s26, 0
        %s378 = sadd.s32 %s377, %s375
        %s379 = smul.addr %s378, 8
        %s380 = scalar_lea.vmem %s0, %s379
      $region60: #{post_patt_encode.14} parent=55 // pred_fallthru
        _
      // Predicated region
      $region61: #{post_patt_encode.14} parent=55 // pred_check
        %p381 = pneg %p78
      $region62: #{post_patt_encode.14} parent=55 // pred_check_branch
        %383 = sbr.rel (%p381) target = $region64
      $region63: #{post_patt_encode.14} parent=55 // pred_region
        %p384 = scmp.lt.s32.totalorder %s25, 1
        %s385 = scalar_select %p384, %s25, 1
        %s386 = smul.addr %s385, 2
        %s387 = smul.addr %s386, 8
        %s388 = scalar_lea.vmem %s1, %s387
      $region64: #{post_patt_encode.14} parent=55 // pred_fallthru
        _
    $region56: #{post_patt_encode.14} parent=5 // pred_fallthru
      _
    %p389 = scmp.le.s32.totalorder 1, %s18
    %p390 = scmp.lt.s32.totalorder %s18, 3
    %p391 = pnand %p389, %p390
    %p392 = pneg %p391
    // Predicated region
    $region65: #{post_patt_encode.14} parent=5 // pred_check
      _
    $region66: #{post_patt_encode.14} parent=5 // pred_check_branch
      %394 = sbr.rel (%p391) target = $region68
    $region67: #{post_patt_encode.14} parent=5 // pred_region
      %s395 = ssub.s32 %s18, 1
      %p396 = scmp.lt.s32.totalorder %s27, 1
      %s397 = scalar_select %p396, %s27, 1
      %p398 = scmp.lt.s32.totalorder %s28, 0
      %s399 = scalar_select %p398, %s28, 0
      %s400 = sadd.s32 %s399, %s397
      %s401 = smul.addr %s400, 8
      %s402 = scalar_lea.vmem %s0, %s401
      %p403 = pneg %p58
      %p404 = pneg %p55
      %p405 = scmp.lt.s32.totalorder %s27, 1
      %s406 = scalar_select %p405, %s27, 1
      %s407 = smul.addr %s406, 2
      %s408 = smul.addr %s407, 8
      %s409 = scalar_lea.vmem %s1, %s408
      %p410 = pneg %p84
      %p411 = pneg %p81
      %p412 = pneg %p105
      %p413 = pneg %p102
      %p414 = pneg %p126
      %p415 = pneg %p123
      %p416 = pneg %p147
      %p417 = pneg %p144
      %p418 = pneg %p168
      %p419 = pneg %p165
      %p420 = pneg %p189
      %p421 = pneg %p186
      %p422 = pneg %p210
      %p423 = pneg %p207
      %p424 = pneg %p231
      %p425 = pneg %p228
      %p426 = pneg %p252
      %p427 = pneg %p249
      %p428 = pneg %p273
      %p429 = pneg %p270
      %p430 = pneg %p294
      %p431 = pneg %p291
      %p432 = pneg %p322
      %p433 = pneg %p319
      %p434 = scmp.lt.s32.totalorder %s27, 1
      %s435 = scalar_select %p434, %s27, 1
      %p436 = scmp.lt.s32.totalorder %s28, 0
      %s437 = scalar_select %p436, %s28, 0
      %s438 = sadd.s32 %s437, %s435
      %s439 = smul.addr %s438, 8
      %s440 = scalar_lea.vmem %s12, %s439
      %p441 = scmp.lt.s32.totalorder %s27, 1
      %s442 = scalar_select %p441, %s27, 1
      %p443 = scmp.lt.s32.totalorder %s28, 0
      %s444 = scalar_select %p443, %s28, 0
      %s445 = sadd.s32 %s444, %s442
      %s446 = smul.addr %s445, 8
      %s447 = scalar_lea.vmem %s0, %s446
      %p448 = scmp.lt.s32.totalorder %s27, 1
      %s449 = scalar_select %p448, %s27, 1
      %s450 = smul.addr %s449, 2
      %s451 = smul.addr %s450, 8
      %s452 = scalar_lea.vmem %s1, %s451
      %p453 = scmp.lt.s32.totalorder %s27, 1
      %s454 = scalar_select %p453, %s27, 1
      %p455 = scmp.lt.s32.totalorder %s28, 0
      %s456 = scalar_select %p455, %s28, 0
      %s457 = sadd.s32 %s456, %s454
      %s458 = smul.addr %s457, 8
      %s459 = scalar_lea.vmem %s12, %s458
      %v461 = vld [vmem:[%s447] sm:$0xff]
      %v462 = vpack.c.bf16 %v461, %v461
      %v463 = vld [vmem:[%s452] sm:$0xff]
      %v464 = vld [vmem:[%s452 + $0x8] sm:$0xff]
      %v465 = vpack.c.bf16 %v464, %v463
      %v466 = vld [vmem:[%s2] sm:$0xf]
      %v467 = vld [vmem:[%s2 + $0x4] sm:$0xf]
      %v468 = vld [vmem:[%s2 + $0x8] sm:$0xf]
      %v469 = vld [vmem:[%s2 + $0xc] sm:$0xf]
      %v470 = vld [vmem:[%s2 + $0x10] sm:$0xf]
      %v471 = vld [vmem:[%s2 + $0x14] sm:$0xf]
      %v472 = vld [vmem:[%s2 + $0x18] sm:$0xf]
      %v473 = vld [vmem:[%s2 + $0x1c] sm:$0xf]
      %v474 = vld [vmem:[%s2 + $0x20] sm:$0xf]
      %v475 = vld [vmem:[%s2 + $0x24] sm:$0xf]
      %v476 = vld [vmem:[%s2 + $0x28] sm:$0xf]
      %v477 = vld [vmem:[%s2 + $0x2c] sm:$0xf]
      %v478 = vld [vmem:[%s2 + $0x30] sm:$0xf]
      %v479 = vld [vmem:[%s2 + $0x34] sm:$0xf]
      %v480 = vld [vmem:[%s2 + $0x38] sm:$0xf]
      %v481 = vld [vmem:[%s2 + $0x3c] sm:$0xf]
      %v482 = vld [vmem:[%s3] sm:$0x1]
      %v484 = vlaneseq
      %v485 = vshrl.u32 %v484, 7
      %v486 = vsub.s32 0, %v485
      %v487 = vrot.slane %v482, %v486
      %v505 = vunpack.c.l.b16 %v466
      %v506 = vunpack.c.l.b16 %v467
      %v507 = vunpack.c.l.b16 %v468
      %v508 = vunpack.c.l.b16 %v469
      %v509 = vunpack.c.l.b16 %v470
      %v510 = vunpack.c.l.b16 %v471
      %v511 = vunpack.c.l.b16 %v472
      %v512 = vunpack.c.l.b16 %v473
      %v513 = vunpack.c.l.b16 %v474
      %v514 = vunpack.c.l.b16 %v475
      %v515 = vunpack.c.l.b16 %v476
      %v516 = vunpack.c.l.b16 %v477
      %v517 = vunpack.c.l.b16 %v478
      %v518 = vunpack.c.l.b16 %v479
      %v519 = vunpack.c.l.b16 %v480
      %v520 = vunpack.c.l.b16 %v481
      %v521 = vpack.c.b16 %v506, %v505
      %v522 = vpack.c.b16 %v508, %v507
      %v523 = vpack.c.b16 %v510, %v509
      %v524 = vpack.c.b16 %v512, %v511
      %v525 = vpack.c.b16 %v514, %v513
      %v526 = vpack.c.b16 %v516, %v515
      %v527 = vpack.c.b16 %v518, %v517
      %v528 = vpack.c.b16 %v520, %v519
      %537 = vmatprep.subr.bf16.mxu0 0
      %538 = vmatpush1.bf16.msra.mxu0 %v521
      %539 = vmatprep.subr.bf16.mxu0 0
      %540 = vmatpush1.bf16.msra.mxu0 %v522
      %541 = vmatprep.subr.bf16.mxu0 0
      %542 = vmatpush1.bf16.msra.mxu0 %v523
      %543 = vmatprep.subr.bf16.mxu0 0
      %544 = vmatpush1.bf16.msra.mxu0 %v524
      %545 = vmatprep.subr.bf16.mxu0 0
      %546 = vmatpush1.bf16.msra.mxu0 %v525
      %547 = vmatprep.subr.bf16.mxu0 0
      %548 = vmatpush1.bf16.msra.mxu0 %v526
      %549 = vmatprep.subr.bf16.mxu0 0
      %550 = vmatpush1.bf16.msra.mxu0 %v527
      %551 = vmatprep.subr.bf16.mxu0 0
      %552 = vmatpush1.bf16.msra.mxu0 %v528
      %553 = vmatprep.subr.bf16.mxu0 0
      %554 = vmatpush1.bf16.msra.mxu0 0
      %555 = vmatprep.subr.bf16.mxu0 0
      %556 = vmatpush1.bf16.msra.mxu0 0
      %557 = vmatprep.subr.bf16.mxu0 0
      %558 = vmatpush1.bf16.msra.mxu0 0
      %559 = vmatprep.subr.bf16.mxu0 0
      %560 = vmatpush1.bf16.msra.mxu0 0
      %561 = vmatprep.subr.bf16.mxu0 0
      %562 = vmatpush1.bf16.msra.mxu0 0
      %563 = vmatprep.subr.bf16.mxu0 0
      %564 = vmatpush1.bf16.msra.mxu0 0
      %565 = vmatprep.subr.bf16.mxu0 0
      %566 = vmatpush1.bf16.msra.mxu0 0
      %567 = vmatprep.subr.bf16.mxu0 0
      %568 = vmatpush1.bf16.msra.mxu0 0
      %569 = vmatprep.mubr.bf16.mxu0 0
      %570 = vmatmul.mubr.bf16.gmra.mrb[0].mxu0 %v462
      %v571 = vpop.f32.mrb[0].mxu0
      %v572 = vadd.f32 %v487, %v571
      %v573 = vpop.f32.mrb[0].mxu0
      %v574 = vpop.f32.mrb[0].mxu0
      %v575 = vpop.f32.mrb[0].mxu0
      %576 = vdwg.mxu0
      %v577 = vpack.c.bf16 %v572, %v572
      %v578 = vld [vmem:[%s4] sm:$0xf]
      %v579 = vld [vmem:[%s4 + $0x4] sm:$0xf]
      %v580 = vld [vmem:[%s4 + $0x8] sm:$0xf]
      %v581 = vld [vmem:[%s4 + $0xc] sm:$0xf]
      %v582 = vld [vmem:[%s4 + $0x10] sm:$0xf]
      %v583 = vld [vmem:[%s4 + $0x14] sm:$0xf]
      %v584 = vld [vmem:[%s4 + $0x18] sm:$0xf]
      %v585 = vld [vmem:[%s4 + $0x1c] sm:$0xf]
      %v586 = vld [vmem:[%s4 + $0x20] sm:$0xf]
      %v587 = vld [vmem:[%s4 + $0x24] sm:$0xf]
      %v588 = vld [vmem:[%s4 + $0x28] sm:$0xf]
      %v589 = vld [vmem:[%s4 + $0x2c] sm:$0xf]
      %v590 = vld [vmem:[%s4 + $0x30] sm:$0xf]
      %v591 = vld [vmem:[%s4 + $0x34] sm:$0xf]
      %v592 = vld [vmem:[%s4 + $0x38] sm:$0xf]
      %v593 = vld [vmem:[%s4 + $0x3c] sm:$0xf]
      %v594 = vld [vmem:[%s5] sm:$0x1]
      %v596 = vlaneseq
      %v597 = vshrl.u32 %v596, 7
      %v598 = vsub.s32 0, %v597
      %v599 = vrot.slane %v594, %v598
      %v617 = vunpack.c.l.b16 %v578
      %v618 = vunpack.c.l.b16 %v579
      %v619 = vunpack.c.l.b16 %v580
      %v620 = vunpack.c.l.b16 %v581
      %v621 = vunpack.c.l.b16 %v582
      %v622 = vunpack.c.l.b16 %v583
      %v623 = vunpack.c.l.b16 %v584
      %v624 = vunpack.c.l.b16 %v585
      %v625 = vunpack.c.l.b16 %v586
      %v626 = vunpack.c.l.b16 %v587
      %v627 = vunpack.c.l.b16 %v588
      %v628 = vunpack.c.l.b16 %v589
      %v629 = vunpack.c.l.b16 %v590
      %v630 = vunpack.c.l.b16 %v591
      %v631 = vunpack.c.l.b16 %v592
      %v632 = vunpack.c.l.b16 %v593
      %v633 = vpack.c.b16 %v618, %v617
      %v634 = vpack.c.b16 %v620, %v619
      %v635 = vpack.c.b16 %v622, %v621
      %v636 = vpack.c.b16 %v624, %v623
      %v637 = vpack.c.b16 %v626, %v625
      %v638 = vpack.c.b16 %v628, %v627
      %v639 = vpack.c.b16 %v630, %v629
      %v640 = vpack.c.b16 %v632, %v631
      %649 = vmatprep.subr.bf16.mxu0 0
      %650 = vmatpush1.bf16.msra.mxu0 %v633
      %651 = vmatprep.subr.bf16.mxu0 0
      %652 = vmatpush1.bf16.msra.mxu0 %v634
      %653 = vmatprep.subr.bf16.mxu0 0
      %654 = vmatpush1.bf16.msra.mxu0 %v635
      %655 = vmatprep.subr.bf16.mxu0 0
      %656 = vmatpush1.bf16.msra.mxu0 %v636
      %657 = vmatprep.subr.bf16.mxu0 0
      %658 = vmatpush1.bf16.msra.mxu0 %v637
      %659 = vmatprep.subr.bf16.mxu0 0
      %660 = vmatpush1.bf16.msra.mxu0 %v638
      %661 = vmatprep.subr.bf16.mxu0 0
      %662 = vmatpush1.bf16.msra.mxu0 %v639
      %663 = vmatprep.subr.bf16.mxu0 0
      %664 = vmatpush1.bf16.msra.mxu0 %v640
      %665 = vmatprep.subr.bf16.mxu0 0
      %666 = vmatpush1.bf16.msra.mxu0 0
      %667 = vmatprep.subr.bf16.mxu0 0
      %668 = vmatpush1.bf16.msra.mxu0 0
      %669 = vmatprep.subr.bf16.mxu0 0
      %670 = vmatpush1.bf16.msra.mxu0 0
      %671 = vmatprep.subr.bf16.mxu0 0
      %672 = vmatpush1.bf16.msra.mxu0 0
      %673 = vmatprep.subr.bf16.mxu0 0
      %674 = vmatpush1.bf16.msra.mxu0 0
      %675 = vmatprep.subr.bf16.mxu0 0
      %676 = vmatpush1.bf16.msra.mxu0 0
      %677 = vmatprep.subr.bf16.mxu0 0
      %678 = vmatpush1.bf16.msra.mxu0 0
      %679 = vmatprep.subr.bf16.mxu0 0
      %680 = vmatpush1.bf16.msra.mxu0 0
      %681 = vmatprep.mubr.bf16.mxu0 0
      %682 = vmatmul.mubr.bf16.gmra.mrb[0].mxu0 %v465
      %v683 = vpop.f32.mrb[0].mxu0
      %v684 = vadd.f32 %v599, %v683
      %v685 = vpop.f32.mrb[0].mxu0
      %v686 = vpop.f32.mrb[0].mxu0
      %v687 = vadd.f32 %v599, %v686
      %v688 = vpop.f32.mrb[0].mxu0
      %689 = vdwg.mxu0
      %v690 = vpack.c.bf16 %v687, %v684
      %v691 = vld [vmem:[%s6] sm:$0xf]
      %v692 = vld [vmem:[%s6 + $0x4] sm:$0xf]
      %v693 = vld [vmem:[%s6 + $0x8] sm:$0xf]
      %v694 = vld [vmem:[%s6 + $0xc] sm:$0xf]
      %v695 = vld [vmem:[%s6 + $0x10] sm:$0xf]
      %v696 = vld [vmem:[%s6 + $0x14] sm:$0xf]
      %v697 = vld [vmem:[%s6 + $0x18] sm:$0xf]
      %v698 = vld [vmem:[%s6 + $0x1c] sm:$0xf]
      %v699 = vld [vmem:[%s6 + $0x20] sm:$0xf]
      %v700 = vld [vmem:[%s6 + $0x24] sm:$0xf]
      %v701 = vld [vmem:[%s6 + $0x28] sm:$0xf]
      %v702 = vld [vmem:[%s6 + $0x2c] sm:$0xf]
      %v703 = vld [vmem:[%s6 + $0x30] sm:$0xf]
      %v704 = vld [vmem:[%s6 + $0x34] sm:$0xf]
      %v705 = vld [vmem:[%s6 + $0x38] sm:$0xf]
      %v706 = vld [vmem:[%s6 + $0x3c] sm:$0xf]
      %v707 = vld [vmem:[%s7] sm:$0x1]
      %v709 = vlaneseq
      %v710 = vshrl.u32 %v709, 7
      %v711 = vsub.s32 0, %v710
      %v712 = vrot.slane %v707, %v711
      %v730 = vunpack.c.l.b16 %v691
      %v731 = vunpack.c.l.b16 %v692
      %v732 = vunpack.c.l.b16 %v693
      %v733 = vunpack.c.l.b16 %v694
      %v734 = vunpack.c.l.b16 %v695
      %v735 = vunpack.c.l.b16 %v696
      %v736 = vunpack.c.l.b16 %v697
      %v737 = vunpack.c.l.b16 %v698
      %v738 = vunpack.c.l.b16 %v699
      %v739 = vunpack.c.l.b16 %v700
      %v740 = vunpack.c.l.b16 %v701
      %v741 = vunpack.c.l.b16 %v702
      %v742 = vunpack.c.l.b16 %v703
      %v743 = vunpack.c.l.b16 %v704
      %v744 = vunpack.c.l.b16 %v705
      %v745 = vunpack.c.l.b16 %v706
      %v746 = vpack.c.b16 %v731, %v730
      %v747 = vpack.c.b16 %v733, %v732
      %v748 = vpack.c.b16 %v735, %v734
      %v749 = vpack.c.b16 %v737, %v736
      %v750 = vpack.c.b16 %v739, %v738
      %v751 = vpack.c.b16 %v741, %v740
      %v752 = vpack.c.b16 %v743, %v742
      %v753 = vpack.c.b16 %v745, %v744
      %762 = vmatprep.subr.bf16.mxu0 0
      %763 = vmatpush1.bf16.msra.mxu0 %v746
      %764 = vmatprep.subr.bf16.mxu0 0
      %765 = vmatpush1.bf16.msra.mxu0 %v747
      %766 = vmatprep.subr.bf16.mxu0 0
      %767 = vmatpush1.bf16.msra.mxu0 %v748
      %768 = vmatprep.subr.bf16.mxu0 0
      %769 = vmatpush1.bf16.msra.mxu0 %v749
      %770 = vmatprep.subr.bf16.mxu0 0
      %771 = vmatpush1.bf16.msra.mxu0 %v750
      %772 = vmatprep.subr.bf16.mxu0 0
      %773 = vmatpush1.bf16.msra.mxu0 %v751
      %774 = vmatprep.subr.bf16.mxu0 0
      %775 = vmatpush1.bf16.msra.mxu0 %v752
      %776 = vmatprep.subr.bf16.mxu0 0
      %777 = vmatpush1.bf16.msra.mxu0 %v753
      %778 = vmatprep.subr.bf16.mxu0 0
      %779 = vmatpush1.bf16.msra.mxu0 0
      %780 = vmatprep.subr.bf16.mxu0 0
      %781 = vmatpush1.bf16.msra.mxu0 0
      %782 = vmatprep.subr.bf16.mxu0 0
      %783 = vmatpush1.bf16.msra.mxu0 0
      %784 = vmatprep.subr.bf16.mxu0 0
      %785 = vmatpush1.bf16.msra.mxu0 0
      %786 = vmatprep.subr.bf16.mxu0 0
      %787 = vmatpush1.bf16.msra.mxu0 0
      %788 = vmatprep.subr.bf16.mxu0 0
      %789 = vmatpush1.bf16.msra.mxu0 0
      %790 = vmatprep.subr.bf16.mxu0 0
      %791 = vmatpush1.bf16.msra.mxu0 0
      %792 = vmatprep.subr.bf16.mxu0 0
      %793 = vmatpush1.bf16.msra.mxu0 0
      %794 = vmatprep.mubr.bf16.mxu0 0
      %795 = vmatmul.mubr.bf16.gmra.mrb[0].mxu0 %v465
      %v796 = vpop.f32.mrb[0].mxu0
      %v797 = vadd.f32 %v712, %v796
      %v798 = vpop.f32.mrb[0].mxu0
      %v799 = vpop.f32.mrb[0].mxu0
      %v800 = vadd.f32 %v712, %v799
      %v801 = vpop.f32.mrb[0].mxu0
      %802 = vdwg.mxu0
      %v803 = vpack.c.bf16 %v800, %v797
      %vm804 = vcmask 261120
      %v806 = vsel %vm804, %v577, 0
      %v809 = vsel %vm804, %v690, 0
      %811 = vmatprep.subr.bf16.mxu0 0
      %812 = vmatpush1.bf16.xpose.msra.mxu0 %v809
      %813 = vmatprep.subr.bf16.mxu0 0
      %814 = vmatpush1.bf16.xpose.msra.mxu0 0
      %815 = vmatprep.subr.bf16.mxu0 0
      %816 = vmatpush1.bf16.xpose.msra.mxu0 0
      %817 = vmatprep.subr.bf16.mxu0 0
      %818 = vmatpush1.bf16.xpose.msra.mxu0 0
      %819 = vmatprep.subr.bf16.mxu0 0
      %820 = vmatpush1.bf16.xpose.msra.mxu0 0
      %821 = vmatprep.subr.bf16.mxu0 0
      %822 = vmatpush1.bf16.xpose.msra.mxu0 0
      %823 = vmatprep.subr.bf16.mxu0 0
      %824 = vmatpush1.bf16.xpose.msra.mxu0 0
      %825 = vmatprep.subr.bf16.mxu0 0
      %826 = vmatpush1.bf16.xpose.msra.mxu0 0
      %827 = vmatprep.subr.bf16.mxu0 0
      %828 = vmatpush1.bf16.xpose.msra.mxu0 0
      %829 = vmatprep.subr.bf16.mxu0 0
      %830 = vmatpush1.bf16.xpose.msra.mxu0 0
      %831 = vmatprep.subr.bf16.mxu0 0
      %832 = vmatpush1.bf16.xpose.msra.mxu0 0
      %833 = vmatprep.subr.bf16.mxu0 0
      %834 = vmatpush1.bf16.xpose.msra.mxu0 0
      %835 = vmatprep.subr.bf16.mxu0 0
      %836 = vmatpush1.bf16.xpose.msra.mxu0 0
      %837 = vmatprep.subr.bf16.mxu0 0
      %838 = vmatpush1.bf16.xpose.msra.mxu0 0
      %839 = vmatprep.subr.bf16.mxu0 0
      %840 = vmatpush1.bf16.xpose.msra.mxu0 0
      %841 = vmatprep.subr.bf16.mxu0 0
      %842 = vmatpush1.bf16.xpose.msra.mxu0 0
      %843 = vmatprep.mubr.bf16.mxu0 0
      %844 = vmatmul.mubr.bf16.gmra.mrb[0].mxu0 %v806
      %v845 = vpop.f32.mrb[0].mxu0
      %v846 = vadd.f32 0.0, %v845
      %v847 = vpop.f32.mrb[0].mxu0
      %v848 = vpop.f32.mrb[0].mxu0
      %v849 = vpop.f32.mrb[0].mxu0
      %850 = vdwg.mxu0
      %vm851 = vcmask 130048
      %v852 = vsel %vm851, %v846, -inf
      %853 = vmax.xlane.f32.xlu0 %v852
      %v854 = vpop.xlane.xlu0 %853
      %v855 = vsub.f32 %v846, %v854
      %v856 = vmul.f32 %v855, 1.442695
      %v857 = vpow.pop %v856
      %v858 = vsel %vm851, %v857, 0.0
      %859 = vadd.xlane.f32.xlu0 %v858
      %v860 = vpop.xlane.xlu0 %859
      %v861 = vrcp.pop %v860
      %v862 = vpack.c.bf16 %v857, %v857
      %v864 = vsel %vm851, %v862, 0
      %866 = vmatprep.subr.bf16.mxu0 0
      %867 = vmatpush1.bf16.msra.mxu0 %v803
      %868 = vmatprep.subr.bf16.mxu0 0
      %869 = vmatpush1.bf16.msra.mxu0 0
      %870 = vmatprep.subr.bf16.mxu0 0
      %871 = vmatpush1.bf16.msra.mxu0 0
      %872 = vmatprep.subr.bf16.mxu0 0
      %873 = vmatpush1.bf16.msra.mxu0 0
      %874 = vmatprep.subr.bf16.mxu0 0
      %875 = vmatpush1.bf16.msra.mxu0 0
      %876 = vmatprep.subr.bf16.mxu0 0
      %877 = vmatpush1.bf16.msra.mxu0 0
      %878 = vmatprep.subr.bf16.mxu0 0
      %879 = vmatpush1.bf16.msra.mxu0 0
      %880 = vmatprep.subr.bf16.mxu0 0
      %881 = vmatpush1.bf16.msra.mxu0 0
      %882 = vmatprep.subr.bf16.mxu0 0
      %883 = vmatpush1.bf16.msra.mxu0 0
      %884 = vmatprep.subr.bf16.mxu0 0
      %885 = vmatpush1.bf16.msra.mxu0 0
      %886 = vmatprep.subr.bf16.mxu0 0
      %887 = vmatpush1.bf16.msra.mxu0 0
      %888 = vmatprep.subr.bf16.mxu0 0
      %889 = vmatpush1.bf16.msra.mxu0 0
      %890 = vmatprep.subr.bf16.mxu0 0
      %891 = vmatpush1.bf16.msra.mxu0 0
      %892 = vmatprep.subr.bf16.mxu0 0
      %893 = vmatpush1.bf16.msra.mxu0 0
      %894 = vmatprep.subr.bf16.mxu0 0
      %895 = vmatpush1.bf16.msra.mxu0 0
      %896 = vmatprep.subr.bf16.mxu0 0
      %897 = vmatpush1.bf16.msra.mxu0 0
      %898 = vmatprep.mubr.bf16.mxu0 0
      %899 = vmatmul.mubr.bf16.gmra.mrb[0].mxu0 %v864
      %v900 = vpop.f32.mrb[0].mxu0
      %v901 = vadd.f32 0.0, %v900
      %v902 = vpop.f32.mrb[0].mxu0
      %v903 = vpop.f32.mrb[0].mxu0
      %v904 = vpop.f32.mrb[0].mxu0
      %905 = vdwg.mxu0
      %v906 = vmul.f32 %v901, %v861
      %v907 = vpack.c.bf16 %v906, %v906
      %909 = vrot.lane.b32.xlu0 %v577, 96
      %v910 = vpop.permute.xlu0 %909
      %912 = vrot.lane.b32.xlu0 %v690, 96
      %v913 = vpop.permute.xlu0 %912
      %v915 = vsel %vm804, %v910, 0
      %v918 = vsel %vm804, %v913, 0
      %920 = vmatprep.subr.bf16.mxu0 0
      %921 = vmatpush1.bf16.xpose.msra.mxu0 %v918
      %922 = vmatprep.subr.bf16.mxu0 0
      %923 = vmatpush1.bf16.xpose.msra.mxu0 0
      %924 = vmatprep.subr.bf16.mxu0 0
      %925 = vmatpush1.bf16.xpose.msra.mxu0 0
      %926 = vmatprep.subr.bf16.mxu0 0
      %927 = vmatpush1.bf16.xpose.msra.mxu0 0
      %928 = vmatprep.subr.bf16.mxu0 0
      %929 = vmatpush1.bf16.xpose.msra.mxu0 0
      %930 = vmatprep.subr.bf16.mxu0 0
      %931 = vmatpush1.bf16.xpose.msra.mxu0 0
      %932 = vmatprep.subr.bf16.mxu0 0
      %933 = vmatpush1.bf16.xpose.msra.mxu0 0
      %934 = vmatprep.subr.bf16.mxu0 0
      %935 = vmatpush1.bf16.xpose.msra.mxu0 0
      %936 = vmatprep.subr.bf16.mxu0 0
      %937 = vmatpush1.bf16.xpose.msra.mxu0 0
      %938 = vmatprep.subr.bf16.mxu0 0
      %939 = vmatpush1.bf16.xpose.msra.mxu0 0
      %940 = vmatprep.subr.bf16.mxu0 0
      %941 = vmatpush1.bf16.xpose.msra.mxu0 0
      %942 = vmatprep.subr.bf16.mxu0 0
      %943 = vmatpush1.bf16.xpose.msra.mxu0 0
      %944 = vmatprep.subr.bf16.mxu0 0
      %945 = vmatpush1.bf16.xpose.msra.mxu0 0
      %946 = vmatprep.subr.bf16.mxu0 0
      %947 = vmatpush1.bf16.xpose.msra.mxu0 0
      %948 = vmatprep.subr.bf16.mxu0 0
      %949 = vmatpush1.bf16.xpose.msra.mxu0 0
      %950 = vmatprep.subr.bf16.mxu0 0
      %951 = vmatpush1.bf16.xpose.msra.mxu0 0
      %952 = vmatprep.mubr.bf16.mxu0 0
      %953 = vmatmul.mubr.bf16.gmra.mrb[0].mxu0 %v915
      %v954 = vpop.f32.mrb[0].mxu0
      %v955 = vadd.f32 0.0, %v954
      %v956 = vpop.f32.mrb[0].mxu0
      %v957 = vpop.f32.mrb[0].mxu0
      %v958 = vpop.f32.mrb[0].mxu0
      %959 = vdwg.mxu0
      %v960 = vsel %vm851, %v955, -inf
      %961 = vmax.xlane.f32.xlu0 %v960
      %v962 = vpop.xlane.xlu0 %961
      %v963 = vsub.f32 %v955, %v962
      %v964 = vmul.f32 %v963, 1.442695
      %v965 = vpow.pop %v964
      %v966 = vsel %vm851, %v965, 0.0
      %967 = vadd.xlane.f32.xlu0 %v966
      %v968 = vpop.xlane.xlu0 %967
      %v969 = vrcp.pop %v968
      %v970 = vpack.c.bf16 %v965, %v965
      %972 = vrot.lane.b32.xlu0 %v803, 96
      %v973 = vpop.permute.xlu0 %972
      %v976 = vsel %vm851, %v970, 0
      %978 = vmatprep.subr.bf16.mxu0 0
      %979 = vmatpush1.bf16.msra.mxu0 %v973
      %980 = vmatprep.subr.bf16.mxu0 0
      %981 = vmatpush1.bf16.msra.mxu0 0
      %982 = vmatprep.subr.bf16.mxu0 0
      %983 = vmatpush1.bf16.msra.mxu0 0
      %984 = vmatprep.subr.bf16.mxu0 0
      %985 = vmatpush1.bf16.msra.mxu0 0
      %986 = vmatprep.subr.bf16.mxu0 0
      %987 = vmatpush1.bf16.msra.mxu0 0
      %988 = vmatprep.subr.bf16.mxu0 0
      %989 = vmatpush1.bf16.msra.mxu0 0
      %990 = vmatprep.subr.bf16.mxu0 0
      %991 = vmatpush1.bf16.msra.mxu0 0
      %992 = vmatprep.subr.bf16.mxu0 0
      %993 = vmatpush1.bf16.msra.mxu0 0
      %994 = vmatprep.subr.bf16.mxu0 0
      %995 = vmatpush1.bf16.msra.mxu0 0
      %996 = vmatprep.subr.bf16.mxu0 0
      %997 = vmatpush1.bf16.msra.mxu0 0
      %998 = vmatprep.subr.bf16.mxu0 0
      %999 = vmatpush1.bf16.msra.mxu0 0
      %1000 = vmatprep.subr.bf16.mxu0 0
      %1001 = vmatpush1.bf16.msra.mxu0 0
      %1002 = vmatprep.subr.bf16.mxu0 0
      %1003 = vmatpush1.bf16.msra.mxu0 0
      %1004 = vmatprep.subr.bf16.mxu0 0
      %1005 = vmatpush1.bf16.msra.mxu0 0
      %1006 = vmatprep.subr.bf16.mxu0 0
      %1007 = vmatpush1.bf16.msra.mxu0 0
      %1008 = vmatprep.subr.bf16.mxu0 0
      %1009 = vmatpush1.bf16.msra.mxu0 0
      %1010 = vmatprep.mubr.bf16.mxu0 0
      %1011 = vmatmul.mubr.bf16.gmra.mrb[0].mxu0 %v976
      %v1012 = vpop.f32.mrb[0].mxu0
      %v1013 = vadd.f32 0.0, %v1012
      %v1014 = vpop.f32.mrb[0].mxu0
      %v1015 = vpop.f32.mrb[0].mxu0
      %v1016 = vpop.f32.mrb[0].mxu0
      %1017 = vdwg.mxu0
      %v1018 = vmul.f32 %v1013, %v969
      %v1019 = vpack.c.bf16 %v1018, %v1018
      %1020 = vrot.lane.b32.xlu0 %v577, 64
      %v1021 = vpop.permute.xlu0 %1020
      %1022 = vrot.lane.b32.xlu0 %v690, 64
      %v1023 = vpop.permute.xlu0 %1022
      %v1025 = vsel %vm804, %v1021, 0
      %v1028 = vsel %vm804, %v1023, 0
      %1030 = vmatprep.subr.bf16.mxu0 0
      %1031 = vmatpush1.bf16.xpose.msra.mxu0 %v1028
      %1032 = vmatprep.subr.bf16.mxu0 0
      %1033 = vmatpush1.bf16.xpose.msra.mxu0 0
      %1034 = vmatprep.subr.bf16.mxu0 0
      %1035 = vmatpush1.bf16.xpose.msra.mxu0 0
      %1036 = vmatprep.subr.bf16.mxu0 0
      %1037 = vmatpush1.bf16.xpose.msra.mxu0 0
      %1038 = vmatprep.subr.bf16.mxu0 0
      %1039 = vmatpush1.bf16.xpose.msra.mxu0 0
      %1040 = vmatprep.subr.bf16.mxu0 0
      %1041 = vmatpush1.bf16.xpose.msra.mxu0 0
      %1042 = vmatprep.subr.bf16.mxu0 0
      %1043 = vmatpush1.bf16.xpose.msra.mxu0 0
      %1044 = vmatprep.subr.bf16.mxu0 0
      %1045 = vmatpush1.bf16.xpose.msra.mxu0 0
      %1046 = vmatprep.subr.bf16.mxu0 0
      %1047 = vmatpush1.bf16.xpose.msra.mxu0 0
      %1048 = vmatprep.subr.bf16.mxu0 0
      %1049 = vmatpush1.bf16.xpose.msra.mxu0 0
      %1050 = vmatprep.subr.bf16.mxu0 0
      %1051 = vmatpush1.bf16.xpose.msra.mxu0 0
      %1052 = vmatprep.subr.bf16.mxu0 0
      %1053 = vmatpush1.bf16.xpose.msra.mxu0 0
      %1054 = vmatprep.subr.bf16.mxu0 0
      %1055 = vmatpush1.bf16.xpose.msra.mxu0 0
      %1056 = vmatprep.subr.bf16.mxu0 0
      %1057 = vmatpush1.bf16.xpose.msra.mxu0 0
      %1058 = vmatprep.subr.bf16.mxu0 0
      %1059 = vmatpush1.bf16.xpose.msra.mxu0 0
      %1060 = vmatprep.subr.bf16.mxu0 0
      %1061 = vmatpush1.bf16.xpose.msra.mxu0 0
      %1062 = vmatprep.mubr.bf16.mxu0 0
      %1063 = vmatmul.mubr.bf16.gmra.mrb[0].mxu0 %v1025
      %v1064 = vpop.f32.mrb[0].mxu0
      %v1065 = vadd.f32 0.0, %v1064
      %v1066 = vpop.f32.mrb[0].mxu0
      %v1067 = vpop.f32.mrb[0].mxu0
      %v1068 = vpop.f32.mrb[0].mxu0
      %1069 = vdwg.mxu0
      %v1070 = vsel %vm851, %v1065, -inf
      %1071 = vmax.xlane.f32.xlu0 %v1070
      %v1072 = vpop.xlane.xlu0 %1071
      %v1073 = vsub.f32 %v1065, %v1072
      %v1074 = vmul.f32 %v1073, 1.442695
      %v1075 = vpow.pop %v1074
      %v1076 = vsel %vm851, %v1075, 0.0
      %1077 = vadd.xlane.f32.xlu0 %v1076
      %v1078 = vpop.xlane.xlu0 %1077
      %v1079 = vrcp.pop %v1078
      %v1080 = vpack.c.bf16 %v1075, %v1075
      %1081 = vrot.lane.b32.xlu0 %v803, 64
      %v1082 = vpop.permute.xlu0 %1081
      %v1085 = vsel %vm851, %v1080, 0
      %1087 = vmatprep.subr.bf16.mxu0 0
      %1088 = vmatpush1.bf16.msra.mxu0 %v1082
      %1089 = vmatprep.subr.bf16.mxu0 0
      %1090 = vmatpush1.bf16.msra.mxu0 0
      %1091 = vmatprep.subr.bf16.mxu0 0
      %1092 = vmatpush1.bf16.msra.mxu0 0
      %1093 = vmatprep.subr.bf16.mxu0 0
      %1094 = vmatpush1.bf16.msra.mxu0 0
      %1095 = vmatprep.subr.bf16.mxu0 0
      %1096 = vmatpush1.bf16.msra.mxu0 0
      %1097 = vmatprep.subr.bf16.mxu0 0
      %1098 = vmatpush1.bf16.msra.mxu0 0
      %1099 = vmatprep.subr.bf16.mxu0 0
      %1100 = vmatpush1.bf16.msra.mxu0 0
      %1101 = vmatprep.subr.bf16.mxu0 0
      %1102 = vmatpush1.bf16.msra.mxu0 0
      %1103 = vmatprep.subr.bf16.mxu0 0
      %1104 = vmatpush1.bf16.msra.mxu0 0
      %1105 = vmatprep.subr.bf16.mxu0 0
      %1106 = vmatpush1.bf16.msra.mxu0 0
      %1107 = vmatprep.subr.bf16.mxu0 0
      %1108 = vmatpush1.bf16.msra.mxu0 0
      %1109 = vmatprep.subr.bf16.mxu0 0
      %1110 = vmatpush1.bf16.msra.mxu0 0
      %1111 = vmatprep.subr.bf16.mxu0 0
      %1112 = vmatpush1.bf16.msra.mxu0 0
      %1113 = vmatprep.subr.bf16.mxu0 0
      %1114 = vmatpush1.bf16.msra.mxu0 0
      %1115 = vmatprep.subr.bf16.mxu0 0
      %1116 = vmatpush1.bf16.msra.mxu0 0
      %1117 = vmatprep.subr.bf16.mxu0 0
      %1118 = vmatpush1.bf16.msra.mxu0 0
      %1119 = vmatprep.mubr.bf16.mxu0 0
      %1120 = vmatmul.mubr.bf16.gmra.mrb[0].mxu0 %v1085
      %v1121 = vpop.f32.mrb[0].mxu0
      %v1122 = vadd.f32 0.0, %v1121
      %v1123 = vpop.f32.mrb[0].mxu0
      %v1124 = vpop.f32.mrb[0].mxu0
      %v1125 = vpop.f32.mrb[0].mxu0
      %1126 = vdwg.mxu0
      %v1127 = vmul.f32 %v1122, %v1079
      %v1128 = vpack.c.bf16 %v1127, %v1127
      %1129 = vrot.lane.b32.xlu0 %v577, 32
      %v1130 = vpop.permute.xlu0 %1129
      %1131 = vrot.lane.b32.xlu0 %v690, 32
      %v1132 = vpop.permute.xlu0 %1131
      %v1134 = vsel %vm804, %v1130, 0
      %v1137 = vsel %vm804, %v1132, 0
      %1139 = vmatprep.subr.bf16.mxu0 0
      %1140 = vmatpush1.bf16.xpose.msra.mxu0 %v1137
      %1141 = vmatprep.subr.bf16.mxu0 0
      %1142 = vmatpush1.bf16.xpose.msra.mxu0 0
      %1143 = vmatprep.subr.bf16.mxu0 0
      %1144 = vmatpush1.bf16.xpose.msra.mxu0 0
      %1145 = vmatprep.subr.bf16.mxu0 0
      %1146 = vmatpush1.bf16.xpose.msra.mxu0 0
      %1147 = vmatprep.subr.bf16.mxu0 0
      %1148 = vmatpush1.bf16.xpose.msra.mxu0 0
      %1149 = vmatprep.subr.bf16.mxu0 0
      %1150 = vmatpush1.bf16.xpose.msra.mxu0 0
      %1151 = vmatprep.subr.bf16.mxu0 0
      %1152 = vmatpush1.bf16.xpose.msra.mxu0 0
      %1153 = vmatprep.subr.bf16.mxu0 0
      %1154 = vmatpush1.bf16.xpose.msra.mxu0 0
      %1155 = vmatprep.subr.bf16.mxu0 0
      %1156 = vmatpush1.bf16.xpose.msra.mxu0 0
      %1157 = vmatprep.subr.bf16.mxu0 0
      %1158 = vmatpush1.bf16.xpose.msra.mxu0 0
      %1159 = vmatprep.subr.bf16.mxu0 0
      %1160 = vmatpush1.bf16.xpose.msra.mxu0 0
      %1161 = vmatprep.subr.bf16.mxu0 0
      %1162 = vmatpush1.bf16.xpose.msra.mxu0 0
      %1163 = vmatprep.subr.bf16.mxu0 0
      %1164 = vmatpush1.bf16.xpose.msra.mxu0 0
      %1165 = vmatprep.subr.bf16.mxu0 0
      %1166 = vmatpush1.bf16.xpose.msra.mxu0 0
      %1167 = vmatprep.subr.bf16.mxu0 0
      %1168 = vmatpush1.bf16.xpose.msra.mxu0 0
      %1169 = vmatprep.subr.bf16.mxu0 0
      %1170 = vmatpush1.bf16.xpose.msra.mxu0 0
      %1171 = vmatprep.mubr.bf16.mxu0 0
      %1172 = vmatmul.mubr.bf16.gmra.mrb[0].mxu0 %v1134
      %v1173 = vpop.f32.mrb[0].mxu0
      %v1174 = vadd.f32 0.0, %v1173
      %v1175 = vpop.f32.mrb[0].mxu0
      %v1176 = vpop.f32.mrb[0].mxu0
      %v1177 = vpop.f32.mrb[0].mxu0
      %1178 = vdwg.mxu0
      %v1179 = vsel %vm851, %v1174, -inf
      %1180 = vmax.xlane.f32.xlu0 %v1179
      %v1181 = vpop.xlane.xlu0 %1180
      %v1182 = vsub.f32 %v1174, %v1181
      %v1183 = vmul.f32 %v1182, 1.442695
      %v1184 = vpow.pop %v1183
      %v1185 = vsel %vm851, %v1184, 0.0
      %1186 = vadd.xlane.f32.xlu0 %v1185
      %v1187 = vpop.xlane.xlu0 %1186
      %v1188 = vrcp.pop %v1187
      %v1189 = vpack.c.bf16 %v1184, %v1184
      %1190 = vrot.lane.b32.xlu0 %v803, 32
      %v1191 = vpop.permute.xlu0 %1190
      %v1194 = vsel %vm851, %v1189, 0
      %1196 = vmatprep.subr.bf16.mxu0 0
      %1197 = vmatpush1.bf16.msra.mxu0 %v1191
      %1198 = vmatprep.subr.bf16.mxu0 0
      %1199 = vmatpush1.bf16.msra.mxu0 0
      %1200 = vmatprep.subr.bf16.mxu0 0
      %1201 = vmatpush1.bf16.msra.mxu0 0
      %1202 = vmatprep.subr.bf16.mxu0 0
      %1203 = vmatpush1.bf16.msra.mxu0 0
      %1204 = vmatprep.subr.bf16.mxu0 0
      %1205 = vmatpush1.bf16.msra.mxu0 0
      %1206 = vmatprep.subr.bf16.mxu0 0
      %1207 = vmatpush1.bf16.msra.mxu0 0
      %1208 = vmatprep.subr.bf16.mxu0 0
      %1209 = vmatpush1.bf16.msra.mxu0 0
      %1210 = vmatprep.subr.bf16.mxu0 0
      %1211 = vmatpush1.bf16.msra.mxu0 0
      %1212 = vmatprep.subr.bf16.mxu0 0
      %1213 = vmatpush1.bf16.msra.mxu0 0
      %1214 = vmatprep.subr.bf16.mxu0 0
      %1215 = vmatpush1.bf16.msra.mxu0 0
      %1216 = vmatprep.subr.bf16.mxu0 0
      %1217 = vmatpush1.bf16.msra.mxu0 0
      %1218 = vmatprep.subr.bf16.mxu0 0
      %1219 = vmatpush1.bf16.msra.mxu0 0
      %1220 = vmatprep.subr.bf16.mxu0 0
      %1221 = vmatpush1.bf16.msra.mxu0 0
      %1222 = vmatprep.subr.bf16.mxu0 0
      %1223 = vmatpush1.bf16.msra.mxu0 0
      %1224 = vmatprep.subr.bf16.mxu0 0
      %1225 = vmatpush1.bf16.msra.mxu0 0
      %1226 = vmatprep.subr.bf16.mxu0 0
      %1227 = vmatpush1.bf16.msra.mxu0 0
      %1228 = vmatprep.mubr.bf16.mxu0 0
      %1229 = vmatmul.mubr.bf16.gmra.mrb[0].mxu0 %v1194
      %v1230 = vpop.f32.mrb[0].mxu0
      %v1231 = vadd.f32 0.0, %v1230
      %v1232 = vpop.f32.mrb[0].mxu0
      %v1233 = vpop.f32.mrb[0].mxu0
      %v1234 = vpop.f32.mrb[0].mxu0
      %1235 = vdwg.mxu0
      %v1236 = vmul.f32 %v1231, %v1188
      %v1237 = vpack.c.bf16 %v1236, %v1236
      %1239 = vrot.lane.b32.xlu0 %v1019, 32
      %v1240 = vpop.permute.xlu0 %1239
      %1242 = vrot.lane.b32.xlu0 %v1128, 64
      %v1243 = vpop.permute.xlu0 %1242
      %1245 = vrot.lane.b32.xlu0 %v1237, 96
      %v1246 = vpop.permute.xlu0 %1245
      %v1249 = vsel %vm804, %v907, %v1240
      %vm1250 = vcmask 523264
      %v1252 = vsel %vm1250, %v1249, %v1243
      %vm1253 = vcmask 785408
      %v1255 = vsel %vm1253, %v1252, %v1246
      %v1257 = vld [vmem:[%s8] sm:$0xf]
      %v1258 = vld [vmem:[%s8 + $0x4] sm:$0xf]
      %v1259 = vld [vmem:[%s8 + $0x8] sm:$0xf]
      %v1260 = vld [vmem:[%s8 + $0xc] sm:$0xf]
      %v1261 = vld [vmem:[%s8 + $0x10] sm:$0xf]
      %v1262 = vld [vmem:[%s8 + $0x14] sm:$0xf]
      %v1263 = vld [vmem:[%s8 + $0x18] sm:$0xf]
      %v1264 = vld [vmem:[%s8 + $0x1c] sm:$0xf]
      %v1265 = vld [vmem:[%s8 + $0x20] sm:$0xf]
      %v1266 = vld [vmem:[%s8 + $0x24] sm:$0xf]
      %v1267 = vld [vmem:[%s8 + $0x28] sm:$0xf]
      %v1268 = vld [vmem:[%s8 + $0x2c] sm:$0xf]
      %v1269 = vld [vmem:[%s8 + $0x30] sm:$0xf]
      %v1270 = vld [vmem:[%s8 + $0x34] sm:$0xf]
      %v1271 = vld [vmem:[%s8 + $0x38] sm:$0xf]
      %v1272 = vld [vmem:[%s8 + $0x3c] sm:$0xf]
      %v1273 = vld [vmem:[%s9] sm:$0x1]
      %v1275 = vlaneseq
      %v1276 = vshrl.u32 %v1275, 7
      %v1277 = vsub.s32 0, %v1276
      %v1278 = vrot.slane %v1273, %v1277
      %v1296 = vunpack.c.l.b16 %v1257
      %v1297 = vunpack.c.l.b16 %v1258
      %v1298 = vunpack.c.l.b16 %v1259
      %v1299 = vunpack.c.l.b16 %v1260
      %v1300 = vunpack.c.l.b16 %v1261
      %v1301 = vunpack.c.l.b16 %v1262
      %v1302 = vunpack.c.l.b16 %v1263
      %v1303 = vunpack.c.l.b16 %v1264
      %v1304 = vunpack.c.l.b16 %v1265
      %v1305 = vunpack.c.l.b16 %v1266
      %v1306 = vunpack.c.l.b16 %v1267
      %v1307 = vunpack.c.l.b16 %v1268
      %v1308 = vunpack.c.l.b16 %v1269
      %v1309 = vunpack.c.l.b16 %v1270
      %v1310 = vunpack.c.l.b16 %v1271
      %v1311 = vunpack.c.l.b16 %v1272
      %v1312 = vpack.c.b16 %v1297, %v1296
      %v1313 = vpack.c.b16 %v1299, %v1298
      %v1314 = vpack.c.b16 %v1301, %v1300
      %v1315 = vpack.c.b16 %v1303, %v1302
      %v1316 = vpack.c.b16 %v1305, %v1304
      %v1317 = vpack.c.b16 %v1307, %v1306
      %v1318 = vpack.c.b16 %v1309, %v1308
      %v1319 = vpack.c.b16 %v1311, %v1310
      %1328 = vmatprep.subr.bf16.mxu0 0
      %1329 = vmatpush1.bf16.msra.mxu0 %v1312
      %1330 = vmatprep.subr.bf16.mxu0 0
      %1331 = vmatpush1.bf16.msra.mxu0 %v1313
      %1332 = vmatprep.subr.bf16.mxu0 0
      %1333 = vmatpush1.bf16.msra.mxu0 %v1314
      %1334 = vmatprep.subr.bf16.mxu0 0
      %1335 = vmatpush1.bf16.msra.mxu0 %v1315
      %1336 = vmatprep.subr.bf16.mxu0 0
      %1337 = vmatpush1.bf16.msra.mxu0 %v1316
      %1338 = vmatprep.subr.bf16.mxu0 0
      %1339 = vmatpush1.bf16.msra.mxu0 %v1317
      %1340 = vmatprep.subr.bf16.mxu0 0
      %1341 = vmatpush1.bf16.msra.mxu0 %v1318
      %1342 = vmatprep.subr.bf16.mxu0 0
      %1343 = vmatpush1.bf16.msra.mxu0 %v1319
      %1344 = vmatprep.subr.bf16.mxu0 0
      %1345 = vmatpush1.bf16.msra.mxu0 0
      %1346 = vmatprep.subr.bf16.mxu0 0
      %1347 = vmatpush1.bf16.msra.mxu0 0
      %1348 = vmatprep.subr.bf16.mxu0 0
      %1349 = vmatpush1.bf16.msra.mxu0 0
      %1350 = vmatprep.subr.bf16.mxu0 0
      %1351 = vmatpush1.bf16.msra.mxu0 0
      %1352 = vmatprep.subr.bf16.mxu0 0
      %1353 = vmatpush1.bf16.msra.mxu0 0
      %1354 = vmatprep.subr.bf16.mxu0 0
      %1355 = vmatpush1.bf16.msra.mxu0 0
      %1356 = vmatprep.subr.bf16.mxu0 0
      %1357 = vmatpush1.bf16.msra.mxu0 0
      %1358 = vmatprep.subr.bf16.mxu0 0
      %1359 = vmatpush1.bf16.msra.mxu0 0
      %1360 = vmatprep.mubr.bf16.mxu0 0
      %1361 = vmatmul.mubr.bf16.gmra.mrb[0].mxu0 %v1255
      %v1362 = vpop.f32.mrb[0].mxu0
      %v1363 = vadd.f32 %v1278, %v1362
      %v1364 = vpop.f32.mrb[0].mxu0
      %v1365 = vpop.f32.mrb[0].mxu0
      %v1366 = vpop.f32.mrb[0].mxu0
      %1367 = vdwg.mxu0
      %v1368 = vadd.f32 %v1363, %v461
      %v1369 = vld [vmem:[%s10] sm:$0x1]
      %v1370 = vld [vmem:[%s11] sm:$0x1]
      %1371 = vadd.xlane.f32.xlu0 %v1368
      %v1372 = vpop.xlane.xlu0 %1371
      %v1373 = vrcp.pop 128.0
      %v1374 = vmul.f32 %v1372, %v1373
      %v1375 = vsub.f32 %v1368, %v1374
      %v1376 = vmul.f32 %v1375, %v1375
      %1377 = vadd.xlane.f32.xlu0 %v1376
      %v1378 = vpop.xlane.xlu0 %1377
      %v1379 = vmul.f32 %v1378, %v1373
      %v1380 = vadd.f32 %v1379, 1e-05
      %v1381 = vrsqrt.pop %v1380
      %v1382 = vmul.f32 %v1375, %v1381
      %v1384 = vlaneseq
      %v1385 = vshrl.u32 %v1384, 7
      %v1386 = vsub.s32 0, %v1385
      %v1387 = vrot.slane %v1369, %v1386
      %v1389 = vmul.f32 %v1382, %v1387
      %v1391 = vlaneseq
      %v1392 = vshrl.u32 %v1391, 7
      %v1393 = vsub.s32 0, %v1392
      %v1394 = vrot.slane %v1370, %v1393
      %v1396 = vadd.f32 %v1389, %v1394
      %1397 = vst [vmem:[%s459] sm:$0xff] %v1396
      %p1398 = scmp.lt.s32.totalorder %s27, 1
      %s1399 = scalar_select %p1398, %s27, 1
      %p1400 = scmp.lt.s32.totalorder %s28, 0
      %s1401 = scalar_select %p1400, %s28, 0
      %s1402 = sadd.s32 %s1401, %s1399
      %s1403 = smul.addr %s1402, 8
      %s1404 = scalar_lea.vmem %s12, %s1403
      // Predicated region
      $region69: #{post_patt_encode.14} parent=67 // pred_check
        %p1405 = pneg %p319
      $region70: #{post_patt_encode.14} parent=67 // pred_check_branch
        %1407 = sbr.rel (%p1405) target = $region72
      $region71: #{post_patt_encode.14} parent=67 // pred_region
        _
      $region72: #{post_patt_encode.14} parent=67 // pred_fallthru
        _
    $region68: #{post_patt_encode.14} parent=5 // pred_fallthru
      _
    %p1408 = scmp.le.s32.totalorder 2, %s18
    // Predicated region
    $region73: #{post_patt_encode.14} parent=5 // pred_check
      %p1409 = pneg %p1408
    $region74: #{post_patt_encode.14} parent=5 // pred_check_branch
      %1411 = sbr.rel (%p1409) target = $region76
    $region75: #{post_patt_encode.14} parent=5 // pred_region
      %s1412 = ssub.s32 %s18, 2
      // Predicated region
      $region77: #{post_patt_encode.14} parent=75 // pred_check
        %p1413 = pneg %p325
      $region78: #{post_patt_encode.14} parent=75 // pred_check_branch
        %1415 = sbr.rel (%p1413) target = $region80
      $region79: #{post_patt_encode.14} parent=75 // pred_region
        %p1416 = scmp.lt.s32.totalorder %s29, 1
        %s1417 = scalar_select %p1416, %s29, 1
        %p1418 = scmp.lt.s32.totalorder %s30, 0
        %s1419 = scalar_select %p1418, %s30, 0
        %s1420 = sadd.s32 %s1419, %s1417
        %s1421 = smul.addr %s1420, 8
        %s1422 = scalar_lea.vmem %s12, %s1421
      $region80: #{post_patt_encode.14} parent=75 // pred_fallthru
        _
    $region76: #{post_patt_encode.14} parent=5 // pred_fallthru
      _
  $region6: #{post_patt_encode.14} parent=0 // loop_footer
    %s22 = sadd.s32 1, %s18
  $region7: #{post_patt_encode.14} parent=0 // loop_footer_branch
    %17 = sbr.rel target = $region3
  $region8: #{post_patt_encode.14} parent=0 // loop_exit
    _

</llo_original>
